<compile_context>
chip_gen: v6e
topology: v6e:2x2x1
jax: 0.10.0
libtpu: 0.0.40
codegen_flags: <defaults>
</compile_context>

<pallas_src>
import jax
import jax.numpy as jnp
from jax.experimental import pallas as pl
from jax.experimental.pallas import tpu as pltpu

LN_EPS = 1e-5  # torch.nn.LayerNorm default


def _make_kernel(mm_dtype, h_chunk):
    """Fused per-(batch-block, layer) kernel body."""
    use_cast = jnp.dtype(mm_dtype) != jnp.dtype(jnp.float32)
    cast = (lambda a: a.astype(mm_dtype)) if use_cast else (lambda a: a)
    inv_sqrt2 = 0.7071067811865476

    def kernel(x_ref, cdsd_ref, cs_ref, ss_ref,
               g1_ref, be1_ref, g2_ref, be2_ref,
               w1_ref, b1_ref, w2_ref, b2_ref,
               o_ref):
        d = pl.program_id(1)                     # depth index ("arbitrary" axis)

        # Initialize the resident accumulator (output block) from x on layer 0.
        @pl.when(d == 0)
        def _():
            o_ref[...] = x_ref[...]

        Bb, S, D = o_ref.shape
        M = Bb * S
        H = w1_ref.shape[1]

        # Activation lives in the output VMEM block across all depth steps.
        x = o_ref[...].reshape(M, D)             # (M, D) f32

        # Hoisted per-layer parameter loads.
        g1, be1 = g1_ref[...], be1_ref[...]      # (1, D)
        g2, be2 = g2_ref[...], be2_ref[...]      # (1, D)
        b2 = b2_ref[...]                         # (1, D)

        # ---- PreNorm + FNetBlock: x += Re(FFT2D(LN(x))) ----
        mu = jnp.mean(x, axis=-1, keepdims=True)
        var = jnp.mean(x * x, axis=-1, keepdims=True) - mu * mu      # one-pass
        xn = (x - mu) * jax.lax.rsqrt(var + LN_EPS) * g1 + be1

        # Merged feature-axis DFT (f32 twiddles): one (M,D)x(D,2D) matmul.
        y = jnp.dot(xn, cdsd_ref[...], preferred_element_type=jnp.float32)
        y3 = y.reshape(Bb, S, 2 * D)
        yc = y3[:, :, :D]                        # x @ C_D   (lane-aligned slice)
        ys = y3[:, :, D:]                        # x @ S_D
        # Sequence-axis DFT: Re = C_S @ yc - S_S @ ys, batched over Bb on the MXU.
        cs_b = jnp.broadcast_to(cs_ref[...], (Bb, S, S))
        ss_b = jnp.broadcast_to(ss_ref[...], (Bb, S, S))
        re = (jnp.einsum('bkt,btd->bkd', cs_b, yc,
                         preferred_element_type=jnp.float32)
              - jnp.einsum('bkt,btd->bkd', ss_b, ys,
                           preferred_element_type=jnp.float32))
        x = x + re.reshape(M, D)

        # ---- PreNorm + FeedForward: x += W2 @ gelu(W1 @ LN(x) + b1) + b2 ----
        mu2 = jnp.mean(x, axis=-1, keepdims=True)
        var2 = jnp.mean(x * x, axis=-1, keepdims=True) - mu2 * mu2   # one-pass
        xn2 = cast((x - mu2) * jax.lax.rsqrt(var2 + LN_EPS) * g2 + be2)

        # Hidden dim processed in h_chunk slices so the f32 (M, hc) temp stays
        # small on v7x (64 MiB VMEM); weights are already mm_dtype in VMEM.
        yff = None
        for c0 in range(0, H, h_chunk):
            hc = min(h_chunk, H - c0)
            h = jnp.dot(xn2, w1_ref[:, c0:c0 + hc],
                        preferred_element_type=jnp.float32) + b1_ref[:, c0:c0 + hc]
            # exact (erf-based) GELU, matching torch.nn.GELU() default.
            h = 0.5 * h * (1.0 + jax.lax.erf(h * inv_sqrt2))
            part = jnp.dot(cast(h), w2_ref[c0:c0 + hc, :],
                           preferred_element_type=jnp.float32)
            yff = part if yff is None else yff + part
        yff = yff + b2

        o_ref[...] = (x + yff).reshape(Bb, S, D)

    return kernel


def _vmem_limit_bytes():
    """~3/4 of physical VMEM (96 MiB on v5e/v6e, 48 MiB on v7x), >= 32 MiB."""
    try:
        cap = int(pltpu.get_tpu_info().vmem_capacity_bytes)
    except Exception:
        cap = 64 * 1024 * 1024
    return max(32 * 1024 * 1024, min(cap * 3 // 4, cap - 8 * 1024 * 1024))


def fnet2_forward(x, layer_params, dft, *, block_b=None,
                  mm_dtype=jnp.bfloat16, h_chunk=512,
                  single_buffer_consts=True, return_complex=True):
    """Full fused forward pass: one pallas_call over (batch blocks, depth)."""
    B, S, D = x.shape
    L = len(layer_params)
    cs, ss, cd, sd = dft
    H = layer_params[0][4].shape[1]

    # Stack per-layer parameters along a leading depth axis.  FF weights go to
    # HBM in mm_dtype (bf16 by default) so there is no in-kernel cast and the
    # weight DMA / double-buffered VMEM footprint is halved.  Biases, LN params
    # and DFT twiddles stay f32 for accuracy.
    g1s = jnp.stack([p[0] for p in layer_params])                 # (L, 1, D)
    be1s = jnp.stack([p[1] for p in layer_params])                # (L, 1, D)
    g2s = jnp.stack([p[2] for p in layer_params])                 # (L, 1, D)
    be2s = jnp.stack([p[3] for p in layer_params])                # (L, 1, D)
    w1s = jnp.stack([p[4] for p in layer_params]).astype(mm_dtype)  # (L, D, H)
    b1s = jnp.stack([p[5] for p in layer_params])                 # (L, 1, H)
    w2s = jnp.stack([p[6] for p in layer_params]).astype(mm_dtype)  # (L, H, D)
    b2s = jnp.stack([p[7] for p in layer_params])                 # (L, 1, D)

    cdsd = jnp.concatenate([cd, sd], axis=1).astype(jnp.float32)  # (D, 2D)
    cs = cs.astype(jnp.float32)                                   # (S, S)
    ss = ss.astype(jnp.float32)                                   # (S, S)

    if block_b is None:
        # nb >= 2 so v7x's two TensorCores both get work; pick block_b so that
        # block_b*S is a multiple of 128 when tuning for real workloads.
        block_b = B // 2 if (B % 2 == 0 and B >= 2) else B
    assert B % block_b == 0, "batch must be divisible by block_b"
    nb = B // block_b

    args = (x, cdsd, cs, ss, g1s, be1s, g2s, be2s, w1s, b1s, w2s, b2s)

    def run(single_buffer):
        # Single-buffer the grid-invariant constants and the x input (only read
        # at d==0); per-layer weights keep the default 2-deep prefetch.
        sb = dict(pipeline_mode=pl.Buffered(1)) if single_buffer else {}

        def const_spec(shape):                     # depth/batch-invariant
            return pl.BlockSpec(shape, lambda b, d: (0, 0), **sb)

        def layer_spec(shape):                     # indexed by depth only
            return pl.BlockSpec((pl.Squeezed(),) + shape, lambda b, d: (d, 0, 0))

        grid_spec = pltpu.PrefetchScalarGridSpec(
            num_scalar_prefetch=0,
            grid=(nb, L),                          # (batch blocks, depth)
            in_specs=[
                pl.BlockSpec((block_b, S, D), lambda b, d: (b, 0, 0), **sb),  # x
                const_spec((D, 2 * D)),            # [C_D | S_D]
                const_spec((S, S)),                # C_S
                const_spec((S, S)),                # S_S
                layer_spec((1, D)), layer_spec((1, D)),   # LN1 gamma, beta
                layer_spec((1, D)), layer_spec((1, D)),   # LN2 gamma, beta
                layer_spec((D, H)), layer_spec((1, H)),   # W1, b1
                layer_spec((H, D)), layer_spec((1, D)),   # W2, b2
            ],
            out_specs=pl.BlockSpec((block_b, S, D), lambda b, d: (b, 0, 0)),
        )

        return pl.pallas_call(
            _make_kernel(mm_dtype, h_chunk),
            out_shape=jax.ShapeDtypeStruct((B, S, D), jnp.float32),
            grid_spec=grid_spec,
            compiler_params=pltpu.CompilerParams(
                # batch blocks shard across TensorCores; depth is the
                # resident-accumulator axis.
                dimension_semantics=("parallel", "arbitrary"),
                vmem_limit_bytes=_vmem_limit_bytes()),
        )(*args)

    try:
        out = run(single_buffer_consts)
    except Exception:
        if not single_buffer_consts:
            raise
        out = run(False)                           # fallback: default buffering

    # PyTorch output dtype is complex64 with zero imaginary part; the cast is a
    # single XLA op outside the kernel (set return_complex=False to skip it).
    return out.astype(jnp.complex64) if return_complex else out


# ------------------------- parameter / input setup -------------------------

def dft_matrices(n):
    k = jnp.arange(n, dtype=jnp.float32)
    # reduce the twiddle exponent mod n before the trig call for f32 accuracy
    kk = jnp.remainder(jnp.outer(k, k), float(n))
    ang = 2.0 * jnp.pi * kk / n
    return jnp.cos(ang).astype(jnp.float32), jnp.sin(ang).astype(jnp.float32)


def init_params(key, dim, mlp_dim, depth):
    layers = []
    for i in range(depth):
        k = jax.random.fold_in(key, i)
        k1, k2, k3, k4 = jax.random.split(k, 4)
        g1 = jnp.ones((1, dim), jnp.float32)           # LayerNorm default init
        be1 = jnp.zeros((1, dim), jnp.float32)
        g2 = jnp.ones((1, dim), jnp.float32)
        be2 = jnp.zeros((1, dim), jnp.float32)
        w1 = jax.random.normal(k1, (dim, mlp_dim), jnp.float32) / jnp.sqrt(dim)
        b1 = 0.01 * jax.random.normal(k2, (1, mlp_dim), jnp.float32)
        w2 = jax.random.normal(k3, (mlp_dim, dim), jnp.float32) / jnp.sqrt(mlp_dim)
        b2 = 0.01 * jax.random.normal(k4, (1, dim), jnp.float32)
        layers.append((g1, be1, g2, be2, w1, b1, w2, b2))
    return layers


# ------------------------- pure-JAX reference ------------------------------

def _layer_norm_ref(x, g, b):
    mu = jnp.mean(x, axis=-1, keepdims=True)
    var = jnp.mean((x - mu) ** 2, axis=-1, keepdims=True)
    return (x - mu) * jax.lax.rsqrt(var + LN_EPS) * g + b


def reference_forward(x, layer_params):
    for (g1, be1, g2, be2, w1, b1, w2, b2) in layer_params:
        xn = _layer_norm_ref(x, g1, be1)
        re = jnp.real(jnp.fft.fft(jnp.fft.fft(xn, axis=-1), axis=-2))
        x = x + re
        xn2 = _layer_norm_ref(x, g2, be2)
        h = jax.nn.gelu(xn2 @ w1 + b1, approximate=False)
        x = x + (h @ w2 + b2)
    return x.astype(jnp.complex64)


if __name__ == "__main__":
    # Lane-dense shapes: D, H multiples of 128; block_b*S = 128; nb = 2.
    B, S, D, H, DEPTH = 16, 16, 128, 256, 2

    key = jax.random.PRNGKey(0)
    kx, kp = jax.random.split(key)
    x = jax.random.normal(kx, (B, S, D), jnp.float32)
    params = init_params(kp, D, H, DEPTH)

    cs, ss = dft_matrices(S)
    cd, sd = dft_matrices(D)
    dft = (cs, ss, cd, sd)

    # Defaults: bf16 FF weights on the MXU (f32 accumulation), f32 DFT twiddles,
    # block_b = B//2 so both v7x TensorCores are used.
    out = fnet2_forward(x, params, dft)
    out = jax.block_until_ready(out)

    ref = reference_forward(x, params)
    assert out.shape == (B, S, D) and out.dtype == jnp.complex64
    err = float(jnp.max(jnp.abs(out - ref)))
    scale = float(jnp.max(jnp.abs(ref))) + 1e-30
    rel = err / scale
    # Relative tolerance sized for bf16 FF weights with f32 accumulation.
    if rel < 2e-3:
        print("KERNEL_OK")
    else:
        print("MISMATCH", err, rel)
</pallas_src>

<mosaic_0001>
module attributes {stable_mosaic.version = 11 : i64} {
  func.func @kernel(%arg0: i32, %arg1: i32, %arg2: memref<8x16x128xf32, #tpu.memory_space<vmem>>, %arg3: memref<128x256xf32, #tpu.memory_space<vmem>>, %arg4: memref<16x16xf32, #tpu.memory_space<vmem>>, %arg5: memref<16x16xf32, #tpu.memory_space<vmem>>, %arg6: memref<1x1x128xf32, #tpu.memory_space<vmem>>, %arg7: memref<1x1x128xf32, #tpu.memory_space<vmem>>, %arg8: memref<1x1x128xf32, #tpu.memory_space<vmem>>, %arg9: memref<1x1x128xf32, #tpu.memory_space<vmem>>, %arg10: memref<1x128x256xbf16, #tpu.memory_space<vmem>>, %arg11: memref<1x1x256xf32, #tpu.memory_space<vmem>>, %arg12: memref<1x256x128xbf16, #tpu.memory_space<vmem>>, %arg13: memref<1x1x128xf32, #tpu.memory_space<vmem>>, %arg14: memref<8x16x128xf32, #tpu.memory_space<vmem>>) attributes {dimension_semantics = [#tpu.dimension_semantics<parallel>, #tpu.dimension_semantics<arbitrary>], iteration_bounds = array<i64: 2, 2>, scalar_prefetch = 0 : i64, scratch_operands = 0 : i64, tpu.core_type = #tpu.core_type<tc>, window_params = [{pipeline_mode = #tpu.pipeline_mode<synchronous>, transform_indices = @transform_0, window_bounds = array<i64: 8, 16, 128>}, {pipeline_mode = #tpu.pipeline_mode<synchronous>, transform_indices = @transform_1, window_bounds = array<i64: 128, 256>}, {pipeline_mode = #tpu.pipeline_mode<synchronous>, transform_indices = @transform_2, window_bounds = array<i64: 16, 16>}, {pipeline_mode = #tpu.pipeline_mode<synchronous>, transform_indices = @transform_3, window_bounds = array<i64: 16, 16>}, {transform_indices = @transform_4, window_bounds = array<i64: 1, 1, 128>}, {transform_indices = @transform_5, window_bounds = array<i64: 1, 1, 128>}, {transform_indices = @transform_6, window_bounds = array<i64: 1, 1, 128>}, {transform_indices = @transform_7, window_bounds = array<i64: 1, 1, 128>}, {transform_indices = @transform_8, window_bounds = array<i64: 1, 128, 256>}, {transform_indices = @transform_9, window_bounds = array<i64: 1, 1, 256>}, {transform_indices = @transform_10, window_bounds = array<i64: 1, 256, 128>}, {transform_indices = @transform_11, window_bounds = array<i64: 1, 1, 128>}, {transform_indices = @transform_12, window_bounds = array<i64: 8, 16, 128>}]} {
    %c0_i32 = arith.constant 0 : i32
    %0 = arith.cmpi eq, %arg1, %c0_i32 : i32
    %1 = arith.extui %0 : i1 to i32
    %c0_i32_0 = arith.constant 0 : i32
    %2 = arith.cmpi ne, %1, %c0_i32_0 : i32
    scf.if %2 {
      %c0_53 = arith.constant 0 : index
      %c0_54 = arith.constant 0 : index
      %c0_55 = arith.constant 0 : index
      %100 = vector.load %arg2[%c0_53, %c0_54, %c0_55] : memref<8x16x128xf32, #tpu.memory_space<vmem>>, vector<8x16x128xf32>
      %c0_56 = arith.constant 0 : index
      %c0_57 = arith.constant 0 : index
      %c0_58 = arith.constant 0 : index
      %101 = vector.load %arg14[%c0_56, %c0_57, %c0_58] : memref<8x16x128xf32, #tpu.memory_space<vmem>>, vector<8x16x128xf32>
      tpu.vector_store %arg14[%c0_56, %c0_57, %c0_58], %100 {strides = array<i32>} : memref<8x16x128xf32, #tpu.memory_space<vmem>>, vector<8x16x128xf32>,
    } else {
    }
    %c0 = arith.constant 0 : index
    %c0_1 = arith.constant 0 : index
    %c0_2 = arith.constant 0 : index
    %3 = vector.load %arg14[%c0, %c0_1, %c0_2] : memref<8x16x128xf32, #tpu.memory_space<vmem>>, vector<8x16x128xf32>
    %4 = vector.shape_cast %3 : vector<8x16x128xf32> to vector<128x128xf32>
    %c0_3 = arith.constant 0 : index
    %c0_4 = arith.constant 0 : index
    %c0_5 = arith.constant 0 : index
    %5 = vector.load %arg6[%c0_3, %c0_4, %c0_5] : memref<1x1x128xf32, #tpu.memory_space<vmem>>, vector<1x1x128xf32>
    %6 = vector.shape_cast %5 : vector<1x1x128xf32> to vector<1x128xf32>
    %c0_6 = arith.constant 0 : index
    %c0_7 = arith.constant 0 : index
    %c0_8 = arith.constant 0 : index
    %7 = vector.load %arg7[%c0_6, %c0_7, %c0_8] : memref<1x1x128xf32, #tpu.memory_space<vmem>>, vector<1x1x128xf32>
    %8 = vector.shape_cast %7 : vector<1x1x128xf32> to vector<1x128xf32>
    %c0_9 = arith.constant 0 : index
    %c0_10 = arith.constant 0 : index
    %c0_11 = arith.constant 0 : index
    %9 = vector.load %arg8[%c0_9, %c0_10, %c0_11] : memref<1x1x128xf32, #tpu.memory_space<vmem>>, vector<1x1x128xf32>
    %10 = vector.shape_cast %9 : vector<1x1x128xf32> to vector<1x128xf32>
    %c0_12 = arith.constant 0 : index
    %c0_13 = arith.constant 0 : index
    %c0_14 = arith.constant 0 : index
    %11 = vector.load %arg9[%c0_12, %c0_13, %c0_14] : memref<1x1x128xf32, #tpu.memory_space<vmem>>, vector<1x1x128xf32>
    %12 = vector.shape_cast %11 : vector<1x1x128xf32> to vector<1x128xf32>
    %c0_15 = arith.constant 0 : index
    %c0_16 = arith.constant 0 : index
    %c0_17 = arith.constant 0 : index
    %13 = vector.load %arg13[%c0_15, %c0_16, %c0_17] : memref<1x1x128xf32, #tpu.memory_space<vmem>>, vector<1x1x128xf32>
    %14 = vector.shape_cast %13 : vector<1x1x128xf32> to vector<1x128xf32>
    %cst = arith.constant dense<0.000000e+00> : vector<128xf32>
    %15 = vector.multi_reduction <add>, %4, %cst [1] : vector<128x128xf32> to vector<128xf32>
    %16 = vector.shape_cast %15 : vector<128xf32> to vector<128x1xf32>
    %cst_18 = arith.constant 1.280000e+02 : f32
    %17 = vector.broadcast %cst_18 : f32 to vector<128x1xf32>
    %18 = arith.divf %16, %17 : vector<128x1xf32>
    %19 = arith.mulf %4, %4 : vector<128x128xf32>
    %cst_19 = arith.constant dense<0.000000e+00> : vector<128xf32>
    %20 = vector.multi_reduction <add>, %19, %cst_19 [1] : vector<128x128xf32> to vector<128xf32>
    %21 = vector.shape_cast %20 : vector<128xf32> to vector<128x1xf32>
    %cst_20 = arith.constant 1.280000e+02 : f32
    %22 = vector.broadcast %cst_20 : f32 to vector<128x1xf32>
    %23 = arith.divf %21, %22 : vector<128x1xf32>
    %24 = arith.mulf %18, %18 : vector<128x1xf32>
    %25 = arith.subf %23, %24 : vector<128x1xf32>
    %26 = vector.broadcast %18 : vector<128x1xf32> to vector<128x128xf32>
    %27 = arith.subf %4, %26 : vector<128x128xf32>
    %cst_21 = arith.constant 9.99999974E-6 : f32
    %28 = vector.broadcast %cst_21 : f32 to vector<128x1xf32>
    %29 = arith.addf %25, %28 : vector<128x1xf32>
    %30 = math.rsqrt %29 : vector<128x1xf32>
    %31 = vector.broadcast %30 : vector<128x1xf32> to vector<128x128xf32>
    %32 = arith.mulf %27, %31 : vector<128x128xf32>
    %33 = vector.broadcast %6 : vector<1x128xf32> to vector<128x128xf32>
    %34 = arith.mulf %32, %33 : vector<128x128xf32>
    %35 = vector.broadcast %8 : vector<1x128xf32> to vector<128x128xf32>
    %36 = arith.addf %34, %35 : vector<128x128xf32>
    %c0_22 = arith.constant 0 : index
    %c0_23 = arith.constant 0 : index
    %37 = vector.load %arg3[%c0_22, %c0_23] : memref<128x256xf32, #tpu.memory_space<vmem>>, vector<128x256xf32>
    %cst_24 = arith.constant dense<0.000000e+00> : vector<128x256xf32>
    %38 = tpu.matmul %36, %37, %cst_24 {dimension_numbers = #tpu.dot_dimension_numbers<[1], [0], [0], [1], [0, 0, 1, 1], [], []>} : vector<128x128xf32>, vector<128x256xf32>, vector<128x256xf32> -> vector<128x256xf32>
    %39 = vector.shape_cast %38 : vector<128x256xf32> to vector<8x16x256xf32>
    %40 = vector.extract_strided_slice %39 {offsets = [0, 0, 0], sizes = [8, 16, 128], strides = [1, 1, 1]} : vector<8x16x256xf32> to vector<8x16x128xf32>
    %41 = vector.extract_strided_slice %39 {offsets = [0, 0, 128], sizes = [8, 16, 128], strides = [1, 1, 1]} : vector<8x16x256xf32> to vector<8x16x128xf32>
    %c0_25 = arith.constant 0 : index
    %c0_26 = arith.constant 0 : index
    %42 = vector.load %arg4[%c0_25, %c0_26] : memref<16x16xf32, #tpu.memory_space<vmem>>, vector<16x16xf32>
    %43 = vector.shape_cast %42 : vector<16x16xf32> to vector<1x16x16xf32>
    %44 = vector.broadcast %43 : vector<1x16x16xf32> to vector<8x16x16xf32>
    %c0_27 = arith.constant 0 : index
    %c0_28 = arith.constant 0 : index
    %45 = vector.load %arg5[%c0_27, %c0_28] : memref<16x16xf32, #tpu.memory_space<vmem>>, vector<16x16xf32>
    %46 = vector.shape_cast %45 : vector<16x16xf32> to vector<1x16x16xf32>
    %47 = vector.broadcast %46 : vector<1x16x16xf32> to vector<8x16x16xf32>
    "tpu.trace_start"() <{level = 10 : i32, message = "bkt,btd->bkd"}> : () -> ()
    %cst_29 = arith.constant dense<0.000000e+00> : vector<8x16x128xf32>
    %48 = tpu.matmul %44, %40, %cst_29 {dimension_numbers = #tpu.dot_dimension_numbers<[2], [1], [1], [2], [0, 0, 0, 1, 1, 2], [0], [0]>} : vector<8x16x16xf32>, vector<8x16x128xf32>, vector<8x16x128xf32> -> vector<8x16x128xf32>
    %cst_30 = arith.constant dense<0.000000e+00> : vector<8x16x128xf32>
    %49 = tpu.matmul %47, %41, %cst_30 {dimension_numbers = #tpu.dot_dimension_numbers<[2], [1], [1], [2], [0, 0, 0, 1, 1, 2], [0], [0]>} : vector<8x16x16xf32>, vector<8x16x128xf32>, vector<8x16x128xf32> -> vector<8x16x128xf32>
    "tpu.trace_stop"() : () -> ()
    %50 = arith.subf %48, %49 : vector<8x16x128xf32>
    %51 = vector.shape_cast %50 : vector<8x16x128xf32> to vector<128x128xf32>
    %52 = arith.addf %4, %51 : vector<128x128xf32>
    %cst_31 = arith.constant dense<0.000000e+00> : vector<128xf32>
    %53 = vector.multi_reduction <add>, %52, %cst_31 [1] : vector<128x128xf32> to vector<128xf32>
    %54 = vector.shape_cast %53 : vector<128xf32> to vector<128x1xf32>
    %cst_32 = arith.constant 1.280000e+02 : f32
    %55 = vector.broadcast %cst_32 : f32 to vector<128x1xf32>
    %56 = arith.divf %54, %55 : vector<128x1xf32>
    %57 = arith.mulf %52, %52 : vector<128x128xf32>
    %cst_33 = arith.constant dense<0.000000e+00> : vector<128xf32>
    %58 = vector.multi_reduction <add>, %57, %cst_33 [1] : vector<128x128xf32> to vector<128xf32>
    %59 = vector.shape_cast %58 : vector<128xf32> to vector<128x1xf32>
    %cst_34 = arith.constant 1.280000e+02 : f32
    %60 = vector.broadcast %cst_34 : f32 to vector<128x1xf32>
    %61 = arith.divf %59, %60 : vector<128x1xf32>
    %62 = arith.mulf %56, %56 : vector<128x1xf32>
    %63 = arith.subf %61, %62 : vector<128x1xf32>
    %64 = vector.broadcast %56 : vector<128x1xf32> to vector<128x128xf32>
    %65 = arith.subf %52, %64 : vector<128x128xf32>
    %cst_35 = arith.constant 9.99999974E-6 : f32
    %66 = vector.broadcast %cst_35 : f32 to vector<128x1xf32>
    %67 = arith.addf %63, %66 : vector<128x1xf32>
    %68 = math.rsqrt %67 : vector<128x1xf32>
    %69 = vector.broadcast %68 : vector<128x1xf32> to vector<128x128xf32>
    %70 = arith.mulf %65, %69 : vector<128x128xf32>
    %71 = vector.broadcast %10 : vector<1x128xf32> to vector<128x128xf32>
    %72 = arith.mulf %70, %71 : vector<128x128xf32>
    %73 = vector.broadcast %12 : vector<1x128xf32> to vector<128x128xf32>
    %74 = arith.addf %72, %73 : vector<128x128xf32>
    %75 = arith.truncf %74 : vector<128x128xf32> to vector<128x128xbf16>
    %c0_36 = arith.constant 0 : index
    %c0_37 = arith.constant 0 : index
    %c0_38 = arith.constant 0 : index
    %76 = vector.load %arg10[%c0_36, %c0_37, %c0_38] : memref<1x128x256xbf16, #tpu.memory_space<vmem>>, vector<1x128x256xbf16>
    %77 = vector.shape_cast %76 : vector<1x128x256xbf16> to vector<128x256xbf16>
    %cst_39 = arith.constant dense<0.000000e+00> : vector<128x256xf32>
    %78 = tpu.matmul %75, %77, %cst_39 {dimension_numbers = #tpu.dot_dimension_numbers<[1], [0], [0], [1], [0, 0, 1, 1], [], []>} : vector<128x128xbf16>, vector<128x256xbf16>, vector<128x256xf32> -> vector<128x256xf32>
    %c0_40 = arith.constant 0 : index
    %c0_41 = arith.constant 0 : index
    %c0_42 = arith.constant 0 : index
    %79 = vector.load %arg11[%c0_40, %c0_41, %c0_42] : memref<1x1x256xf32, #tpu.memory_space<vmem>>, vector<1x1x256xf32>
    %80 = vector.shape_cast %79 : vector<1x1x256xf32> to vector<1x256xf32>
    %81 = vector.broadcast %80 : vector<1x256xf32> to vector<128x256xf32>
    %82 = arith.addf %78, %81 : vector<128x256xf32>
    %cst_43 = arith.constant 5.000000e-01 : f32
    %83 = vector.broadcast %cst_43 : f32 to vector<128x256xf32>
    %84 = arith.mulf %83, %82 : vector<128x256xf32>
    %cst_44 = arith.constant 0.707106769 : f32
    %85 = vector.broadcast %cst_44 : f32 to vector<128x256xf32>
    %86 = arith.mulf %82, %85 : vector<128x256xf32>
    %87 = math.erf %86 : vector<128x256xf32>
    %cst_45 = arith.constant 1.000000e+00 : f32
    %88 = vector.broadcast %cst_45 : f32 to vector<128x256xf32>
    %89 = arith.addf %88, %87 : vector<128x256xf32>
    %90 = arith.mulf %84, %89 : vector<128x256xf32>
    %91 = arith.truncf %90 : vector<128x256xf32> to vector<128x256xbf16>
    %c0_46 = arith.constant 0 : index
    %c0_47 = arith.constant 0 : index
    %c0_48 = arith.constant 0 : index
    %92 = vector.load %arg12[%c0_46, %c0_47, %c0_48] : memref<1x256x128xbf16, #tpu.memory_space<vmem>>, vector<1x256x128xbf16>
    %93 = vector.shape_cast %92 : vector<1x256x128xbf16> to vector<256x128xbf16>
    %cst_49 = arith.constant dense<0.000000e+00> : vector<128x128xf32>
    %94 = tpu.matmul %91, %93, %cst_49 {dimension_numbers = #tpu.dot_dimension_numbers<[1], [0], [0], [1], [0, 0, 1, 1], [], []>} : vector<128x256xbf16>, vector<256x128xbf16>, vector<128x128xf32> -> vector<128x128xf32>
    %95 = vector.broadcast %14 : vector<1x128xf32> to vector<128x128xf32>
    %96 = arith.addf %94, %95 : vector<128x128xf32>
    %97 = arith.addf %52, %96 : vector<128x128xf32>
    %98 = vector.shape_cast %97 : vector<128x128xf32> to vector<8x16x128xf32>
    %c0_50 = arith.constant 0 : index
    %c0_51 = arith.constant 0 : index
    %c0_52 = arith.constant 0 : index
    %99 = vector.load %arg14[%c0_50, %c0_51, %c0_52] : memref<8x16x128xf32, #tpu.memory_space<vmem>>, vector<8x16x128xf32>
    tpu.vector_store %arg14[%c0_50, %c0_51, %c0_52], %98 {strides = array<i32>} : memref<8x16x128xf32, #tpu.memory_space<vmem>>, vector<8x16x128xf32>,
    return
  }
  func.func @transform_0(%arg0: i32, %arg1: i32) -> (i32, i32, i32) {
    %c0_i32 = arith.constant 0 : i32
    %c0_i32_0 = arith.constant 0 : i32
    %c0_i32_1 = arith.constant 0 : i32
    return %arg0, %c0_i32, %c0_i32_0 : i32, i32, i32
  }
  func.func @transform_1(%arg0: i32, %arg1: i32) -> (i32, i32) {
    %c0_i32 = arith.constant 0 : i32
    %c0_i32_0 = arith.constant 0 : i32
    %c0_i32_1 = arith.constant 0 : i32
    return %c0_i32, %c0_i32_0 : i32, i32
  }
  func.func @transform_2(%arg0: i32, %arg1: i32) -> (i32, i32) {
    %c0_i32 = arith.constant 0 : i32
    %c0_i32_0 = arith.constant 0 : i32
    %c0_i32_1 = arith.constant 0 : i32
    return %c0_i32, %c0_i32_0 : i32, i32
  }
  func.func @transform_3(%arg0: i32, %arg1: i32) -> (i32, i32) {
    %c0_i32 = arith.constant 0 : i32
    %c0_i32_0 = arith.constant 0 : i32
    %c0_i32_1 = arith.constant 0 : i32
    return %c0_i32, %c0_i32_0 : i32, i32
  }
  func.func @transform_4(%arg0: i32, %arg1: i32) -> (i32, i32, i32) {
    %c0_i32 = arith.constant 0 : i32
    %c0_i32_0 = arith.constant 0 : i32
    %c0_i32_1 = arith.constant 0 : i32
    return %arg1, %c0_i32, %c0_i32_0 : i32, i32, i32
  }
  func.func @transform_5(%arg0: i32, %arg1: i32) -> (i32, i32, i32) {
    %c0_i32 = arith.constant 0 : i32
    %c0_i32_0 = arith.constant 0 : i32
    %c0_i32_1 = arith.constant 0 : i32
    return %arg1, %c0_i32, %c0_i32_0 : i32, i32, i32
  }
  func.func @transform_6(%arg0: i32, %arg1: i32) -> (i32, i32, i32) {
    %c0_i32 = arith.constant 0 : i32
    %c0_i32_0 = arith.constant 0 : i32
    %c0_i32_1 = arith.constant 0 : i32
    return %arg1, %c0_i32, %c0_i32_0 : i32, i32, i32
  }
  func.func @transform_7(%arg0: i32, %arg1: i32) -> (i32, i32, i32) {
    %c0_i32 = arith.constant 0 : i32
    %c0_i32_0 = arith.constant 0 : i32
    %c0_i32_1 = arith.constant 0 : i32
    return %arg1, %c0_i32, %c0_i32_0 : i32, i32, i32
  }
  func.func @transform_8(%arg0: i32, %arg1: i32) -> (i32, i32, i32) {
    %c0_i32 = arith.constant 0 : i32
    %c0_i32_0 = arith.constant 0 : i32
    %c0_i32_1 = arith.constant 0 : i32
    return %arg1, %c0_i32, %c0_i32_0 : i32, i32, i32
  }
  func.func @transform_9(%arg0: i32, %arg1: i32) -> (i32, i32, i32) {
    %c0_i32 = arith.constant 0 : i32
    %c0_i32_0 = arith.constant 0 : i32
    %c0_i32_1 = arith.constant 0 : i32
    return %arg1, %c0_i32, %c0_i32_0 : i32, i32, i32
  }
  func.func @transform_10(%arg0: i32, %arg1: i32) -> (i32, i32, i32) {
    %c0_i32 = arith.constant 0 : i32
    %c0_i32_0 = arith.constant 0 : i32
    %c0_i32_1 = arith.constant 0 : i32
    return %arg1, %c0_i32, %c0_i32_0 : i32, i32, i32
  }
  func.func @transform_11(%arg0: i32, %arg1: i32) -> (i32, i32, i32) {
    %c0_i32 = arith.constant 0 : i32
    %c0_i32_0 = arith.constant 0 : i32
    %c0_i32_1 = arith.constant 0 : i32
    return %arg1, %c0_i32, %c0_i32_0 : i32, i32, i32
  }
  func.func @transform_12(%arg0: i32, %arg1: i32) -> (i32, i32, i32) {
    %c0_i32 = arith.constant 0 : i32
    %c0_i32_0 = arith.constant 0 : i32
    %c0_i32_1 = arith.constant 0 : i32
    return %arg0, %c0_i32, %c0_i32_0 : i32, i32, i32
  }
}

module attributes {stable_mosaic.version = 11 : i64} {
  func.func @kernel(%arg0: i32, %arg1: i32, %arg2: memref<8x16x128xf32, #tpu.memory_space<vmem>>, %arg3: memref<128x256xf32, #tpu.memory_space<vmem>>, %arg4: memref<16x16xf32, #tpu.memory_space<vmem>>, %arg5: memref<16x16xf32, #tpu.memory_space<vmem>>, %arg6: memref<1x1x128xf32, #tpu.memory_space<vmem>>, %arg7: memref<1x1x128xf32, #tpu.memory_space<vmem>>, %arg8: memref<1x1x128xf32, #tpu.memory_space<vmem>>, %arg9: memref<1x1x128xf32, #tpu.memory_space<vmem>>, %arg10: memref<1x128x256xbf16, #tpu.memory_space<vmem>>, %arg11: memref<1x1x256xf32, #tpu.memory_space<vmem>>, %arg12: memref<1x256x128xbf16, #tpu.memory_space<vmem>>, %arg13: memref<1x1x128xf32, #tpu.memory_space<vmem>>, %arg14: memref<8x16x128xf32, #tpu.memory_space<vmem>>) attributes {dimension_semantics = [#tpu.dimension_semantics<parallel>, #tpu.dimension_semantics<arbitrary>], iteration_bounds = array<i64: 2, 2>, scalar_prefetch = 0 : i64, scratch_operands = 0 : i64, tpu.core_type = #tpu.core_type<tc>, window_params = [{transform_indices = @transform_0, window_bounds = array<i64: 8, 16, 128>}, {pipeline_mode = #tpu.pipeline_mode<synchronous>, transform_indices = @transform_1, window_bounds = array<i64: 128, 256>}, {pipeline_mode = #tpu.pipeline_mode<synchronous>, transform_indices = @transform_2, window_bounds = array<i64: 16, 16>}, {pipeline_mode = #tpu.pipeline_mode<synchronous>, transform_indices = @transform_3, window_bounds = array<i64: 16, 16>}, {transform_indices = @transform_4, window_bounds = array<i64: 1, 1, 128>}, {transform_indices = @transform_5, window_bounds = array<i64: 1, 1, 128>}, {transform_indices = @transform_6, window_bounds = array<i64: 1, 1, 128>}, {transform_indices = @transform_7, window_bounds = array<i64: 1, 1, 128>}, {transform_indices = @transform_8, window_bounds = array<i64: 1, 128, 256>}, {transform_indices = @transform_9, window_bounds = array<i64: 1, 1, 256>}, {transform_indices = @transform_10, window_bounds = array<i64: 1, 256, 128>}, {transform_indices = @transform_11, window_bounds = array<i64: 1, 1, 128>}, {transform_indices = @transform_12, window_bounds = array<i64: 8, 16, 128>}]} {
    %c0_i32 = arith.constant 0 : i32
    %0 = arith.cmpi eq, %arg1, %c0_i32 : i32
    %1 = arith.extui %0 : i1 to i32
    %c0_i32_0 = arith.constant 0 : i32
    %2 = arith.cmpi ne, %1, %c0_i32_0 : i32
    scf.if %2 {
      %c0_53 = arith.constant 0 : index
      %c0_54 = arith.constant 0 : index
      %c0_55 = arith.constant 0 : index
      %100 = vector.load %arg2[%c0_53, %c0_54, %c0_55] : memref<8x16x128xf32, #tpu.memory_space<vmem>>, vector<8x16x128xf32>
      %c0_56 = arith.constant 0 : index
      %c0_57 = arith.constant 0 : index
      %c0_58 = arith.constant 0 : index
      %101 = vector.load %arg14[%c0_56, %c0_57, %c0_58] : memref<8x16x128xf32, #tpu.memory_space<vmem>>, vector<8x16x128xf32>
      tpu.vector_store %arg14[%c0_56, %c0_57, %c0_58], %100 {strides = array<i32>} : memref<8x16x128xf32, #tpu.memory_space<vmem>>, vector<8x16x128xf32>,
    } else {
    }
    %c0 = arith.constant 0 : index
    %c0_1 = arith.constant 0 : index
    %c0_2 = arith.constant 0 : index
    %3 = vector.load %arg14[%c0, %c0_1, %c0_2] : memref<8x16x128xf32, #tpu.memory_space<vmem>>, vector<8x16x128xf32>
    %4 = vector.shape_cast %3 : vector<8x16x128xf32> to vector<128x128xf32>
    %c0_3 = arith.constant 0 : index
    %c0_4 = arith.constant 0 : index
    %c0_5 = arith.constant 0 : index
    %5 = vector.load %arg6[%c0_3, %c0_4, %c0_5] : memref<1x1x128xf32, #tpu.memory_space<vmem>>, vector<1x1x128xf32>
    %6 = vector.shape_cast %5 : vector<1x1x128xf32> to vector<1x128xf32>
    %c0_6 = arith.constant 0 : index
    %c0_7 = arith.constant 0 : index
    %c0_8 = arith.constant 0 : index
    %7 = vector.load %arg7[%c0_6, %c0_7, %c0_8] : memref<1x1x128xf32, #tpu.memory_space<vmem>>, vector<1x1x128xf32>
    %8 = vector.shape_cast %7 : vector<1x1x128xf32> to vector<1x128xf32>
    %c0_9 = arith.constant 0 : index
    %c0_10 = arith.constant 0 : index
    %c0_11 = arith.constant 0 : index
    %9 = vector.load %arg8[%c0_9, %c0_10, %c0_11] : memref<1x1x128xf32, #tpu.memory_space<vmem>>, vector<1x1x128xf32>
    %10 = vector.shape_cast %9 : vector<1x1x128xf32> to vector<1x128xf32>
    %c0_12 = arith.constant 0 : index
    %c0_13 = arith.constant 0 : index
    %c0_14 = arith.constant 0 : index
    %11 = vector.load %arg9[%c0_12, %c0_13, %c0_14] : memref<1x1x128xf32, #tpu.memory_space<vmem>>, vector<1x1x128xf32>
    %12 = vector.shape_cast %11 : vector<1x1x128xf32> to vector<1x128xf32>
    %c0_15 = arith.constant 0 : index
    %c0_16 = arith.constant 0 : index
    %c0_17 = arith.constant 0 : index
    %13 = vector.load %arg13[%c0_15, %c0_16, %c0_17] : memref<1x1x128xf32, #tpu.memory_space<vmem>>, vector<1x1x128xf32>
    %14 = vector.shape_cast %13 : vector<1x1x128xf32> to vector<1x128xf32>
    %cst = arith.constant dense<0.000000e+00> : vector<128xf32>
    %15 = vector.multi_reduction <add>, %4, %cst [1] : vector<128x128xf32> to vector<128xf32>
    %16 = vector.shape_cast %15 : vector<128xf32> to vector<128x1xf32>
    %cst_18 = arith.constant 1.280000e+02 : f32
    %17 = vector.broadcast %cst_18 : f32 to vector<128x1xf32>
    %18 = arith.divf %16, %17 : vector<128x1xf32>
    %19 = arith.mulf %4, %4 : vector<128x128xf32>
    %cst_19 = arith.constant dense<0.000000e+00> : vector<128xf32>
    %20 = vector.multi_reduction <add>, %19, %cst_19 [1] : vector<128x128xf32> to vector<128xf32>
    %21 = vector.shape_cast %20 : vector<128xf32> to vector<128x1xf32>
    %cst_20 = arith.constant 1.280000e+02 : f32
    %22 = vector.broadcast %cst_20 : f32 to vector<128x1xf32>
    %23 = arith.divf %21, %22 : vector<128x1xf32>
    %24 = arith.mulf %18, %18 : vector<128x1xf32>
    %25 = arith.subf %23, %24 : vector<128x1xf32>
    %26 = vector.broadcast %18 : vector<128x1xf32> to vector<128x128xf32>
    %27 = arith.subf %4, %26 : vector<128x128xf32>
    %cst_21 = arith.constant 9.99999974E-6 : f32
    %28 = vector.broadcast %cst_21 : f32 to vector<128x1xf32>
    %29 = arith.addf %25, %28 : vector<128x1xf32>
    %30 = math.rsqrt %29 : vector<128x1xf32>
    %31 = vector.broadcast %30 : vector<128x1xf32> to vector<128x128xf32>
    %32 = arith.mulf %27, %31 : vector<128x128xf32>
    %33 = vector.broadcast %6 : vector<1x128xf32> to vector<128x128xf32>
    %34 = arith.mulf %32, %33 : vector<128x128xf32>
    %35 = vector.broadcast %8 : vector<1x128xf32> to vector<128x128xf32>
    %36 = arith.addf %34, %35 : vector<128x128xf32>
    %c0_22 = arith.constant 0 : index
    %c0_23 = arith.constant 0 : index
    %37 = vector.load %arg3[%c0_22, %c0_23] : memref<128x256xf32, #tpu.memory_space<vmem>>, vector<128x256xf32>
    %cst_24 = arith.constant dense<0.000000e+00> : vector<128x256xf32>
    %38 = tpu.matmul %36, %37, %cst_24 {dimension_numbers = #tpu.dot_dimension_numbers<[1], [0], [0], [1], [0, 0, 1, 1], [], []>} : vector<128x128xf32>, vector<128x256xf32>, vector<128x256xf32> -> vector<128x256xf32>
    %39 = vector.shape_cast %38 : vector<128x256xf32> to vector<8x16x256xf32>
    %40 = vector.extract_strided_slice %39 {offsets = [0, 0, 0], sizes = [8, 16, 128], strides = [1, 1, 1]} : vector<8x16x256xf32> to vector<8x16x128xf32>
    %41 = vector.extract_strided_slice %39 {offsets = [0, 0, 128], sizes = [8, 16, 128], strides = [1, 1, 1]} : vector<8x16x256xf32> to vector<8x16x128xf32>
    %c0_25 = arith.constant 0 : index
    %c0_26 = arith.constant 0 : index
    %42 = vector.load %arg4[%c0_25, %c0_26] : memref<16x16xf32, #tpu.memory_space<vmem>>, vector<16x16xf32>
    %43 = vector.shape_cast %42 : vector<16x16xf32> to vector<1x16x16xf32>
    %44 = vector.broadcast %43 : vector<1x16x16xf32> to vector<8x16x16xf32>
    %c0_27 = arith.constant 0 : index
    %c0_28 = arith.constant 0 : index
    %45 = vector.load %arg5[%c0_27, %c0_28] : memref<16x16xf32, #tpu.memory_space<vmem>>, vector<16x16xf32>
    %46 = vector.shape_cast %45 : vector<16x16xf32> to vector<1x16x16xf32>
    %47 = vector.broadcast %46 : vector<1x16x16xf32> to vector<8x16x16xf32>
    "tpu.trace_start"() <{level = 10 : i32, message = "bkt,btd->bkd"}> : () -> ()
    %cst_29 = arith.constant dense<0.000000e+00> : vector<8x16x128xf32>
    %48 = tpu.matmul %44, %40, %cst_29 {dimension_numbers = #tpu.dot_dimension_numbers<[2], [1], [1], [2], [0, 0, 0, 1, 1, 2], [0], [0]>} : vector<8x16x16xf32>, vector<8x16x128xf32>, vector<8x16x128xf32> -> vector<8x16x128xf32>
    %cst_30 = arith.constant dense<0.000000e+00> : vector<8x16x128xf32>
    %49 = tpu.matmul %47, %41, %cst_30 {dimension_numbers = #tpu.dot_dimension_numbers<[2], [1], [1], [2], [0, 0, 0, 1, 1, 2], [0], [0]>} : vector<8x16x16xf32>, vector<8x16x128xf32>, vector<8x16x128xf32> -> vector<8x16x128xf32>
    "tpu.trace_stop"() : () -> ()
    %50 = arith.subf %48, %49 : vector<8x16x128xf32>
    %51 = vector.shape_cast %50 : vector<8x16x128xf32> to vector<128x128xf32>
    %52 = arith.addf %4, %51 : vector<128x128xf32>
    %cst_31 = arith.constant dense<0.000000e+00> : vector<128xf32>
    %53 = vector.multi_reduction <add>, %52, %cst_31 [1] : vector<128x128xf32> to vector<128xf32>
    %54 = vector.shape_cast %53 : vector<128xf32> to vector<128x1xf32>
    %cst_32 = arith.constant 1.280000e+02 : f32
    %55 = vector.broadcast %cst_32 : f32 to vector<128x1xf32>
    %56 = arith.divf %54, %55 : vector<128x1xf32>
    %57 = arith.mulf %52, %52 : vector<128x128xf32>
    %cst_33 = arith.constant dense<0.000000e+00> : vector<128xf32>
    %58 = vector.multi_reduction <add>, %57, %cst_33 [1] : vector<128x128xf32> to vector<128xf32>
    %59 = vector.shape_cast %58 : vector<128xf32> to vector<128x1xf32>
    %cst_34 = arith.constant 1.280000e+02 : f32
    %60 = vector.broadcast %cst_34 : f32 to vector<128x1xf32>
    %61 = arith.divf %59, %60 : vector<128x1xf32>
    %62 = arith.mulf %56, %56 : vector<128x1xf32>
    %63 = arith.subf %61, %62 : vector<128x1xf32>
    %64 = vector.broadcast %56 : vector<128x1xf32> to vector<128x128xf32>
    %65 = arith.subf %52, %64 : vector<128x128xf32>
    %cst_35 = arith.constant 9.99999974E-6 : f32
    %66 = vector.broadcast %cst_35 : f32 to vector<128x1xf32>
    %67 = arith.addf %63, %66 : vector<128x1xf32>
    %68 = math.rsqrt %67 : vector<128x1xf32>
    %69 = vector.broadcast %68 : vector<128x1xf32> to vector<128x128xf32>
    %70 = arith.mulf %65, %69 : vector<128x128xf32>
    %71 = vector.broadcast %10 : vector<1x128xf32> to vector<128x128xf32>
    %72 = arith.mulf %70, %71 : vector<128x128xf32>
    %73 = vector.broadcast %12 : vector<1x128xf32> to vector<128x128xf32>
    %74 = arith.addf %72, %73 : vector<128x128xf32>
    %75 = arith.truncf %74 : vector<128x128xf32> to vector<128x128xbf16>
    %c0_36 = arith.constant 0 : index
    %c0_37 = arith.constant 0 : index
    %c0_38 = arith.constant 0 : index
    %76 = vector.load %arg10[%c0_36, %c0_37, %c0_38] : memref<1x128x256xbf16, #tpu.memory_space<vmem>>, vector<1x128x256xbf16>
    %77 = vector.shape_cast %76 : vector<1x128x256xbf16> to vector<128x256xbf16>
    %cst_39 = arith.constant dense<0.000000e+00> : vector<128x256xf32>
    %78 = tpu.matmul %75, %77, %cst_39 {dimension_numbers = #tpu.dot_dimension_numbers<[1], [0], [0], [1], [0, 0, 1, 1], [], []>} : vector<128x128xbf16>, vector<128x256xbf16>, vector<128x256xf32> -> vector<128x256xf32>
    %c0_40 = arith.constant 0 : index
    %c0_41 = arith.constant 0 : index
    %c0_42 = arith.constant 0 : index
    %79 = vector.load %arg11[%c0_40, %c0_41, %c0_42] : memref<1x1x256xf32, #tpu.memory_space<vmem>>, vector<1x1x256xf32>
    %80 = vector.shape_cast %79 : vector<1x1x256xf32> to vector<1x256xf32>
    %81 = vector.broadcast %80 : vector<1x256xf32> to vector<128x256xf32>
    %82 = arith.addf %78, %81 : vector<128x256xf32>
    %cst_43 = arith.constant 5.000000e-01 : f32
    %83 = vector.broadcast %cst_43 : f32 to vector<128x256xf32>
    %84 = arith.mulf %83, %82 : vector<128x256xf32>
    %cst_44 = arith.constant 0.707106769 : f32
    %85 = vector.broadcast %cst_44 : f32 to vector<128x256xf32>
    %86 = arith.mulf %82, %85 : vector<128x256xf32>
    %87 = math.erf %86 : vector<128x256xf32>
    %cst_45 = arith.constant 1.000000e+00 : f32
    %88 = vector.broadcast %cst_45 : f32 to vector<128x256xf32>
    %89 = arith.addf %88, %87 : vector<128x256xf32>
    %90 = arith.mulf %84, %89 : vector<128x256xf32>
    %91 = arith.truncf %90 : vector<128x256xf32> to vector<128x256xbf16>
    %c0_46 = arith.constant 0 : index
    %c0_47 = arith.constant 0 : index
    %c0_48 = arith.constant 0 : index
    %92 = vector.load %arg12[%c0_46, %c0_47, %c0_48] : memref<1x256x128xbf16, #tpu.memory_space<vmem>>, vector<1x256x128xbf16>
    %93 = vector.shape_cast %92 : vector<1x256x128xbf16> to vector<256x128xbf16>
    %cst_49 = arith.constant dense<0.000000e+00> : vector<128x128xf32>
    %94 = tpu.matmul %91, %93, %cst_49 {dimension_numbers = #tpu.dot_dimension_numbers<[1], [0], [0], [1], [0, 0, 1, 1], [], []>} : vector<128x256xbf16>, vector<256x128xbf16>, vector<128x128xf32> -> vector<128x128xf32>
    %95 = vector.broadcast %14 : vector<1x128xf32> to vector<128x128xf32>
    %96 = arith.addf %94, %95 : vector<128x128xf32>
    %97 = arith.addf %52, %96 : vector<128x128xf32>
    %98 = vector.shape_cast %97 : vector<128x128xf32> to vector<8x16x128xf32>
    %c0_50 = arith.constant 0 : index
    %c0_51 = arith.constant 0 : index
    %c0_52 = arith.constant 0 : index
    %99 = vector.load %arg14[%c0_50, %c0_51, %c0_52] : memref<8x16x128xf32, #tpu.memory_space<vmem>>, vector<8x16x128xf32>
    tpu.vector_store %arg14[%c0_50, %c0_51, %c0_52], %98 {strides = array<i32>} : memref<8x16x128xf32, #tpu.memory_space<vmem>>, vector<8x16x128xf32>,
    return
  }
  func.func @transform_0(%arg0: i32, %arg1: i32) -> (i32, i32, i32) {
    %c0_i32 = arith.constant 0 : i32
    %c0_i32_0 = arith.constant 0 : i32
    %c0_i32_1 = arith.constant 0 : i32
    return %arg0, %c0_i32, %c0_i32_0 : i32, i32, i32
  }
  func.func @transform_1(%arg0: i32, %arg1: i32) -> (i32, i32) {
    %c0_i32 = arith.constant 0 : i32
    %c0_i32_0 = arith.constant 0 : i32
    %c0_i32_1 = arith.constant 0 : i32
    return %c0_i32, %c0_i32_0 : i32, i32
  }
  func.func @transform_2(%arg0: i32, %arg1: i32) -> (i32, i32) {
    %c0_i32 = arith.constant 0 : i32
    %c0_i32_0 = arith.constant 0 : i32
    %c0_i32_1 = arith.constant 0 : i32
    return %c0_i32, %c0_i32_0 : i32, i32
  }
  func.func @transform_3(%arg0: i32, %arg1: i32) -> (i32, i32) {
    %c0_i32 = arith.constant 0 : i32
    %c0_i32_0 = arith.constant 0 : i32
    %c0_i32_1 = arith.constant 0 : i32
    return %c0_i32, %c0_i32_0 : i32, i32
  }
  func.func @transform_4(%arg0: i32, %arg1: i32) -> (i32, i32, i32) {
    %c0_i32 = arith.constant 0 : i32
    %c0_i32_0 = arith.constant 0 : i32
    %c0_i32_1 = arith.constant 0 : i32
    return %arg1, %c0_i32, %c0_i32_0 : i32, i32, i32
  }
  func.func @transform_5(%arg0: i32, %arg1: i32) -> (i32, i32, i32) {
    %c0_i32 = arith.constant 0 : i32
    %c0_i32_0 = arith.constant 0 : i32
    %c0_i32_1 = arith.constant 0 : i32
    return %arg1, %c0_i32, %c0_i32_0 : i32, i32, i32
  }
  func.func @transform_6(%arg0: i32, %arg1: i32) -> (i32, i32, i32) {
    %c0_i32 = arith.constant 0 : i32
    %c0_i32_0 = arith.constant 0 : i32
    %c0_i32_1 = arith.constant 0 : i32
    return %arg1, %c0_i32, %c0_i32_0 : i32, i32, i32
  }
  func.func @transform_7(%arg0: i32, %arg1: i32) -> (i32, i32, i32) {
    %c0_i32 = arith.constant 0 : i32
    %c0_i32_0 = arith.constant 0 : i32
    %c0_i32_1 = arith.constant 0 : i32
    return %arg1, %c0_i32, %c0_i32_0 : i32, i32, i32
  }
  func.func @transform_8(%arg0: i32, %arg1: i32) -> (i32, i32, i32) {
    %c0_i32 = arith.constant 0 : i32
    %c0_i32_0 = arith.constant 0 : i32
    %c0_i32_1 = arith.constant 0 : i32
    return %arg1, %c0_i32, %c0_i32_0 : i32, i32, i32
  }
  func.func @transform_9(%arg0: i32, %arg1: i32) -> (i32, i32, i32) {
    %c0_i32 = arith.constant 0 : i32
    %c0_i32_0 = arith.constant 0 : i32
    %c0_i32_1 = arith.constant 0 : i32
    return %arg1, %c0_i32, %c0_i32_0 : i32, i32, i32
  }
  func.func @transform_10(%arg0: i32, %arg1: i32) -> (i32, i32, i32) {
    %c0_i32 = arith.constant 0 : i32
    %c0_i32_0 = arith.constant 0 : i32
    %c0_i32_1 = arith.constant 0 : i32
    return %arg1, %c0_i32, %c0_i32_0 : i32, i32, i32
  }
  func.func @transform_11(%arg0: i32, %arg1: i32) -> (i32, i32, i32) {
    %c0_i32 = arith.constant 0 : i32
    %c0_i32_0 = arith.constant 0 : i32
    %c0_i32_1 = arith.constant 0 : i32
    return %arg1, %c0_i32, %c0_i32_0 : i32, i32, i32
  }
  func.func @transform_12(%arg0: i32, %arg1: i32) -> (i32, i32, i32) {
    %c0_i32 = arith.constant 0 : i32
    %c0_i32_0 = arith.constant 0 : i32
    %c0_i32_1 = arith.constant 0 : i32
    return %arg0, %c0_i32, %c0_i32_0 : i32, i32, i32
  }
}

</mosaic_0001>

<llo_original>
// kernel: tpu_custom_call.1
$region0: #{tpu_custom_call.1}
  #allocation0 [shape = 'u32[]', space=smem, size = 0x4, offset = 0x4, fixed_abs, tag = 'smem constant byte address 0x4 - core index']
  #allocation1 [shape = 'u32[144,128]{1,0:T(1,128)}', space=vmem, size = 0x12000, scoped, tag = 'internal scratch']
  %s0 = inlined_call_operand.hbm [shape: f32[16,16,128], index: 0, kind: input, shape index: {}]
  %s1 = inlined_call_operand.hbm [shape: f32[128,256], index: 1, kind: input, shape index: {}]
  %s2 = inlined_call_operand.hbm [shape: f32[16,16], index: 2, kind: input, shape index: {}]
  %s3 = inlined_call_operand.hbm [shape: f32[16,16], index: 3, kind: input, shape index: {}]
  %s4 = inlined_call_operand.vmem [shape: f32[2,1,128], index: 4, kind: input, shape index: {}]
  %s5 = inlined_call_operand.vmem [shape: f32[2,1,128], index: 5, kind: input, shape index: {}]
  %s6 = inlined_call_operand.vmem [shape: f32[2,1,128], index: 6, kind: input, shape index: {}]
  %s7 = inlined_call_operand.vmem [shape: f32[2,1,128], index: 7, kind: input, shape index: {}]
  %s8 = inlined_call_operand.hbm [shape: bf16[2,128,256], index: 8, kind: input, shape index: {}]
  %s9 = inlined_call_operand.vmem [shape: f32[2,1,256], index: 9, kind: input, shape index: {}]
  %s10 = inlined_call_operand.hbm [shape: bf16[2,256,128], index: 10, kind: input, shape index: {}]
  %s11 = inlined_call_operand.vmem [shape: f32[2,1,128], index: 11, kind: input, shape index: {}]
  %s12 = inlined_call_operand.hbm [shape: f32[16,16,128], index: 12, kind: output, shape index: {}]
  %s13 = sld [smem:[#allocation0]]
  $region109: #{tpu_custom_call.1} parent=0
    _
  %s15 = ssub.s32 1, %s13
  %s16 = scalar_select 0, %s15, %s13
  $region1: #{tpu_custom_call.1} parent=0
    #allocation2 [shape = 'u8[65536]{0}', space=vmem, size = 0x10000, scoped, tag = 'input window, operand 0, single buffered']
    #allocation3 [shape = 's32[2]{0}', space=sflag, size = 0x8, scoped, tag = 'scoped memory for tpu_custom_call.1']
    #allocation4 [shape = 's32[2]{0}', space=sflag, size = 0x8, scoped, tag = 'scoped memory for tpu_custom_call.1']
    #allocation5 [shape = 'u8[131072]{0}', space=vmem, size = 0x20000, scoped, tag = 'input window, operand 1, single buffered']
    #allocation6 [shape = 's32[1]{0}', space=sflag, size = 0x4, scoped, tag = 'scoped memory for tpu_custom_call.1']
    #allocation7 [shape = 'u8[8192]{0}', space=vmem, size = 0x2000, scoped, tag = 'input window, operand 2, single buffered']
    #allocation8 [shape = 'u8[8192]{0}', space=vmem, size = 0x2000, scoped, tag = 'input window, operand 3, single buffered']
    #allocation9 [shape = 's32[1]{0}', space=sflag, size = 0x4, scoped, tag = 'scoped memory for tpu_custom_call.1']
    #allocation10 [shape = 'u8[131072]{0}', space=vmem, size = 0x20000, scoped, tag = 'input window, operand 8']
    #allocation11 [shape = 'u8[131072]{0}', space=vmem, size = 0x20000, scoped, tag = 'input window, operand 10']
    #allocation12 [shape = 'u8[131072]{0}', space=vmem, size = 0x20000, scoped, tag = 'output window, operand 0']
    %17 = vsyncpa [#allocation3], 0
    %18 = vsyncpa [#allocation6], 0
    %19 = vsyncpa [#allocation9], 0
    %20 = vsyncpa [#allocation4], 0
    %s21 = scalar_lea.sflag [#allocation4], 1
    %22 = vsyncpa %s21, 0
    loop: start=0, step=1, limit=6
    $region2: #{tpu_custom_call.1} parent=1 // loop_pre_header
      _
    $region3: #{tpu_custom_call.1} parent=1 // loop_header
      %s24 = sphi 0, %s28
      %p25 = scmp.ge.s32.totalorder %s24, 6
      %s31 = sphi 0, %s43
      %s32 = sphi 0, %s39
      %s33 = sphi 0, %s31
      %s34 = sphi 0, %s32
      %s35 = sphi 0, %s33
      %s36 = sphi 0, %s34
      %s46 = sphi 0, %s48
      %s49 = sphi 0, %s46
      %s50 = sphi 0, %s49
      %s66 = sphi 0, %s50
      %s70 = sphi 0, %s70
      %s72 = sphi 0, %s70
      %s73 = sphi 0, %s72
      %s87 = sphi 0, %s73
      %s91 = sphi 0, %s91
      %s93 = sphi 0, %s91
      %s94 = sphi 0, %s93
      %s108 = sphi 0, %s94
      %s112 = sphi 0, %s112
      %s114 = sphi 0, %s112
      %s115 = sphi 0, %s114
      %s129 = sphi 0, %s115
      %s135 = sphi 0, %s137
      %s138 = sphi 0, %s135
      %s139 = sphi 0, %s138
      %s155 = sphi 0, %s139
      %s161 = sphi 0, %s163
      %s164 = sphi 0, %s161
      %s165 = sphi 0, %s164
      %s181 = sphi 0, %s165
      %s187 = sphi 0, %s189
      %s190 = sphi 0, %s187
      %s191 = sphi 0, %s190
      %s207 = sphi 0, %s191
      %s213 = sphi 0, %s215
      %s216 = sphi 0, %s213
      %s217 = sphi 0, %s216
      %s233 = sphi 0, %s217
      %s239 = sphi 0, %s241
      %s242 = sphi 0, %s239
      %s243 = sphi 0, %s242
      %s259 = sphi 0, %s243
      %s265 = sphi 0, %s267
      %s268 = sphi 0, %s265
      %s269 = sphi 0, %s268
      %s285 = sphi 0, %s269
      %s291 = sphi 0, %s293
      %s294 = sphi 0, %s291
      %s295 = sphi 0, %s294
      %s311 = sphi 0, %s295
      %s317 = sphi 0, %s319
      %s320 = sphi 0, %s317
      %s321 = sphi 0, %s320
      %s337 = sphi 0, %s321
      %s343 = sphi 0, %s345
      %s346 = sphi 0, %s343
      %s347 = sphi 0, %s346
      %s363 = sphi 0, %s347
    $region4: #{tpu_custom_call.1} parent=1 // loop_header_branch
      %27 = sbr.rel (%p25) target = $region8
    $region5: #{tpu_custom_call.1} parent=1 // loop_body
      %s29 = ssub.s32 %s24, 1
      %s30 = ssub.s32 %s24, 2
      %s37 = sadd.s32 1, %s32
      %p38 = scmp.ge.s32.totalorder %s37, 2
      %s39 = scalar_select %p38, 0, %s37
      %s40 = sadd.s32 1, %s31
      %s41 = scalar_select %p38, %s40, %s31
      %p42 = scmp.ge.s32.totalorder %s41, 2
      %s43 = scalar_select %p42, 0, %s41
      %s44 = ssub.s32 %s31, %s43
      %p45 = scmp.eq.s32.totalorder %s44, 0
      %s47 = sadd.s32 %s46, 1
      %s48 = scalar_select %p45, %s46, %s47
      %p51 = pneg %p45
      %p52 = scmp.eq.s32.totalorder %s24, 3
      %p53 = por %p51, %p52
      %p54 = scmp.ne.s32.totalorder %s46, %s49
      %p55 = scmp.eq.s32.totalorder %s24, 0
      %p56 = por %p54, %p55
      %p57 = scmp.ne.s32.totalorder %s46, %s49
      %p58 = scmp.eq.s32.totalorder %s29, 3
      %p59 = por %p57, %p58
      %p60 = scmp.ne.s32.totalorder %s49, %s50
      %p61 = scmp.eq.s32.totalorder %s29, 0
      %p62 = por %p60, %p61
      %p63 = scmp.ne.s32.totalorder %s49, %s50
      %p64 = scmp.eq.s32.totalorder %s30, 3
      %p65 = por %p63, %p64
      %p67 = scmp.ne.s32.totalorder %s50, %s66
      %p68 = scmp.eq.s32.totalorder %s30, 0
      %p69 = por %p67, %p68
      %s71 = sadd.s32 %s70, 1
      %p74 = scmp.eq.s32.totalorder %s24, 3
      %p75 = scmp.ne.s32.totalorder %s70, %s72
      %p76 = scmp.eq.s32.totalorder %s24, 0
      %p77 = por %p75, %p76
      %p78 = scmp.ne.s32.totalorder %s70, %s72
      %p79 = scmp.eq.s32.totalorder %s29, 3
      %p80 = por %p78, %p79
      %p81 = scmp.ne.s32.totalorder %s72, %s73
      %p82 = scmp.eq.s32.totalorder %s29, 0
      %p83 = por %p81, %p82
      %p84 = scmp.ne.s32.totalorder %s72, %s73
      %p85 = scmp.eq.s32.totalorder %s30, 3
      %p86 = por %p84, %p85
      %p88 = scmp.ne.s32.totalorder %s73, %s87
      %p89 = scmp.eq.s32.totalorder %s30, 0
      %p90 = por %p88, %p89
      %s92 = sadd.s32 %s91, 1
      %p95 = scmp.eq.s32.totalorder %s24, 3
      %p96 = scmp.ne.s32.totalorder %s91, %s93
      %p97 = scmp.eq.s32.totalorder %s24, 0
      %p98 = por %p96, %p97
      %p99 = scmp.ne.s32.totalorder %s91, %s93
      %p100 = scmp.eq.s32.totalorder %s29, 3
      %p101 = por %p99, %p100
      %p102 = scmp.ne.s32.totalorder %s93, %s94
      %p103 = scmp.eq.s32.totalorder %s29, 0
      %p104 = por %p102, %p103
      %p105 = scmp.ne.s32.totalorder %s93, %s94
      %p106 = scmp.eq.s32.totalorder %s30, 3
      %p107 = por %p105, %p106
      %p109 = scmp.ne.s32.totalorder %s94, %s108
      %p110 = scmp.eq.s32.totalorder %s30, 0
      %p111 = por %p109, %p110
      %s113 = sadd.s32 %s112, 1
      %p116 = scmp.eq.s32.totalorder %s24, 3
      %p117 = scmp.ne.s32.totalorder %s112, %s114
      %p118 = scmp.eq.s32.totalorder %s24, 0
      %p119 = por %p117, %p118
      %p120 = scmp.ne.s32.totalorder %s112, %s114
      %p121 = scmp.eq.s32.totalorder %s29, 3
      %p122 = por %p120, %p121
      %p123 = scmp.ne.s32.totalorder %s114, %s115
      %p124 = scmp.eq.s32.totalorder %s29, 0
      %p125 = por %p123, %p124
      %p126 = scmp.ne.s32.totalorder %s114, %s115
      %p127 = scmp.eq.s32.totalorder %s30, 3
      %p128 = por %p126, %p127
      %p130 = scmp.ne.s32.totalorder %s115, %s129
      %p131 = scmp.eq.s32.totalorder %s30, 0
      %p132 = por %p130, %p131
      %s133 = ssub.s32 %s32, %s39
      %p134 = scmp.eq.s32.totalorder %s133, 0
      %s136 = sadd.s32 %s135, 1
      %s137 = scalar_select %p134, %s135, %s136
      %p140 = pneg %p134
      %p141 = scmp.eq.s32.totalorder %s24, 3
      %p142 = por %p140, %p141
      %p143 = scmp.ne.s32.totalorder %s135, %s138
      %p144 = scmp.eq.s32.totalorder %s24, 0
      %p145 = por %p143, %p144
      %p146 = scmp.ne.s32.totalorder %s135, %s138
      %p147 = scmp.eq.s32.totalorder %s29, 3
      %p148 = por %p146, %p147
      %p149 = scmp.ne.s32.totalorder %s138, %s139
      %p150 = scmp.eq.s32.totalorder %s29, 0
      %p151 = por %p149, %p150
      %p152 = scmp.ne.s32.totalorder %s138, %s139
      %p153 = scmp.eq.s32.totalorder %s30, 3
      %p154 = por %p152, %p153
      %p156 = scmp.ne.s32.totalorder %s139, %s155
      %p157 = scmp.eq.s32.totalorder %s30, 0
      %p158 = por %p156, %p157
      %s159 = ssub.s32 %s32, %s39
      %p160 = scmp.eq.s32.totalorder %s159, 0
      %s162 = sadd.s32 %s161, 1
      %s163 = scalar_select %p160, %s161, %s162
      %p166 = pneg %p160
      %p167 = scmp.eq.s32.totalorder %s24, 3
      %p168 = por %p166, %p167
      %p169 = scmp.ne.s32.totalorder %s161, %s164
      %p170 = scmp.eq.s32.totalorder %s24, 0
      %p171 = por %p169, %p170
      %p172 = scmp.ne.s32.totalorder %s161, %s164
      %p173 = scmp.eq.s32.totalorder %s29, 3
      %p174 = por %p172, %p173
      %p175 = scmp.ne.s32.totalorder %s164, %s165
      %p176 = scmp.eq.s32.totalorder %s29, 0
      %p177 = por %p175, %p176
      %p178 = scmp.ne.s32.totalorder %s164, %s165
      %p179 = scmp.eq.s32.totalorder %s30, 3
      %p180 = por %p178, %p179
      %p182 = scmp.ne.s32.totalorder %s165, %s181
      %p183 = scmp.eq.s32.totalorder %s30, 0
      %p184 = por %p182, %p183
      %s185 = ssub.s32 %s32, %s39
      %p186 = scmp.eq.s32.totalorder %s185, 0
      %s188 = sadd.s32 %s187, 1
      %s189 = scalar_select %p186, %s187, %s188
      %p192 = pneg %p186
      %p193 = scmp.eq.s32.totalorder %s24, 3
      %p194 = por %p192, %p193
      %p195 = scmp.ne.s32.totalorder %s187, %s190
      %p196 = scmp.eq.s32.totalorder %s24, 0
      %p197 = por %p195, %p196
      %p198 = scmp.ne.s32.totalorder %s187, %s190
      %p199 = scmp.eq.s32.totalorder %s29, 3
      %p200 = por %p198, %p199
      %p201 = scmp.ne.s32.totalorder %s190, %s191
      %p202 = scmp.eq.s32.totalorder %s29, 0
      %p203 = por %p201, %p202
      %p204 = scmp.ne.s32.totalorder %s190, %s191
      %p205 = scmp.eq.s32.totalorder %s30, 3
      %p206 = por %p204, %p205
      %p208 = scmp.ne.s32.totalorder %s191, %s207
      %p209 = scmp.eq.s32.totalorder %s30, 0
      %p210 = por %p208, %p209
      %s211 = ssub.s32 %s32, %s39
      %p212 = scmp.eq.s32.totalorder %s211, 0
      %s214 = sadd.s32 %s213, 1
      %s215 = scalar_select %p212, %s213, %s214
      %p218 = pneg %p212
      %p219 = scmp.eq.s32.totalorder %s24, 3
      %p220 = por %p218, %p219
      %p221 = scmp.ne.s32.totalorder %s213, %s216
      %p222 = scmp.eq.s32.totalorder %s24, 0
      %p223 = por %p221, %p222
      %p224 = scmp.ne.s32.totalorder %s213, %s216
      %p225 = scmp.eq.s32.totalorder %s29, 3
      %p226 = por %p224, %p225
      %p227 = scmp.ne.s32.totalorder %s216, %s217
      %p228 = scmp.eq.s32.totalorder %s29, 0
      %p229 = por %p227, %p228
      %p230 = scmp.ne.s32.totalorder %s216, %s217
      %p231 = scmp.eq.s32.totalorder %s30, 3
      %p232 = por %p230, %p231
      %p234 = scmp.ne.s32.totalorder %s217, %s233
      %p235 = scmp.eq.s32.totalorder %s30, 0
      %p236 = por %p234, %p235
      %s237 = ssub.s32 %s32, %s39
      %p238 = scmp.eq.s32.totalorder %s237, 0
      %s240 = sadd.s32 %s239, 1
      %s241 = scalar_select %p238, %s239, %s240
      %p244 = pneg %p238
      %p245 = scmp.eq.s32.totalorder %s24, 3
      %p246 = por %p244, %p245
      %p247 = scmp.ne.s32.totalorder %s239, %s242
      %p248 = scmp.eq.s32.totalorder %s24, 0
      %p249 = por %p247, %p248
      %p250 = scmp.ne.s32.totalorder %s239, %s242
      %p251 = scmp.eq.s32.totalorder %s29, 3
      %p252 = por %p250, %p251
      %p253 = scmp.ne.s32.totalorder %s242, %s243
      %p254 = scmp.eq.s32.totalorder %s29, 0
      %p255 = por %p253, %p254
      %p256 = scmp.ne.s32.totalorder %s242, %s243
      %p257 = scmp.eq.s32.totalorder %s30, 3
      %p258 = por %p256, %p257
      %p260 = scmp.ne.s32.totalorder %s243, %s259
      %p261 = scmp.eq.s32.totalorder %s30, 0
      %p262 = por %p260, %p261
      %s263 = ssub.s32 %s32, %s39
      %p264 = scmp.eq.s32.totalorder %s263, 0
      %s266 = sadd.s32 %s265, 1
      %s267 = scalar_select %p264, %s265, %s266
      %p270 = pneg %p264
      %p271 = scmp.eq.s32.totalorder %s24, 3
      %p272 = por %p270, %p271
      %p273 = scmp.ne.s32.totalorder %s265, %s268
      %p274 = scmp.eq.s32.totalorder %s24, 0
      %p275 = por %p273, %p274
      %p276 = scmp.ne.s32.totalorder %s265, %s268
      %p277 = scmp.eq.s32.totalorder %s29, 3
      %p278 = por %p276, %p277
      %p279 = scmp.ne.s32.totalorder %s268, %s269
      %p280 = scmp.eq.s32.totalorder %s29, 0
      %p281 = por %p279, %p280
      %p282 = scmp.ne.s32.totalorder %s268, %s269
      %p283 = scmp.eq.s32.totalorder %s30, 3
      %p284 = por %p282, %p283
      %p286 = scmp.ne.s32.totalorder %s269, %s285
      %p287 = scmp.eq.s32.totalorder %s30, 0
      %p288 = por %p286, %p287
      %s289 = ssub.s32 %s32, %s39
      %p290 = scmp.eq.s32.totalorder %s289, 0
      %s292 = sadd.s32 %s291, 1
      %s293 = scalar_select %p290, %s291, %s292
      %p296 = pneg %p290
      %p297 = scmp.eq.s32.totalorder %s24, 3
      %p298 = por %p296, %p297
      %p299 = scmp.ne.s32.totalorder %s291, %s294
      %p300 = scmp.eq.s32.totalorder %s24, 0
      %p301 = por %p299, %p300
      %p302 = scmp.ne.s32.totalorder %s291, %s294
      %p303 = scmp.eq.s32.totalorder %s29, 3
      %p304 = por %p302, %p303
      %p305 = scmp.ne.s32.totalorder %s294, %s295
      %p306 = scmp.eq.s32.totalorder %s29, 0
      %p307 = por %p305, %p306
      %p308 = scmp.ne.s32.totalorder %s294, %s295
      %p309 = scmp.eq.s32.totalorder %s30, 3
      %p310 = por %p308, %p309
      %p312 = scmp.ne.s32.totalorder %s295, %s311
      %p313 = scmp.eq.s32.totalorder %s30, 0
      %p314 = por %p312, %p313
      %s315 = ssub.s32 %s32, %s39
      %p316 = scmp.eq.s32.totalorder %s315, 0
      %s318 = sadd.s32 %s317, 1
      %s319 = scalar_select %p316, %s317, %s318
      %p322 = pneg %p316
      %p323 = scmp.eq.s32.totalorder %s24, 3
      %p324 = por %p322, %p323
      %p325 = scmp.ne.s32.totalorder %s317, %s320
      %p326 = scmp.eq.s32.totalorder %s24, 0
      %p327 = por %p325, %p326
      %p328 = scmp.ne.s32.totalorder %s317, %s320
      %p329 = scmp.eq.s32.totalorder %s29, 3
      %p330 = por %p328, %p329
      %p331 = scmp.ne.s32.totalorder %s320, %s321
      %p332 = scmp.eq.s32.totalorder %s29, 0
      %p333 = por %p331, %p332
      %p334 = scmp.ne.s32.totalorder %s320, %s321
      %p335 = scmp.eq.s32.totalorder %s30, 3
      %p336 = por %p334, %p335
      %p338 = scmp.ne.s32.totalorder %s321, %s337
      %p339 = scmp.eq.s32.totalorder %s30, 0
      %p340 = por %p338, %p339
      %s341 = ssub.s32 %s31, %s43
      %p342 = scmp.eq.s32.totalorder %s341, 0
      %s344 = sadd.s32 %s343, 1
      %s345 = scalar_select %p342, %s343, %s344
      %p348 = pneg %p342
      %p349 = scmp.eq.s32.totalorder %s24, 3
      %p350 = por %p348, %p349
      %p351 = scmp.ne.s32.totalorder %s343, %s346
      %p352 = scmp.eq.s32.totalorder %s24, 0
      %p353 = por %p351, %p352
      %p354 = scmp.ne.s32.totalorder %s343, %s346
      %p355 = scmp.eq.s32.totalorder %s29, 3
      %p356 = por %p354, %p355
      %p357 = scmp.ne.s32.totalorder %s346, %s347
      %p358 = scmp.eq.s32.totalorder %s29, 0
      %p359 = por %p357, %p358
      %p360 = scmp.ne.s32.totalorder %s346, %s347
      %p361 = scmp.eq.s32.totalorder %s30, 3
      %p362 = por %p360, %p361
      %p364 = scmp.ne.s32.totalorder %s347, %s363
      %p365 = scmp.eq.s32.totalorder %s30, 0
      %p366 = por %p364, %p365
      %p367 = scmp.le.s32.totalorder 1, %s24
      %p368 = scmp.lt.s32.totalorder %s24, 5
      %p369 = pnand %p367, %p368
      %p370 = pneg %p369
      // Predicated region
      $region9: #{tpu_custom_call.1} parent=5 // pred_check
        _
      $region10: #{tpu_custom_call.1} parent=5 // pred_check_branch
        %372 = sbr.rel (%p369) target = $region12
      $region11: #{tpu_custom_call.1} parent=5 // pred_region
        %s373 = ssub.s32 %s24, 1
        // Predicated region
        $region13: #{tpu_custom_call.1} parent=11 // pred_check
          %p374 = pneg %p62
        $region14: #{tpu_custom_call.1} parent=11 // pred_check_branch
          %376 = sbr.rel (%p374) target = $region16
        $region15: #{tpu_custom_call.1} parent=11 // pred_region
          %s377 = smul.u32 8, %s33
          %s379 = ssub.s32 2048, 2048
          %380 = vsyncadd [#allocation3], %s379
          %s381 = smul.addr %s377, 2
          %s382 = smul.addr %s381, 128
          %s383 = scalar_lea.hbm %s0, %s382
          %s384 = sshll.u32 [#allocation2], 4
          %s385 = int_to_ptr.vmem [resolvable:$true] %s384
          %390 = dma.hbm_to_vmem [thread:$0]  %s383, 2048, %s385, [#allocation3], 128, 128, 8
        $region16: #{tpu_custom_call.1} parent=11 // pred_fallthru
          _
        // Predicated region
        $region17: #{tpu_custom_call.1} parent=11 // pred_check
          %p391 = pneg %p83
        $region18: #{tpu_custom_call.1} parent=11 // pred_check_branch
          %393 = sbr.rel (%p391) target = $region20
        $region19: #{tpu_custom_call.1} parent=11 // pred_region
          %s395 = ssub.s32 4096, 4096
          %396 = vsyncadd [#allocation6], %s395
          %s397 = sshll.u32 [#allocation5], 4
          %s398 = int_to_ptr.vmem [resolvable:$true] %s397
          %403 = dma.hbm_to_vmem [thread:$0]  %s1, 4096, %s398, [#allocation6], 256, 256, 16
        $region20: #{tpu_custom_call.1} parent=11 // pred_fallthru
          _
        // Predicated region
        $region21: #{tpu_custom_call.1} parent=11 // pred_check
          %p404 = pneg %p104
        $region22: #{tpu_custom_call.1} parent=11 // pred_check_branch
          %406 = sbr.rel (%p404) target = $region24
        $region23: #{tpu_custom_call.1} parent=11 // pred_region
          %s408 = ssub.s32 256, 256
          %409 = vsyncadd [#allocation6], %s408
          %s410 = sshll.u32 [#allocation7], 4
          %s411 = int_to_ptr.vmem [resolvable:$true] %s410
          %416 = dma.hbm_to_vmem [thread:$0]  %s2, 256, %s411, [#allocation6], 128, 128, 8
        $region24: #{tpu_custom_call.1} parent=11 // pred_fallthru
          _
        // Predicated region
        $region25: #{tpu_custom_call.1} parent=11 // pred_check
          %p417 = pneg %p125
        $region26: #{tpu_custom_call.1} parent=11 // pred_check_branch
          %419 = sbr.rel (%p417) target = $region28
        $region27: #{tpu_custom_call.1} parent=11 // pred_region
          %s421 = ssub.s32 256, 256
          %422 = vsyncadd [#allocation9], %s421
          %s423 = sshll.u32 [#allocation8], 4
          %s424 = int_to_ptr.vmem [resolvable:$true] %s423
          %429 = dma.hbm_to_vmem [thread:$0]  %s3, 256, %s424, [#allocation9], 128, 128, 8
        $region28: #{tpu_custom_call.1} parent=11 // pred_fallthru
          _
      $region12: #{tpu_custom_call.1} parent=5 // pred_fallthru
        _
      %p430 = scmp.lt.s32.totalorder %s24, 4
      // Predicated region
      $region29: #{tpu_custom_call.1} parent=5 // pred_check
        %p431 = pneg %p430
      $region30: #{tpu_custom_call.1} parent=5 // pred_check_branch
        %433 = sbr.rel (%p431) target = $region32
      $region31: #{tpu_custom_call.1} parent=5 // pred_region
        // Predicated region
        $region33: #{tpu_custom_call.1} parent=31 // pred_check
          %p434 = pneg %p145
        $region34: #{tpu_custom_call.1} parent=31 // pred_check_branch
          %436 = sbr.rel (%p434) target = $region36
        $region35: #{tpu_custom_call.1} parent=31 // pred_region
          %p437 = scmp.lt.s32.totalorder %s32, 1
          %s438 = scalar_select %p437, %s32, 1
          %s439 = scalar_lea.vmem %s4, %s438
        $region36: #{tpu_custom_call.1} parent=31 // pred_fallthru
          _
        // Predicated region
        $region37: #{tpu_custom_call.1} parent=31 // pred_check
          %p440 = pneg %p171
        $region38: #{tpu_custom_call.1} parent=31 // pred_check_branch
          %442 = sbr.rel (%p440) target = $region40
        $region39: #{tpu_custom_call.1} parent=31 // pred_region
          %p443 = scmp.lt.s32.totalorder %s32, 1
          %s444 = scalar_select %p443, %s32, 1
          %s445 = scalar_lea.vmem %s5, %s444
        $region40: #{tpu_custom_call.1} parent=31 // pred_fallthru
          _
        // Predicated region
        $region41: #{tpu_custom_call.1} parent=31 // pred_check
          %p446 = pneg %p197
        $region42: #{tpu_custom_call.1} parent=31 // pred_check_branch
          %448 = sbr.rel (%p446) target = $region44
        $region43: #{tpu_custom_call.1} parent=31 // pred_region
          %p449 = scmp.lt.s32.totalorder %s32, 1
          %s450 = scalar_select %p449, %s32, 1
          %s451 = scalar_lea.vmem %s6, %s450
        $region44: #{tpu_custom_call.1} parent=31 // pred_fallthru
          _
        // Predicated region
        $region45: #{tpu_custom_call.1} parent=31 // pred_check
          %p452 = pneg %p223
        $region46: #{tpu_custom_call.1} parent=31 // pred_check_branch
          %454 = sbr.rel (%p452) target = $region48
        $region47: #{tpu_custom_call.1} parent=31 // pred_region
          %p455 = scmp.lt.s32.totalorder %s32, 1
          %s456 = scalar_select %p455, %s32, 1
          %s457 = scalar_lea.vmem %s7, %s456
        $region48: #{tpu_custom_call.1} parent=31 // pred_fallthru
          _
        // Predicated region
        $region49: #{tpu_custom_call.1} parent=31 // pred_check
          %p458 = pneg %p249
        $region50: #{tpu_custom_call.1} parent=31 // pred_check_branch
          %460 = sbr.rel (%p458) target = $region52
        $region51: #{tpu_custom_call.1} parent=31 // pred_region
          %s461 = sand.u32 %s24, 1
          %s462 = scalar_lea.sflag [#allocation3], %s461
          %s463 = sand.u32 %s239, 1
          %s464 = smul.addr %s463, 128
          %s465 = scalar_lea.vmem [#allocation10], %s464
          %s467 = ssub.s32 2048, 2048
          %468 = vsyncadd %s462, %s467
          %s469 = smul.addr %s32, 32
          %s470 = smul.addr %s469, 64
          %s471 = scalar_lea.hbm %s8, %s470
          %s472 = sshll.u32 %s465, 4
          %s473 = int_to_ptr.vmem [resolvable:$true] %s472
          %478 = dma.hbm_to_vmem [thread:$0]  %s471, 2048, %s473, %s462, 128, 128, 8
        $region52: #{tpu_custom_call.1} parent=31 // pred_fallthru
          _
        // Predicated region
        $region53: #{tpu_custom_call.1} parent=31 // pred_check
          %p479 = pneg %p275
        $region54: #{tpu_custom_call.1} parent=31 // pred_check_branch
          %481 = sbr.rel (%p479) target = $region56
        $region55: #{tpu_custom_call.1} parent=31 // pred_region
          %p482 = scmp.lt.s32.totalorder %s32, 1
          %s483 = scalar_select %p482, %s32, 1
          %s484 = smul.addr %s483, 2
          %s485 = scalar_lea.vmem %s9, %s484
        $region56: #{tpu_custom_call.1} parent=31 // pred_fallthru
          _
        // Predicated region
        $region57: #{tpu_custom_call.1} parent=31 // pred_check
          %p486 = pneg %p301
        $region58: #{tpu_custom_call.1} parent=31 // pred_check_branch
          %488 = sbr.rel (%p486) target = $region60
        $region59: #{tpu_custom_call.1} parent=31 // pred_region
          %s489 = sand.u32 %s24, 1
          %s490 = scalar_lea.sflag [#allocation3], %s489
          %s491 = sand.u32 %s291, 1
          %s492 = smul.addr %s491, 128
          %s493 = scalar_lea.vmem [#allocation11], %s492
          %s495 = ssub.s32 2048, 2048
          %496 = vsyncadd %s490, %s495
          %s497 = smul.addr %s32, 32
          %s498 = smul.addr %s497, 64
          %s499 = scalar_lea.hbm %s10, %s498
          %s500 = sshll.u32 %s493, 4
          %s501 = int_to_ptr.vmem [resolvable:$true] %s500
          %506 = dma.hbm_to_vmem [thread:$0]  %s499, 2048, %s501, %s490, 64, 64, 4
        $region60: #{tpu_custom_call.1} parent=31 // pred_fallthru
          _
        // Predicated region
        $region61: #{tpu_custom_call.1} parent=31 // pred_check
          %p507 = pneg %p327
        $region62: #{tpu_custom_call.1} parent=31 // pred_check_branch
          %509 = sbr.rel (%p507) target = $region64
        $region63: #{tpu_custom_call.1} parent=31 // pred_region
          %p510 = scmp.lt.s32.totalorder %s32, 1
          %s511 = scalar_select %p510, %s32, 1
          %s512 = scalar_lea.vmem %s11, %s511
        $region64: #{tpu_custom_call.1} parent=31 // pred_fallthru
          _
      $region32: #{tpu_custom_call.1} parent=5 // pred_fallthru
        _
      %p513 = scmp.le.s32.totalorder 1, %s24
      %p514 = scmp.lt.s32.totalorder %s24, 5
      %p515 = pnand %p513, %p514
      %p516 = pneg %p515
      // Predicated region
      $region65: #{tpu_custom_call.1} parent=5 // pred_check
        _
      $region66: #{tpu_custom_call.1} parent=5 // pred_check_branch
        %518 = sbr.rel (%p515) target = $region68
      $region67: #{tpu_custom_call.1} parent=5 // pred_region
        %s519 = ssub.s32 %s24, 1
        // Predicated region
        $region69: #{tpu_custom_call.1} parent=67 // pred_check
          %p520 = pneg %p62
        $region70: #{tpu_custom_call.1} parent=67 // pred_check_branch
          %522 = sbr.rel (%p520) target = $region72
        $region71: #{tpu_custom_call.1} parent=67 // pred_region
          %523 = dma.done [#allocation3], 2048
        $region72: #{tpu_custom_call.1} parent=67 // pred_fallthru
          _
        // Predicated region
        $region73: #{tpu_custom_call.1} parent=67 // pred_check
          %p524 = pneg %p83
        $region74: #{tpu_custom_call.1} parent=67 // pred_check_branch
          %526 = sbr.rel (%p524) target = $region76
        $region75: #{tpu_custom_call.1} parent=67 // pred_region
          %527 = dma.done [#allocation6], 4096
        $region76: #{tpu_custom_call.1} parent=67 // pred_fallthru
          _
        // Predicated region
        $region77: #{tpu_custom_call.1} parent=67 // pred_check
          %p528 = pneg %p104
        $region78: #{tpu_custom_call.1} parent=67 // pred_check_branch
          %530 = sbr.rel (%p528) target = $region80
        $region79: #{tpu_custom_call.1} parent=67 // pred_region
          %531 = dma.done [#allocation6], 256
        $region80: #{tpu_custom_call.1} parent=67 // pred_fallthru
          _
        // Predicated region
        $region81: #{tpu_custom_call.1} parent=67 // pred_check
          %p532 = pneg %p125
        $region82: #{tpu_custom_call.1} parent=67 // pred_check_branch
          %534 = sbr.rel (%p532) target = $region84
        $region83: #{tpu_custom_call.1} parent=67 // pred_region
          %535 = dma.done [#allocation9], 256
        $region84: #{tpu_custom_call.1} parent=67 // pred_fallthru
          _
        %s536 = sand.u32 %s29, 1
        %s537 = scalar_lea.sflag [#allocation3], %s536
        %s538 = sand.u32 %s242, 1
        %s539 = smul.addr %s538, 128
        %s540 = scalar_lea.vmem [#allocation10], %s539
        // Predicated region
        $region85: #{tpu_custom_call.1} parent=67 // pred_check
          %p541 = pneg %p255
        $region86: #{tpu_custom_call.1} parent=67 // pred_check_branch
          %543 = sbr.rel (%p541) target = $region88
        $region87: #{tpu_custom_call.1} parent=67 // pred_region
          %544 = dma.done %s537, 2048
        $region88: #{tpu_custom_call.1} parent=67 // pred_fallthru
          _
        %s545 = sand.u32 %s29, 1
        %s546 = scalar_lea.sflag [#allocation3], %s545
        %s547 = sand.u32 %s294, 1
        %s548 = smul.addr %s547, 128
        %s549 = scalar_lea.vmem [#allocation11], %s548
        // Predicated region
        $region89: #{tpu_custom_call.1} parent=67 // pred_check
          %p550 = pneg %p307
        $region90: #{tpu_custom_call.1} parent=67 // pred_check_branch
          %552 = sbr.rel (%p550) target = $region92
        $region91: #{tpu_custom_call.1} parent=67 // pred_region
          %553 = dma.done %s546, 2048
        $region92: #{tpu_custom_call.1} parent=67 // pred_fallthru
          _
        %p554 = pneg %p62
        %p555 = pneg %p59
        %p556 = pneg %p83
        %p557 = pneg %p80
        %p558 = pneg %p104
        %p559 = pneg %p101
        %p560 = pneg %p125
        %p561 = pneg %p122
        %p562 = scmp.lt.s32.totalorder %s34, 1
        %s563 = scalar_select %p562, %s34, 1
        %s564 = scalar_lea.vmem %s4, %s563
        %p565 = pneg %p151
        %p566 = pneg %p148
        %p567 = scmp.lt.s32.totalorder %s34, 1
        %s568 = scalar_select %p567, %s34, 1
        %s569 = scalar_lea.vmem %s5, %s568
        %p570 = pneg %p177
        %p571 = pneg %p174
        %p572 = scmp.lt.s32.totalorder %s34, 1
        %s573 = scalar_select %p572, %s34, 1
        %s574 = scalar_lea.vmem %s6, %s573
        %p575 = pneg %p203
        %p576 = pneg %p200
        %p577 = scmp.lt.s32.totalorder %s34, 1
        %s578 = scalar_select %p577, %s34, 1
        %s579 = scalar_lea.vmem %s7, %s578
        %p580 = pneg %p229
        %p581 = pneg %p226
        %s582 = sand.u32 %s29, 1
        %s583 = scalar_lea.sflag [#allocation3], %s582
        %s584 = sand.u32 %s242, 1
        %s585 = smul.addr %s584, 128
        %s586 = scalar_lea.vmem [#allocation10], %s585
        %p587 = pneg %p255
        %p588 = pneg %p252
        %p589 = scmp.lt.s32.totalorder %s34, 1
        %s590 = scalar_select %p589, %s34, 1
        %s591 = smul.addr %s590, 2
        %s592 = scalar_lea.vmem %s9, %s591
        %p593 = pneg %p281
        %p594 = pneg %p278
        %s595 = sand.u32 %s29, 1
        %s596 = scalar_lea.sflag [#allocation3], %s595
        %s597 = sand.u32 %s294, 1
        %s598 = smul.addr %s597, 128
        %s599 = scalar_lea.vmem [#allocation11], %s598
        %p600 = pneg %p307
        %p601 = pneg %p304
        %p602 = scmp.lt.s32.totalorder %s34, 1
        %s603 = scalar_select %p602, %s34, 1
        %s604 = scalar_lea.vmem %s11, %s603
        %p605 = pneg %p333
        %p606 = pneg %p330
        %p607 = pneg %p359
        %p608 = pneg %p356
        %s609 = sand.u32 %s346, 1
        %s610 = scalar_lea.sflag [#allocation4], %s609
        %s611 = sand.u32 %s346, 1
        %s612 = smul.addr %s611, 128
        %s613 = scalar_lea.vmem [#allocation12], %s612
        %s614 = smul.u32 8, %s33
        %p615 = scmp.lt.s32.totalorder %s34, 1
        %s616 = scalar_select %p615, %s34, 1
        %s617 = scalar_lea.vmem %s4, %s616
        %p618 = scmp.lt.s32.totalorder %s34, 1
        %s619 = scalar_select %p618, %s34, 1
        %s620 = scalar_lea.vmem %s5, %s619
        %p621 = scmp.lt.s32.totalorder %s34, 1
        %s622 = scalar_select %p621, %s34, 1
        %s623 = scalar_lea.vmem %s6, %s622
        %p624 = scmp.lt.s32.totalorder %s34, 1
        %s625 = scalar_select %p624, %s34, 1
        %s626 = scalar_lea.vmem %s7, %s625
        %p627 = scmp.lt.s32.totalorder %s34, 1
        %s628 = scalar_select %p627, %s34, 1
        %s629 = smul.addr %s628, 2
        %s630 = scalar_lea.vmem %s9, %s629
        %p631 = scmp.lt.s32.totalorder %s34, 1
        %s632 = scalar_select %p631, %s34, 1
        %s633 = scalar_lea.vmem %s11, %s632
        %s634 = smul.u32 8, %s33
        %p636 = scmp.eq.s32.totalorder %s34, 0
        // Predicated region
        $region93: #{tpu_custom_call.1} parent=67 // pred_check
          %p637 = pneg %p636
        $region94: #{tpu_custom_call.1} parent=67 // pred_check_branch
          %639 = sbr.rel (%p637) target = $region96
        $region95: #{tpu_custom_call.1} parent=67 // pred_region
          %v640 = vld [vmem:[#allocation2] sm:$0xff]
          %v641 = vld [vmem:[#allocation2 + $0x8] sm:$0xff]
          %v642 = vld [vmem:[#allocation2 + $0x10] sm:$0xff]
          %v643 = vld [vmem:[#allocation2 + $0x18] sm:$0xff]
          %v644 = vld [vmem:[#allocation2 + $0x20] sm:$0xff]
          %v645 = vld [vmem:[#allocation2 + $0x28] sm:$0xff]
          %v646 = vld [vmem:[#allocation2 + $0x30] sm:$0xff]
          %v647 = vld [vmem:[#allocation2 + $0x38] sm:$0xff]
          %v648 = vld [vmem:[#allocation2 + $0x40] sm:$0xff]
          %v649 = vld [vmem:[#allocation2 + $0x48] sm:$0xff]
          %v650 = vld [vmem:[#allocation2 + $0x50] sm:$0xff]
          %v651 = vld [vmem:[#allocation2 + $0x58] sm:$0xff]
          %v652 = vld [vmem:[#allocation2 + $0x60] sm:$0xff]
          %v653 = vld [vmem:[#allocation2 + $0x68] sm:$0xff]
          %v654 = vld [vmem:[#allocation2 + $0x70] sm:$0xff]
          %v655 = vld [vmem:[#allocation2 + $0x78] sm:$0xff]
          %656 = vst [vmem:[%s613] sm:$0xff] %v640
          %657 = vst [vmem:[%s613 + $0x8] sm:$0xff] %v641
          %658 = vst [vmem:[%s613 + $0x10] sm:$0xff] %v642
          %659 = vst [vmem:[%s613 + $0x18] sm:$0xff] %v643
          %660 = vst [vmem:[%s613 + $0x20] sm:$0xff] %v644
          %661 = vst [vmem:[%s613 + $0x28] sm:$0xff] %v645
          %662 = vst [vmem:[%s613 + $0x30] sm:$0xff] %v646
          %663 = vst [vmem:[%s613 + $0x38] sm:$0xff] %v647
          %664 = vst [vmem:[%s613 + $0x40] sm:$0xff] %v648
          %665 = vst [vmem:[%s613 + $0x48] sm:$0xff] %v649
          %666 = vst [vmem:[%s613 + $0x50] sm:$0xff] %v650
          %667 = vst [vmem:[%s613 + $0x58] sm:$0xff] %v651
          %668 = vst [vmem:[%s613 + $0x60] sm:$0xff] %v652
          %669 = vst [vmem:[%s613 + $0x68] sm:$0xff] %v653
          %670 = vst [vmem:[%s613 + $0x70] sm:$0xff] %v654
          %671 = vst [vmem:[%s613 + $0x78] sm:$0xff] %v655
        $region96: #{tpu_custom_call.1} parent=67 // pred_fallthru
          _
        %v672 = vld [vmem:[%s613] sm:$0xff]
        %v673 = vld [vmem:[%s613 + $0x8] sm:$0xff]
        %v674 = vld [vmem:[%s613 + $0x10] sm:$0xff]
        %v675 = vld [vmem:[%s613 + $0x18] sm:$0xff]
        %v676 = vld [vmem:[%s613 + $0x20] sm:$0xff]
        %v677 = vld [vmem:[%s613 + $0x28] sm:$0xff]
        %v678 = vld [vmem:[%s613 + $0x30] sm:$0xff]
        %v679 = vld [vmem:[%s613 + $0x38] sm:$0xff]
        %v680 = vld [vmem:[%s613 + $0x40] sm:$0xff]
        %v681 = vld [vmem:[%s613 + $0x48] sm:$0xff]
        %v682 = vld [vmem:[%s613 + $0x50] sm:$0xff]
        %v683 = vld [vmem:[%s613 + $0x58] sm:$0xff]
        %v684 = vld [vmem:[%s613 + $0x60] sm:$0xff]
        %v685 = vld [vmem:[%s613 + $0x68] sm:$0xff]
        %v686 = vld [vmem:[%s613 + $0x70] sm:$0xff]
        %v687 = vld [vmem:[%s613 + $0x78] sm:$0xff]
        %v688 = vld [vmem:[%s617] sm:$0x1]
        %v689 = vld [vmem:[%s620] sm:$0x1]
        %v690 = vld [vmem:[%s623] sm:$0x1]
        %v691 = vld [vmem:[%s626] sm:$0x1]
        %v692 = vld [vmem:[%s633] sm:$0x1]
        %693 = vadd.xlane.f32.xlu0 %v672
        %v694 = vpop.xlane.xlu0 %693
        %695 = vadd.xlane.f32.xlu0 %v673
        %v696 = vpop.xlane.xlu0 %695
        %697 = vadd.xlane.f32.xlu0 %v674
        %v698 = vpop.xlane.xlu0 %697
        %699 = vadd.xlane.f32.xlu0 %v675
        %v700 = vpop.xlane.xlu0 %699
        %701 = vadd.xlane.f32.xlu0 %v676
        %v702 = vpop.xlane.xlu0 %701
        %703 = vadd.xlane.f32.xlu0 %v677
        %v704 = vpop.xlane.xlu0 %703
        %705 = vadd.xlane.f32.xlu0 %v678
        %v706 = vpop.xlane.xlu0 %705
        %707 = vadd.xlane.f32.xlu0 %v679
        %v708 = vpop.xlane.xlu0 %707
        %709 = vadd.xlane.f32.xlu0 %v680
        %v710 = vpop.xlane.xlu0 %709
        %711 = vadd.xlane.f32.xlu0 %v681
        %v712 = vpop.xlane.xlu0 %711
        %713 = vadd.xlane.f32.xlu0 %v682
        %v714 = vpop.xlane.xlu0 %713
        %715 = vadd.xlane.f32.xlu0 %v683
        %v716 = vpop.xlane.xlu0 %715
        %717 = vadd.xlane.f32.xlu0 %v684
        %v718 = vpop.xlane.xlu0 %717
        %719 = vadd.xlane.f32.xlu0 %v685
        %v720 = vpop.xlane.xlu0 %719
        %721 = vadd.xlane.f32.xlu0 %v686
        %v722 = vpop.xlane.xlu0 %721
        %723 = vadd.xlane.f32.xlu0 %v687
        %v724 = vpop.xlane.xlu0 %723
        %v725 = vrcp.pop 128.0
        %v726 = vmul.f32 %v694, %v725
        %v727 = vmul.f32 %v696, %v725
        %v728 = vmul.f32 %v698, %v725
        %v729 = vmul.f32 %v700, %v725
        %v730 = vmul.f32 %v702, %v725
        %v731 = vmul.f32 %v704, %v725
        %v732 = vmul.f32 %v706, %v725
        %v733 = vmul.f32 %v708, %v725
        %v734 = vmul.f32 %v710, %v725
        %v735 = vmul.f32 %v712, %v725
        %v736 = vmul.f32 %v714, %v725
        %v737 = vmul.f32 %v716, %v725
        %v738 = vmul.f32 %v718, %v725
        %v739 = vmul.f32 %v720, %v725
        %v740 = vmul.f32 %v722, %v725
        %v741 = vmul.f32 %v724, %v725
        %v742 = vmul.f32 %v672, %v672
        %v743 = vmul.f32 %v673, %v673
        %v744 = vmul.f32 %v674, %v674
        %v745 = vmul.f32 %v675, %v675
        %v746 = vmul.f32 %v676, %v676
        %v747 = vmul.f32 %v677, %v677
        %v748 = vmul.f32 %v678, %v678
        %v749 = vmul.f32 %v679, %v679
        %v750 = vmul.f32 %v680, %v680
        %v751 = vmul.f32 %v681, %v681
        %v752 = vmul.f32 %v682, %v682
        %v753 = vmul.f32 %v683, %v683
        %v754 = vmul.f32 %v684, %v684
        %v755 = vmul.f32 %v685, %v685
        %v756 = vmul.f32 %v686, %v686
        %v757 = vmul.f32 %v687, %v687
        %758 = vadd.xlane.f32.xlu0 %v742
        %v759 = vpop.xlane.xlu0 %758
        %760 = vadd.xlane.f32.xlu0 %v743
        %v761 = vpop.xlane.xlu0 %760
        %762 = vadd.xlane.f32.xlu0 %v744
        %v763 = vpop.xlane.xlu0 %762
        %764 = vadd.xlane.f32.xlu0 %v745
        %v765 = vpop.xlane.xlu0 %764
        %766 = vadd.xlane.f32.xlu0 %v746
        %v767 = vpop.xlane.xlu0 %766
        %768 = vadd.xlane.f32.xlu0 %v747
        %v769 = vpop.xlane.xlu0 %768
        %770 = vadd.xlane.f32.xlu0 %v748
        %v771 = vpop.xlane.xlu0 %770
        %772 = vadd.xlane.f32.xlu0 %v749
        %v773 = vpop.xlane.xlu0 %772
        %774 = vadd.xlane.f32.xlu0 %v750
        %v775 = vpop.xlane.xlu0 %774
        %776 = vadd.xlane.f32.xlu0 %v751
        %v777 = vpop.xlane.xlu0 %776
        %778 = vadd.xlane.f32.xlu0 %v752
        %v779 = vpop.xlane.xlu0 %778
        %780 = vadd.xlane.f32.xlu0 %v753
        %v781 = vpop.xlane.xlu0 %780
        %782 = vadd.xlane.f32.xlu0 %v754
        %v783 = vpop.xlane.xlu0 %782
        %784 = vadd.xlane.f32.xlu0 %v755
        %v785 = vpop.xlane.xlu0 %784
        %786 = vadd.xlane.f32.xlu0 %v756
        %v787 = vpop.xlane.xlu0 %786
        %788 = vadd.xlane.f32.xlu0 %v757
        %v789 = vpop.xlane.xlu0 %788
        %v790 = vmul.f32 %v759, %v725
        %v791 = vmul.f32 %v761, %v725
        %v792 = vmul.f32 %v763, %v725
        %v793 = vmul.f32 %v765, %v725
        %v794 = vmul.f32 %v767, %v725
        %v795 = vmul.f32 %v769, %v725
        %v796 = vmul.f32 %v771, %v725
        %v797 = vmul.f32 %v773, %v725
        %v798 = vmul.f32 %v775, %v725
        %v799 = vmul.f32 %v777, %v725
        %v800 = vmul.f32 %v779, %v725
        %v801 = vmul.f32 %v781, %v725
        %v802 = vmul.f32 %v783, %v725
        %v803 = vmul.f32 %v785, %v725
        %v804 = vmul.f32 %v787, %v725
        %v805 = vmul.f32 %v789, %v725
        %v806 = vmul.f32 %v726, %v726
        %v807 = vmul.f32 %v727, %v727
        %v808 = vmul.f32 %v728, %v728
        %v809 = vmul.f32 %v729, %v729
        %v810 = vmul.f32 %v730, %v730
        %v811 = vmul.f32 %v731, %v731
        %v812 = vmul.f32 %v732, %v732
        %v813 = vmul.f32 %v733, %v733
        %v814 = vmul.f32 %v734, %v734
        %v815 = vmul.f32 %v735, %v735
        %v816 = vmul.f32 %v736, %v736
        %v817 = vmul.f32 %v737, %v737
        %v818 = vmul.f32 %v738, %v738
        %v819 = vmul.f32 %v739, %v739
        %v820 = vmul.f32 %v740, %v740
        %v821 = vmul.f32 %v741, %v741
        %v822 = vsub.f32 %v790, %v806
        %v823 = vsub.f32 %v791, %v807
        %v824 = vsub.f32 %v792, %v808
        %v825 = vsub.f32 %v793, %v809
        %v826 = vsub.f32 %v794, %v810
        %v827 = vsub.f32 %v795, %v811
        %v828 = vsub.f32 %v796, %v812
        %v829 = vsub.f32 %v797, %v813
        %v830 = vsub.f32 %v798, %v814
        %v831 = vsub.f32 %v799, %v815
        %v832 = vsub.f32 %v800, %v816
        %v833 = vsub.f32 %v801, %v817
        %v834 = vsub.f32 %v802, %v818
        %v835 = vsub.f32 %v803, %v819
        %v836 = vsub.f32 %v804, %v820
        %v837 = vsub.f32 %v805, %v821
        %v838 = vsub.f32 %v672, %v726
        %v839 = vsub.f32 %v673, %v727
        %v840 = vsub.f32 %v674, %v728
        %v841 = vsub.f32 %v675, %v729
        %v842 = vsub.f32 %v676, %v730
        %v843 = vsub.f32 %v677, %v731
        %v844 = vsub.f32 %v678, %v732
        %v845 = vsub.f32 %v679, %v733
        %v846 = vsub.f32 %v680, %v734
        %v847 = vsub.f32 %v681, %v735
        %v848 = vsub.f32 %v682, %v736
        %v849 = vsub.f32 %v683, %v737
        %v850 = vsub.f32 %v684, %v738
        %v851 = vsub.f32 %v685, %v739
        %v852 = vsub.f32 %v686, %v740
        %v853 = vsub.f32 %v687, %v741
        %v854 = vadd.f32 %v822, 1e-05
        %v855 = vadd.f32 %v823, 1e-05
        %v856 = vadd.f32 %v824, 1e-05
        %v857 = vadd.f32 %v825, 1e-05
        %v858 = vadd.f32 %v826, 1e-05
        %v859 = vadd.f32 %v827, 1e-05
        %v860 = vadd.f32 %v828, 1e-05
        %v861 = vadd.f32 %v829, 1e-05
        %v862 = vadd.f32 %v830, 1e-05
        %v863 = vadd.f32 %v831, 1e-05
        %v864 = vadd.f32 %v832, 1e-05
        %v865 = vadd.f32 %v833, 1e-05
        %v866 = vadd.f32 %v834, 1e-05
        %v867 = vadd.f32 %v835, 1e-05
        %v868 = vadd.f32 %v836, 1e-05
        %v869 = vadd.f32 %v837, 1e-05
        %v870 = vrsqrt.pop %v854
        %v871 = vrsqrt.pop %v855
        %v872 = vrsqrt.pop %v856
        %v873 = vrsqrt.pop %v857
        %v874 = vrsqrt.pop %v858
        %v875 = vrsqrt.pop %v859
        %v876 = vrsqrt.pop %v860
        %v877 = vrsqrt.pop %v861
        %v878 = vrsqrt.pop %v862
        %v879 = vrsqrt.pop %v863
        %v880 = vrsqrt.pop %v864
        %v881 = vrsqrt.pop %v865
        %v882 = vrsqrt.pop %v866
        %v883 = vrsqrt.pop %v867
        %v884 = vrsqrt.pop %v868
        %v885 = vrsqrt.pop %v869
        %v886 = vmul.f32 %v838, %v870
        %v887 = vmul.f32 %v839, %v871
        %v888 = vmul.f32 %v840, %v872
        %v889 = vmul.f32 %v841, %v873
        %v890 = vmul.f32 %v842, %v874
        %v891 = vmul.f32 %v843, %v875
        %v892 = vmul.f32 %v844, %v876
        %v893 = vmul.f32 %v845, %v877
        %v894 = vmul.f32 %v846, %v878
        %v895 = vmul.f32 %v847, %v879
        %v896 = vmul.f32 %v848, %v880
        %v897 = vmul.f32 %v849, %v881
        %v898 = vmul.f32 %v850, %v882
        %v899 = vmul.f32 %v851, %v883
        %v900 = vmul.f32 %v852, %v884
        %v901 = vmul.f32 %v853, %v885
        %v903 = vlaneseq
        %v904 = vshrl.u32 %v903, 7
        %v905 = vsub.s32 0, %v904
        %v906 = vrot.slane %v688, %v905
        %v908 = vmul.f32 %v886, %v906
        %v909 = vmul.f32 %v887, %v906
        %v910 = vmul.f32 %v888, %v906
        %v911 = vmul.f32 %v889, %v906
        %v912 = vmul.f32 %v890, %v906
        %v913 = vmul.f32 %v891, %v906
        %v914 = vmul.f32 %v892, %v906
        %v915 = vmul.f32 %v893, %v906
        %v916 = vmul.f32 %v894, %v906
        %v917 = vmul.f32 %v895, %v906
        %v918 = vmul.f32 %v896, %v906
        %v919 = vmul.f32 %v897, %v906
        %v920 = vmul.f32 %v898, %v906
        %v921 = vmul.f32 %v899, %v906
        %v922 = vmul.f32 %v900, %v906
        %v923 = vmul.f32 %v901, %v906
        %v925 = vlaneseq
        %v926 = vshrl.u32 %v925, 7
        %v927 = vsub.s32 0, %v926
        %v928 = vrot.slane %v689, %v927
        %v930 = vadd.f32 %v908, %v928
        %v931 = vadd.f32 %v909, %v928
        %v932 = vadd.f32 %v910, %v928
        %v933 = vadd.f32 %v911, %v928
        %v934 = vadd.f32 %v912, %v928
        %v935 = vadd.f32 %v913, %v928
        %v936 = vadd.f32 %v914, %v928
        %v937 = vadd.f32 %v915, %v928
        %v938 = vadd.f32 %v916, %v928
        %v939 = vadd.f32 %v917, %v928
        %v940 = vadd.f32 %v918, %v928
        %v941 = vadd.f32 %v919, %v928
        %v942 = vadd.f32 %v920, %v928
        %v943 = vadd.f32 %v921, %v928
        %v944 = vadd.f32 %v922, %v928
        %v945 = vadd.f32 %v923, %v928
        %v946 = vld [vmem:[#allocation5] sm:$0xff]
        %v947 = vld [vmem:[#allocation5 + $0x8] sm:$0xff]
        %v948 = vld [vmem:[#allocation5 + $0x10] sm:$0xff]
        %v949 = vld [vmem:[#allocation5 + $0x18] sm:$0xff]
        %v950 = vld [vmem:[#allocation5 + $0x20] sm:$0xff]
        %v951 = vld [vmem:[#allocation5 + $0x28] sm:$0xff]
        %v952 = vld [vmem:[#allocation5 + $0x30] sm:$0xff]
        %v953 = vld [vmem:[#allocation5 + $0x38] sm:$0xff]
        %v954 = vld [vmem:[#allocation5 + $0x40] sm:$0xff]
        %v955 = vld [vmem:[#allocation5 + $0x48] sm:$0xff]
        %v956 = vld [vmem:[#allocation5 + $0x50] sm:$0xff]
        %v957 = vld [vmem:[#allocation5 + $0x58] sm:$0xff]
        %v958 = vld [vmem:[#allocation5 + $0x60] sm:$0xff]
        %v959 = vld [vmem:[#allocation5 + $0x68] sm:$0xff]
        %v960 = vld [vmem:[#allocation5 + $0x70] sm:$0xff]
        %v961 = vld [vmem:[#allocation5 + $0x78] sm:$0xff]
        %v962 = vld [vmem:[#allocation5 + $0x80] sm:$0xff]
        %v963 = vld [vmem:[#allocation5 + $0x88] sm:$0xff]
        %v964 = vld [vmem:[#allocation5 + $0x90] sm:$0xff]
        %v965 = vld [vmem:[#allocation5 + $0x98] sm:$0xff]
        %v966 = vld [vmem:[#allocation5 + $0xa0] sm:$0xff]
        %v967 = vld [vmem:[#allocation5 + $0xa8] sm:$0xff]
        %v968 = vld [vmem:[#allocation5 + $0xb0] sm:$0xff]
        %v969 = vld [vmem:[#allocation5 + $0xb8] sm:$0xff]
        %v970 = vld [vmem:[#allocation5 + $0xc0] sm:$0xff]
        %v971 = vld [vmem:[#allocation5 + $0xc8] sm:$0xff]
        %v972 = vld [vmem:[#allocation5 + $0xd0] sm:$0xff]
        %v973 = vld [vmem:[#allocation5 + $0xd8] sm:$0xff]
        %v974 = vld [vmem:[#allocation5 + $0xe0] sm:$0xff]
        %v975 = vld [vmem:[#allocation5 + $0xe8] sm:$0xff]
        %v976 = vld [vmem:[#allocation5 + $0xf0] sm:$0xff]
        %v977 = vld [vmem:[#allocation5 + $0xf8] sm:$0xff]
        %978 = vmatprep.subr.mxu0 %v977
        %979 = vmatpush1.msra.mxu0 %v976
        %980 = vmatprep.subr.mxu0 %v975
        %981 = vmatpush1.msra.mxu0 %v974
        %982 = vmatprep.subr.mxu0 %v973
        %983 = vmatpush1.msra.mxu0 %v972
        %984 = vmatprep.subr.mxu0 %v971
        %985 = vmatpush1.msra.mxu0 %v970
        %986 = vmatprep.subr.mxu0 %v969
        %987 = vmatpush1.msra.mxu0 %v968
        %988 = vmatprep.subr.mxu0 %v967
        %989 = vmatpush1.msra.mxu0 %v966
        %990 = vmatprep.subr.mxu0 %v965
        %991 = vmatpush1.msra.mxu0 %v964
        %992 = vmatprep.subr.mxu0 %v963
        %993 = vmatpush1.msra.mxu0 %v962
        %994 = vmatprep.subr.mxu0 %v961
        %995 = vmatpush1.msra.mxu0 %v960
        %996 = vmatprep.subr.mxu0 %v959
        %997 = vmatpush1.msra.mxu0 %v958
        %998 = vmatprep.subr.mxu0 %v957
        %999 = vmatpush1.msra.mxu0 %v956
        %1000 = vmatprep.subr.mxu0 %v955
        %1001 = vmatpush1.msra.mxu0 %v954
        %1002 = vmatprep.subr.mxu0 %v953
        %1003 = vmatpush1.msra.mxu0 %v952
        %1004 = vmatprep.subr.mxu0 %v951
        %1005 = vmatpush1.msra.mxu0 %v950
        %1006 = vmatprep.subr.mxu0 %v949
        %1007 = vmatpush1.msra.mxu0 %v948
        %1008 = vmatprep.subr.mxu0 %v947
        %1009 = vmatpush1.msra.mxu0 %v946
        %1010 = vmatprep.subr.mxu0 0.0
        %1011 = vmatpush2.msra.mxu0 0.0
        %1012 = vmatprep.subr.mxu0 0.0
        %1013 = vmatpush2.msra.mxu0 0.0
        %1014 = vmatprep.subr.mxu0 0.0
        %1015 = vmatpush2.msra.mxu0 0.0
        %1016 = vmatprep.subr.mxu0 0.0
        %1017 = vmatpush2.msra.mxu0 0.0
        %1018 = vmatprep.subr.mxu0 0.0
        %1019 = vmatpush2.msra.mxu0 0.0
        %1020 = vmatprep.subr.mxu0 0.0
        %1021 = vmatpush2.msra.mxu0 0.0
        %1022 = vmatprep.subr.mxu0 0.0
        %1023 = vmatpush2.msra.mxu0 0.0
        %1024 = vmatprep.subr.mxu0 0.0
        %1025 = vmatpush2.msra.mxu0 0.0
        %1026 = vmatprep.subr.mxu0 0.0
        %1027 = vmatpush2.msra.mxu0 0.0
        %1028 = vmatprep.subr.mxu0 0.0
        %1029 = vmatpush2.msra.mxu0 0.0
        %1030 = vmatprep.subr.mxu0 0.0
        %1031 = vmatpush2.msra.mxu0 0.0
        %1032 = vmatprep.subr.mxu0 0.0
        %1033 = vmatpush2.msra.mxu0 0.0
        %1034 = vmatprep.subr.mxu0 0.0
        %1035 = vmatpush2.msra.mxu0 0.0
        %1036 = vmatprep.subr.mxu0 0.0
        %1037 = vmatpush2.msra.mxu0 0.0
        %1038 = vmatprep.subr.mxu0 0.0
        %1039 = vmatpush2.msra.mxu0 0.0
        %1040 = vmatprep.subr.mxu0 0.0
        %1041 = vmatpush2.msra.mxu0 0.0
        %1042 = vmatprep.mubr.f32.mxu0 0.0
        %1043 = vmatmul.mubr.f32.gmra.mxu0 %v930
        %v1044 = vpop.f32.mrf.mxu0
        %v1045 = vadd.f32 0.0, %v1044
        %v1046 = vpop.f32.mrf.mxu0
        %v1047 = vadd.f32 0.0, %v1046
        %1048 = vmatprep.mubr.f32.mxu0 0.0
        %1049 = vmatmul.mubr.f32.gmra.mxu0 %v931
        %v1050 = vpop.f32.mrf.mxu0
        %v1051 = vadd.f32 0.0, %v1050
        %v1052 = vpop.f32.mrf.mxu0
        %v1053 = vadd.f32 0.0, %v1052
        %1054 = vmatprep.mubr.f32.mxu0 0.0
        %1055 = vmatmul.mubr.f32.gmra.mxu0 %v932
        %v1056 = vpop.f32.mrf.mxu0
        %v1057 = vadd.f32 0.0, %v1056
        %v1058 = vpop.f32.mrf.mxu0
        %v1059 = vadd.f32 0.0, %v1058
        %1060 = vmatprep.mubr.f32.mxu0 0.0
        %1061 = vmatmul.mubr.f32.gmra.mxu0 %v933
        %v1062 = vpop.f32.mrf.mxu0
        %v1063 = vadd.f32 0.0, %v1062
        %v1064 = vpop.f32.mrf.mxu0
        %v1065 = vadd.f32 0.0, %v1064
        %1066 = vmatprep.mubr.f32.mxu0 0.0
        %1067 = vmatmul.mubr.f32.gmra.mxu0 %v934
        %v1068 = vpop.f32.mrf.mxu0
        %v1069 = vadd.f32 0.0, %v1068
        %v1070 = vpop.f32.mrf.mxu0
        %v1071 = vadd.f32 0.0, %v1070
        %1072 = vmatprep.mubr.f32.mxu0 0.0
        %1073 = vmatmul.mubr.f32.gmra.mxu0 %v935
        %v1074 = vpop.f32.mrf.mxu0
        %v1075 = vadd.f32 0.0, %v1074
        %v1076 = vpop.f32.mrf.mxu0
        %v1077 = vadd.f32 0.0, %v1076
        %1078 = vmatprep.mubr.f32.mxu0 0.0
        %1079 = vmatmul.mubr.f32.gmra.mxu0 %v936
        %v1080 = vpop.f32.mrf.mxu0
        %v1081 = vadd.f32 0.0, %v1080
        %v1082 = vpop.f32.mrf.mxu0
        %v1083 = vadd.f32 0.0, %v1082
        %1084 = vmatprep.mubr.f32.mxu0 0.0
        %1085 = vmatmul.mubr.f32.gmra.mxu0 %v937
        %v1086 = vpop.f32.mrf.mxu0
        %v1087 = vadd.f32 0.0, %v1086
        %v1088 = vpop.f32.mrf.mxu0
        %v1089 = vadd.f32 0.0, %v1088
        %1090 = vmatprep.mubr.f32.mxu0 0.0
        %1091 = vmatmul.mubr.f32.gmra.mxu0 %v938
        %v1092 = vpop.f32.mrf.mxu0
        %v1093 = vadd.f32 0.0, %v1092
        %v1094 = vpop.f32.mrf.mxu0
        %v1095 = vadd.f32 0.0, %v1094
        %1096 = vmatprep.mubr.f32.mxu0 0.0
        %1097 = vmatmul.mubr.f32.gmra.mxu0 %v939
        %v1098 = vpop.f32.mrf.mxu0
        %v1099 = vadd.f32 0.0, %v1098
        %v1100 = vpop.f32.mrf.mxu0
        %v1101 = vadd.f32 0.0, %v1100
        %1102 = vmatprep.mubr.f32.mxu0 0.0
        %1103 = vmatmul.mubr.f32.gmra.mxu0 %v940
        %v1104 = vpop.f32.mrf.mxu0
        %v1105 = vadd.f32 0.0, %v1104
        %v1106 = vpop.f32.mrf.mxu0
        %v1107 = vadd.f32 0.0, %v1106
        %1108 = vmatprep.mubr.f32.mxu0 0.0
        %1109 = vmatmul.mubr.f32.gmra.mxu0 %v941
        %v1110 = vpop.f32.mrf.mxu0
        %v1111 = vadd.f32 0.0, %v1110
        %v1112 = vpop.f32.mrf.mxu0
        %v1113 = vadd.f32 0.0, %v1112
        %1114 = vmatprep.mubr.f32.mxu0 0.0
        %1115 = vmatmul.mubr.f32.gmra.mxu0 %v942
        %v1116 = vpop.f32.mrf.mxu0
        %v1117 = vadd.f32 0.0, %v1116
        %v1118 = vpop.f32.mrf.mxu0
        %v1119 = vadd.f32 0.0, %v1118
        %1120 = vmatprep.mubr.f32.mxu0 0.0
        %1121 = vmatmul.mubr.f32.gmra.mxu0 %v943
        %v1122 = vpop.f32.mrf.mxu0
        %v1123 = vadd.f32 0.0, %v1122
        %v1124 = vpop.f32.mrf.mxu0
        %v1125 = vadd.f32 0.0, %v1124
        %1126 = vmatprep.mubr.f32.mxu0 0.0
        %1127 = vmatmul.mubr.f32.gmra.mxu0 %v944
        %v1128 = vpop.f32.mrf.mxu0
        %v1129 = vadd.f32 0.0, %v1128
        %v1130 = vpop.f32.mrf.mxu0
        %v1131 = vadd.f32 0.0, %v1130
        %1132 = vmatprep.mubr.f32.mxu0 0.0
        %1133 = vmatmul.mubr.f32.gmra.mxu0 %v945
        %v1134 = vpop.f32.mrf.mxu0
        %v1135 = vadd.f32 0.0, %v1134
        %v1136 = vpop.f32.mrf.mxu0
        %v1137 = vadd.f32 0.0, %v1136
        %1138 = vdwg.mxu0
        %v1139 = vld [vmem:[#allocation7] sm:$0xff]
        %v1140 = vld [vmem:[#allocation7 + $0x8] sm:$0xff]
        %v1141 = vld [vmem:[#allocation8] sm:$0xff]
        %v1142 = vld [vmem:[#allocation8 + $0x8] sm:$0xff]
        %vm1143 = vcmask 130048
        %v1145 = vsel %vm1143, %v1139, 0
        %v1148 = vsel %vm1143, %v1140, 0
        %1150 = vmatprep.subr.mxu0 0.0
        %1151 = vmatpush1.msra.mxu0 0.0
        %1152 = vmatprep.subr.mxu0 0.0
        %1153 = vmatpush1.msra.mxu0 0.0
        %1154 = vmatprep.subr.mxu0 0.0
        %1155 = vmatpush1.msra.mxu0 0.0
        %1156 = vmatprep.subr.mxu0 0.0
        %1157 = vmatpush1.msra.mxu0 0.0
        %1158 = vmatprep.subr.mxu0 0.0
        %1159 = vmatpush1.msra.mxu0 0.0
        %1160 = vmatprep.subr.mxu0 0.0
        %1161 = vmatpush1.msra.mxu0 0.0
        %1162 = vmatprep.subr.mxu0 0.0
        %1163 = vmatpush1.msra.mxu0 0.0
        %1164 = vmatprep.subr.mxu0 0.0
        %1165 = vmatpush1.msra.mxu0 0.0
        %1166 = vmatprep.subr.mxu0 0.0
        %1167 = vmatpush1.msra.mxu0 0.0
        %1168 = vmatprep.subr.mxu0 0.0
        %1169 = vmatpush1.msra.mxu0 0.0
        %1170 = vmatprep.subr.mxu0 0.0
        %1171 = vmatpush1.msra.mxu0 0.0
        %1172 = vmatprep.subr.mxu0 0.0
        %1173 = vmatpush1.msra.mxu0 0.0
        %1174 = vmatprep.subr.mxu0 0.0
        %1175 = vmatpush1.msra.mxu0 0.0
        %1176 = vmatprep.subr.mxu0 0.0
        %1177 = vmatpush1.msra.mxu0 0.0
        %1178 = vmatprep.subr.mxu0 0.0
        %1179 = vmatpush1.msra.mxu0 %v1051
        %1180 = vmatprep.subr.mxu0 0.0
        %1181 = vmatpush1.msra.mxu0 %v1045
        %1182 = vmatprep.subr.mxu0 0.0
        %1183 = vmatpush2.msra.mxu0 0.0
        %1184 = vmatprep.subr.mxu0 0.0
        %1185 = vmatpush2.msra.mxu0 0.0
        %1186 = vmatprep.subr.mxu0 0.0
        %1187 = vmatpush2.msra.mxu0 0.0
        %1188 = vmatprep.subr.mxu0 0.0
        %1189 = vmatpush2.msra.mxu0 0.0
        %1190 = vmatprep.subr.mxu0 0.0
        %1191 = vmatpush2.msra.mxu0 0.0
        %1192 = vmatprep.subr.mxu0 0.0
        %1193 = vmatpush2.msra.mxu0 0.0
        %1194 = vmatprep.subr.mxu0 0.0
        %1195 = vmatpush2.msra.mxu0 0.0
        %1196 = vmatprep.subr.mxu0 0.0
        %1197 = vmatpush2.msra.mxu0 0.0
        %1198 = vmatprep.subr.mxu0 0.0
        %1199 = vmatpush2.msra.mxu0 0.0
        %1200 = vmatprep.subr.mxu0 0.0
        %1201 = vmatpush2.msra.mxu0 0.0
        %1202 = vmatprep.subr.mxu0 0.0
        %1203 = vmatpush2.msra.mxu0 0.0
        %1204 = vmatprep.subr.mxu0 0.0
        %1205 = vmatpush2.msra.mxu0 0.0
        %1206 = vmatprep.subr.mxu0 0.0
        %1207 = vmatpush2.msra.mxu0 0.0
        %1208 = vmatprep.subr.mxu0 0.0
        %1209 = vmatpush2.msra.mxu0 0.0
        %1210 = vmatprep.subr.mxu0 0.0
        %1211 = vmatpush2.msra.mxu0 0.0
        %1212 = vmatprep.subr.mxu0 0.0
        %1213 = vmatpush2.msra.mxu0 0.0
        %1214 = vmatprep.mubr.f32.mxu0 0.0
        %1215 = vmatmul.mubr.f32.gmra.mxu0 %v1145
        %v1216 = vpop.f32.mrf.mxu0
        %v1217 = vadd.f32 0.0, %v1216
        %v1218 = vpop.f32.mrf.mxu0
        %1219 = vmatprep.mubr.f32.mxu0 0.0
        %1220 = vmatmul.mubr.f32.gmra.mxu0 %v1148
        %v1221 = vpop.f32.mrf.mxu0
        %v1222 = vadd.f32 0.0, %v1221
        %v1223 = vpop.f32.mrf.mxu0
        %1224 = vdwg.mxu0
        %1225 = vmatprep.subr.mxu0 0.0
        %1226 = vmatpush1.msra.mxu0 0.0
        %1227 = vmatprep.subr.mxu0 0.0
        %1228 = vmatpush1.msra.mxu0 0.0
        %1229 = vmatprep.subr.mxu0 0.0
        %1230 = vmatpush1.msra.mxu0 0.0
        %1231 = vmatprep.subr.mxu0 0.0
        %1232 = vmatpush1.msra.mxu0 0.0
        %1233 = vmatprep.subr.mxu0 0.0
        %1234 = vmatpush1.msra.mxu0 0.0
        %1235 = vmatprep.subr.mxu0 0.0
        %1236 = vmatpush1.msra.mxu0 0.0
        %1237 = vmatprep.subr.mxu0 0.0
        %1238 = vmatpush1.msra.mxu0 0.0
        %1239 = vmatprep.subr.mxu0 0.0
        %1240 = vmatpush1.msra.mxu0 0.0
        %1241 = vmatprep.subr.mxu0 0.0
        %1242 = vmatpush1.msra.mxu0 0.0
        %1243 = vmatprep.subr.mxu0 0.0
        %1244 = vmatpush1.msra.mxu0 0.0
        %1245 = vmatprep.subr.mxu0 0.0
        %1246 = vmatpush1.msra.mxu0 0.0
        %1247 = vmatprep.subr.mxu0 0.0
        %1248 = vmatpush1.msra.mxu0 0.0
        %1249 = vmatprep.subr.mxu0 0.0
        %1250 = vmatpush1.msra.mxu0 0.0
        %1251 = vmatprep.subr.mxu0 0.0
        %1252 = vmatpush1.msra.mxu0 0.0
        %1253 = vmatprep.subr.mxu0 0.0
        %1254 = vmatpush1.msra.mxu0 %v1063
        %1255 = vmatprep.subr.mxu0 0.0
        %1256 = vmatpush1.msra.mxu0 %v1057
        %1257 = vmatprep.subr.mxu0 0.0
        %1258 = vmatpush2.msra.mxu0 0.0
        %1259 = vmatprep.subr.mxu0 0.0
        %1260 = vmatpush2.msra.mxu0 0.0
        %1261 = vmatprep.subr.mxu0 0.0
        %1262 = vmatpush2.msra.mxu0 0.0
        %1263 = vmatprep.subr.mxu0 0.0
        %1264 = vmatpush2.msra.mxu0 0.0
        %1265 = vmatprep.subr.mxu0 0.0
        %1266 = vmatpush2.msra.mxu0 0.0
        %1267 = vmatprep.subr.mxu0 0.0
        %1268 = vmatpush2.msra.mxu0 0.0
        %1269 = vmatprep.subr.mxu0 0.0
        %1270 = vmatpush2.msra.mxu0 0.0
        %1271 = vmatprep.subr.mxu0 0.0
        %1272 = vmatpush2.msra.mxu0 0.0
        %1273 = vmatprep.subr.mxu0 0.0
        %1274 = vmatpush2.msra.mxu0 0.0
        %1275 = vmatprep.subr.mxu0 0.0
        %1276 = vmatpush2.msra.mxu0 0.0
        %1277 = vmatprep.subr.mxu0 0.0
        %1278 = vmatpush2.msra.mxu0 0.0
        %1279 = vmatprep.subr.mxu0 0.0
        %1280 = vmatpush2.msra.mxu0 0.0
        %1281 = vmatprep.subr.mxu0 0.0
        %1282 = vmatpush2.msra.mxu0 0.0
        %1283 = vmatprep.subr.mxu0 0.0
        %1284 = vmatpush2.msra.mxu0 0.0
        %1285 = vmatprep.subr.mxu0 0.0
        %1286 = vmatpush2.msra.mxu0 0.0
        %1287 = vmatprep.subr.mxu0 0.0
        %1288 = vmatpush2.msra.mxu0 0.0
        %1289 = vmatprep.mubr.f32.mxu0 0.0
        %1290 = vmatmul.mubr.f32.gmra.mxu0 %v1145
        %v1291 = vpop.f32.mrf.mxu0
        %v1292 = vadd.f32 0.0, %v1291
        %v1293 = vpop.f32.mrf.mxu0
        %1294 = vmatprep.mubr.f32.mxu0 0.0
        %1295 = vmatmul.mubr.f32.gmra.mxu0 %v1148
        %v1296 = vpop.f32.mrf.mxu0
        %v1297 = vadd.f32 0.0, %v1296
        %v1298 = vpop.f32.mrf.mxu0
        %1299 = vdwg.mxu0
        %1300 = vmatprep.subr.mxu0 0.0
        %1301 = vmatpush1.msra.mxu0 0.0
        %1302 = vmatprep.subr.mxu0 0.0
        %1303 = vmatpush1.msra.mxu0 0.0
        %1304 = vmatprep.subr.mxu0 0.0
        %1305 = vmatpush1.msra.mxu0 0.0
        %1306 = vmatprep.subr.mxu0 0.0
        %1307 = vmatpush1.msra.mxu0 0.0
        %1308 = vmatprep.subr.mxu0 0.0
        %1309 = vmatpush1.msra.mxu0 0.0
        %1310 = vmatprep.subr.mxu0 0.0
        %1311 = vmatpush1.msra.mxu0 0.0
        %1312 = vmatprep.subr.mxu0 0.0
        %1313 = vmatpush1.msra.mxu0 0.0
        %1314 = vmatprep.subr.mxu0 0.0
        %1315 = vmatpush1.msra.mxu0 0.0
        %1316 = vmatprep.subr.mxu0 0.0
        %1317 = vmatpush1.msra.mxu0 0.0
        %1318 = vmatprep.subr.mxu0 0.0
        %1319 = vmatpush1.msra.mxu0 0.0
        %1320 = vmatprep.subr.mxu0 0.0
        %1321 = vmatpush1.msra.mxu0 0.0
        %1322 = vmatprep.subr.mxu0 0.0
        %1323 = vmatpush1.msra.mxu0 0.0
        %1324 = vmatprep.subr.mxu0 0.0
        %1325 = vmatpush1.msra.mxu0 0.0
        %1326 = vmatprep.subr.mxu0 0.0
        %1327 = vmatpush1.msra.mxu0 0.0
        %1328 = vmatprep.subr.mxu0 0.0
        %1329 = vmatpush1.msra.mxu0 %v1075
        %1330 = vmatprep.subr.mxu0 0.0
        %1331 = vmatpush1.msra.mxu0 %v1069
        %1332 = vmatprep.subr.mxu0 0.0
        %1333 = vmatpush2.msra.mxu0 0.0
        %1334 = vmatprep.subr.mxu0 0.0
        %1335 = vmatpush2.msra.mxu0 0.0
        %1336 = vmatprep.subr.mxu0 0.0
        %1337 = vmatpush2.msra.mxu0 0.0
        %1338 = vmatprep.subr.mxu0 0.0
        %1339 = vmatpush2.msra.mxu0 0.0
        %1340 = vmatprep.subr.mxu0 0.0
        %1341 = vmatpush2.msra.mxu0 0.0
        %1342 = vmatprep.subr.mxu0 0.0
        %1343 = vmatpush2.msra.mxu0 0.0
        %1344 = vmatprep.subr.mxu0 0.0
        %1345 = vmatpush2.msra.mxu0 0.0
        %1346 = vmatprep.subr.mxu0 0.0
        %1347 = vmatpush2.msra.mxu0 0.0
        %1348 = vmatprep.subr.mxu0 0.0
        %1349 = vmatpush2.msra.mxu0 0.0
        %1350 = vmatprep.subr.mxu0 0.0
        %1351 = vmatpush2.msra.mxu0 0.0
        %1352 = vmatprep.subr.mxu0 0.0
        %1353 = vmatpush2.msra.mxu0 0.0
        %1354 = vmatprep.subr.mxu0 0.0
        %1355 = vmatpush2.msra.mxu0 0.0
        %1356 = vmatprep.subr.mxu0 0.0
        %1357 = vmatpush2.msra.mxu0 0.0
        %1358 = vmatprep.subr.mxu0 0.0
        %1359 = vmatpush2.msra.mxu0 0.0
        %1360 = vmatprep.subr.mxu0 0.0
        %1361 = vmatpush2.msra.mxu0 0.0
        %1362 = vmatprep.subr.mxu0 0.0
        %1363 = vmatpush2.msra.mxu0 0.0
        %1364 = vmatprep.mubr.f32.mxu0 0.0
        %1365 = vmatmul.mubr.f32.gmra.mxu0 %v1145
        %v1366 = vpop.f32.mrf.mxu0
        %v1367 = vadd.f32 0.0, %v1366
        %v1368 = vpop.f32.mrf.mxu0
        %1369 = vmatprep.mubr.f32.mxu0 0.0
        %1370 = vmatmul.mubr.f32.gmra.mxu0 %v1148
        %v1371 = vpop.f32.mrf.mxu0
        %v1372 = vadd.f32 0.0, %v1371
        %v1373 = vpop.f32.mrf.mxu0
        %1374 = vdwg.mxu0
        %1375 = vmatprep.subr.mxu0 0.0
        %1376 = vmatpush1.msra.mxu0 0.0
        %1377 = vmatprep.subr.mxu0 0.0
        %1378 = vmatpush1.msra.mxu0 0.0
        %1379 = vmatprep.subr.mxu0 0.0
        %1380 = vmatpush1.msra.mxu0 0.0
        %1381 = vmatprep.subr.mxu0 0.0
        %1382 = vmatpush1.msra.mxu0 0.0
        %1383 = vmatprep.subr.mxu0 0.0
        %1384 = vmatpush1.msra.mxu0 0.0
        %1385 = vmatprep.subr.mxu0 0.0
        %1386 = vmatpush1.msra.mxu0 0.0
        %1387 = vmatprep.subr.mxu0 0.0
        %1388 = vmatpush1.msra.mxu0 0.0
        %1389 = vmatprep.subr.mxu0 0.0
        %1390 = vmatpush1.msra.mxu0 0.0
        %1391 = vmatprep.subr.mxu0 0.0
        %1392 = vmatpush1.msra.mxu0 0.0
        %1393 = vmatprep.subr.mxu0 0.0
        %1394 = vmatpush1.msra.mxu0 0.0
        %1395 = vmatprep.subr.mxu0 0.0
        %1396 = vmatpush1.msra.mxu0 0.0
        %1397 = vmatprep.subr.mxu0 0.0
        %1398 = vmatpush1.msra.mxu0 0.0
        %1399 = vmatprep.subr.mxu0 0.0
        %1400 = vmatpush1.msra.mxu0 0.0
        %1401 = vmatprep.subr.mxu0 0.0
        %1402 = vmatpush1.msra.mxu0 0.0
        %1403 = vmatprep.subr.mxu0 0.0
        %1404 = vmatpush1.msra.mxu0 %v1087
        %1405 = vmatprep.subr.mxu0 0.0
        %1406 = vmatpush1.msra.mxu0 %v1081
        %1407 = vmatprep.subr.mxu0 0.0
        %1408 = vmatpush2.msra.mxu0 0.0
        %1409 = vmatprep.subr.mxu0 0.0
        %1410 = vmatpush2.msra.mxu0 0.0
        %1411 = vmatprep.subr.mxu0 0.0
        %1412 = vmatpush2.msra.mxu0 0.0
        %1413 = vmatprep.subr.mxu0 0.0
        %1414 = vmatpush2.msra.mxu0 0.0
        %1415 = vmatprep.subr.mxu0 0.0
        %1416 = vmatpush2.msra.mxu0 0.0
        %1417 = vmatprep.subr.mxu0 0.0
        %1418 = vmatpush2.msra.mxu0 0.0
        %1419 = vmatprep.subr.mxu0 0.0
        %1420 = vmatpush2.msra.mxu0 0.0
        %1421 = vmatprep.subr.mxu0 0.0
        %1422 = vmatpush2.msra.mxu0 0.0
        %1423 = vmatprep.subr.mxu0 0.0
        %1424 = vmatpush2.msra.mxu0 0.0
        %1425 = vmatprep.subr.mxu0 0.0
        %1426 = vmatpush2.msra.mxu0 0.0
        %1427 = vmatprep.subr.mxu0 0.0
        %1428 = vmatpush2.msra.mxu0 0.0
        %1429 = vmatprep.subr.mxu0 0.0
        %1430 = vmatpush2.msra.mxu0 0.0
        %1431 = vmatprep.subr.mxu0 0.0
        %1432 = vmatpush2.msra.mxu0 0.0
        %1433 = vmatprep.subr.mxu0 0.0
        %1434 = vmatpush2.msra.mxu0 0.0
        %1435 = vmatprep.subr.mxu0 0.0
        %1436 = vmatpush2.msra.mxu0 0.0
        %1437 = vmatprep.subr.mxu0 0.0
        %1438 = vmatpush2.msra.mxu0 0.0
        %1439 = vmatprep.mubr.f32.mxu0 0.0
        %1440 = vmatmul.mubr.f32.gmra.mxu0 %v1145
        %v1441 = vpop.f32.mrf.mxu0
        %v1442 = vadd.f32 0.0, %v1441
        %v1443 = vpop.f32.mrf.mxu0
        %1444 = vmatprep.mubr.f32.mxu0 0.0
        %1445 = vmatmul.mubr.f32.gmra.mxu0 %v1148
        %v1446 = vpop.f32.mrf.mxu0
        %v1447 = vadd.f32 0.0, %v1446
        %v1448 = vpop.f32.mrf.mxu0
        %1449 = vdwg.mxu0
        %1450 = vmatprep.subr.mxu0 0.0
        %1451 = vmatpush1.msra.mxu0 0.0
        %1452 = vmatprep.subr.mxu0 0.0
        %1453 = vmatpush1.msra.mxu0 0.0
        %1454 = vmatprep.subr.mxu0 0.0
        %1455 = vmatpush1.msra.mxu0 0.0
        %1456 = vmatprep.subr.mxu0 0.0
        %1457 = vmatpush1.msra.mxu0 0.0
        %1458 = vmatprep.subr.mxu0 0.0
        %1459 = vmatpush1.msra.mxu0 0.0
        %1460 = vmatprep.subr.mxu0 0.0
        %1461 = vmatpush1.msra.mxu0 0.0
        %1462 = vmatprep.subr.mxu0 0.0
        %1463 = vmatpush1.msra.mxu0 0.0
        %1464 = vmatprep.subr.mxu0 0.0
        %1465 = vmatpush1.msra.mxu0 0.0
        %1466 = vmatprep.subr.mxu0 0.0
        %1467 = vmatpush1.msra.mxu0 0.0
        %1468 = vmatprep.subr.mxu0 0.0
        %1469 = vmatpush1.msra.mxu0 0.0
        %1470 = vmatprep.subr.mxu0 0.0
        %1471 = vmatpush1.msra.mxu0 0.0
        %1472 = vmatprep.subr.mxu0 0.0
        %1473 = vmatpush1.msra.mxu0 0.0
        %1474 = vmatprep.subr.mxu0 0.0
        %1475 = vmatpush1.msra.mxu0 0.0
        %1476 = vmatprep.subr.mxu0 0.0
        %1477 = vmatpush1.msra.mxu0 0.0
        %1478 = vmatprep.subr.mxu0 0.0
        %1479 = vmatpush1.msra.mxu0 %v1099
        %1480 = vmatprep.subr.mxu0 0.0
        %1481 = vmatpush1.msra.mxu0 %v1093
        %1482 = vmatprep.subr.mxu0 0.0
        %1483 = vmatpush2.msra.mxu0 0.0
        %1484 = vmatprep.subr.mxu0 0.0
        %1485 = vmatpush2.msra.mxu0 0.0
        %1486 = vmatprep.subr.mxu0 0.0
        %1487 = vmatpush2.msra.mxu0 0.0
        %1488 = vmatprep.subr.mxu0 0.0
        %1489 = vmatpush2.msra.mxu0 0.0
        %1490 = vmatprep.subr.mxu0 0.0
        %1491 = vmatpush2.msra.mxu0 0.0
        %1492 = vmatprep.subr.mxu0 0.0
        %1493 = vmatpush2.msra.mxu0 0.0
        %1494 = vmatprep.subr.mxu0 0.0
        %1495 = vmatpush2.msra.mxu0 0.0
        %1496 = vmatprep.subr.mxu0 0.0
        %1497 = vmatpush2.msra.mxu0 0.0
        %1498 = vmatprep.subr.mxu0 0.0
        %1499 = vmatpush2.msra.mxu0 0.0
        %1500 = vmatprep.subr.mxu0 0.0
        %1501 = vmatpush2.msra.mxu0 0.0
        %1502 = vmatprep.subr.mxu0 0.0
        %1503 = vmatpush2.msra.mxu0 0.0
        %1504 = vmatprep.subr.mxu0 0.0
        %1505 = vmatpush2.msra.mxu0 0.0
        %1506 = vmatprep.subr.mxu0 0.0
        %1507 = vmatpush2.msra.mxu0 0.0
        %1508 = vmatprep.subr.mxu0 0.0
        %1509 = vmatpush2.msra.mxu0 0.0
        %1510 = vmatprep.subr.mxu0 0.0
        %1511 = vmatpush2.msra.mxu0 0.0
        %1512 = vmatprep.subr.mxu0 0.0
        %1513 = vmatpush2.msra.mxu0 0.0
        %1514 = vmatprep.mubr.f32.mxu0 0.0
        %1515 = vmatmul.mubr.f32.gmra.mxu0 %v1145
        %v1516 = vpop.f32.mrf.mxu0
        %v1517 = vadd.f32 0.0, %v1516
        %v1518 = vpop.f32.mrf.mxu0
        %1519 = vmatprep.mubr.f32.mxu0 0.0
        %1520 = vmatmul.mubr.f32.gmra.mxu0 %v1148
        %v1521 = vpop.f32.mrf.mxu0
        %v1522 = vadd.f32 0.0, %v1521
        %v1523 = vpop.f32.mrf.mxu0
        %1524 = vdwg.mxu0
        %1525 = vmatprep.subr.mxu0 0.0
        %1526 = vmatpush1.msra.mxu0 0.0
        %1527 = vmatprep.subr.mxu0 0.0
        %1528 = vmatpush1.msra.mxu0 0.0
        %1529 = vmatprep.subr.mxu0 0.0
        %1530 = vmatpush1.msra.mxu0 0.0
        %1531 = vmatprep.subr.mxu0 0.0
        %1532 = vmatpush1.msra.mxu0 0.0
        %1533 = vmatprep.subr.mxu0 0.0
        %1534 = vmatpush1.msra.mxu0 0.0
        %1535 = vmatprep.subr.mxu0 0.0
        %1536 = vmatpush1.msra.mxu0 0.0
        %1537 = vmatprep.subr.mxu0 0.0
        %1538 = vmatpush1.msra.mxu0 0.0
        %1539 = vmatprep.subr.mxu0 0.0
        %1540 = vmatpush1.msra.mxu0 0.0
        %1541 = vmatprep.subr.mxu0 0.0
        %1542 = vmatpush1.msra.mxu0 0.0
        %1543 = vmatprep.subr.mxu0 0.0
        %1544 = vmatpush1.msra.mxu0 0.0
        %1545 = vmatprep.subr.mxu0 0.0
        %1546 = vmatpush1.msra.mxu0 0.0
        %1547 = vmatprep.subr.mxu0 0.0
        %1548 = vmatpush1.msra.mxu0 0.0
        %1549 = vmatprep.subr.mxu0 0.0
        %1550 = vmatpush1.msra.mxu0 0.0
        %1551 = vmatprep.subr.mxu0 0.0
        %1552 = vmatpush1.msra.mxu0 0.0
        %1553 = vmatprep.subr.mxu0 0.0
        %1554 = vmatpush1.msra.mxu0 %v1111
        %1555 = vmatprep.subr.mxu0 0.0
        %1556 = vmatpush1.msra.mxu0 %v1105
        %1557 = vmatprep.subr.mxu0 0.0
        %1558 = vmatpush2.msra.mxu0 0.0
        %1559 = vmatprep.subr.mxu0 0.0
        %1560 = vmatpush2.msra.mxu0 0.0
        %1561 = vmatprep.subr.mxu0 0.0
        %1562 = vmatpush2.msra.mxu0 0.0
        %1563 = vmatprep.subr.mxu0 0.0
        %1564 = vmatpush2.msra.mxu0 0.0
        %1565 = vmatprep.subr.mxu0 0.0
        %1566 = vmatpush2.msra.mxu0 0.0
        %1567 = vmatprep.subr.mxu0 0.0
        %1568 = vmatpush2.msra.mxu0 0.0
        %1569 = vmatprep.subr.mxu0 0.0
        %1570 = vmatpush2.msra.mxu0 0.0
        %1571 = vmatprep.subr.mxu0 0.0
        %1572 = vmatpush2.msra.mxu0 0.0
        %1573 = vmatprep.subr.mxu0 0.0
        %1574 = vmatpush2.msra.mxu0 0.0
        %1575 = vmatprep.subr.mxu0 0.0
        %1576 = vmatpush2.msra.mxu0 0.0
        %1577 = vmatprep.subr.mxu0 0.0
        %1578 = vmatpush2.msra.mxu0 0.0
        %1579 = vmatprep.subr.mxu0 0.0
        %1580 = vmatpush2.msra.mxu0 0.0
        %1581 = vmatprep.subr.mxu0 0.0
        %1582 = vmatpush2.msra.mxu0 0.0
        %1583 = vmatprep.subr.mxu0 0.0
        %1584 = vmatpush2.msra.mxu0 0.0
        %1585 = vmatprep.subr.mxu0 0.0
        %1586 = vmatpush2.msra.mxu0 0.0
        %1587 = vmatprep.subr.mxu0 0.0
        %1588 = vmatpush2.msra.mxu0 0.0
        %1589 = vmatprep.mubr.f32.mxu0 0.0
        %1590 = vmatmul.mubr.f32.gmra.mxu0 %v1145
        %v1591 = vpop.f32.mrf.mxu0
        %v1592 = vadd.f32 0.0, %v1591
        %v1593 = vpop.f32.mrf.mxu0
        %1594 = vmatprep.mubr.f32.mxu0 0.0
        %1595 = vmatmul.mubr.f32.gmra.mxu0 %v1148
        %v1596 = vpop.f32.mrf.mxu0
        %v1597 = vadd.f32 0.0, %v1596
        %v1598 = vpop.f32.mrf.mxu0
        %1599 = vdwg.mxu0
        %1600 = vmatprep.subr.mxu0 0.0
        %1601 = vmatpush1.msra.mxu0 0.0
        %1602 = vmatprep.subr.mxu0 0.0
        %1603 = vmatpush1.msra.mxu0 0.0
        %1604 = vmatprep.subr.mxu0 0.0
        %1605 = vmatpush1.msra.mxu0 0.0
        %1606 = vmatprep.subr.mxu0 0.0
        %1607 = vmatpush1.msra.mxu0 0.0
        %1608 = vmatprep.subr.mxu0 0.0
        %1609 = vmatpush1.msra.mxu0 0.0
        %1610 = vmatprep.subr.mxu0 0.0
        %1611 = vmatpush1.msra.mxu0 0.0
        %1612 = vmatprep.subr.mxu0 0.0
        %1613 = vmatpush1.msra.mxu0 0.0
        %1614 = vmatprep.subr.mxu0 0.0
        %1615 = vmatpush1.msra.mxu0 0.0
        %1616 = vmatprep.subr.mxu0 0.0
        %1617 = vmatpush1.msra.mxu0 0.0
        %1618 = vmatprep.subr.mxu0 0.0
        %1619 = vmatpush1.msra.mxu0 0.0
        %1620 = vmatprep.subr.mxu0 0.0
        %1621 = vmatpush1.msra.mxu0 0.0
        %1622 = vmatprep.subr.mxu0 0.0
        %1623 = vmatpush1.msra.mxu0 0.0
        %1624 = vmatprep.subr.mxu0 0.0
        %1625 = vmatpush1.msra.mxu0 0.0
        %1626 = vmatprep.subr.mxu0 0.0
        %1627 = vmatpush1.msra.mxu0 0.0
        %1628 = vmatprep.subr.mxu0 0.0
        %1629 = vmatpush1.msra.mxu0 %v1123
        %1630 = vmatprep.subr.mxu0 0.0
        %1631 = vmatpush1.msra.mxu0 %v1117
        %1632 = vmatprep.subr.mxu0 0.0
        %1633 = vmatpush2.msra.mxu0 0.0
        %1634 = vmatprep.subr.mxu0 0.0
        %1635 = vmatpush2.msra.mxu0 0.0
        %1636 = vmatprep.subr.mxu0 0.0
        %1637 = vmatpush2.msra.mxu0 0.0
        %1638 = vmatprep.subr.mxu0 0.0
        %1639 = vmatpush2.msra.mxu0 0.0
        %1640 = vmatprep.subr.mxu0 0.0
        %1641 = vmatpush2.msra.mxu0 0.0
        %1642 = vmatprep.subr.mxu0 0.0
        %1643 = vmatpush2.msra.mxu0 0.0
        %1644 = vmatprep.subr.mxu0 0.0
        %1645 = vmatpush2.msra.mxu0 0.0
        %1646 = vmatprep.subr.mxu0 0.0
        %1647 = vmatpush2.msra.mxu0 0.0
        %1648 = vmatprep.subr.mxu0 0.0
        %1649 = vmatpush2.msra.mxu0 0.0
        %1650 = vmatprep.subr.mxu0 0.0
        %1651 = vmatpush2.msra.mxu0 0.0
        %1652 = vmatprep.subr.mxu0 0.0
        %1653 = vmatpush2.msra.mxu0 0.0
        %1654 = vmatprep.subr.mxu0 0.0
        %1655 = vmatpush2.msra.mxu0 0.0
        %1656 = vmatprep.subr.mxu0 0.0
        %1657 = vmatpush2.msra.mxu0 0.0
        %1658 = vmatprep.subr.mxu0 0.0
        %1659 = vmatpush2.msra.mxu0 0.0
        %1660 = vmatprep.subr.mxu0 0.0
        %1661 = vmatpush2.msra.mxu0 0.0
        %1662 = vmatprep.subr.mxu0 0.0
        %1663 = vmatpush2.msra.mxu0 0.0
        %1664 = vmatprep.mubr.f32.mxu0 0.0
        %1665 = vmatmul.mubr.f32.gmra.mxu0 %v1145
        %v1666 = vpop.f32.mrf.mxu0
        %v1667 = vadd.f32 0.0, %v1666
        %v1668 = vpop.f32.mrf.mxu0
        %1669 = vmatprep.mubr.f32.mxu0 0.0
        %1670 = vmatmul.mubr.f32.gmra.mxu0 %v1148
        %v1671 = vpop.f32.mrf.mxu0
        %v1672 = vadd.f32 0.0, %v1671
        %v1673 = vpop.f32.mrf.mxu0
        %1674 = vdwg.mxu0
        %1675 = vmatprep.subr.mxu0 0.0
        %1676 = vmatpush1.msra.mxu0 0.0
        %1677 = vmatprep.subr.mxu0 0.0
        %1678 = vmatpush1.msra.mxu0 0.0
        %1679 = vmatprep.subr.mxu0 0.0
        %1680 = vmatpush1.msra.mxu0 0.0
        %1681 = vmatprep.subr.mxu0 0.0
        %1682 = vmatpush1.msra.mxu0 0.0
        %1683 = vmatprep.subr.mxu0 0.0
        %1684 = vmatpush1.msra.mxu0 0.0
        %1685 = vmatprep.subr.mxu0 0.0
        %1686 = vmatpush1.msra.mxu0 0.0
        %1687 = vmatprep.subr.mxu0 0.0
        %1688 = vmatpush1.msra.mxu0 0.0
        %1689 = vmatprep.subr.mxu0 0.0
        %1690 = vmatpush1.msra.mxu0 0.0
        %1691 = vmatprep.subr.mxu0 0.0
        %1692 = vmatpush1.msra.mxu0 0.0
        %1693 = vmatprep.subr.mxu0 0.0
        %1694 = vmatpush1.msra.mxu0 0.0
        %1695 = vmatprep.subr.mxu0 0.0
        %1696 = vmatpush1.msra.mxu0 0.0
        %1697 = vmatprep.subr.mxu0 0.0
        %1698 = vmatpush1.msra.mxu0 0.0
        %1699 = vmatprep.subr.mxu0 0.0
        %1700 = vmatpush1.msra.mxu0 0.0
        %1701 = vmatprep.subr.mxu0 0.0
        %1702 = vmatpush1.msra.mxu0 0.0
        %1703 = vmatprep.subr.mxu0 0.0
        %1704 = vmatpush1.msra.mxu0 %v1135
        %1705 = vmatprep.subr.mxu0 0.0
        %1706 = vmatpush1.msra.mxu0 %v1129
        %1707 = vmatprep.subr.mxu0 0.0
        %1708 = vmatpush2.msra.mxu0 0.0
        %1709 = vmatprep.subr.mxu0 0.0
        %1710 = vmatpush2.msra.mxu0 0.0
        %1711 = vmatprep.subr.mxu0 0.0
        %1712 = vmatpush2.msra.mxu0 0.0
        %1713 = vmatprep.subr.mxu0 0.0
        %1714 = vmatpush2.msra.mxu0 0.0
        %1715 = vmatprep.subr.mxu0 0.0
        %1716 = vmatpush2.msra.mxu0 0.0
        %1717 = vmatprep.subr.mxu0 0.0
        %1718 = vmatpush2.msra.mxu0 0.0
        %1719 = vmatprep.subr.mxu0 0.0
        %1720 = vmatpush2.msra.mxu0 0.0
        %1721 = vmatprep.subr.mxu0 0.0
        %1722 = vmatpush2.msra.mxu0 0.0
        %1723 = vmatprep.subr.mxu0 0.0
        %1724 = vmatpush2.msra.mxu0 0.0
        %1725 = vmatprep.subr.mxu0 0.0
        %1726 = vmatpush2.msra.mxu0 0.0
        %1727 = vmatprep.subr.mxu0 0.0
        %1728 = vmatpush2.msra.mxu0 0.0
        %1729 = vmatprep.subr.mxu0 0.0
        %1730 = vmatpush2.msra.mxu0 0.0
        %1731 = vmatprep.subr.mxu0 0.0
        %1732 = vmatpush2.msra.mxu0 0.0
        %1733 = vmatprep.subr.mxu0 0.0
        %1734 = vmatpush2.msra.mxu0 0.0
        %1735 = vmatprep.subr.mxu0 0.0
        %1736 = vmatpush2.msra.mxu0 0.0
        %1737 = vmatprep.subr.mxu0 0.0
        %1738 = vmatpush2.msra.mxu0 0.0
        %1739 = vmatprep.mubr.f32.mxu0 0.0
        %1740 = vmatmul.mubr.f32.gmra.mxu0 %v1145
        %v1741 = vpop.f32.mrf.mxu0
        %v1742 = vadd.f32 0.0, %v1741
        %v1743 = vpop.f32.mrf.mxu0
        %1744 = vmatprep.mubr.f32.mxu0 0.0
        %1745 = vmatmul.mubr.f32.gmra.mxu0 %v1148
        %v1746 = vpop.f32.mrf.mxu0
        %v1747 = vadd.f32 0.0, %v1746
        %v1748 = vpop.f32.mrf.mxu0
        %1749 = vdwg.mxu0
        %v1751 = vsel %vm1143, %v1141, 0
        %v1754 = vsel %vm1143, %v1142, 0
        %1756 = vmatprep.subr.mxu0 0.0
        %1757 = vmatpush1.msra.mxu0 0.0
        %1758 = vmatprep.subr.mxu0 0.0
        %1759 = vmatpush1.msra.mxu0 0.0
        %1760 = vmatprep.subr.mxu0 0.0
        %1761 = vmatpush1.msra.mxu0 0.0
        %1762 = vmatprep.subr.mxu0 0.0
        %1763 = vmatpush1.msra.mxu0 0.0
        %1764 = vmatprep.subr.mxu0 0.0
        %1765 = vmatpush1.msra.mxu0 0.0
        %1766 = vmatprep.subr.mxu0 0.0
        %1767 = vmatpush1.msra.mxu0 0.0
        %1768 = vmatprep.subr.mxu0 0.0
        %1769 = vmatpush1.msra.mxu0 0.0
        %1770 = vmatprep.subr.mxu0 0.0
        %1771 = vmatpush1.msra.mxu0 0.0
        %1772 = vmatprep.subr.mxu0 0.0
        %1773 = vmatpush1.msra.mxu0 0.0
        %1774 = vmatprep.subr.mxu0 0.0
        %1775 = vmatpush1.msra.mxu0 0.0
        %1776 = vmatprep.subr.mxu0 0.0
        %1777 = vmatpush1.msra.mxu0 0.0
        %1778 = vmatprep.subr.mxu0 0.0
        %1779 = vmatpush1.msra.mxu0 0.0
        %1780 = vmatprep.subr.mxu0 0.0
        %1781 = vmatpush1.msra.mxu0 0.0
        %1782 = vmatprep.subr.mxu0 0.0
        %1783 = vmatpush1.msra.mxu0 0.0
        %1784 = vmatprep.subr.mxu0 0.0
        %1785 = vmatpush1.msra.mxu0 %v1053
        %1786 = vmatprep.subr.mxu0 0.0
        %1787 = vmatpush1.msra.mxu0 %v1047
        %1788 = vmatprep.subr.mxu0 0.0
        %1789 = vmatpush2.msra.mxu0 0.0
        %1790 = vmatprep.subr.mxu0 0.0
        %1791 = vmatpush2.msra.mxu0 0.0
        %1792 = vmatprep.subr.mxu0 0.0
        %1793 = vmatpush2.msra.mxu0 0.0
        %1794 = vmatprep.subr.mxu0 0.0
        %1795 = vmatpush2.msra.mxu0 0.0
        %1796 = vmatprep.subr.mxu0 0.0
        %1797 = vmatpush2.msra.mxu0 0.0
        %1798 = vmatprep.subr.mxu0 0.0
        %1799 = vmatpush2.msra.mxu0 0.0
        %1800 = vmatprep.subr.mxu0 0.0
        %1801 = vmatpush2.msra.mxu0 0.0
        %1802 = vmatprep.subr.mxu0 0.0
        %1803 = vmatpush2.msra.mxu0 0.0
        %1804 = vmatprep.subr.mxu0 0.0
        %1805 = vmatpush2.msra.mxu0 0.0
        %1806 = vmatprep.subr.mxu0 0.0
        %1807 = vmatpush2.msra.mxu0 0.0
        %1808 = vmatprep.subr.mxu0 0.0
        %1809 = vmatpush2.msra.mxu0 0.0
        %1810 = vmatprep.subr.mxu0 0.0
        %1811 = vmatpush2.msra.mxu0 0.0
        %1812 = vmatprep.subr.mxu0 0.0
        %1813 = vmatpush2.msra.mxu0 0.0
        %1814 = vmatprep.subr.mxu0 0.0
        %1815 = vmatpush2.msra.mxu0 0.0
        %1816 = vmatprep.subr.mxu0 0.0
        %1817 = vmatpush2.msra.mxu0 0.0
        %1818 = vmatprep.subr.mxu0 0.0
        %1819 = vmatpush2.msra.mxu0 0.0
        %1820 = vmatprep.mubr.f32.mxu0 0.0
        %1821 = vmatmul.mubr.f32.gmra.mxu0 %v1751
        %v1822 = vpop.f32.mrf.mxu0
        %v1823 = vadd.f32 0.0, %v1822
        %v1824 = vpop.f32.mrf.mxu0
        %1825 = vmatprep.mubr.f32.mxu0 0.0
        %1826 = vmatmul.mubr.f32.gmra.mxu0 %v1754
        %v1827 = vpop.f32.mrf.mxu0
        %v1828 = vadd.f32 0.0, %v1827
        %v1829 = vpop.f32.mrf.mxu0
        %1830 = vdwg.mxu0
        %1831 = vmatprep.subr.mxu0 0.0
        %1832 = vmatpush1.msra.mxu0 0.0
        %1833 = vmatprep.subr.mxu0 0.0
        %1834 = vmatpush1.msra.mxu0 0.0
        %1835 = vmatprep.subr.mxu0 0.0
        %1836 = vmatpush1.msra.mxu0 0.0
        %1837 = vmatprep.subr.mxu0 0.0
        %1838 = vmatpush1.msra.mxu0 0.0
        %1839 = vmatprep.subr.mxu0 0.0
        %1840 = vmatpush1.msra.mxu0 0.0
        %1841 = vmatprep.subr.mxu0 0.0
        %1842 = vmatpush1.msra.mxu0 0.0
        %1843 = vmatprep.subr.mxu0 0.0
        %1844 = vmatpush1.msra.mxu0 0.0
        %1845 = vmatprep.subr.mxu0 0.0
        %1846 = vmatpush1.msra.mxu0 0.0
        %1847 = vmatprep.subr.mxu0 0.0
        %1848 = vmatpush1.msra.mxu0 0.0
        %1849 = vmatprep.subr.mxu0 0.0
        %1850 = vmatpush1.msra.mxu0 0.0
        %1851 = vmatprep.subr.mxu0 0.0
        %1852 = vmatpush1.msra.mxu0 0.0
        %1853 = vmatprep.subr.mxu0 0.0
        %1854 = vmatpush1.msra.mxu0 0.0
        %1855 = vmatprep.subr.mxu0 0.0
        %1856 = vmatpush1.msra.mxu0 0.0
        %1857 = vmatprep.subr.mxu0 0.0
        %1858 = vmatpush1.msra.mxu0 0.0
        %1859 = vmatprep.subr.mxu0 0.0
        %1860 = vmatpush1.msra.mxu0 %v1065
        %1861 = vmatprep.subr.mxu0 0.0
        %1862 = vmatpush1.msra.mxu0 %v1059
        %1863 = vmatprep.subr.mxu0 0.0
        %1864 = vmatpush2.msra.mxu0 0.0
        %1865 = vmatprep.subr.mxu0 0.0
        %1866 = vmatpush2.msra.mxu0 0.0
        %1867 = vmatprep.subr.mxu0 0.0
        %1868 = vmatpush2.msra.mxu0 0.0
        %1869 = vmatprep.subr.mxu0 0.0
        %1870 = vmatpush2.msra.mxu0 0.0
        %1871 = vmatprep.subr.mxu0 0.0
        %1872 = vmatpush2.msra.mxu0 0.0
        %1873 = vmatprep.subr.mxu0 0.0
        %1874 = vmatpush2.msra.mxu0 0.0
        %1875 = vmatprep.subr.mxu0 0.0
        %1876 = vmatpush2.msra.mxu0 0.0
        %1877 = vmatprep.subr.mxu0 0.0
        %1878 = vmatpush2.msra.mxu0 0.0
        %1879 = vmatprep.subr.mxu0 0.0
        %1880 = vmatpush2.msra.mxu0 0.0
        %1881 = vmatprep.subr.mxu0 0.0
        %1882 = vmatpush2.msra.mxu0 0.0
        %1883 = vmatprep.subr.mxu0 0.0
        %1884 = vmatpush2.msra.mxu0 0.0
        %1885 = vmatprep.subr.mxu0 0.0
        %1886 = vmatpush2.msra.mxu0 0.0
        %1887 = vmatprep.subr.mxu0 0.0
        %1888 = vmatpush2.msra.mxu0 0.0
        %1889 = vmatprep.subr.mxu0 0.0
        %1890 = vmatpush2.msra.mxu0 0.0
        %1891 = vmatprep.subr.mxu0 0.0
        %1892 = vmatpush2.msra.mxu0 0.0
        %1893 = vmatprep.subr.mxu0 0.0
        %1894 = vmatpush2.msra.mxu0 0.0
        %1895 = vmatprep.mubr.f32.mxu0 0.0
        %1896 = vmatmul.mubr.f32.gmra.mxu0 %v1751
        %v1897 = vpop.f32.mrf.mxu0
        %v1898 = vadd.f32 0.0, %v1897
        %v1899 = vpop.f32.mrf.mxu0
        %1900 = vmatprep.mubr.f32.mxu0 0.0
        %1901 = vmatmul.mubr.f32.gmra.mxu0 %v1754
        %v1902 = vpop.f32.mrf.mxu0
        %v1903 = vadd.f32 0.0, %v1902
        %v1904 = vpop.f32.mrf.mxu0
        %1905 = vdwg.mxu0
        %1906 = vmatprep.subr.mxu0 0.0
        %1907 = vmatpush1.msra.mxu0 0.0
        %1908 = vmatprep.subr.mxu0 0.0
        %1909 = vmatpush1.msra.mxu0 0.0
        %1910 = vmatprep.subr.mxu0 0.0
        %1911 = vmatpush1.msra.mxu0 0.0
        %1912 = vmatprep.subr.mxu0 0.0
        %1913 = vmatpush1.msra.mxu0 0.0
        %1914 = vmatprep.subr.mxu0 0.0
        %1915 = vmatpush1.msra.mxu0 0.0
        %1916 = vmatprep.subr.mxu0 0.0
        %1917 = vmatpush1.msra.mxu0 0.0
        %1918 = vmatprep.subr.mxu0 0.0
        %1919 = vmatpush1.msra.mxu0 0.0
        %1920 = vmatprep.subr.mxu0 0.0
        %1921 = vmatpush1.msra.mxu0 0.0
        %1922 = vmatprep.subr.mxu0 0.0
        %1923 = vmatpush1.msra.mxu0 0.0
        %1924 = vmatprep.subr.mxu0 0.0
        %1925 = vmatpush1.msra.mxu0 0.0
        %1926 = vmatprep.subr.mxu0 0.0
        %1927 = vmatpush1.msra.mxu0 0.0
        %1928 = vmatprep.subr.mxu0 0.0
        %1929 = vmatpush1.msra.mxu0 0.0
        %1930 = vmatprep.subr.mxu0 0.0
        %1931 = vmatpush1.msra.mxu0 0.0
        %1932 = vmatprep.subr.mxu0 0.0
        %1933 = vmatpush1.msra.mxu0 0.0
        %1934 = vmatprep.subr.mxu0 0.0
        %1935 = vmatpush1.msra.mxu0 %v1077
        %1936 = vmatprep.subr.mxu0 0.0
        %1937 = vmatpush1.msra.mxu0 %v1071
        %1938 = vmatprep.subr.mxu0 0.0
        %1939 = vmatpush2.msra.mxu0 0.0
        %1940 = vmatprep.subr.mxu0 0.0
        %1941 = vmatpush2.msra.mxu0 0.0
        %1942 = vmatprep.subr.mxu0 0.0
        %1943 = vmatpush2.msra.mxu0 0.0
        %1944 = vmatprep.subr.mxu0 0.0
        %1945 = vmatpush2.msra.mxu0 0.0
        %1946 = vmatprep.subr.mxu0 0.0
        %1947 = vmatpush2.msra.mxu0 0.0
        %1948 = vmatprep.subr.mxu0 0.0
        %1949 = vmatpush2.msra.mxu0 0.0
        %1950 = vmatprep.subr.mxu0 0.0
        %1951 = vmatpush2.msra.mxu0 0.0
        %1952 = vmatprep.subr.mxu0 0.0
        %1953 = vmatpush2.msra.mxu0 0.0
        %1954 = vmatprep.subr.mxu0 0.0
        %1955 = vmatpush2.msra.mxu0 0.0
        %1956 = vmatprep.subr.mxu0 0.0
        %1957 = vmatpush2.msra.mxu0 0.0
        %1958 = vmatprep.subr.mxu0 0.0
        %1959 = vmatpush2.msra.mxu0 0.0
        %1960 = vmatprep.subr.mxu0 0.0
        %1961 = vmatpush2.msra.mxu0 0.0
        %1962 = vmatprep.subr.mxu0 0.0
        %1963 = vmatpush2.msra.mxu0 0.0
        %1964 = vmatprep.subr.mxu0 0.0
        %1965 = vmatpush2.msra.mxu0 0.0
        %1966 = vmatprep.subr.mxu0 0.0
        %1967 = vmatpush2.msra.mxu0 0.0
        %1968 = vmatprep.subr.mxu0 0.0
        %1969 = vmatpush2.msra.mxu0 0.0
        %1970 = vmatprep.mubr.f32.mxu0 0.0
        %1971 = vmatmul.mubr.f32.gmra.mxu0 %v1751
        %v1972 = vpop.f32.mrf.mxu0
        %v1973 = vadd.f32 0.0, %v1972
        %v1974 = vpop.f32.mrf.mxu0
        %1975 = vmatprep.mubr.f32.mxu0 0.0
        %1976 = vmatmul.mubr.f32.gmra.mxu0 %v1754
        %v1977 = vpop.f32.mrf.mxu0
        %v1978 = vadd.f32 0.0, %v1977
        %v1979 = vpop.f32.mrf.mxu0
        %1980 = vdwg.mxu0
        %1981 = vmatprep.subr.mxu0 0.0
        %1982 = vmatpush1.msra.mxu0 0.0
        %1983 = vmatprep.subr.mxu0 0.0
        %1984 = vmatpush1.msra.mxu0 0.0
        %1985 = vmatprep.subr.mxu0 0.0
        %1986 = vmatpush1.msra.mxu0 0.0
        %1987 = vmatprep.subr.mxu0 0.0
        %1988 = vmatpush1.msra.mxu0 0.0
        %1989 = vmatprep.subr.mxu0 0.0
        %1990 = vmatpush1.msra.mxu0 0.0
        %1991 = vmatprep.subr.mxu0 0.0
        %1992 = vmatpush1.msra.mxu0 0.0
        %1993 = vmatprep.subr.mxu0 0.0
        %1994 = vmatpush1.msra.mxu0 0.0
        %1995 = vmatprep.subr.mxu0 0.0
        %1996 = vmatpush1.msra.mxu0 0.0
        %1997 = vmatprep.subr.mxu0 0.0
        %1998 = vmatpush1.msra.mxu0 0.0
        %1999 = vmatprep.subr.mxu0 0.0
        %2000 = vmatpush1.msra.mxu0 0.0
        %2001 = vmatprep.subr.mxu0 0.0
        %2002 = vmatpush1.msra.mxu0 0.0
        %2003 = vmatprep.subr.mxu0 0.0
        %2004 = vmatpush1.msra.mxu0 0.0
        %2005 = vmatprep.subr.mxu0 0.0
        %2006 = vmatpush1.msra.mxu0 0.0
        %2007 = vmatprep.subr.mxu0 0.0
        %2008 = vmatpush1.msra.mxu0 0.0
        %2009 = vmatprep.subr.mxu0 0.0
        %2010 = vmatpush1.msra.mxu0 %v1089
        %2011 = vmatprep.subr.mxu0 0.0
        %2012 = vmatpush1.msra.mxu0 %v1083
        %2013 = vmatprep.subr.mxu0 0.0
        %2014 = vmatpush2.msra.mxu0 0.0
        %2015 = vmatprep.subr.mxu0 0.0
        %2016 = vmatpush2.msra.mxu0 0.0
        %2017 = vmatprep.subr.mxu0 0.0
        %2018 = vmatpush2.msra.mxu0 0.0
        %2019 = vmatprep.subr.mxu0 0.0
        %2020 = vmatpush2.msra.mxu0 0.0
        %2021 = vmatprep.subr.mxu0 0.0
        %2022 = vmatpush2.msra.mxu0 0.0
        %2023 = vmatprep.subr.mxu0 0.0
        %2024 = vmatpush2.msra.mxu0 0.0
        %2025 = vmatprep.subr.mxu0 0.0
        %2026 = vmatpush2.msra.mxu0 0.0
        %2027 = vmatprep.subr.mxu0 0.0
        %2028 = vmatpush2.msra.mxu0 0.0
        %2029 = vmatprep.subr.mxu0 0.0
        %2030 = vmatpush2.msra.mxu0 0.0
        %2031 = vmatprep.subr.mxu0 0.0
        %2032 = vmatpush2.msra.mxu0 0.0
        %2033 = vmatprep.subr.mxu0 0.0
        %2034 = vmatpush2.msra.mxu0 0.0
        %2035 = vmatprep.subr.mxu0 0.0
        %2036 = vmatpush2.msra.mxu0 0.0
        %2037 = vmatprep.subr.mxu0 0.0
        %2038 = vmatpush2.msra.mxu0 0.0
        %2039 = vmatprep.subr.mxu0 0.0
        %2040 = vmatpush2.msra.mxu0 0.0
        %2041 = vmatprep.subr.mxu0 0.0
        %2042 = vmatpush2.msra.mxu0 0.0
        %2043 = vmatprep.subr.mxu0 0.0
        %2044 = vmatpush2.msra.mxu0 0.0
        %2045 = vmatprep.mubr.f32.mxu0 0.0
        %2046 = vmatmul.mubr.f32.gmra.mxu0 %v1751
        %v2047 = vpop.f32.mrf.mxu0
        %v2048 = vadd.f32 0.0, %v2047
        %v2049 = vpop.f32.mrf.mxu0
        %2050 = vmatprep.mubr.f32.mxu0 0.0
        %2051 = vmatmul.mubr.f32.gmra.mxu0 %v1754
        %v2052 = vpop.f32.mrf.mxu0
        %v2053 = vadd.f32 0.0, %v2052
        %v2054 = vpop.f32.mrf.mxu0
        %2055 = vdwg.mxu0
        %2056 = vmatprep.subr.mxu0 0.0
        %2057 = vmatpush1.msra.mxu0 0.0
        %2058 = vmatprep.subr.mxu0 0.0
        %2059 = vmatpush1.msra.mxu0 0.0
        %2060 = vmatprep.subr.mxu0 0.0
        %2061 = vmatpush1.msra.mxu0 0.0
        %2062 = vmatprep.subr.mxu0 0.0
        %2063 = vmatpush1.msra.mxu0 0.0
        %2064 = vmatprep.subr.mxu0 0.0
        %2065 = vmatpush1.msra.mxu0 0.0
        %2066 = vmatprep.subr.mxu0 0.0
        %2067 = vmatpush1.msra.mxu0 0.0
        %2068 = vmatprep.subr.mxu0 0.0
        %2069 = vmatpush1.msra.mxu0 0.0
        %2070 = vmatprep.subr.mxu0 0.0
        %2071 = vmatpush1.msra.mxu0 0.0
        %2072 = vmatprep.subr.mxu0 0.0
        %2073 = vmatpush1.msra.mxu0 0.0
        %2074 = vmatprep.subr.mxu0 0.0
        %2075 = vmatpush1.msra.mxu0 0.0
        %2076 = vmatprep.subr.mxu0 0.0
        %2077 = vmatpush1.msra.mxu0 0.0
        %2078 = vmatprep.subr.mxu0 0.0
        %2079 = vmatpush1.msra.mxu0 0.0
        %2080 = vmatprep.subr.mxu0 0.0
        %2081 = vmatpush1.msra.mxu0 0.0
        %2082 = vmatprep.subr.mxu0 0.0
        %2083 = vmatpush1.msra.mxu0 0.0
        %2084 = vmatprep.subr.mxu0 0.0
        %2085 = vmatpush1.msra.mxu0 %v1101
        %2086 = vmatprep.subr.mxu0 0.0
        %2087 = vmatpush1.msra.mxu0 %v1095
        %2088 = vmatprep.subr.mxu0 0.0
        %2089 = vmatpush2.msra.mxu0 0.0
        %2090 = vmatprep.subr.mxu0 0.0
        %2091 = vmatpush2.msra.mxu0 0.0
        %2092 = vmatprep.subr.mxu0 0.0
        %2093 = vmatpush2.msra.mxu0 0.0
        %2094 = vmatprep.subr.mxu0 0.0
        %2095 = vmatpush2.msra.mxu0 0.0
        %2096 = vmatprep.subr.mxu0 0.0
        %2097 = vmatpush2.msra.mxu0 0.0
        %2098 = vmatprep.subr.mxu0 0.0
        %2099 = vmatpush2.msra.mxu0 0.0
        %2100 = vmatprep.subr.mxu0 0.0
        %2101 = vmatpush2.msra.mxu0 0.0
        %2102 = vmatprep.subr.mxu0 0.0
        %2103 = vmatpush2.msra.mxu0 0.0
        %2104 = vmatprep.subr.mxu0 0.0
        %2105 = vmatpush2.msra.mxu0 0.0
        %2106 = vmatprep.subr.mxu0 0.0
        %2107 = vmatpush2.msra.mxu0 0.0
        %2108 = vmatprep.subr.mxu0 0.0
        %2109 = vmatpush2.msra.mxu0 0.0
        %2110 = vmatprep.subr.mxu0 0.0
        %2111 = vmatpush2.msra.mxu0 0.0
        %2112 = vmatprep.subr.mxu0 0.0
        %2113 = vmatpush2.msra.mxu0 0.0
        %2114 = vmatprep.subr.mxu0 0.0
        %2115 = vmatpush2.msra.mxu0 0.0
        %2116 = vmatprep.subr.mxu0 0.0
        %2117 = vmatpush2.msra.mxu0 0.0
        %2118 = vmatprep.subr.mxu0 0.0
        %2119 = vmatpush2.msra.mxu0 0.0
        %2120 = vmatprep.mubr.f32.mxu0 0.0
        %2121 = vmatmul.mubr.f32.gmra.mxu0 %v1751
        %v2122 = vpop.f32.mrf.mxu0
        %v2123 = vadd.f32 0.0, %v2122
        %v2124 = vpop.f32.mrf.mxu0
        %2125 = vmatprep.mubr.f32.mxu0 0.0
        %2126 = vmatmul.mubr.f32.gmra.mxu0 %v1754
        %v2127 = vpop.f32.mrf.mxu0
        %v2128 = vadd.f32 0.0, %v2127
        %v2129 = vpop.f32.mrf.mxu0
        %2130 = vdwg.mxu0
        %2131 = vmatprep.subr.mxu0 0.0
        %2132 = vmatpush1.msra.mxu0 0.0
        %2133 = vmatprep.subr.mxu0 0.0
        %2134 = vmatpush1.msra.mxu0 0.0
        %2135 = vmatprep.subr.mxu0 0.0
        %2136 = vmatpush1.msra.mxu0 0.0
        %2137 = vmatprep.subr.mxu0 0.0
        %2138 = vmatpush1.msra.mxu0 0.0
        %2139 = vmatprep.subr.mxu0 0.0
        %2140 = vmatpush1.msra.mxu0 0.0
        %2141 = vmatprep.subr.mxu0 0.0
        %2142 = vmatpush1.msra.mxu0 0.0
        %2143 = vmatprep.subr.mxu0 0.0
        %2144 = vmatpush1.msra.mxu0 0.0
        %2145 = vmatprep.subr.mxu0 0.0
        %2146 = vmatpush1.msra.mxu0 0.0
        %2147 = vmatprep.subr.mxu0 0.0
        %2148 = vmatpush1.msra.mxu0 0.0
        %2149 = vmatprep.subr.mxu0 0.0
        %2150 = vmatpush1.msra.mxu0 0.0
        %2151 = vmatprep.subr.mxu0 0.0
        %2152 = vmatpush1.msra.mxu0 0.0
        %2153 = vmatprep.subr.mxu0 0.0
        %2154 = vmatpush1.msra.mxu0 0.0
        %2155 = vmatprep.subr.mxu0 0.0
        %2156 = vmatpush1.msra.mxu0 0.0
        %2157 = vmatprep.subr.mxu0 0.0
        %2158 = vmatpush1.msra.mxu0 0.0
        %2159 = vmatprep.subr.mxu0 0.0
        %2160 = vmatpush1.msra.mxu0 %v1113
        %2161 = vmatprep.subr.mxu0 0.0
        %2162 = vmatpush1.msra.mxu0 %v1107
        %2163 = vmatprep.subr.mxu0 0.0
        %2164 = vmatpush2.msra.mxu0 0.0
        %2165 = vmatprep.subr.mxu0 0.0
        %2166 = vmatpush2.msra.mxu0 0.0
        %2167 = vmatprep.subr.mxu0 0.0
        %2168 = vmatpush2.msra.mxu0 0.0
        %2169 = vmatprep.subr.mxu0 0.0
        %2170 = vmatpush2.msra.mxu0 0.0
        %2171 = vmatprep.subr.mxu0 0.0
        %2172 = vmatpush2.msra.mxu0 0.0
        %2173 = vmatprep.subr.mxu0 0.0
        %2174 = vmatpush2.msra.mxu0 0.0
        %2175 = vmatprep.subr.mxu0 0.0
        %2176 = vmatpush2.msra.mxu0 0.0
        %2177 = vmatprep.subr.mxu0 0.0
        %2178 = vmatpush2.msra.mxu0 0.0
        %2179 = vmatprep.subr.mxu0 0.0
        %2180 = vmatpush2.msra.mxu0 0.0
        %2181 = vmatprep.subr.mxu0 0.0
        %2182 = vmatpush2.msra.mxu0 0.0
        %2183 = vmatprep.subr.mxu0 0.0
        %2184 = vmatpush2.msra.mxu0 0.0
        %2185 = vmatprep.subr.mxu0 0.0
        %2186 = vmatpush2.msra.mxu0 0.0
        %2187 = vmatprep.subr.mxu0 0.0
        %2188 = vmatpush2.msra.mxu0 0.0
        %2189 = vmatprep.subr.mxu0 0.0
        %2190 = vmatpush2.msra.mxu0 0.0
        %2191 = vmatprep.subr.mxu0 0.0
        %2192 = vmatpush2.msra.mxu0 0.0
        %2193 = vmatprep.subr.mxu0 0.0
        %2194 = vmatpush2.msra.mxu0 0.0
        %2195 = vmatprep.mubr.f32.mxu0 0.0
        %2196 = vmatmul.mubr.f32.gmra.mxu0 %v1751
        %v2197 = vpop.f32.mrf.mxu0
        %v2198 = vadd.f32 0.0, %v2197
        %v2199 = vpop.f32.mrf.mxu0
        %2200 = vmatprep.mubr.f32.mxu0 0.0
        %2201 = vmatmul.mubr.f32.gmra.mxu0 %v1754
        %v2202 = vpop.f32.mrf.mxu0
        %v2203 = vadd.f32 0.0, %v2202
        %v2204 = vpop.f32.mrf.mxu0
        %2205 = vdwg.mxu0
        %2206 = vmatprep.subr.mxu0 0.0
        %2207 = vmatpush1.msra.mxu0 0.0
        %2208 = vmatprep.subr.mxu0 0.0
        %2209 = vmatpush1.msra.mxu0 0.0
        %2210 = vmatprep.subr.mxu0 0.0
        %2211 = vmatpush1.msra.mxu0 0.0
        %2212 = vmatprep.subr.mxu0 0.0
        %2213 = vmatpush1.msra.mxu0 0.0
        %2214 = vmatprep.subr.mxu0 0.0
        %2215 = vmatpush1.msra.mxu0 0.0
        %2216 = vmatprep.subr.mxu0 0.0
        %2217 = vmatpush1.msra.mxu0 0.0
        %2218 = vmatprep.subr.mxu0 0.0
        %2219 = vmatpush1.msra.mxu0 0.0
        %2220 = vmatprep.subr.mxu0 0.0
        %2221 = vmatpush1.msra.mxu0 0.0
        %2222 = vmatprep.subr.mxu0 0.0
        %2223 = vmatpush1.msra.mxu0 0.0
        %2224 = vmatprep.subr.mxu0 0.0
        %2225 = vmatpush1.msra.mxu0 0.0
        %2226 = vmatprep.subr.mxu0 0.0
        %2227 = vmatpush1.msra.mxu0 0.0
        %2228 = vmatprep.subr.mxu0 0.0
        %2229 = vmatpush1.msra.mxu0 0.0
        %2230 = vmatprep.subr.mxu0 0.0
        %2231 = vmatpush1.msra.mxu0 0.0
        %2232 = vmatprep.subr.mxu0 0.0
        %2233 = vmatpush1.msra.mxu0 0.0
        %2234 = vmatprep.subr.mxu0 0.0
        %2235 = vmatpush1.msra.mxu0 %v1125
        %2236 = vmatprep.subr.mxu0 0.0
        %2237 = vmatpush1.msra.mxu0 %v1119
        %2238 = vmatprep.subr.mxu0 0.0
        %2239 = vmatpush2.msra.mxu0 0.0
        %2240 = vmatprep.subr.mxu0 0.0
        %2241 = vmatpush2.msra.mxu0 0.0
        %2242 = vmatprep.subr.mxu0 0.0
        %2243 = vmatpush2.msra.mxu0 0.0
        %2244 = vmatprep.subr.mxu0 0.0
        %2245 = vmatpush2.msra.mxu0 0.0
        %2246 = vmatprep.subr.mxu0 0.0
        %2247 = vmatpush2.msra.mxu0 0.0
        %2248 = vmatprep.subr.mxu0 0.0
        %2249 = vmatpush2.msra.mxu0 0.0
        %2250 = vmatprep.subr.mxu0 0.0
        %2251 = vmatpush2.msra.mxu0 0.0
        %2252 = vmatprep.subr.mxu0 0.0
        %2253 = vmatpush2.msra.mxu0 0.0
        %2254 = vmatprep.subr.mxu0 0.0
        %2255 = vmatpush2.msra.mxu0 0.0
        %2256 = vmatprep.subr.mxu0 0.0
        %2257 = vmatpush2.msra.mxu0 0.0
        %2258 = vmatprep.subr.mxu0 0.0
        %2259 = vmatpush2.msra.mxu0 0.0
        %2260 = vmatprep.subr.mxu0 0.0
        %2261 = vmatpush2.msra.mxu0 0.0
        %2262 = vmatprep.subr.mxu0 0.0
        %2263 = vmatpush2.msra.mxu0 0.0
        %2264 = vmatprep.subr.mxu0 0.0
        %2265 = vmatpush2.msra.mxu0 0.0
        %2266 = vmatprep.subr.mxu0 0.0
        %2267 = vmatpush2.msra.mxu0 0.0
        %2268 = vmatprep.subr.mxu0 0.0
        %2269 = vmatpush2.msra.mxu0 0.0
        %2270 = vmatprep.mubr.f32.mxu0 0.0
        %2271 = vmatmul.mubr.f32.gmra.mxu0 %v1751
        %v2272 = vpop.f32.mrf.mxu0
        %v2273 = vadd.f32 0.0, %v2272
        %v2274 = vpop.f32.mrf.mxu0
        %2275 = vmatprep.mubr.f32.mxu0 0.0
        %2276 = vmatmul.mubr.f32.gmra.mxu0 %v1754
        %v2277 = vpop.f32.mrf.mxu0
        %v2278 = vadd.f32 0.0, %v2277
        %v2279 = vpop.f32.mrf.mxu0
        %2280 = vdwg.mxu0
        %2281 = vmatprep.subr.mxu0 0.0
        %2282 = vmatpush1.msra.mxu0 0.0
        %2283 = vmatprep.subr.mxu0 0.0
        %2284 = vmatpush1.msra.mxu0 0.0
        %2285 = vmatprep.subr.mxu0 0.0
        %2286 = vmatpush1.msra.mxu0 0.0
        %2287 = vmatprep.subr.mxu0 0.0
        %2288 = vmatpush1.msra.mxu0 0.0
        %2289 = vmatprep.subr.mxu0 0.0
        %2290 = vmatpush1.msra.mxu0 0.0
        %2291 = vmatprep.subr.mxu0 0.0
        %2292 = vmatpush1.msra.mxu0 0.0
        %2293 = vmatprep.subr.mxu0 0.0
        %2294 = vmatpush1.msra.mxu0 0.0
        %2295 = vmatprep.subr.mxu0 0.0
        %2296 = vmatpush1.msra.mxu0 0.0
        %2297 = vmatprep.subr.mxu0 0.0
        %2298 = vmatpush1.msra.mxu0 0.0
        %2299 = vmatprep.subr.mxu0 0.0
        %2300 = vmatpush1.msra.mxu0 0.0
        %2301 = vmatprep.subr.mxu0 0.0
        %2302 = vmatpush1.msra.mxu0 0.0
        %2303 = vmatprep.subr.mxu0 0.0
        %2304 = vmatpush1.msra.mxu0 0.0
        %2305 = vmatprep.subr.mxu0 0.0
        %2306 = vmatpush1.msra.mxu0 0.0
        %2307 = vmatprep.subr.mxu0 0.0
        %2308 = vmatpush1.msra.mxu0 0.0
        %2309 = vmatprep.subr.mxu0 0.0
        %2310 = vmatpush1.msra.mxu0 %v1137
        %2311 = vmatprep.subr.mxu0 0.0
        %2312 = vmatpush1.msra.mxu0 %v1131
        %2313 = vmatprep.subr.mxu0 0.0
        %2314 = vmatpush2.msra.mxu0 0.0
        %2315 = vmatprep.subr.mxu0 0.0
        %2316 = vmatpush2.msra.mxu0 0.0
        %2317 = vmatprep.subr.mxu0 0.0
        %2318 = vmatpush2.msra.mxu0 0.0
        %2319 = vmatprep.subr.mxu0 0.0
        %2320 = vmatpush2.msra.mxu0 0.0
        %2321 = vmatprep.subr.mxu0 0.0
        %2322 = vmatpush2.msra.mxu0 0.0
        %2323 = vmatprep.subr.mxu0 0.0
        %2324 = vmatpush2.msra.mxu0 0.0
        %2325 = vmatprep.subr.mxu0 0.0
        %2326 = vmatpush2.msra.mxu0 0.0
        %2327 = vmatprep.subr.mxu0 0.0
        %2328 = vmatpush2.msra.mxu0 0.0
        %2329 = vmatprep.subr.mxu0 0.0
        %2330 = vmatpush2.msra.mxu0 0.0
        %2331 = vmatprep.subr.mxu0 0.0
        %2332 = vmatpush2.msra.mxu0 0.0
        %2333 = vmatprep.subr.mxu0 0.0
        %2334 = vmatpush2.msra.mxu0 0.0
        %2335 = vmatprep.subr.mxu0 0.0
        %2336 = vmatpush2.msra.mxu0 0.0
        %2337 = vmatprep.subr.mxu0 0.0
        %2338 = vmatpush2.msra.mxu0 0.0
        %2339 = vmatprep.subr.mxu0 0.0
        %2340 = vmatpush2.msra.mxu0 0.0
        %2341 = vmatprep.subr.mxu0 0.0
        %2342 = vmatpush2.msra.mxu0 0.0
        %2343 = vmatprep.subr.mxu0 0.0
        %2344 = vmatpush2.msra.mxu0 0.0
        %2345 = vmatprep.mubr.f32.mxu0 0.0
        %2346 = vmatmul.mubr.f32.gmra.mxu0 %v1751
        %v2347 = vpop.f32.mrf.mxu0
        %v2348 = vadd.f32 0.0, %v2347
        %v2349 = vpop.f32.mrf.mxu0
        %2350 = vmatprep.mubr.f32.mxu0 0.0
        %2351 = vmatmul.mubr.f32.gmra.mxu0 %v1754
        %v2352 = vpop.f32.mrf.mxu0
        %v2353 = vadd.f32 0.0, %v2352
        %v2354 = vpop.f32.mrf.mxu0
        %2355 = vdwg.mxu0
        %v2356 = vsub.f32 %v1217, %v1823
        %v2357 = vsub.f32 %v1222, %v1828
        %v2358 = vsub.f32 %v1292, %v1898
        %v2359 = vsub.f32 %v1297, %v1903
        %v2360 = vsub.f32 %v1367, %v1973
        %v2361 = vsub.f32 %v1372, %v1978
        %v2362 = vsub.f32 %v1442, %v2048
        %v2363 = vsub.f32 %v1447, %v2053
        %v2364 = vsub.f32 %v1517, %v2123
        %v2365 = vsub.f32 %v1522, %v2128
        %v2366 = vsub.f32 %v1592, %v2198
        %v2367 = vsub.f32 %v1597, %v2203
        %v2368 = vsub.f32 %v1667, %v2273
        %v2369 = vsub.f32 %v1672, %v2278
        %v2370 = vsub.f32 %v1742, %v2348
        %v2371 = vsub.f32 %v1747, %v2353
        %v2372 = vadd.f32 %v672, %v2356
        %v2373 = vadd.f32 %v673, %v2357
        %v2374 = vadd.f32 %v674, %v2358
        %v2375 = vadd.f32 %v675, %v2359
        %v2376 = vadd.f32 %v676, %v2360
        %v2377 = vadd.f32 %v677, %v2361
        %v2378 = vadd.f32 %v678, %v2362
        %v2379 = vadd.f32 %v679, %v2363
        %v2380 = vadd.f32 %v680, %v2364
        %v2381 = vadd.f32 %v681, %v2365
        %v2382 = vadd.f32 %v682, %v2366
        %v2383 = vadd.f32 %v683, %v2367
        %v2384 = vadd.f32 %v684, %v2368
        %v2385 = vadd.f32 %v685, %v2369
        %v2386 = vadd.f32 %v686, %v2370
        %v2387 = vadd.f32 %v687, %v2371
        %2388 = vadd.xlane.f32.xlu0 %v2372
        %v2389 = vpop.xlane.xlu0 %2388
        %2390 = vadd.xlane.f32.xlu0 %v2373
        %v2391 = vpop.xlane.xlu0 %2390
        %2392 = vadd.xlane.f32.xlu0 %v2374
        %v2393 = vpop.xlane.xlu0 %2392
        %2394 = vadd.xlane.f32.xlu0 %v2375
        %v2395 = vpop.xlane.xlu0 %2394
        %2396 = vadd.xlane.f32.xlu0 %v2376
        %v2397 = vpop.xlane.xlu0 %2396
        %2398 = vadd.xlane.f32.xlu0 %v2377
        %v2399 = vpop.xlane.xlu0 %2398
        %2400 = vadd.xlane.f32.xlu0 %v2378
        %v2401 = vpop.xlane.xlu0 %2400
        %2402 = vadd.xlane.f32.xlu0 %v2379
        %v2403 = vpop.xlane.xlu0 %2402
        %2404 = vadd.xlane.f32.xlu0 %v2380
        %v2405 = vpop.xlane.xlu0 %2404
        %2406 = vadd.xlane.f32.xlu0 %v2381
        %v2407 = vpop.xlane.xlu0 %2406
        %2408 = vadd.xlane.f32.xlu0 %v2382
        %v2409 = vpop.xlane.xlu0 %2408
        %2410 = vadd.xlane.f32.xlu0 %v2383
        %v2411 = vpop.xlane.xlu0 %2410
        %2412 = vadd.xlane.f32.xlu0 %v2384
        %v2413 = vpop.xlane.xlu0 %2412
        %2414 = vadd.xlane.f32.xlu0 %v2385
        %v2415 = vpop.xlane.xlu0 %2414
        %2416 = vadd.xlane.f32.xlu0 %v2386
        %v2417 = vpop.xlane.xlu0 %2416
        %2418 = vadd.xlane.f32.xlu0 %v2387
        %v2419 = vpop.xlane.xlu0 %2418
        %v2420 = vmul.f32 %v2389, %v725
        %v2421 = vmul.f32 %v2391, %v725
        %v2422 = vmul.f32 %v2393, %v725
        %v2423 = vmul.f32 %v2395, %v725
        %v2424 = vmul.f32 %v2397, %v725
        %v2425 = vmul.f32 %v2399, %v725
        %v2426 = vmul.f32 %v2401, %v725
        %v2427 = vmul.f32 %v2403, %v725
        %v2428 = vmul.f32 %v2405, %v725
        %v2429 = vmul.f32 %v2407, %v725
        %v2430 = vmul.f32 %v2409, %v725
        %v2431 = vmul.f32 %v2411, %v725
        %v2432 = vmul.f32 %v2413, %v725
        %v2433 = vmul.f32 %v2415, %v725
        %v2434 = vmul.f32 %v2417, %v725
        %v2435 = vmul.f32 %v2419, %v725
        %v2436 = vmul.f32 %v2372, %v2372
        %v2437 = vmul.f32 %v2373, %v2373
        %v2438 = vmul.f32 %v2374, %v2374
        %v2439 = vmul.f32 %v2375, %v2375
        %v2440 = vmul.f32 %v2376, %v2376
        %v2441 = vmul.f32 %v2377, %v2377
        %v2442 = vmul.f32 %v2378, %v2378
        %v2443 = vmul.f32 %v2379, %v2379
        %v2444 = vmul.f32 %v2380, %v2380
        %v2445 = vmul.f32 %v2381, %v2381
        %v2446 = vmul.f32 %v2382, %v2382
        %v2447 = vmul.f32 %v2383, %v2383
        %v2448 = vmul.f32 %v2384, %v2384
        %v2449 = vmul.f32 %v2385, %v2385
        %v2450 = vmul.f32 %v2386, %v2386
        %v2451 = vmul.f32 %v2387, %v2387
        %2452 = vadd.xlane.f32.xlu0 %v2436
        %v2453 = vpop.xlane.xlu0 %2452
        %2454 = vadd.xlane.f32.xlu0 %v2437
        %v2455 = vpop.xlane.xlu0 %2454
        %2456 = vadd.xlane.f32.xlu0 %v2438
        %v2457 = vpop.xlane.xlu0 %2456
        %2458 = vadd.xlane.f32.xlu0 %v2439
        %v2459 = vpop.xlane.xlu0 %2458
        %2460 = vadd.xlane.f32.xlu0 %v2440
        %v2461 = vpop.xlane.xlu0 %2460
        %2462 = vadd.xlane.f32.xlu0 %v2441
        %v2463 = vpop.xlane.xlu0 %2462
        %2464 = vadd.xlane.f32.xlu0 %v2442
        %v2465 = vpop.xlane.xlu0 %2464
        %2466 = vadd.xlane.f32.xlu0 %v2443
        %v2467 = vpop.xlane.xlu0 %2466
        %2468 = vadd.xlane.f32.xlu0 %v2444
        %v2469 = vpop.xlane.xlu0 %2468
        %2470 = vadd.xlane.f32.xlu0 %v2445
        %v2471 = vpop.xlane.xlu0 %2470
        %2472 = vadd.xlane.f32.xlu0 %v2446
        %v2473 = vpop.xlane.xlu0 %2472
        %2474 = vadd.xlane.f32.xlu0 %v2447
        %v2475 = vpop.xlane.xlu0 %2474
        %2476 = vadd.xlane.f32.xlu0 %v2448
        %v2477 = vpop.xlane.xlu0 %2476
        %2478 = vadd.xlane.f32.xlu0 %v2449
        %v2479 = vpop.xlane.xlu0 %2478
        %2480 = vadd.xlane.f32.xlu0 %v2450
        %v2481 = vpop.xlane.xlu0 %2480
        %2482 = vadd.xlane.f32.xlu0 %v2451
        %v2483 = vpop.xlane.xlu0 %2482
        %v2484 = vmul.f32 %v2453, %v725
        %v2485 = vmul.f32 %v2455, %v725
        %v2486 = vmul.f32 %v2457, %v725
        %v2487 = vmul.f32 %v2459, %v725
        %v2488 = vmul.f32 %v2461, %v725
        %v2489 = vmul.f32 %v2463, %v725
        %v2490 = vmul.f32 %v2465, %v725
        %v2491 = vmul.f32 %v2467, %v725
        %v2492 = vmul.f32 %v2469, %v725
        %v2493 = vmul.f32 %v2471, %v725
        %v2494 = vmul.f32 %v2473, %v725
        %v2495 = vmul.f32 %v2475, %v725
        %v2496 = vmul.f32 %v2477, %v725
        %v2497 = vmul.f32 %v2479, %v725
        %v2498 = vmul.f32 %v2481, %v725
        %v2499 = vmul.f32 %v2483, %v725
        %v2500 = vmul.f32 %v2420, %v2420
        %v2501 = vmul.f32 %v2421, %v2421
        %v2502 = vmul.f32 %v2422, %v2422
        %v2503 = vmul.f32 %v2423, %v2423
        %v2504 = vmul.f32 %v2424, %v2424
        %v2505 = vmul.f32 %v2425, %v2425
        %v2506 = vmul.f32 %v2426, %v2426
        %v2507 = vmul.f32 %v2427, %v2427
        %v2508 = vmul.f32 %v2428, %v2428
        %v2509 = vmul.f32 %v2429, %v2429
        %v2510 = vmul.f32 %v2430, %v2430
        %v2511 = vmul.f32 %v2431, %v2431
        %v2512 = vmul.f32 %v2432, %v2432
        %v2513 = vmul.f32 %v2433, %v2433
        %v2514 = vmul.f32 %v2434, %v2434
        %v2515 = vmul.f32 %v2435, %v2435
        %v2516 = vsub.f32 %v2484, %v2500
        %v2517 = vsub.f32 %v2485, %v2501
        %v2518 = vsub.f32 %v2486, %v2502
        %v2519 = vsub.f32 %v2487, %v2503
        %v2520 = vsub.f32 %v2488, %v2504
        %v2521 = vsub.f32 %v2489, %v2505
        %v2522 = vsub.f32 %v2490, %v2506
        %v2523 = vsub.f32 %v2491, %v2507
        %v2524 = vsub.f32 %v2492, %v2508
        %v2525 = vsub.f32 %v2493, %v2509
        %v2526 = vsub.f32 %v2494, %v2510
        %v2527 = vsub.f32 %v2495, %v2511
        %v2528 = vsub.f32 %v2496, %v2512
        %v2529 = vsub.f32 %v2497, %v2513
        %v2530 = vsub.f32 %v2498, %v2514
        %v2531 = vsub.f32 %v2499, %v2515
        %v2532 = vsub.f32 %v2372, %v2420
        %v2533 = vsub.f32 %v2373, %v2421
        %v2534 = vsub.f32 %v2374, %v2422
        %v2535 = vsub.f32 %v2375, %v2423
        %v2536 = vsub.f32 %v2376, %v2424
        %v2537 = vsub.f32 %v2377, %v2425
        %v2538 = vsub.f32 %v2378, %v2426
        %v2539 = vsub.f32 %v2379, %v2427
        %v2540 = vsub.f32 %v2380, %v2428
        %v2541 = vsub.f32 %v2381, %v2429
        %v2542 = vsub.f32 %v2382, %v2430
        %v2543 = vsub.f32 %v2383, %v2431
        %v2544 = vsub.f32 %v2384, %v2432
        %v2545 = vsub.f32 %v2385, %v2433
        %v2546 = vsub.f32 %v2386, %v2434
        %v2547 = vsub.f32 %v2387, %v2435
        %v2548 = vadd.f32 %v2516, 1e-05
        %v2549 = vadd.f32 %v2517, 1e-05
        %v2550 = vadd.f32 %v2518, 1e-05
        %v2551 = vadd.f32 %v2519, 1e-05
        %v2552 = vadd.f32 %v2520, 1e-05
        %v2553 = vadd.f32 %v2521, 1e-05
        %v2554 = vadd.f32 %v2522, 1e-05
        %v2555 = vadd.f32 %v2523, 1e-05
        %v2556 = vadd.f32 %v2524, 1e-05
        %v2557 = vadd.f32 %v2525, 1e-05
        %v2558 = vadd.f32 %v2526, 1e-05
        %v2559 = vadd.f32 %v2527, 1e-05
        %v2560 = vadd.f32 %v2528, 1e-05
        %v2561 = vadd.f32 %v2529, 1e-05
        %v2562 = vadd.f32 %v2530, 1e-05
        %v2563 = vadd.f32 %v2531, 1e-05
        %v2564 = vrsqrt.pop %v2548
        %v2565 = vrsqrt.pop %v2549
        %v2566 = vrsqrt.pop %v2550
        %v2567 = vrsqrt.pop %v2551
        %v2568 = vrsqrt.pop %v2552
        %v2569 = vrsqrt.pop %v2553
        %v2570 = vrsqrt.pop %v2554
        %v2571 = vrsqrt.pop %v2555
        %v2572 = vrsqrt.pop %v2556
        %v2573 = vrsqrt.pop %v2557
        %v2574 = vrsqrt.pop %v2558
        %v2575 = vrsqrt.pop %v2559
        %v2576 = vrsqrt.pop %v2560
        %v2577 = vrsqrt.pop %v2561
        %v2578 = vrsqrt.pop %v2562
        %v2579 = vrsqrt.pop %v2563
        %v2580 = vmul.f32 %v2532, %v2564
        %v2581 = vmul.f32 %v2533, %v2565
        %v2582 = vmul.f32 %v2534, %v2566
        %v2583 = vmul.f32 %v2535, %v2567
        %v2584 = vmul.f32 %v2536, %v2568
        %v2585 = vmul.f32 %v2537, %v2569
        %v2586 = vmul.f32 %v2538, %v2570
        %v2587 = vmul.f32 %v2539, %v2571
        %v2588 = vmul.f32 %v2540, %v2572
        %v2589 = vmul.f32 %v2541, %v2573
        %v2590 = vmul.f32 %v2542, %v2574
        %v2591 = vmul.f32 %v2543, %v2575
        %v2592 = vmul.f32 %v2544, %v2576
        %v2593 = vmul.f32 %v2545, %v2577
        %v2594 = vmul.f32 %v2546, %v2578
        %v2595 = vmul.f32 %v2547, %v2579
        %v2597 = vlaneseq
        %v2598 = vshrl.u32 %v2597, 7
        %v2599 = vsub.s32 0, %v2598
        %v2600 = vrot.slane %v690, %v2599
        %v2602 = vmul.f32 %v2580, %v2600
        %v2603 = vmul.f32 %v2581, %v2600
        %v2604 = vmul.f32 %v2582, %v2600
        %v2605 = vmul.f32 %v2583, %v2600
        %v2606 = vmul.f32 %v2584, %v2600
        %v2607 = vmul.f32 %v2585, %v2600
        %v2608 = vmul.f32 %v2586, %v2600
        %v2609 = vmul.f32 %v2587, %v2600
        %v2610 = vmul.f32 %v2588, %v2600
        %v2611 = vmul.f32 %v2589, %v2600
        %v2612 = vmul.f32 %v2590, %v2600
        %v2613 = vmul.f32 %v2591, %v2600
        %v2614 = vmul.f32 %v2592, %v2600
        %v2615 = vmul.f32 %v2593, %v2600
        %v2616 = vmul.f32 %v2594, %v2600
        %v2617 = vmul.f32 %v2595, %v2600
        %v2619 = vlaneseq
        %v2620 = vshrl.u32 %v2619, 7
        %v2621 = vsub.s32 0, %v2620
        %v2622 = vrot.slane %v691, %v2621
        %v2624 = vadd.f32 %v2602, %v2622
        %v2625 = vadd.f32 %v2603, %v2622
        %v2626 = vadd.f32 %v2604, %v2622
        %v2627 = vadd.f32 %v2605, %v2622
        %v2628 = vadd.f32 %v2606, %v2622
        %v2629 = vadd.f32 %v2607, %v2622
        %v2630 = vadd.f32 %v2608, %v2622
        %v2631 = vadd.f32 %v2609, %v2622
        %v2632 = vadd.f32 %v2610, %v2622
        %v2633 = vadd.f32 %v2611, %v2622
        %v2634 = vadd.f32 %v2612, %v2622
        %v2635 = vadd.f32 %v2613, %v2622
        %v2636 = vadd.f32 %v2614, %v2622
        %v2637 = vadd.f32 %v2615, %v2622
        %v2638 = vadd.f32 %v2616, %v2622
        %v2639 = vadd.f32 %v2617, %v2622
        %v2640 = vpack.c.bf16 %v2625, %v2624
        %v2641 = vpack.c.bf16 %v2627, %v2626
        %v2642 = vpack.c.bf16 %v2629, %v2628
        %v2643 = vpack.c.bf16 %v2631, %v2630
        %v2644 = vpack.c.bf16 %v2633, %v2632
        %v2645 = vpack.c.bf16 %v2635, %v2634
        %v2646 = vpack.c.bf16 %v2637, %v2636
        %v2647 = vpack.c.bf16 %v2639, %v2638
        %v2648 = vld [vmem:[%s540] sm:$0xff]
        %v2649 = vld [vmem:[%s540 + $0x8] sm:$0xff]
        %v2650 = vld [vmem:[%s540 + $0x10] sm:$0xff]
        %v2651 = vld [vmem:[%s540 + $0x18] sm:$0xff]
        %v2652 = vld [vmem:[%s540 + $0x20] sm:$0xff]
        %v2653 = vld [vmem:[%s540 + $0x28] sm:$0xff]
        %v2654 = vld [vmem:[%s540 + $0x30] sm:$0xff]
        %v2655 = vld [vmem:[%s540 + $0x38] sm:$0xff]
        %v2656 = vld [vmem:[%s540 + $0x40] sm:$0xff]
        %v2657 = vld [vmem:[%s540 + $0x48] sm:$0xff]
        %v2658 = vld [vmem:[%s540 + $0x50] sm:$0xff]
        %v2659 = vld [vmem:[%s540 + $0x58] sm:$0xff]
        %v2660 = vld [vmem:[%s540 + $0x60] sm:$0xff]
        %v2661 = vld [vmem:[%s540 + $0x68] sm:$0xff]
        %v2662 = vld [vmem:[%s540 + $0x70] sm:$0xff]
        %v2663 = vld [vmem:[%s540 + $0x78] sm:$0xff]
        %v2664 = vld [vmem:[%s630] sm:$0x3]
        %v2666 = vlaneseq
        %v2667 = vshrl.u32 %v2666, 7
        %v2668 = vsub.s32 0, %v2667
        %v2669 = vrot.slane %v2664, %v2668
        %v2670 = vlaneseq
        %v2671 = vshrl.u32 %v2670, 7
        %v2672 = vsub.s32 1, %v2671
        %v2673 = vrot.slane %v2664, %v2672
        %v2692 = vunpack.c.l.b16 %v2648
        %v2693 = vunpack.c.h.b16 %v2648
        %v2694 = vunpack.c.l.b16 %v2649
        %v2695 = vunpack.c.h.b16 %v2649
        %v2696 = vunpack.c.l.b16 %v2650
        %v2697 = vunpack.c.h.b16 %v2650
        %v2698 = vunpack.c.l.b16 %v2651
        %v2699 = vunpack.c.h.b16 %v2651
        %v2700 = vunpack.c.l.b16 %v2652
        %v2701 = vunpack.c.h.b16 %v2652
        %v2702 = vunpack.c.l.b16 %v2653
        %v2703 = vunpack.c.h.b16 %v2653
        %v2704 = vunpack.c.l.b16 %v2654
        %v2705 = vunpack.c.h.b16 %v2654
        %v2706 = vunpack.c.l.b16 %v2655
        %v2707 = vunpack.c.h.b16 %v2655
        %v2708 = vunpack.c.l.b16 %v2656
        %v2709 = vunpack.c.h.b16 %v2656
        %v2710 = vunpack.c.l.b16 %v2657
        %v2711 = vunpack.c.h.b16 %v2657
        %v2712 = vunpack.c.l.b16 %v2658
        %v2713 = vunpack.c.h.b16 %v2658
        %v2714 = vunpack.c.l.b16 %v2659
        %v2715 = vunpack.c.h.b16 %v2659
        %v2716 = vunpack.c.l.b16 %v2660
        %v2717 = vunpack.c.h.b16 %v2660
        %v2718 = vunpack.c.l.b16 %v2661
        %v2719 = vunpack.c.h.b16 %v2661
        %v2720 = vunpack.c.l.b16 %v2662
        %v2721 = vunpack.c.h.b16 %v2662
        %v2722 = vunpack.c.l.b16 %v2663
        %v2723 = vunpack.c.h.b16 %v2663
        %v2724 = vpack.c.b16 %v2694, %v2692
        %v2725 = vpack.c.b16 %v2695, %v2693
        %v2726 = vpack.c.b16 %v2698, %v2696
        %v2727 = vpack.c.b16 %v2699, %v2697
        %v2728 = vpack.c.b16 %v2702, %v2700
        %v2729 = vpack.c.b16 %v2703, %v2701
        %v2730 = vpack.c.b16 %v2706, %v2704
        %v2731 = vpack.c.b16 %v2707, %v2705
        %v2732 = vpack.c.b16 %v2710, %v2708
        %v2733 = vpack.c.b16 %v2711, %v2709
        %v2734 = vpack.c.b16 %v2714, %v2712
        %v2735 = vpack.c.b16 %v2715, %v2713
        %v2736 = vpack.c.b16 %v2718, %v2716
        %v2737 = vpack.c.b16 %v2719, %v2717
        %v2738 = vpack.c.b16 %v2722, %v2720
        %v2739 = vpack.c.b16 %v2723, %v2721
        %2756 = vmatprep.subr.bf16.mxu0 %v2739
        %2757 = vmatpush1.bf16.msra.mxu0 %v2738
        %2758 = vmatprep.subr.bf16.mxu0 %v2737
        %2759 = vmatpush1.bf16.msra.mxu0 %v2736
        %2760 = vmatprep.subr.bf16.mxu0 %v2735
        %2761 = vmatpush1.bf16.msra.mxu0 %v2734
        %2762 = vmatprep.subr.bf16.mxu0 %v2733
        %2763 = vmatpush1.bf16.msra.mxu0 %v2732
        %2764 = vmatprep.subr.bf16.mxu0 %v2731
        %2765 = vmatpush1.bf16.msra.mxu0 %v2730
        %2766 = vmatprep.subr.bf16.mxu0 %v2729
        %2767 = vmatpush1.bf16.msra.mxu0 %v2728
        %2768 = vmatprep.subr.bf16.mxu0 %v2727
        %2769 = vmatpush1.bf16.msra.mxu0 %v2726
        %2770 = vmatprep.subr.bf16.mxu0 %v2725
        %2771 = vmatpush1.bf16.msra.mxu0 %v2724
        %2772 = vmatprep.subr.bf16.mxu0 0
        %2773 = vmatpush2.bf16.msra.mxu0 0
        %2774 = vmatprep.subr.bf16.mxu0 0
        %2775 = vmatpush2.bf16.msra.mxu0 0
        %2776 = vmatprep.subr.bf16.mxu0 0
        %2777 = vmatpush2.bf16.msra.mxu0 0
        %2778 = vmatprep.subr.bf16.mxu0 0
        %2779 = vmatpush2.bf16.msra.mxu0 0
        %2780 = vmatprep.subr.bf16.mxu0 0
        %2781 = vmatpush2.bf16.msra.mxu0 0
        %2782 = vmatprep.subr.bf16.mxu0 0
        %2783 = vmatpush2.bf16.msra.mxu0 0
        %2784 = vmatprep.subr.bf16.mxu0 0
        %2785 = vmatpush2.bf16.msra.mxu0 0
        %2786 = vmatprep.subr.bf16.mxu0 0
        %2787 = vmatpush2.bf16.msra.mxu0 0
        %2788 = vmatprep.mubr.bf16.mxu0 0
        %2789 = vmatmul.mubr.bf16.gmra.mxu0 %v2640
        %v2790 = vpop.f32.mrf.mxu0
        %v2791 = vadd.f32 %v2669, %v2790
        %v2792 = vpop.f32.mrf.mxu0
        %v2793 = vadd.f32 %v2673, %v2792
        %v2794 = vpop.f32.mrf.mxu0
        %v2795 = vadd.f32 %v2669, %v2794
        %v2796 = vpop.f32.mrf.mxu0
        %v2797 = vadd.f32 %v2673, %v2796
        %2798 = vmatprep.mubr.bf16.mxu0 0
        %2799 = vmatmul.mubr.bf16.gmra.mxu0 %v2641
        %v2800 = vpop.f32.mrf.mxu0
        %v2801 = vadd.f32 %v2669, %v2800
        %v2802 = vpop.f32.mrf.mxu0
        %v2803 = vadd.f32 %v2673, %v2802
        %v2804 = vpop.f32.mrf.mxu0
        %v2805 = vadd.f32 %v2669, %v2804
        %v2806 = vpop.f32.mrf.mxu0
        %v2807 = vadd.f32 %v2673, %v2806
        %2808 = vmatprep.mubr.bf16.mxu0 0
        %2809 = vmatmul.mubr.bf16.gmra.mxu0 %v2642
        %v2810 = vpop.f32.mrf.mxu0
        %v2811 = vadd.f32 %v2669, %v2810
        %v2812 = vpop.f32.mrf.mxu0
        %v2813 = vadd.f32 %v2673, %v2812
        %v2814 = vpop.f32.mrf.mxu0
        %v2815 = vadd.f32 %v2669, %v2814
        %v2816 = vpop.f32.mrf.mxu0
        %v2817 = vadd.f32 %v2673, %v2816
        %2818 = vmatprep.mubr.bf16.mxu0 0
        %2819 = vmatmul.mubr.bf16.gmra.mxu0 %v2643
        %v2820 = vpop.f32.mrf.mxu0
        %v2821 = vadd.f32 %v2669, %v2820
        %v2822 = vpop.f32.mrf.mxu0
        %v2823 = vadd.f32 %v2673, %v2822
        %v2824 = vpop.f32.mrf.mxu0
        %v2825 = vadd.f32 %v2669, %v2824
        %v2826 = vpop.f32.mrf.mxu0
        %v2827 = vadd.f32 %v2673, %v2826
        %2828 = vmatprep.mubr.bf16.mxu0 0
        %2829 = vmatmul.mubr.bf16.gmra.mxu0 %v2644
        %v2830 = vpop.f32.mrf.mxu0
        %v2831 = vadd.f32 %v2669, %v2830
        %v2832 = vpop.f32.mrf.mxu0
        %v2833 = vadd.f32 %v2673, %v2832
        %v2834 = vpop.f32.mrf.mxu0
        %v2835 = vadd.f32 %v2669, %v2834
        %v2836 = vpop.f32.mrf.mxu0
        %v2837 = vadd.f32 %v2673, %v2836
        %2838 = vmatprep.mubr.bf16.mxu0 0
        %2839 = vmatmul.mubr.bf16.gmra.mxu0 %v2645
        %v2840 = vpop.f32.mrf.mxu0
        %v2841 = vadd.f32 %v2669, %v2840
        %v2842 = vpop.f32.mrf.mxu0
        %v2843 = vadd.f32 %v2673, %v2842
        %v2844 = vpop.f32.mrf.mxu0
        %v2845 = vadd.f32 %v2669, %v2844
        %v2846 = vpop.f32.mrf.mxu0
        %v2847 = vadd.f32 %v2673, %v2846
        %2848 = vmatprep.mubr.bf16.mxu0 0
        %2849 = vmatmul.mubr.bf16.gmra.mxu0 %v2646
        %v2850 = vpop.f32.mrf.mxu0
        %v2851 = vadd.f32 %v2669, %v2850
        %v2852 = vpop.f32.mrf.mxu0
        %v2853 = vadd.f32 %v2673, %v2852
        %v2854 = vpop.f32.mrf.mxu0
        %v2855 = vadd.f32 %v2669, %v2854
        %v2856 = vpop.f32.mrf.mxu0
        %v2857 = vadd.f32 %v2673, %v2856
        %2858 = vmatprep.mubr.bf16.mxu0 0
        %2859 = vmatmul.mubr.bf16.gmra.mxu0 %v2647
        %v2860 = vpop.f32.mrf.mxu0
        %v2861 = vadd.f32 %v2669, %v2860
        %v2862 = vpop.f32.mrf.mxu0
        %v2863 = vadd.f32 %v2673, %v2862
        %v2864 = vpop.f32.mrf.mxu0
        %v2865 = vadd.f32 %v2669, %v2864
        %v2866 = vpop.f32.mrf.mxu0
        %v2867 = vadd.f32 %v2673, %v2866
        %2868 = vdwg.mxu0
        %v2869 = vmul.f32 %v2791, 0.5
        %v2870 = vmul.f32 %v2793, 0.5
        %v2871 = vmul.f32 %v2795, 0.5
        %v2872 = vmul.f32 %v2797, 0.5
        %v2873 = vmul.f32 %v2801, 0.5
        %v2874 = vmul.f32 %v2803, 0.5
        %v2875 = vmul.f32 %v2805, 0.5
        %v2876 = vmul.f32 %v2807, 0.5
        %v2877 = vmul.f32 %v2811, 0.5
        %v2878 = vmul.f32 %v2813, 0.5
        %v2879 = vmul.f32 %v2815, 0.5
        %v2880 = vmul.f32 %v2817, 0.5
        %v2881 = vmul.f32 %v2821, 0.5
        %v2882 = vmul.f32 %v2823, 0.5
        %v2883 = vmul.f32 %v2825, 0.5
        %v2884 = vmul.f32 %v2827, 0.5
        %v2885 = vmul.f32 %v2831, 0.5
        %v2886 = vmul.f32 %v2833, 0.5
        %v2887 = vmul.f32 %v2835, 0.5
        %v2888 = vmul.f32 %v2837, 0.5
        %v2889 = vmul.f32 %v2841, 0.5
        %v2890 = vmul.f32 %v2843, 0.5
        %v2891 = vmul.f32 %v2845, 0.5
        %v2892 = vmul.f32 %v2847, 0.5
        %v2893 = vmul.f32 %v2851, 0.5
        %v2894 = vmul.f32 %v2853, 0.5
        %v2895 = vmul.f32 %v2855, 0.5
        %v2896 = vmul.f32 %v2857, 0.5
        %v2897 = vmul.f32 %v2861, 0.5
        %v2898 = vmul.f32 %v2863, 0.5
        %v2899 = vmul.f32 %v2865, 0.5
        %v2900 = vmul.f32 %v2867, 0.5
        %v2901 = vmul.f32 %v2791, 0.70710677
        %v2902 = vmul.f32 %v2793, 0.70710677
        %v2903 = vmul.f32 %v2795, 0.70710677
        %v2904 = vmul.f32 %v2797, 0.70710677
        %v2905 = vmul.f32 %v2801, 0.70710677
        %v2906 = vmul.f32 %v2803, 0.70710677
        %v2907 = vmul.f32 %v2805, 0.70710677
        %v2908 = vmul.f32 %v2807, 0.70710677
        %v2909 = vmul.f32 %v2811, 0.70710677
        %v2910 = vmul.f32 %v2813, 0.70710677
        %v2911 = vmul.f32 %v2815, 0.70710677
        %v2912 = vmul.f32 %v2817, 0.70710677
        %v2913 = vmul.f32 %v2821, 0.70710677
        %v2914 = vmul.f32 %v2823, 0.70710677
        %v2915 = vmul.f32 %v2825, 0.70710677
        %v2916 = vmul.f32 %v2827, 0.70710677
        %v2917 = vmul.f32 %v2831, 0.70710677
        %v2918 = vmul.f32 %v2833, 0.70710677
        %v2919 = vmul.f32 %v2835, 0.70710677
        %v2920 = vmul.f32 %v2837, 0.70710677
        %v2921 = vmul.f32 %v2841, 0.70710677
        %v2922 = vmul.f32 %v2843, 0.70710677
        %v2923 = vmul.f32 %v2845, 0.70710677
        %v2924 = vmul.f32 %v2847, 0.70710677
        %v2925 = vmul.f32 %v2851, 0.70710677
        %v2926 = vmul.f32 %v2853, 0.70710677
        %v2927 = vmul.f32 %v2855, 0.70710677
        %v2928 = vmul.f32 %v2857, 0.70710677
        %v2929 = vmul.f32 %v2861, 0.70710677
        %v2930 = vmul.f32 %v2863, 0.70710677
        %v2931 = vmul.f32 %v2865, 0.70710677
        %v2932 = vmul.f32 %v2867, 0.70710677
        %v2933 = verf.f32.pop %v2901
        %v2934 = verf.f32.pop %v2902
        %v2935 = verf.f32.pop %v2903
        %v2936 = verf.f32.pop %v2904
        %v2937 = verf.f32.pop %v2905
        %v2938 = verf.f32.pop %v2906
        %v2939 = verf.f32.pop %v2907
        %v2940 = verf.f32.pop %v2908
        %v2941 = verf.f32.pop %v2909
        %v2942 = verf.f32.pop %v2910
        %v2943 = verf.f32.pop %v2911
        %v2944 = verf.f32.pop %v2912
        %v2945 = verf.f32.pop %v2913
        %v2946 = verf.f32.pop %v2914
        %v2947 = verf.f32.pop %v2915
        %v2948 = verf.f32.pop %v2916
        %v2949 = verf.f32.pop %v2917
        %v2950 = verf.f32.pop %v2918
        %v2951 = verf.f32.pop %v2919
        %v2952 = verf.f32.pop %v2920
        %v2953 = verf.f32.pop %v2921
        %v2954 = verf.f32.pop %v2922
        %v2955 = verf.f32.pop %v2923
        %v2956 = verf.f32.pop %v2924
        %v2957 = verf.f32.pop %v2925
        %v2958 = verf.f32.pop %v2926
        %v2959 = verf.f32.pop %v2927
        %v2960 = verf.f32.pop %v2928
        %v2961 = verf.f32.pop %v2929
        %v2962 = verf.f32.pop %v2930
        %v2963 = verf.f32.pop %v2931
        %v2964 = verf.f32.pop %v2932
        %v2965 = vadd.f32 %v2933, 1.0
        %v2966 = vadd.f32 %v2934, 1.0
        %v2967 = vadd.f32 %v2935, 1.0
        %v2968 = vadd.f32 %v2936, 1.0
        %v2969 = vadd.f32 %v2937, 1.0
        %v2970 = vadd.f32 %v2938, 1.0
        %v2971 = vadd.f32 %v2939, 1.0
        %v2972 = vadd.f32 %v2940, 1.0
        %v2973 = vadd.f32 %v2941, 1.0
        %v2974 = vadd.f32 %v2942, 1.0
        %v2975 = vadd.f32 %v2943, 1.0
        %v2976 = vadd.f32 %v2944, 1.0
        %v2977 = vadd.f32 %v2945, 1.0
        %v2978 = vadd.f32 %v2946, 1.0
        %v2979 = vadd.f32 %v2947, 1.0
        %v2980 = vadd.f32 %v2948, 1.0
        %v2981 = vadd.f32 %v2949, 1.0
        %v2982 = vadd.f32 %v2950, 1.0
        %v2983 = vadd.f32 %v2951, 1.0
        %v2984 = vadd.f32 %v2952, 1.0
        %v2985 = vadd.f32 %v2953, 1.0
        %v2986 = vadd.f32 %v2954, 1.0
        %v2987 = vadd.f32 %v2955, 1.0
        %v2988 = vadd.f32 %v2956, 1.0
        %v2989 = vadd.f32 %v2957, 1.0
        %v2990 = vadd.f32 %v2958, 1.0
        %v2991 = vadd.f32 %v2959, 1.0
        %v2992 = vadd.f32 %v2960, 1.0
        %v2993 = vadd.f32 %v2961, 1.0
        %v2994 = vadd.f32 %v2962, 1.0
        %v2995 = vadd.f32 %v2963, 1.0
        %v2996 = vadd.f32 %v2964, 1.0
        %v2997 = vmul.f32 %v2869, %v2965
        %v2998 = vmul.f32 %v2870, %v2966
        %v2999 = vmul.f32 %v2871, %v2967
        %v3000 = vmul.f32 %v2872, %v2968
        %v3001 = vmul.f32 %v2873, %v2969
        %v3002 = vmul.f32 %v2874, %v2970
        %v3003 = vmul.f32 %v2875, %v2971
        %v3004 = vmul.f32 %v2876, %v2972
        %v3005 = vmul.f32 %v2877, %v2973
        %v3006 = vmul.f32 %v2878, %v2974
        %v3007 = vmul.f32 %v2879, %v2975
        %v3008 = vmul.f32 %v2880, %v2976
        %v3009 = vmul.f32 %v2881, %v2977
        %v3010 = vmul.f32 %v2882, %v2978
        %v3011 = vmul.f32 %v2883, %v2979
        %v3012 = vmul.f32 %v2884, %v2980
        %v3013 = vmul.f32 %v2885, %v2981
        %v3014 = vmul.f32 %v2886, %v2982
        %v3015 = vmul.f32 %v2887, %v2983
        %v3016 = vmul.f32 %v2888, %v2984
        %v3017 = vmul.f32 %v2889, %v2985
        %v3018 = vmul.f32 %v2890, %v2986
        %v3019 = vmul.f32 %v2891, %v2987
        %v3020 = vmul.f32 %v2892, %v2988
        %v3021 = vmul.f32 %v2893, %v2989
        %v3022 = vmul.f32 %v2894, %v2990
        %v3023 = vmul.f32 %v2895, %v2991
        %v3024 = vmul.f32 %v2896, %v2992
        %v3025 = vmul.f32 %v2897, %v2993
        %v3026 = vmul.f32 %v2898, %v2994
        %v3027 = vmul.f32 %v2899, %v2995
        %v3028 = vmul.f32 %v2900, %v2996
        %v3029 = vpack.c.bf16 %v2999, %v2997
        %v3030 = vpack.c.bf16 %v3000, %v2998
        %v3031 = vpack.c.bf16 %v3003, %v3001
        %v3032 = vpack.c.bf16 %v3004, %v3002
        %v3033 = vpack.c.bf16 %v3007, %v3005
        %v3034 = vpack.c.bf16 %v3008, %v3006
        %v3035 = vpack.c.bf16 %v3011, %v3009
        %v3036 = vpack.c.bf16 %v3012, %v3010
        %v3037 = vpack.c.bf16 %v3015, %v3013
        %v3038 = vpack.c.bf16 %v3016, %v3014
        %v3039 = vpack.c.bf16 %v3019, %v3017
        %v3040 = vpack.c.bf16 %v3020, %v3018
        %v3041 = vpack.c.bf16 %v3023, %v3021
        %v3042 = vpack.c.bf16 %v3024, %v3022
        %v3043 = vpack.c.bf16 %v3027, %v3025
        %v3044 = vpack.c.bf16 %v3028, %v3026
        %v3045 = vld [vmem:[%s549] sm:$0xf]
        %v3046 = vld [vmem:[%s549 + $0x4] sm:$0xf]
        %v3047 = vld [vmem:[%s549 + $0x8] sm:$0xf]
        %v3048 = vld [vmem:[%s549 + $0xc] sm:$0xf]
        %v3049 = vld [vmem:[%s549 + $0x10] sm:$0xf]
        %v3050 = vld [vmem:[%s549 + $0x14] sm:$0xf]
        %v3051 = vld [vmem:[%s549 + $0x18] sm:$0xf]
        %v3052 = vld [vmem:[%s549 + $0x1c] sm:$0xf]
        %v3053 = vld [vmem:[%s549 + $0x20] sm:$0xf]
        %v3054 = vld [vmem:[%s549 + $0x24] sm:$0xf]
        %v3055 = vld [vmem:[%s549 + $0x28] sm:$0xf]
        %v3056 = vld [vmem:[%s549 + $0x2c] sm:$0xf]
        %v3057 = vld [vmem:[%s549 + $0x30] sm:$0xf]
        %v3058 = vld [vmem:[%s549 + $0x34] sm:$0xf]
        %v3059 = vld [vmem:[%s549 + $0x38] sm:$0xf]
        %v3060 = vld [vmem:[%s549 + $0x3c] sm:$0xf]
        %v3061 = vld [vmem:[%s549 + $0x40] sm:$0xf]
        %v3062 = vld [vmem:[%s549 + $0x44] sm:$0xf]
        %v3063 = vld [vmem:[%s549 + $0x48] sm:$0xf]
        %v3064 = vld [vmem:[%s549 + $0x4c] sm:$0xf]
        %v3065 = vld [vmem:[%s549 + $0x50] sm:$0xf]
        %v3066 = vld [vmem:[%s549 + $0x54] sm:$0xf]
        %v3067 = vld [vmem:[%s549 + $0x58] sm:$0xf]
        %v3068 = vld [vmem:[%s549 + $0x5c] sm:$0xf]
        %v3069 = vld [vmem:[%s549 + $0x60] sm:$0xf]
        %v3070 = vld [vmem:[%s549 + $0x64] sm:$0xf]
        %v3071 = vld [vmem:[%s549 + $0x68] sm:$0xf]
        %v3072 = vld [vmem:[%s549 + $0x6c] sm:$0xf]
        %v3073 = vld [vmem:[%s549 + $0x70] sm:$0xf]
        %v3074 = vld [vmem:[%s549 + $0x74] sm:$0xf]
        %v3075 = vld [vmem:[%s549 + $0x78] sm:$0xf]
        %v3076 = vld [vmem:[%s549 + $0x7c] sm:$0xf]
        %v3078 = vlaneseq
        %v3079 = vshrl.u32 %v3078, 7
        %v3080 = vsub.s32 0, %v3079
        %v3081 = vrot.slane %v692, %v3080
        %v3115 = vunpack.c.l.b16 %v3045
        %v3116 = vunpack.c.l.b16 %v3046
        %v3117 = vunpack.c.l.b16 %v3047
        %v3118 = vunpack.c.l.b16 %v3048
        %v3119 = vunpack.c.l.b16 %v3049
        %v3120 = vunpack.c.l.b16 %v3050
        %v3121 = vunpack.c.l.b16 %v3051
        %v3122 = vunpack.c.l.b16 %v3052
        %v3123 = vunpack.c.l.b16 %v3053
        %v3124 = vunpack.c.l.b16 %v3054
        %v3125 = vunpack.c.l.b16 %v3055
        %v3126 = vunpack.c.l.b16 %v3056
        %v3127 = vunpack.c.l.b16 %v3057
        %v3128 = vunpack.c.l.b16 %v3058
        %v3129 = vunpack.c.l.b16 %v3059
        %v3130 = vunpack.c.l.b16 %v3060
        %v3131 = vunpack.c.l.b16 %v3061
        %v3132 = vunpack.c.l.b16 %v3062
        %v3133 = vunpack.c.l.b16 %v3063
        %v3134 = vunpack.c.l.b16 %v3064
        %v3135 = vunpack.c.l.b16 %v3065
        %v3136 = vunpack.c.l.b16 %v3066
        %v3137 = vunpack.c.l.b16 %v3067
        %v3138 = vunpack.c.l.b16 %v3068
        %v3139 = vunpack.c.l.b16 %v3069
        %v3140 = vunpack.c.l.b16 %v3070
        %v3141 = vunpack.c.l.b16 %v3071
        %v3142 = vunpack.c.l.b16 %v3072
        %v3143 = vunpack.c.l.b16 %v3073
        %v3144 = vunpack.c.l.b16 %v3074
        %v3145 = vunpack.c.l.b16 %v3075
        %v3146 = vunpack.c.l.b16 %v3076
        %v3147 = vpack.c.b16 %v3116, %v3115
        %v3148 = vpack.c.b16 %v3118, %v3117
        %v3149 = vpack.c.b16 %v3120, %v3119
        %v3150 = vpack.c.b16 %v3122, %v3121
        %v3151 = vpack.c.b16 %v3124, %v3123
        %v3152 = vpack.c.b16 %v3126, %v3125
        %v3153 = vpack.c.b16 %v3128, %v3127
        %v3154 = vpack.c.b16 %v3130, %v3129
        %v3155 = vpack.c.b16 %v3132, %v3131
        %v3156 = vpack.c.b16 %v3134, %v3133
        %v3157 = vpack.c.b16 %v3136, %v3135
        %v3158 = vpack.c.b16 %v3138, %v3137
        %v3159 = vpack.c.b16 %v3140, %v3139
        %v3160 = vpack.c.b16 %v3142, %v3141
        %v3161 = vpack.c.b16 %v3144, %v3143
        %v3162 = vpack.c.b16 %v3146, %v3145
        %3179 = vmatprep.subr.bf16.mxu0 0
        %3180 = vmatpush1.bf16.msra.mxu0 %v3154
        %3181 = vmatprep.subr.bf16.mxu0 0
        %3182 = vmatpush1.bf16.msra.mxu0 %v3153
        %3183 = vmatprep.subr.bf16.mxu0 0
        %3184 = vmatpush1.bf16.msra.mxu0 %v3152
        %3185 = vmatprep.subr.bf16.mxu0 0
        %3186 = vmatpush1.bf16.msra.mxu0 %v3151
        %3187 = vmatprep.subr.bf16.mxu0 0
        %3188 = vmatpush1.bf16.msra.mxu0 %v3150
        %3189 = vmatprep.subr.bf16.mxu0 0
        %3190 = vmatpush1.bf16.msra.mxu0 %v3149
        %3191 = vmatprep.subr.bf16.mxu0 0
        %3192 = vmatpush1.bf16.msra.mxu0 %v3148
        %3193 = vmatprep.subr.bf16.mxu0 0
        %3194 = vmatpush1.bf16.msra.mxu0 %v3147
        %3195 = vmatprep.subr.bf16.mxu0 0
        %3196 = vmatpush2.bf16.msra.mxu0 %v3162
        %3197 = vmatprep.subr.bf16.mxu0 0
        %3198 = vmatpush2.bf16.msra.mxu0 %v3161
        %3199 = vmatprep.subr.bf16.mxu0 0
        %3200 = vmatpush2.bf16.msra.mxu0 %v3160
        %3201 = vmatprep.subr.bf16.mxu0 0
        %3202 = vmatpush2.bf16.msra.mxu0 %v3159
        %3203 = vmatprep.subr.bf16.mxu0 0
        %3204 = vmatpush2.bf16.msra.mxu0 %v3158
        %3205 = vmatprep.subr.bf16.mxu0 0
        %3206 = vmatpush2.bf16.msra.mxu0 %v3157
        %3207 = vmatprep.subr.bf16.mxu0 0
        %3208 = vmatpush2.bf16.msra.mxu0 %v3156
        %3209 = vmatprep.subr.bf16.mxu0 0
        %3210 = vmatpush2.bf16.msra.mxu0 %v3155
        %3211 = vmatprep.mubr.bf16.mxu0 %v3030
        %3212 = vmatmul.mubr.bf16.gmra.mxu0 %v3029
        %v3213 = vpop.f32.mrf.mxu0
        %v3214 = vadd.f32 %v3081, %v3213
        %v3215 = vpop.f32.mrf.mxu0
        %v3216 = vpop.f32.mrf.mxu0
        %v3217 = vadd.f32 %v3081, %v3216
        %v3218 = vpop.f32.mrf.mxu0
        %3219 = vmatprep.mubr.bf16.mxu0 %v3032
        %3220 = vmatmul.mubr.bf16.gmra.mxu0 %v3031
        %v3221 = vpop.f32.mrf.mxu0
        %v3222 = vadd.f32 %v3081, %v3221
        %v3223 = vpop.f32.mrf.mxu0
        %v3224 = vpop.f32.mrf.mxu0
        %v3225 = vadd.f32 %v3081, %v3224
        %v3226 = vpop.f32.mrf.mxu0
        %3227 = vmatprep.mubr.bf16.mxu0 %v3034
        %3228 = vmatmul.mubr.bf16.gmra.mxu0 %v3033
        %v3229 = vpop.f32.mrf.mxu0
        %v3230 = vadd.f32 %v3081, %v3229
        %v3231 = vpop.f32.mrf.mxu0
        %v3232 = vpop.f32.mrf.mxu0
        %v3233 = vadd.f32 %v3081, %v3232
        %v3234 = vpop.f32.mrf.mxu0
        %3235 = vmatprep.mubr.bf16.mxu0 %v3036
        %3236 = vmatmul.mubr.bf16.gmra.mxu0 %v3035
        %v3237 = vpop.f32.mrf.mxu0
        %v3238 = vadd.f32 %v3081, %v3237
        %v3239 = vpop.f32.mrf.mxu0
        %v3240 = vpop.f32.mrf.mxu0
        %v3241 = vadd.f32 %v3081, %v3240
        %v3242 = vpop.f32.mrf.mxu0
        %3243 = vmatprep.mubr.bf16.mxu0 %v3038
        %3244 = vmatmul.mubr.bf16.gmra.mxu0 %v3037
        %v3245 = vpop.f32.mrf.mxu0
        %v3246 = vadd.f32 %v3081, %v3245
        %v3247 = vpop.f32.mrf.mxu0
        %v3248 = vpop.f32.mrf.mxu0
        %v3249 = vadd.f32 %v3081, %v3248
        %v3250 = vpop.f32.mrf.mxu0
        %3251 = vmatprep.mubr.bf16.mxu0 %v3040
        %3252 = vmatmul.mubr.bf16.gmra.mxu0 %v3039
        %v3253 = vpop.f32.mrf.mxu0
        %v3254 = vadd.f32 %v3081, %v3253
        %v3255 = vpop.f32.mrf.mxu0
        %v3256 = vpop.f32.mrf.mxu0
        %v3257 = vadd.f32 %v3081, %v3256
        %v3258 = vpop.f32.mrf.mxu0
        %3259 = vmatprep.mubr.bf16.mxu0 %v3042
        %3260 = vmatmul.mubr.bf16.gmra.mxu0 %v3041
        %v3261 = vpop.f32.mrf.mxu0
        %v3262 = vadd.f32 %v3081, %v3261
        %v3263 = vpop.f32.mrf.mxu0
        %v3264 = vpop.f32.mrf.mxu0
        %v3265 = vadd.f32 %v3081, %v3264
        %v3266 = vpop.f32.mrf.mxu0
        %3267 = vmatprep.mubr.bf16.mxu0 %v3044
        %3268 = vmatmul.mubr.bf16.gmra.mxu0 %v3043
        %v3269 = vpop.f32.mrf.mxu0
        %v3270 = vadd.f32 %v3081, %v3269
        %v3271 = vpop.f32.mrf.mxu0
        %v3272 = vpop.f32.mrf.mxu0
        %v3273 = vadd.f32 %v3081, %v3272
        %v3274 = vpop.f32.mrf.mxu0
        %3275 = vdwg.mxu0
        %v3276 = vadd.f32 %v2372, %v3214
        %v3277 = vadd.f32 %v2373, %v3217
        %v3278 = vadd.f32 %v2374, %v3222
        %v3279 = vadd.f32 %v2375, %v3225
        %v3280 = vadd.f32 %v2376, %v3230
        %v3281 = vadd.f32 %v2377, %v3233
        %v3282 = vadd.f32 %v2378, %v3238
        %v3283 = vadd.f32 %v2379, %v3241
        %v3284 = vadd.f32 %v2380, %v3246
        %v3285 = vadd.f32 %v2381, %v3249
        %v3286 = vadd.f32 %v2382, %v3254
        %v3287 = vadd.f32 %v2383, %v3257
        %v3288 = vadd.f32 %v2384, %v3262
        %v3289 = vadd.f32 %v2385, %v3265
        %v3290 = vadd.f32 %v2386, %v3270
        %v3291 = vadd.f32 %v2387, %v3273
        %3292 = vst [vmem:[%s613] sm:$0xff] %v3276
        %3293 = vst [vmem:[%s613 + $0x8] sm:$0xff] %v3277
        %3294 = vst [vmem:[%s613 + $0x10] sm:$0xff] %v3278
        %3295 = vst [vmem:[%s613 + $0x18] sm:$0xff] %v3279
        %3296 = vst [vmem:[%s613 + $0x20] sm:$0xff] %v3280
        %3297 = vst [vmem:[%s613 + $0x28] sm:$0xff] %v3281
        %3298 = vst [vmem:[%s613 + $0x30] sm:$0xff] %v3282
        %3299 = vst [vmem:[%s613 + $0x38] sm:$0xff] %v3283
        %3300 = vst [vmem:[%s613 + $0x40] sm:$0xff] %v3284
        %3301 = vst [vmem:[%s613 + $0x48] sm:$0xff] %v3285
        %3302 = vst [vmem:[%s613 + $0x50] sm:$0xff] %v3286
        %3303 = vst [vmem:[%s613 + $0x58] sm:$0xff] %v3287
        %3304 = vst [vmem:[%s613 + $0x60] sm:$0xff] %v3288
        %3305 = vst [vmem:[%s613 + $0x68] sm:$0xff] %v3289
        %3306 = vst [vmem:[%s613 + $0x70] sm:$0xff] %v3290
        %3307 = vst [vmem:[%s613 + $0x78] sm:$0xff] %v3291
        %s3308 = sand.u32 %s346, 1
        %s3309 = scalar_lea.sflag [#allocation4], %s3308
        %s3310 = sand.u32 %s346, 1
        %s3311 = smul.addr %s3310, 128
        %s3312 = scalar_lea.vmem [#allocation12], %s3311
        // Predicated region
        $region97: #{tpu_custom_call.1} parent=67 // pred_check
          %p3313 = pneg %p356
        $region98: #{tpu_custom_call.1} parent=67 // pred_check_branch
          %3315 = sbr.rel (%p3313) target = $region100
        $region99: #{tpu_custom_call.1} parent=67 // pred_region
          %s3316 = smul.u32 8, %s33
          %s3318 = ssub.s32 2048, 2048
          %3319 = vsyncadd %s3309, %s3318
          %s3320 = smul.addr %s3316, 2
          %s3321 = smul.addr %s3320, 128
          %s3322 = scalar_lea.hbm %s12, %s3321
          %s3323 = sshll.u32 %s3312, 4
          %s3324 = int_to_ptr.vmem [resolvable:$true] %s3323
          %3329 = dma.vmem_to_hbm [thread:$0]  %s3324, 2048, %s3322, %s3309, 128, 128, 8
        $region100: #{tpu_custom_call.1} parent=67 // pred_fallthru
          _
      $region68: #{tpu_custom_call.1} parent=5 // pred_fallthru
        _
      %p3330 = scmp.le.s32.totalorder 2, %s24
      // Predicated region
      $region101: #{tpu_custom_call.1} parent=5 // pred_check
        %p3331 = pneg %p3330
      $region102: #{tpu_custom_call.1} parent=5 // pred_check_branch
        %3333 = sbr.rel (%p3331) target = $region104
      $region103: #{tpu_custom_call.1} parent=5 // pred_region
        %s3334 = ssub.s32 %s24, 2
        // Predicated region
        $region105: #{tpu_custom_call.1} parent=103 // pred_check
          %p3335 = pneg %p362
        $region106: #{tpu_custom_call.1} parent=103 // pred_check_branch
          %3337 = sbr.rel (%p3335) target = $region108
        $region107: #{tpu_custom_call.1} parent=103 // pred_region
          %s3338 = sand.u32 %s347, 1
          %s3339 = scalar_lea.sflag [#allocation4], %s3338
          %s3340 = sand.u32 %s347, 1
          %s3341 = smul.addr %s3340, 128
          %s3342 = scalar_lea.vmem [#allocation12], %s3341
          %3343 = dma.done %s3339, 2048
        $region108: #{tpu_custom_call.1} parent=103 // pred_fallthru
          _
      $region104: #{tpu_custom_call.1} parent=5 // pred_fallthru
        _
    $region6: #{tpu_custom_call.1} parent=1 // loop_footer
      %s28 = sadd.s32 1, %s24
    $region7: #{tpu_custom_call.1} parent=1 // loop_footer_branch
      %23 = sbr.rel target = $region3
    $region8: #{tpu_custom_call.1} parent=1 // loop_exit
      _
    %3344 = vsyncpa [#allocation3], 1
    %s3345 = scalar_lea.sflag [#allocation3], 1
    %3346 = vsyncpa %s3345, 1
    %3347 = vsyncpa [#allocation6], 1
    %3348 = vsyncpa [#allocation9], 1
    %3349 = vsyncpa [#allocation4], 1
    %s3350 = scalar_lea.sflag [#allocation4], 1
    %3351 = vsyncpa %s3350, 1

// kernel: tpu_custom_call.1
$region0: #{tpu_custom_call.1}
  #allocation0 [shape = 'u32[]', space=smem, size = 0x4, offset = 0x4, fixed_abs, tag = 'smem constant byte address 0x4 - core index']
  #allocation1 [shape = 'u32[144,128]{1,0:T(1,128)}', space=vmem, size = 0x12000, scoped, tag = 'internal scratch']
  %s0 = inlined_call_operand.hbm [shape: f32[16,16,128], index: 0, kind: input, shape index: {}]
  %s1 = inlined_call_operand.hbm [shape: f32[128,256], index: 1, kind: input, shape index: {}]
  %s2 = inlined_call_operand.hbm [shape: f32[16,16], index: 2, kind: input, shape index: {}]
  %s3 = inlined_call_operand.hbm [shape: f32[16,16], index: 3, kind: input, shape index: {}]
  %s4 = inlined_call_operand.vmem [shape: f32[2,1,128], index: 4, kind: input, shape index: {}]
  %s5 = inlined_call_operand.vmem [shape: f32[2,1,128], index: 5, kind: input, shape index: {}]
  %s6 = inlined_call_operand.vmem [shape: f32[2,1,128], index: 6, kind: input, shape index: {}]
  %s7 = inlined_call_operand.vmem [shape: f32[2,1,128], index: 7, kind: input, shape index: {}]
  %s8 = inlined_call_operand.hbm [shape: bf16[2,128,256], index: 8, kind: input, shape index: {}]
  %s9 = inlined_call_operand.vmem [shape: f32[2,1,256], index: 9, kind: input, shape index: {}]
  %s10 = inlined_call_operand.hbm [shape: bf16[2,256,128], index: 10, kind: input, shape index: {}]
  %s11 = inlined_call_operand.vmem [shape: f32[2,1,128], index: 11, kind: input, shape index: {}]
  %s12 = inlined_call_operand.hbm [shape: f32[16,16,128], index: 12, kind: output, shape index: {}]
  %s13 = sld [smem:[#allocation0]]
  $region109: #{tpu_custom_call.1} parent=0
    _
  %s15 = ssub.s32 1, %s13
  %s16 = scalar_select 0, %s15, %s13
  $region1: #{tpu_custom_call.1} parent=0
    #allocation2 [shape = 'u8[131072]{0}', space=vmem, size = 0x20000, scoped, tag = 'input window, operand 0']
    #allocation3 [shape = 's32[2]{0}', space=sflag, size = 0x8, scoped, tag = 'scoped memory for tpu_custom_call.1']
    #allocation4 [shape = 's32[2]{0}', space=sflag, size = 0x8, scoped, tag = 'scoped memory for tpu_custom_call.1']
    #allocation5 [shape = 'u8[131072]{0}', space=vmem, size = 0x20000, scoped, tag = 'input window, operand 1, single buffered']
    #allocation6 [shape = 's32[1]{0}', space=sflag, size = 0x4, scoped, tag = 'scoped memory for tpu_custom_call.1']
    #allocation7 [shape = 'u8[8192]{0}', space=vmem, size = 0x2000, scoped, tag = 'input window, operand 2, single buffered']
    #allocation8 [shape = 'u8[8192]{0}', space=vmem, size = 0x2000, scoped, tag = 'input window, operand 3, single buffered']
    #allocation9 [shape = 's32[1]{0}', space=sflag, size = 0x4, scoped, tag = 'scoped memory for tpu_custom_call.1']
    #allocation10 [shape = 'u8[131072]{0}', space=vmem, size = 0x20000, scoped, tag = 'input window, operand 8']
    #allocation11 [shape = 'u8[131072]{0}', space=vmem, size = 0x20000, scoped, tag = 'input window, operand 10']
    #allocation12 [shape = 'u8[131072]{0}', space=vmem, size = 0x20000, scoped, tag = 'output window, operand 0']
    %17 = vsyncpa [#allocation3], 0
    %s18 = scalar_lea.sflag [#allocation3], 1
    %19 = vsyncpa %s18, 0
    %20 = vsyncpa [#allocation6], 0
    %21 = vsyncpa [#allocation9], 0
    %22 = vsyncpa [#allocation4], 0
    %s23 = scalar_lea.sflag [#allocation4], 1
    %24 = vsyncpa %s23, 0
    loop: start=0, step=1, limit=6
    $region2: #{tpu_custom_call.1} parent=1 // loop_pre_header
      _
    $region3: #{tpu_custom_call.1} parent=1 // loop_header
      %s26 = sphi 0, %s30
      %p27 = scmp.ge.s32.totalorder %s26, 6
      %s33 = sphi 0, %s45
      %s34 = sphi 0, %s41
      %s35 = sphi 0, %s33
      %s36 = sphi 0, %s34
      %s37 = sphi 0, %s35
      %s38 = sphi 0, %s36
      %s48 = sphi 0, %s50
      %s51 = sphi 0, %s48
      %s52 = sphi 0, %s51
      %s68 = sphi 0, %s52
      %s72 = sphi 0, %s72
      %s74 = sphi 0, %s72
      %s75 = sphi 0, %s74
      %s89 = sphi 0, %s75
      %s93 = sphi 0, %s93
      %s95 = sphi 0, %s93
      %s96 = sphi 0, %s95
      %s110 = sphi 0, %s96
      %s114 = sphi 0, %s114
      %s116 = sphi 0, %s114
      %s117 = sphi 0, %s116
      %s131 = sphi 0, %s117
      %s137 = sphi 0, %s139
      %s140 = sphi 0, %s137
      %s141 = sphi 0, %s140
      %s157 = sphi 0, %s141
      %s163 = sphi 0, %s165
      %s166 = sphi 0, %s163
      %s167 = sphi 0, %s166
      %s183 = sphi 0, %s167
      %s189 = sphi 0, %s191
      %s192 = sphi 0, %s189
      %s193 = sphi 0, %s192
      %s209 = sphi 0, %s193
      %s215 = sphi 0, %s217
      %s218 = sphi 0, %s215
      %s219 = sphi 0, %s218
      %s235 = sphi 0, %s219
      %s241 = sphi 0, %s243
      %s244 = sphi 0, %s241
      %s245 = sphi 0, %s244
      %s261 = sphi 0, %s245
      %s267 = sphi 0, %s269
      %s270 = sphi 0, %s267
      %s271 = sphi 0, %s270
      %s287 = sphi 0, %s271
      %s293 = sphi 0, %s295
      %s296 = sphi 0, %s293
      %s297 = sphi 0, %s296
      %s313 = sphi 0, %s297
      %s319 = sphi 0, %s321
      %s322 = sphi 0, %s319
      %s323 = sphi 0, %s322
      %s339 = sphi 0, %s323
      %s345 = sphi 0, %s347
      %s348 = sphi 0, %s345
      %s349 = sphi 0, %s348
      %s365 = sphi 0, %s349
    $region4: #{tpu_custom_call.1} parent=1 // loop_header_branch
      %29 = sbr.rel (%p27) target = $region8
    $region5: #{tpu_custom_call.1} parent=1 // loop_body
      %s31 = ssub.s32 %s26, 1
      %s32 = ssub.s32 %s26, 2
      %s39 = sadd.s32 1, %s34
      %p40 = scmp.ge.s32.totalorder %s39, 2
      %s41 = scalar_select %p40, 0, %s39
      %s42 = sadd.s32 1, %s33
      %s43 = scalar_select %p40, %s42, %s33
      %p44 = scmp.ge.s32.totalorder %s43, 2
      %s45 = scalar_select %p44, 0, %s43
      %s46 = ssub.s32 %s33, %s45
      %p47 = scmp.eq.s32.totalorder %s46, 0
      %s49 = sadd.s32 %s48, 1
      %s50 = scalar_select %p47, %s48, %s49
      %p53 = pneg %p47
      %p54 = scmp.eq.s32.totalorder %s26, 3
      %p55 = por %p53, %p54
      %p56 = scmp.ne.s32.totalorder %s48, %s51
      %p57 = scmp.eq.s32.totalorder %s26, 0
      %p58 = por %p56, %p57
      %p59 = scmp.ne.s32.totalorder %s48, %s51
      %p60 = scmp.eq.s32.totalorder %s31, 3
      %p61 = por %p59, %p60
      %p62 = scmp.ne.s32.totalorder %s51, %s52
      %p63 = scmp.eq.s32.totalorder %s31, 0
      %p64 = por %p62, %p63
      %p65 = scmp.ne.s32.totalorder %s51, %s52
      %p66 = scmp.eq.s32.totalorder %s32, 3
      %p67 = por %p65, %p66
      %p69 = scmp.ne.s32.totalorder %s52, %s68
      %p70 = scmp.eq.s32.totalorder %s32, 0
      %p71 = por %p69, %p70
      %s73 = sadd.s32 %s72, 1
      %p76 = scmp.eq.s32.totalorder %s26, 3
      %p77 = scmp.ne.s32.totalorder %s72, %s74
      %p78 = scmp.eq.s32.totalorder %s26, 0
      %p79 = por %p77, %p78
      %p80 = scmp.ne.s32.totalorder %s72, %s74
      %p81 = scmp.eq.s32.totalorder %s31, 3
      %p82 = por %p80, %p81
      %p83 = scmp.ne.s32.totalorder %s74, %s75
      %p84 = scmp.eq.s32.totalorder %s31, 0
      %p85 = por %p83, %p84
      %p86 = scmp.ne.s32.totalorder %s74, %s75
      %p87 = scmp.eq.s32.totalorder %s32, 3
      %p88 = por %p86, %p87
      %p90 = scmp.ne.s32.totalorder %s75, %s89
      %p91 = scmp.eq.s32.totalorder %s32, 0
      %p92 = por %p90, %p91
      %s94 = sadd.s32 %s93, 1
      %p97 = scmp.eq.s32.totalorder %s26, 3
      %p98 = scmp.ne.s32.totalorder %s93, %s95
      %p99 = scmp.eq.s32.totalorder %s26, 0
      %p100 = por %p98, %p99
      %p101 = scmp.ne.s32.totalorder %s93, %s95
      %p102 = scmp.eq.s32.totalorder %s31, 3
      %p103 = por %p101, %p102
      %p104 = scmp.ne.s32.totalorder %s95, %s96
      %p105 = scmp.eq.s32.totalorder %s31, 0
      %p106 = por %p104, %p105
      %p107 = scmp.ne.s32.totalorder %s95, %s96
      %p108 = scmp.eq.s32.totalorder %s32, 3
      %p109 = por %p107, %p108
      %p111 = scmp.ne.s32.totalorder %s96, %s110
      %p112 = scmp.eq.s32.totalorder %s32, 0
      %p113 = por %p111, %p112
      %s115 = sadd.s32 %s114, 1
      %p118 = scmp.eq.s32.totalorder %s26, 3
      %p119 = scmp.ne.s32.totalorder %s114, %s116
      %p120 = scmp.eq.s32.totalorder %s26, 0
      %p121 = por %p119, %p120
      %p122 = scmp.ne.s32.totalorder %s114, %s116
      %p123 = scmp.eq.s32.totalorder %s31, 3
      %p124 = por %p122, %p123
      %p125 = scmp.ne.s32.totalorder %s116, %s117
      %p126 = scmp.eq.s32.totalorder %s31, 0
      %p127 = por %p125, %p126
      %p128 = scmp.ne.s32.totalorder %s116, %s117
      %p129 = scmp.eq.s32.totalorder %s32, 3
      %p130 = por %p128, %p129
      %p132 = scmp.ne.s32.totalorder %s117, %s131
      %p133 = scmp.eq.s32.totalorder %s32, 0
      %p134 = por %p132, %p133
      %s135 = ssub.s32 %s34, %s41
      %p136 = scmp.eq.s32.totalorder %s135, 0
      %s138 = sadd.s32 %s137, 1
      %s139 = scalar_select %p136, %s137, %s138
      %p142 = pneg %p136
      %p143 = scmp.eq.s32.totalorder %s26, 3
      %p144 = por %p142, %p143
      %p145 = scmp.ne.s32.totalorder %s137, %s140
      %p146 = scmp.eq.s32.totalorder %s26, 0
      %p147 = por %p145, %p146
      %p148 = scmp.ne.s32.totalorder %s137, %s140
      %p149 = scmp.eq.s32.totalorder %s31, 3
      %p150 = por %p148, %p149
      %p151 = scmp.ne.s32.totalorder %s140, %s141
      %p152 = scmp.eq.s32.totalorder %s31, 0
      %p153 = por %p151, %p152
      %p154 = scmp.ne.s32.totalorder %s140, %s141
      %p155 = scmp.eq.s32.totalorder %s32, 3
      %p156 = por %p154, %p155
      %p158 = scmp.ne.s32.totalorder %s141, %s157
      %p159 = scmp.eq.s32.totalorder %s32, 0
      %p160 = por %p158, %p159
      %s161 = ssub.s32 %s34, %s41
      %p162 = scmp.eq.s32.totalorder %s161, 0
      %s164 = sadd.s32 %s163, 1
      %s165 = scalar_select %p162, %s163, %s164
      %p168 = pneg %p162
      %p169 = scmp.eq.s32.totalorder %s26, 3
      %p170 = por %p168, %p169
      %p171 = scmp.ne.s32.totalorder %s163, %s166
      %p172 = scmp.eq.s32.totalorder %s26, 0
      %p173 = por %p171, %p172
      %p174 = scmp.ne.s32.totalorder %s163, %s166
      %p175 = scmp.eq.s32.totalorder %s31, 3
      %p176 = por %p174, %p175
      %p177 = scmp.ne.s32.totalorder %s166, %s167
      %p178 = scmp.eq.s32.totalorder %s31, 0
      %p179 = por %p177, %p178
      %p180 = scmp.ne.s32.totalorder %s166, %s167
      %p181 = scmp.eq.s32.totalorder %s32, 3
      %p182 = por %p180, %p181
      %p184 = scmp.ne.s32.totalorder %s167, %s183
      %p185 = scmp.eq.s32.totalorder %s32, 0
      %p186 = por %p184, %p185
      %s187 = ssub.s32 %s34, %s41
      %p188 = scmp.eq.s32.totalorder %s187, 0
      %s190 = sadd.s32 %s189, 1
      %s191 = scalar_select %p188, %s189, %s190
      %p194 = pneg %p188
      %p195 = scmp.eq.s32.totalorder %s26, 3
      %p196 = por %p194, %p195
      %p197 = scmp.ne.s32.totalorder %s189, %s192
      %p198 = scmp.eq.s32.totalorder %s26, 0
      %p199 = por %p197, %p198
      %p200 = scmp.ne.s32.totalorder %s189, %s192
      %p201 = scmp.eq.s32.totalorder %s31, 3
      %p202 = por %p200, %p201
      %p203 = scmp.ne.s32.totalorder %s192, %s193
      %p204 = scmp.eq.s32.totalorder %s31, 0
      %p205 = por %p203, %p204
      %p206 = scmp.ne.s32.totalorder %s192, %s193
      %p207 = scmp.eq.s32.totalorder %s32, 3
      %p208 = por %p206, %p207
      %p210 = scmp.ne.s32.totalorder %s193, %s209
      %p211 = scmp.eq.s32.totalorder %s32, 0
      %p212 = por %p210, %p211
      %s213 = ssub.s32 %s34, %s41
      %p214 = scmp.eq.s32.totalorder %s213, 0
      %s216 = sadd.s32 %s215, 1
      %s217 = scalar_select %p214, %s215, %s216
      %p220 = pneg %p214
      %p221 = scmp.eq.s32.totalorder %s26, 3
      %p222 = por %p220, %p221
      %p223 = scmp.ne.s32.totalorder %s215, %s218
      %p224 = scmp.eq.s32.totalorder %s26, 0
      %p225 = por %p223, %p224
      %p226 = scmp.ne.s32.totalorder %s215, %s218
      %p227 = scmp.eq.s32.totalorder %s31, 3
      %p228 = por %p226, %p227
      %p229 = scmp.ne.s32.totalorder %s218, %s219
      %p230 = scmp.eq.s32.totalorder %s31, 0
      %p231 = por %p229, %p230
      %p232 = scmp.ne.s32.totalorder %s218, %s219
      %p233 = scmp.eq.s32.totalorder %s32, 3
      %p234 = por %p232, %p233
      %p236 = scmp.ne.s32.totalorder %s219, %s235
      %p237 = scmp.eq.s32.totalorder %s32, 0
      %p238 = por %p236, %p237
      %s239 = ssub.s32 %s34, %s41
      %p240 = scmp.eq.s32.totalorder %s239, 0
      %s242 = sadd.s32 %s241, 1
      %s243 = scalar_select %p240, %s241, %s242
      %p246 = pneg %p240
      %p247 = scmp.eq.s32.totalorder %s26, 3
      %p248 = por %p246, %p247
      %p249 = scmp.ne.s32.totalorder %s241, %s244
      %p250 = scmp.eq.s32.totalorder %s26, 0
      %p251 = por %p249, %p250
      %p252 = scmp.ne.s32.totalorder %s241, %s244
      %p253 = scmp.eq.s32.totalorder %s31, 3
      %p254 = por %p252, %p253
      %p255 = scmp.ne.s32.totalorder %s244, %s245
      %p256 = scmp.eq.s32.totalorder %s31, 0
      %p257 = por %p255, %p256
      %p258 = scmp.ne.s32.totalorder %s244, %s245
      %p259 = scmp.eq.s32.totalorder %s32, 3
      %p260 = por %p258, %p259
      %p262 = scmp.ne.s32.totalorder %s245, %s261
      %p263 = scmp.eq.s32.totalorder %s32, 0
      %p264 = por %p262, %p263
      %s265 = ssub.s32 %s34, %s41
      %p266 = scmp.eq.s32.totalorder %s265, 0
      %s268 = sadd.s32 %s267, 1
      %s269 = scalar_select %p266, %s267, %s268
      %p272 = pneg %p266
      %p273 = scmp.eq.s32.totalorder %s26, 3
      %p274 = por %p272, %p273
      %p275 = scmp.ne.s32.totalorder %s267, %s270
      %p276 = scmp.eq.s32.totalorder %s26, 0
      %p277 = por %p275, %p276
      %p278 = scmp.ne.s32.totalorder %s267, %s270
      %p279 = scmp.eq.s32.totalorder %s31, 3
      %p280 = por %p278, %p279
      %p281 = scmp.ne.s32.totalorder %s270, %s271
      %p282 = scmp.eq.s32.totalorder %s31, 0
      %p283 = por %p281, %p282
      %p284 = scmp.ne.s32.totalorder %s270, %s271
      %p285 = scmp.eq.s32.totalorder %s32, 3
      %p286 = por %p284, %p285
      %p288 = scmp.ne.s32.totalorder %s271, %s287
      %p289 = scmp.eq.s32.totalorder %s32, 0
      %p290 = por %p288, %p289
      %s291 = ssub.s32 %s34, %s41
      %p292 = scmp.eq.s32.totalorder %s291, 0
      %s294 = sadd.s32 %s293, 1
      %s295 = scalar_select %p292, %s293, %s294
      %p298 = pneg %p292
      %p299 = scmp.eq.s32.totalorder %s26, 3
      %p300 = por %p298, %p299
      %p301 = scmp.ne.s32.totalorder %s293, %s296
      %p302 = scmp.eq.s32.totalorder %s26, 0
      %p303 = por %p301, %p302
      %p304 = scmp.ne.s32.totalorder %s293, %s296
      %p305 = scmp.eq.s32.totalorder %s31, 3
      %p306 = por %p304, %p305
      %p307 = scmp.ne.s32.totalorder %s296, %s297
      %p308 = scmp.eq.s32.totalorder %s31, 0
      %p309 = por %p307, %p308
      %p310 = scmp.ne.s32.totalorder %s296, %s297
      %p311 = scmp.eq.s32.totalorder %s32, 3
      %p312 = por %p310, %p311
      %p314 = scmp.ne.s32.totalorder %s297, %s313
      %p315 = scmp.eq.s32.totalorder %s32, 0
      %p316 = por %p314, %p315
      %s317 = ssub.s32 %s34, %s41
      %p318 = scmp.eq.s32.totalorder %s317, 0
      %s320 = sadd.s32 %s319, 1
      %s321 = scalar_select %p318, %s319, %s320
      %p324 = pneg %p318
      %p325 = scmp.eq.s32.totalorder %s26, 3
      %p326 = por %p324, %p325
      %p327 = scmp.ne.s32.totalorder %s319, %s322
      %p328 = scmp.eq.s32.totalorder %s26, 0
      %p329 = por %p327, %p328
      %p330 = scmp.ne.s32.totalorder %s319, %s322
      %p331 = scmp.eq.s32.totalorder %s31, 3
      %p332 = por %p330, %p331
      %p333 = scmp.ne.s32.totalorder %s322, %s323
      %p334 = scmp.eq.s32.totalorder %s31, 0
      %p335 = por %p333, %p334
      %p336 = scmp.ne.s32.totalorder %s322, %s323
      %p337 = scmp.eq.s32.totalorder %s32, 3
      %p338 = por %p336, %p337
      %p340 = scmp.ne.s32.totalorder %s323, %s339
      %p341 = scmp.eq.s32.totalorder %s32, 0
      %p342 = por %p340, %p341
      %s343 = ssub.s32 %s33, %s45
      %p344 = scmp.eq.s32.totalorder %s343, 0
      %s346 = sadd.s32 %s345, 1
      %s347 = scalar_select %p344, %s345, %s346
      %p350 = pneg %p344
      %p351 = scmp.eq.s32.totalorder %s26, 3
      %p352 = por %p350, %p351
      %p353 = scmp.ne.s32.totalorder %s345, %s348
      %p354 = scmp.eq.s32.totalorder %s26, 0
      %p355 = por %p353, %p354
      %p356 = scmp.ne.s32.totalorder %s345, %s348
      %p357 = scmp.eq.s32.totalorder %s31, 3
      %p358 = por %p356, %p357
      %p359 = scmp.ne.s32.totalorder %s348, %s349
      %p360 = scmp.eq.s32.totalorder %s31, 0
      %p361 = por %p359, %p360
      %p362 = scmp.ne.s32.totalorder %s348, %s349
      %p363 = scmp.eq.s32.totalorder %s32, 3
      %p364 = por %p362, %p363
      %p366 = scmp.ne.s32.totalorder %s349, %s365
      %p367 = scmp.eq.s32.totalorder %s32, 0
      %p368 = por %p366, %p367
      %p369 = scmp.le.s32.totalorder 1, %s26
      %p370 = scmp.lt.s32.totalorder %s26, 5
      %p371 = pnand %p369, %p370
      %p372 = pneg %p371
      // Predicated region
      $region9: #{tpu_custom_call.1} parent=5 // pred_check
        _
      $region10: #{tpu_custom_call.1} parent=5 // pred_check_branch
        %374 = sbr.rel (%p371) target = $region12
      $region11: #{tpu_custom_call.1} parent=5 // pred_region
        %s375 = ssub.s32 %s26, 1
        // Predicated region
        $region13: #{tpu_custom_call.1} parent=11 // pred_check
          %p376 = pneg %p85
        $region14: #{tpu_custom_call.1} parent=11 // pred_check_branch
          %378 = sbr.rel (%p376) target = $region16
        $region15: #{tpu_custom_call.1} parent=11 // pred_region
          %s380 = ssub.s32 4096, 4096
          %381 = vsyncadd [#allocation6], %s380
          %s382 = sshll.u32 [#allocation5], 4
          %s383 = int_to_ptr.vmem [resolvable:$true] %s382
          %388 = dma.hbm_to_vmem [thread:$0]  %s1, 4096, %s383, [#allocation6], 256, 256, 16
        $region16: #{tpu_custom_call.1} parent=11 // pred_fallthru
          _
        // Predicated region
        $region17: #{tpu_custom_call.1} parent=11 // pred_check
          %p389 = pneg %p106
        $region18: #{tpu_custom_call.1} parent=11 // pred_check_branch
          %391 = sbr.rel (%p389) target = $region20
        $region19: #{tpu_custom_call.1} parent=11 // pred_region
          %s393 = ssub.s32 256, 256
          %394 = vsyncadd [#allocation6], %s393
          %s395 = sshll.u32 [#allocation7], 4
          %s396 = int_to_ptr.vmem [resolvable:$true] %s395
          %401 = dma.hbm_to_vmem [thread:$0]  %s2, 256, %s396, [#allocation6], 128, 128, 8
        $region20: #{tpu_custom_call.1} parent=11 // pred_fallthru
          _
        // Predicated region
        $region21: #{tpu_custom_call.1} parent=11 // pred_check
          %p402 = pneg %p127
        $region22: #{tpu_custom_call.1} parent=11 // pred_check_branch
          %404 = sbr.rel (%p402) target = $region24
        $region23: #{tpu_custom_call.1} parent=11 // pred_region
          %s406 = ssub.s32 256, 256
          %407 = vsyncadd [#allocation9], %s406
          %s408 = sshll.u32 [#allocation8], 4
          %s409 = int_to_ptr.vmem [resolvable:$true] %s408
          %414 = dma.hbm_to_vmem [thread:$0]  %s3, 256, %s409, [#allocation9], 128, 128, 8
        $region24: #{tpu_custom_call.1} parent=11 // pred_fallthru
          _
      $region12: #{tpu_custom_call.1} parent=5 // pred_fallthru
        _
      %p415 = scmp.lt.s32.totalorder %s26, 4
      // Predicated region
      $region25: #{tpu_custom_call.1} parent=5 // pred_check
        %p416 = pneg %p415
      $region26: #{tpu_custom_call.1} parent=5 // pred_check_branch
        %418 = sbr.rel (%p416) target = $region28
      $region27: #{tpu_custom_call.1} parent=5 // pred_region
        // Predicated region
        $region29: #{tpu_custom_call.1} parent=27 // pred_check
          %p419 = pneg %p58
        $region30: #{tpu_custom_call.1} parent=27 // pred_check_branch
          %421 = sbr.rel (%p419) target = $region32
        $region31: #{tpu_custom_call.1} parent=27 // pred_region
          %s422 = sand.u32 %s26, 1
          %s423 = scalar_lea.sflag [#allocation3], %s422
          %s424 = sand.u32 %s48, 1
          %s425 = smul.addr %s424, 128
          %s426 = scalar_lea.vmem [#allocation2], %s425
          %s427 = smul.u32 8, %s33
          %s429 = ssub.s32 2048, 2048
          %430 = vsyncadd %s423, %s429
          %s431 = smul.addr %s427, 2
          %s432 = smul.addr %s431, 128
          %s433 = scalar_lea.hbm %s0, %s432
          %s434 = sshll.u32 %s426, 4
          %s435 = int_to_ptr.vmem [resolvable:$true] %s434
          %440 = dma.hbm_to_vmem [thread:$0]  %s433, 2048, %s435, %s423, 128, 128, 8
        $region32: #{tpu_custom_call.1} parent=27 // pred_fallthru
          _
        // Predicated region
        $region33: #{tpu_custom_call.1} parent=27 // pred_check
          %p441 = pneg %p147
        $region34: #{tpu_custom_call.1} parent=27 // pred_check_branch
          %443 = sbr.rel (%p441) target = $region36
        $region35: #{tpu_custom_call.1} parent=27 // pred_region
          %p444 = scmp.lt.s32.totalorder %s34, 1
          %s445 = scalar_select %p444, %s34, 1
          %s446 = scalar_lea.vmem %s4, %s445
        $region36: #{tpu_custom_call.1} parent=27 // pred_fallthru
          _
        // Predicated region
        $region37: #{tpu_custom_call.1} parent=27 // pred_check
          %p447 = pneg %p173
        $region38: #{tpu_custom_call.1} parent=27 // pred_check_branch
          %449 = sbr.rel (%p447) target = $region40
        $region39: #{tpu_custom_call.1} parent=27 // pred_region
          %p450 = scmp.lt.s32.totalorder %s34, 1
          %s451 = scalar_select %p450, %s34, 1
          %s452 = scalar_lea.vmem %s5, %s451
        $region40: #{tpu_custom_call.1} parent=27 // pred_fallthru
          _
        // Predicated region
        $region41: #{tpu_custom_call.1} parent=27 // pred_check
          %p453 = pneg %p199
        $region42: #{tpu_custom_call.1} parent=27 // pred_check_branch
          %455 = sbr.rel (%p453) target = $region44
        $region43: #{tpu_custom_call.1} parent=27 // pred_region
          %p456 = scmp.lt.s32.totalorder %s34, 1
          %s457 = scalar_select %p456, %s34, 1
          %s458 = scalar_lea.vmem %s6, %s457
        $region44: #{tpu_custom_call.1} parent=27 // pred_fallthru
          _
        // Predicated region
        $region45: #{tpu_custom_call.1} parent=27 // pred_check
          %p459 = pneg %p225
        $region46: #{tpu_custom_call.1} parent=27 // pred_check_branch
          %461 = sbr.rel (%p459) target = $region48
        $region47: #{tpu_custom_call.1} parent=27 // pred_region
          %p462 = scmp.lt.s32.totalorder %s34, 1
          %s463 = scalar_select %p462, %s34, 1
          %s464 = scalar_lea.vmem %s7, %s463
        $region48: #{tpu_custom_call.1} parent=27 // pred_fallthru
          _
        // Predicated region
        $region49: #{tpu_custom_call.1} parent=27 // pred_check
          %p465 = pneg %p251
        $region50: #{tpu_custom_call.1} parent=27 // pred_check_branch
          %467 = sbr.rel (%p465) target = $region52
        $region51: #{tpu_custom_call.1} parent=27 // pred_region
          %s468 = sand.u32 %s26, 1
          %s469 = scalar_lea.sflag [#allocation3], %s468
          %s470 = sand.u32 %s241, 1
          %s471 = smul.addr %s470, 128
          %s472 = scalar_lea.vmem [#allocation10], %s471
          %s474 = ssub.s32 2048, 2048
          %475 = vsyncadd %s469, %s474
          %s476 = smul.addr %s34, 32
          %s477 = smul.addr %s476, 64
          %s478 = scalar_lea.hbm %s8, %s477
          %s479 = sshll.u32 %s472, 4
          %s480 = int_to_ptr.vmem [resolvable:$true] %s479
          %485 = dma.hbm_to_vmem [thread:$0]  %s478, 2048, %s480, %s469, 128, 128, 8
        $region52: #{tpu_custom_call.1} parent=27 // pred_fallthru
          _
        // Predicated region
        $region53: #{tpu_custom_call.1} parent=27 // pred_check
          %p486 = pneg %p277
        $region54: #{tpu_custom_call.1} parent=27 // pred_check_branch
          %488 = sbr.rel (%p486) target = $region56
        $region55: #{tpu_custom_call.1} parent=27 // pred_region
          %p489 = scmp.lt.s32.totalorder %s34, 1
          %s490 = scalar_select %p489, %s34, 1
          %s491 = smul.addr %s490, 2
          %s492 = scalar_lea.vmem %s9, %s491
        $region56: #{tpu_custom_call.1} parent=27 // pred_fallthru
          _
        // Predicated region
        $region57: #{tpu_custom_call.1} parent=27 // pred_check
          %p493 = pneg %p303
        $region58: #{tpu_custom_call.1} parent=27 // pred_check_branch
          %495 = sbr.rel (%p493) target = $region60
        $region59: #{tpu_custom_call.1} parent=27 // pred_region
          %s496 = sand.u32 %s26, 1
          %s497 = scalar_lea.sflag [#allocation3], %s496
          %s498 = sand.u32 %s293, 1
          %s499 = smul.addr %s498, 128
          %s500 = scalar_lea.vmem [#allocation11], %s499
          %s502 = ssub.s32 2048, 2048
          %503 = vsyncadd %s497, %s502
          %s504 = smul.addr %s34, 32
          %s505 = smul.addr %s504, 64
          %s506 = scalar_lea.hbm %s10, %s505
          %s507 = sshll.u32 %s500, 4
          %s508 = int_to_ptr.vmem [resolvable:$true] %s507
          %513 = dma.hbm_to_vmem [thread:$0]  %s506, 2048, %s508, %s497, 64, 64, 4
        $region60: #{tpu_custom_call.1} parent=27 // pred_fallthru
          _
        // Predicated region
        $region61: #{tpu_custom_call.1} parent=27 // pred_check
          %p514 = pneg %p329
        $region62: #{tpu_custom_call.1} parent=27 // pred_check_branch
          %516 = sbr.rel (%p514) target = $region64
        $region63: #{tpu_custom_call.1} parent=27 // pred_region
          %p517 = scmp.lt.s32.totalorder %s34, 1
          %s518 = scalar_select %p517, %s34, 1
          %s519 = scalar_lea.vmem %s11, %s518
        $region64: #{tpu_custom_call.1} parent=27 // pred_fallthru
          _
      $region28: #{tpu_custom_call.1} parent=5 // pred_fallthru
        _
      %p520 = scmp.le.s32.totalorder 1, %s26
      %p521 = scmp.lt.s32.totalorder %s26, 5
      %p522 = pnand %p520, %p521
      %p523 = pneg %p522
      // Predicated region
      $region65: #{tpu_custom_call.1} parent=5 // pred_check
        _
      $region66: #{tpu_custom_call.1} parent=5 // pred_check_branch
        %525 = sbr.rel (%p522) target = $region68
      $region67: #{tpu_custom_call.1} parent=5 // pred_region
        %s526 = ssub.s32 %s26, 1
        %s527 = sand.u32 %s31, 1
        %s528 = scalar_lea.sflag [#allocation3], %s527
        %s529 = sand.u32 %s51, 1
        %s530 = smul.addr %s529, 128
        %s531 = scalar_lea.vmem [#allocation2], %s530
        // Predicated region
        $region69: #{tpu_custom_call.1} parent=67 // pred_check
          %p532 = pneg %p64
        $region70: #{tpu_custom_call.1} parent=67 // pred_check_branch
          %534 = sbr.rel (%p532) target = $region72
        $region71: #{tpu_custom_call.1} parent=67 // pred_region
          %535 = dma.done %s528, 2048
        $region72: #{tpu_custom_call.1} parent=67 // pred_fallthru
          _
        // Predicated region
        $region73: #{tpu_custom_call.1} parent=67 // pred_check
          %p536 = pneg %p85
        $region74: #{tpu_custom_call.1} parent=67 // pred_check_branch
          %538 = sbr.rel (%p536) target = $region76
        $region75: #{tpu_custom_call.1} parent=67 // pred_region
          %539 = dma.done [#allocation6], 4096
        $region76: #{tpu_custom_call.1} parent=67 // pred_fallthru
          _
        // Predicated region
        $region77: #{tpu_custom_call.1} parent=67 // pred_check
          %p540 = pneg %p106
        $region78: #{tpu_custom_call.1} parent=67 // pred_check_branch
          %542 = sbr.rel (%p540) target = $region80
        $region79: #{tpu_custom_call.1} parent=67 // pred_region
          %543 = dma.done [#allocation6], 256
        $region80: #{tpu_custom_call.1} parent=67 // pred_fallthru
          _
        // Predicated region
        $region81: #{tpu_custom_call.1} parent=67 // pred_check
          %p544 = pneg %p127
        $region82: #{tpu_custom_call.1} parent=67 // pred_check_branch
          %546 = sbr.rel (%p544) target = $region84
        $region83: #{tpu_custom_call.1} parent=67 // pred_region
          %547 = dma.done [#allocation9], 256
        $region84: #{tpu_custom_call.1} parent=67 // pred_fallthru
          _
        %s548 = sand.u32 %s31, 1
        %s549 = scalar_lea.sflag [#allocation3], %s548
        %s550 = sand.u32 %s244, 1
        %s551 = smul.addr %s550, 128
        %s552 = scalar_lea.vmem [#allocation10], %s551
        // Predicated region
        $region85: #{tpu_custom_call.1} parent=67 // pred_check
          %p553 = pneg %p257
        $region86: #{tpu_custom_call.1} parent=67 // pred_check_branch
          %555 = sbr.rel (%p553) target = $region88
        $region87: #{tpu_custom_call.1} parent=67 // pred_region
          %556 = dma.done %s549, 2048
        $region88: #{tpu_custom_call.1} parent=67 // pred_fallthru
          _
        %s557 = sand.u32 %s31, 1
        %s558 = scalar_lea.sflag [#allocation3], %s557
        %s559 = sand.u32 %s296, 1
        %s560 = smul.addr %s559, 128
        %s561 = scalar_lea.vmem [#allocation11], %s560
        // Predicated region
        $region89: #{tpu_custom_call.1} parent=67 // pred_check
          %p562 = pneg %p309
        $region90: #{tpu_custom_call.1} parent=67 // pred_check_branch
          %564 = sbr.rel (%p562) target = $region92
        $region91: #{tpu_custom_call.1} parent=67 // pred_region
          %565 = dma.done %s558, 2048
        $region92: #{tpu_custom_call.1} parent=67 // pred_fallthru
          _
        %s566 = sand.u32 %s31, 1
        %s567 = scalar_lea.sflag [#allocation3], %s566
        %s568 = sand.u32 %s51, 1
        %s569 = smul.addr %s568, 128
        %s570 = scalar_lea.vmem [#allocation2], %s569
        %p571 = pneg %p64
        %p572 = pneg %p61
        %p573 = pneg %p85
        %p574 = pneg %p82
        %p575 = pneg %p106
        %p576 = pneg %p103
        %p577 = pneg %p127
        %p578 = pneg %p124
        %p579 = scmp.lt.s32.totalorder %s36, 1
        %s580 = scalar_select %p579, %s36, 1
        %s581 = scalar_lea.vmem %s4, %s580
        %p582 = pneg %p153
        %p583 = pneg %p150
        %p584 = scmp.lt.s32.totalorder %s36, 1
        %s585 = scalar_select %p584, %s36, 1
        %s586 = scalar_lea.vmem %s5, %s585
        %p587 = pneg %p179
        %p588 = pneg %p176
        %p589 = scmp.lt.s32.totalorder %s36, 1
        %s590 = scalar_select %p589, %s36, 1
        %s591 = scalar_lea.vmem %s6, %s590
        %p592 = pneg %p205
        %p593 = pneg %p202
        %p594 = scmp.lt.s32.totalorder %s36, 1
        %s595 = scalar_select %p594, %s36, 1
        %s596 = scalar_lea.vmem %s7, %s595
        %p597 = pneg %p231
        %p598 = pneg %p228
        %s599 = sand.u32 %s31, 1
        %s600 = scalar_lea.sflag [#allocation3], %s599
        %s601 = sand.u32 %s244, 1
        %s602 = smul.addr %s601, 128
        %s603 = scalar_lea.vmem [#allocation10], %s602
        %p604 = pneg %p257
        %p605 = pneg %p254
        %p606 = scmp.lt.s32.totalorder %s36, 1
        %s607 = scalar_select %p606, %s36, 1
        %s608 = smul.addr %s607, 2
        %s609 = scalar_lea.vmem %s9, %s608
        %p610 = pneg %p283
        %p611 = pneg %p280
        %s612 = sand.u32 %s31, 1
        %s613 = scalar_lea.sflag [#allocation3], %s612
        %s614 = sand.u32 %s296, 1
        %s615 = smul.addr %s614, 128
        %s616 = scalar_lea.vmem [#allocation11], %s615
        %p617 = pneg %p309
        %p618 = pneg %p306
        %p619 = scmp.lt.s32.totalorder %s36, 1
        %s620 = scalar_select %p619, %s36, 1
        %s621 = scalar_lea.vmem %s11, %s620
        %p622 = pneg %p335
        %p623 = pneg %p332
        %p624 = pneg %p361
        %p625 = pneg %p358
        %s626 = sand.u32 %s348, 1
        %s627 = scalar_lea.sflag [#allocation4], %s626
        %s628 = sand.u32 %s348, 1
        %s629 = smul.addr %s628, 128
        %s630 = scalar_lea.vmem [#allocation12], %s629
        %s631 = smul.u32 8, %s35
        %p632 = scmp.lt.s32.totalorder %s36, 1
        %s633 = scalar_select %p632, %s36, 1
        %s634 = scalar_lea.vmem %s4, %s633
        %p635 = scmp.lt.s32.totalorder %s36, 1
        %s636 = scalar_select %p635, %s36, 1
        %s637 = scalar_lea.vmem %s5, %s636
        %p638 = scmp.lt.s32.totalorder %s36, 1
        %s639 = scalar_select %p638, %s36, 1
        %s640 = scalar_lea.vmem %s6, %s639
        %p641 = scmp.lt.s32.totalorder %s36, 1
        %s642 = scalar_select %p641, %s36, 1
        %s643 = scalar_lea.vmem %s7, %s642
        %p644 = scmp.lt.s32.totalorder %s36, 1
        %s645 = scalar_select %p644, %s36, 1
        %s646 = smul.addr %s645, 2
        %s647 = scalar_lea.vmem %s9, %s646
        %p648 = scmp.lt.s32.totalorder %s36, 1
        %s649 = scalar_select %p648, %s36, 1
        %s650 = scalar_lea.vmem %s11, %s649
        %s651 = smul.u32 8, %s35
        %p653 = scmp.eq.s32.totalorder %s36, 0
        // Predicated region
        $region93: #{tpu_custom_call.1} parent=67 // pred_check
          %p654 = pneg %p653
        $region94: #{tpu_custom_call.1} parent=67 // pred_check_branch
          %656 = sbr.rel (%p654) target = $region96
        $region95: #{tpu_custom_call.1} parent=67 // pred_region
          %v657 = vld [vmem:[%s531] sm:$0xff]
          %v658 = vld [vmem:[%s531 + $0x8] sm:$0xff]
          %v659 = vld [vmem:[%s531 + $0x10] sm:$0xff]
          %v660 = vld [vmem:[%s531 + $0x18] sm:$0xff]
          %v661 = vld [vmem:[%s531 + $0x20] sm:$0xff]
          %v662 = vld [vmem:[%s531 + $0x28] sm:$0xff]
          %v663 = vld [vmem:[%s531 + $0x30] sm:$0xff]
          %v664 = vld [vmem:[%s531 + $0x38] sm:$0xff]
          %v665 = vld [vmem:[%s531 + $0x40] sm:$0xff]
          %v666 = vld [vmem:[%s531 + $0x48] sm:$0xff]
          %v667 = vld [vmem:[%s531 + $0x50] sm:$0xff]
          %v668 = vld [vmem:[%s531 + $0x58] sm:$0xff]
          %v669 = vld [vmem:[%s531 + $0x60] sm:$0xff]
          %v670 = vld [vmem:[%s531 + $0x68] sm:$0xff]
          %v671 = vld [vmem:[%s531 + $0x70] sm:$0xff]
          %v672 = vld [vmem:[%s531 + $0x78] sm:$0xff]
          %673 = vst [vmem:[%s630] sm:$0xff] %v657
          %674 = vst [vmem:[%s630 + $0x8] sm:$0xff] %v658
          %675 = vst [vmem:[%s630 + $0x10] sm:$0xff] %v659
          %676 = vst [vmem:[%s630 + $0x18] sm:$0xff] %v660
          %677 = vst [vmem:[%s630 + $0x20] sm:$0xff] %v661
          %678 = vst [vmem:[%s630 + $0x28] sm:$0xff] %v662
          %679 = vst [vmem:[%s630 + $0x30] sm:$0xff] %v663
          %680 = vst [vmem:[%s630 + $0x38] sm:$0xff] %v664
          %681 = vst [vmem:[%s630 + $0x40] sm:$0xff] %v665
          %682 = vst [vmem:[%s630 + $0x48] sm:$0xff] %v666
          %683 = vst [vmem:[%s630 + $0x50] sm:$0xff] %v667
          %684 = vst [vmem:[%s630 + $0x58] sm:$0xff] %v668
          %685 = vst [vmem:[%s630 + $0x60] sm:$0xff] %v669
          %686 = vst [vmem:[%s630 + $0x68] sm:$0xff] %v670
          %687 = vst [vmem:[%s630 + $0x70] sm:$0xff] %v671
          %688 = vst [vmem:[%s630 + $0x78] sm:$0xff] %v672
        $region96: #{tpu_custom_call.1} parent=67 // pred_fallthru
          _
        %v689 = vld [vmem:[%s630] sm:$0xff]
        %v690 = vld [vmem:[%s630 + $0x8] sm:$0xff]
        %v691 = vld [vmem:[%s630 + $0x10] sm:$0xff]
        %v692 = vld [vmem:[%s630 + $0x18] sm:$0xff]
        %v693 = vld [vmem:[%s630 + $0x20] sm:$0xff]
        %v694 = vld [vmem:[%s630 + $0x28] sm:$0xff]
        %v695 = vld [vmem:[%s630 + $0x30] sm:$0xff]
        %v696 = vld [vmem:[%s630 + $0x38] sm:$0xff]
        %v697 = vld [vmem:[%s630 + $0x40] sm:$0xff]
        %v698 = vld [vmem:[%s630 + $0x48] sm:$0xff]
        %v699 = vld [vmem:[%s630 + $0x50] sm:$0xff]
        %v700 = vld [vmem:[%s630 + $0x58] sm:$0xff]
        %v701 = vld [vmem:[%s630 + $0x60] sm:$0xff]
        %v702 = vld [vmem:[%s630 + $0x68] sm:$0xff]
        %v703 = vld [vmem:[%s630 + $0x70] sm:$0xff]
        %v704 = vld [vmem:[%s630 + $0x78] sm:$0xff]
        %v705 = vld [vmem:[%s634] sm:$0x1]
        %v706 = vld [vmem:[%s637] sm:$0x1]
        %v707 = vld [vmem:[%s640] sm:$0x1]
        %v708 = vld [vmem:[%s643] sm:$0x1]
        %v709 = vld [vmem:[%s650] sm:$0x1]
        %710 = vadd.xlane.f32.xlu0 %v689
        %v711 = vpop.xlane.xlu0 %710
        %712 = vadd.xlane.f32.xlu0 %v690
        %v713 = vpop.xlane.xlu0 %712
        %714 = vadd.xlane.f32.xlu0 %v691
        %v715 = vpop.xlane.xlu0 %714
        %716 = vadd.xlane.f32.xlu0 %v692
        %v717 = vpop.xlane.xlu0 %716
        %718 = vadd.xlane.f32.xlu0 %v693
        %v719 = vpop.xlane.xlu0 %718
        %720 = vadd.xlane.f32.xlu0 %v694
        %v721 = vpop.xlane.xlu0 %720
        %722 = vadd.xlane.f32.xlu0 %v695
        %v723 = vpop.xlane.xlu0 %722
        %724 = vadd.xlane.f32.xlu0 %v696
        %v725 = vpop.xlane.xlu0 %724
        %726 = vadd.xlane.f32.xlu0 %v697
        %v727 = vpop.xlane.xlu0 %726
        %728 = vadd.xlane.f32.xlu0 %v698
        %v729 = vpop.xlane.xlu0 %728
        %730 = vadd.xlane.f32.xlu0 %v699
        %v731 = vpop.xlane.xlu0 %730
        %732 = vadd.xlane.f32.xlu0 %v700
        %v733 = vpop.xlane.xlu0 %732
        %734 = vadd.xlane.f32.xlu0 %v701
        %v735 = vpop.xlane.xlu0 %734
        %736 = vadd.xlane.f32.xlu0 %v702
        %v737 = vpop.xlane.xlu0 %736
        %738 = vadd.xlane.f32.xlu0 %v703
        %v739 = vpop.xlane.xlu0 %738
        %740 = vadd.xlane.f32.xlu0 %v704
        %v741 = vpop.xlane.xlu0 %740
        %v742 = vrcp.pop 128.0
        %v743 = vmul.f32 %v711, %v742
        %v744 = vmul.f32 %v713, %v742
        %v745 = vmul.f32 %v715, %v742
        %v746 = vmul.f32 %v717, %v742
        %v747 = vmul.f32 %v719, %v742
        %v748 = vmul.f32 %v721, %v742
        %v749 = vmul.f32 %v723, %v742
        %v750 = vmul.f32 %v725, %v742
        %v751 = vmul.f32 %v727, %v742
        %v752 = vmul.f32 %v729, %v742
        %v753 = vmul.f32 %v731, %v742
        %v754 = vmul.f32 %v733, %v742
        %v755 = vmul.f32 %v735, %v742
        %v756 = vmul.f32 %v737, %v742
        %v757 = vmul.f32 %v739, %v742
        %v758 = vmul.f32 %v741, %v742
        %v759 = vmul.f32 %v689, %v689
        %v760 = vmul.f32 %v690, %v690
        %v761 = vmul.f32 %v691, %v691
        %v762 = vmul.f32 %v692, %v692
        %v763 = vmul.f32 %v693, %v693
        %v764 = vmul.f32 %v694, %v694
        %v765 = vmul.f32 %v695, %v695
        %v766 = vmul.f32 %v696, %v696
        %v767 = vmul.f32 %v697, %v697
        %v768 = vmul.f32 %v698, %v698
        %v769 = vmul.f32 %v699, %v699
        %v770 = vmul.f32 %v700, %v700
        %v771 = vmul.f32 %v701, %v701
        %v772 = vmul.f32 %v702, %v702
        %v773 = vmul.f32 %v703, %v703
        %v774 = vmul.f32 %v704, %v704
        %775 = vadd.xlane.f32.xlu0 %v759
        %v776 = vpop.xlane.xlu0 %775
        %777 = vadd.xlane.f32.xlu0 %v760
        %v778 = vpop.xlane.xlu0 %777
        %779 = vadd.xlane.f32.xlu0 %v761
        %v780 = vpop.xlane.xlu0 %779
        %781 = vadd.xlane.f32.xlu0 %v762
        %v782 = vpop.xlane.xlu0 %781
        %783 = vadd.xlane.f32.xlu0 %v763
        %v784 = vpop.xlane.xlu0 %783
        %785 = vadd.xlane.f32.xlu0 %v764
        %v786 = vpop.xlane.xlu0 %785
        %787 = vadd.xlane.f32.xlu0 %v765
        %v788 = vpop.xlane.xlu0 %787
        %789 = vadd.xlane.f32.xlu0 %v766
        %v790 = vpop.xlane.xlu0 %789
        %791 = vadd.xlane.f32.xlu0 %v767
        %v792 = vpop.xlane.xlu0 %791
        %793 = vadd.xlane.f32.xlu0 %v768
        %v794 = vpop.xlane.xlu0 %793
        %795 = vadd.xlane.f32.xlu0 %v769
        %v796 = vpop.xlane.xlu0 %795
        %797 = vadd.xlane.f32.xlu0 %v770
        %v798 = vpop.xlane.xlu0 %797
        %799 = vadd.xlane.f32.xlu0 %v771
        %v800 = vpop.xlane.xlu0 %799
        %801 = vadd.xlane.f32.xlu0 %v772
        %v802 = vpop.xlane.xlu0 %801
        %803 = vadd.xlane.f32.xlu0 %v773
        %v804 = vpop.xlane.xlu0 %803
        %805 = vadd.xlane.f32.xlu0 %v774
        %v806 = vpop.xlane.xlu0 %805
        %v807 = vmul.f32 %v776, %v742
        %v808 = vmul.f32 %v778, %v742
        %v809 = vmul.f32 %v780, %v742
        %v810 = vmul.f32 %v782, %v742
        %v811 = vmul.f32 %v784, %v742
        %v812 = vmul.f32 %v786, %v742
        %v813 = vmul.f32 %v788, %v742
        %v814 = vmul.f32 %v790, %v742
        %v815 = vmul.f32 %v792, %v742
        %v816 = vmul.f32 %v794, %v742
        %v817 = vmul.f32 %v796, %v742
        %v818 = vmul.f32 %v798, %v742
        %v819 = vmul.f32 %v800, %v742
        %v820 = vmul.f32 %v802, %v742
        %v821 = vmul.f32 %v804, %v742
        %v822 = vmul.f32 %v806, %v742
        %v823 = vmul.f32 %v743, %v743
        %v824 = vmul.f32 %v744, %v744
        %v825 = vmul.f32 %v745, %v745
        %v826 = vmul.f32 %v746, %v746
        %v827 = vmul.f32 %v747, %v747
        %v828 = vmul.f32 %v748, %v748
        %v829 = vmul.f32 %v749, %v749
        %v830 = vmul.f32 %v750, %v750
        %v831 = vmul.f32 %v751, %v751
        %v832 = vmul.f32 %v752, %v752
        %v833 = vmul.f32 %v753, %v753
        %v834 = vmul.f32 %v754, %v754
        %v835 = vmul.f32 %v755, %v755
        %v836 = vmul.f32 %v756, %v756
        %v837 = vmul.f32 %v757, %v757
        %v838 = vmul.f32 %v758, %v758
        %v839 = vsub.f32 %v807, %v823
        %v840 = vsub.f32 %v808, %v824
        %v841 = vsub.f32 %v809, %v825
        %v842 = vsub.f32 %v810, %v826
        %v843 = vsub.f32 %v811, %v827
        %v844 = vsub.f32 %v812, %v828
        %v845 = vsub.f32 %v813, %v829
        %v846 = vsub.f32 %v814, %v830
        %v847 = vsub.f32 %v815, %v831
        %v848 = vsub.f32 %v816, %v832
        %v849 = vsub.f32 %v817, %v833
        %v850 = vsub.f32 %v818, %v834
        %v851 = vsub.f32 %v819, %v835
        %v852 = vsub.f32 %v820, %v836
        %v853 = vsub.f32 %v821, %v837
        %v854 = vsub.f32 %v822, %v838
        %v855 = vsub.f32 %v689, %v743
        %v856 = vsub.f32 %v690, %v744
        %v857 = vsub.f32 %v691, %v745
        %v858 = vsub.f32 %v692, %v746
        %v859 = vsub.f32 %v693, %v747
        %v860 = vsub.f32 %v694, %v748
        %v861 = vsub.f32 %v695, %v749
        %v862 = vsub.f32 %v696, %v750
        %v863 = vsub.f32 %v697, %v751
        %v864 = vsub.f32 %v698, %v752
        %v865 = vsub.f32 %v699, %v753
        %v866 = vsub.f32 %v700, %v754
        %v867 = vsub.f32 %v701, %v755
        %v868 = vsub.f32 %v702, %v756
        %v869 = vsub.f32 %v703, %v757
        %v870 = vsub.f32 %v704, %v758
        %v871 = vadd.f32 %v839, 1e-05
        %v872 = vadd.f32 %v840, 1e-05
        %v873 = vadd.f32 %v841, 1e-05
        %v874 = vadd.f32 %v842, 1e-05
        %v875 = vadd.f32 %v843, 1e-05
        %v876 = vadd.f32 %v844, 1e-05
        %v877 = vadd.f32 %v845, 1e-05
        %v878 = vadd.f32 %v846, 1e-05
        %v879 = vadd.f32 %v847, 1e-05
        %v880 = vadd.f32 %v848, 1e-05
        %v881 = vadd.f32 %v849, 1e-05
        %v882 = vadd.f32 %v850, 1e-05
        %v883 = vadd.f32 %v851, 1e-05
        %v884 = vadd.f32 %v852, 1e-05
        %v885 = vadd.f32 %v853, 1e-05
        %v886 = vadd.f32 %v854, 1e-05
        %v887 = vrsqrt.pop %v871
        %v888 = vrsqrt.pop %v872
        %v889 = vrsqrt.pop %v873
        %v890 = vrsqrt.pop %v874
        %v891 = vrsqrt.pop %v875
        %v892 = vrsqrt.pop %v876
        %v893 = vrsqrt.pop %v877
        %v894 = vrsqrt.pop %v878
        %v895 = vrsqrt.pop %v879
        %v896 = vrsqrt.pop %v880
        %v897 = vrsqrt.pop %v881
        %v898 = vrsqrt.pop %v882
        %v899 = vrsqrt.pop %v883
        %v900 = vrsqrt.pop %v884
        %v901 = vrsqrt.pop %v885
        %v902 = vrsqrt.pop %v886
        %v903 = vmul.f32 %v855, %v887
        %v904 = vmul.f32 %v856, %v888
        %v905 = vmul.f32 %v857, %v889
        %v906 = vmul.f32 %v858, %v890
        %v907 = vmul.f32 %v859, %v891
        %v908 = vmul.f32 %v860, %v892
        %v909 = vmul.f32 %v861, %v893
        %v910 = vmul.f32 %v862, %v894
        %v911 = vmul.f32 %v863, %v895
        %v912 = vmul.f32 %v864, %v896
        %v913 = vmul.f32 %v865, %v897
        %v914 = vmul.f32 %v866, %v898
        %v915 = vmul.f32 %v867, %v899
        %v916 = vmul.f32 %v868, %v900
        %v917 = vmul.f32 %v869, %v901
        %v918 = vmul.f32 %v870, %v902
        %v920 = vlaneseq
        %v921 = vshrl.u32 %v920, 7
        %v922 = vsub.s32 0, %v921
        %v923 = vrot.slane %v705, %v922
        %v925 = vmul.f32 %v903, %v923
        %v926 = vmul.f32 %v904, %v923
        %v927 = vmul.f32 %v905, %v923
        %v928 = vmul.f32 %v906, %v923
        %v929 = vmul.f32 %v907, %v923
        %v930 = vmul.f32 %v908, %v923
        %v931 = vmul.f32 %v909, %v923
        %v932 = vmul.f32 %v910, %v923
        %v933 = vmul.f32 %v911, %v923
        %v934 = vmul.f32 %v912, %v923
        %v935 = vmul.f32 %v913, %v923
        %v936 = vmul.f32 %v914, %v923
        %v937 = vmul.f32 %v915, %v923
        %v938 = vmul.f32 %v916, %v923
        %v939 = vmul.f32 %v917, %v923
        %v940 = vmul.f32 %v918, %v923
        %v942 = vlaneseq
        %v943 = vshrl.u32 %v942, 7
        %v944 = vsub.s32 0, %v943
        %v945 = vrot.slane %v706, %v944
        %v947 = vadd.f32 %v925, %v945
        %v948 = vadd.f32 %v926, %v945
        %v949 = vadd.f32 %v927, %v945
        %v950 = vadd.f32 %v928, %v945
        %v951 = vadd.f32 %v929, %v945
        %v952 = vadd.f32 %v930, %v945
        %v953 = vadd.f32 %v931, %v945
        %v954 = vadd.f32 %v932, %v945
        %v955 = vadd.f32 %v933, %v945
        %v956 = vadd.f32 %v934, %v945
        %v957 = vadd.f32 %v935, %v945
        %v958 = vadd.f32 %v936, %v945
        %v959 = vadd.f32 %v937, %v945
        %v960 = vadd.f32 %v938, %v945
        %v961 = vadd.f32 %v939, %v945
        %v962 = vadd.f32 %v940, %v945
        %v963 = vld [vmem:[#allocation5] sm:$0xff]
        %v964 = vld [vmem:[#allocation5 + $0x8] sm:$0xff]
        %v965 = vld [vmem:[#allocation5 + $0x10] sm:$0xff]
        %v966 = vld [vmem:[#allocation5 + $0x18] sm:$0xff]
        %v967 = vld [vmem:[#allocation5 + $0x20] sm:$0xff]
        %v968 = vld [vmem:[#allocation5 + $0x28] sm:$0xff]
        %v969 = vld [vmem:[#allocation5 + $0x30] sm:$0xff]
        %v970 = vld [vmem:[#allocation5 + $0x38] sm:$0xff]
        %v971 = vld [vmem:[#allocation5 + $0x40] sm:$0xff]
        %v972 = vld [vmem:[#allocation5 + $0x48] sm:$0xff]
        %v973 = vld [vmem:[#allocation5 + $0x50] sm:$0xff]
        %v974 = vld [vmem:[#allocation5 + $0x58] sm:$0xff]
        %v975 = vld [vmem:[#allocation5 + $0x60] sm:$0xff]
        %v976 = vld [vmem:[#allocation5 + $0x68] sm:$0xff]
        %v977 = vld [vmem:[#allocation5 + $0x70] sm:$0xff]
        %v978 = vld [vmem:[#allocation5 + $0x78] sm:$0xff]
        %v979 = vld [vmem:[#allocation5 + $0x80] sm:$0xff]
        %v980 = vld [vmem:[#allocation5 + $0x88] sm:$0xff]
        %v981 = vld [vmem:[#allocation5 + $0x90] sm:$0xff]
        %v982 = vld [vmem:[#allocation5 + $0x98] sm:$0xff]
        %v983 = vld [vmem:[#allocation5 + $0xa0] sm:$0xff]
        %v984 = vld [vmem:[#allocation5 + $0xa8] sm:$0xff]
        %v985 = vld [vmem:[#allocation5 + $0xb0] sm:$0xff]
        %v986 = vld [vmem:[#allocation5 + $0xb8] sm:$0xff]
        %v987 = vld [vmem:[#allocation5 + $0xc0] sm:$0xff]
        %v988 = vld [vmem:[#allocation5 + $0xc8] sm:$0xff]
        %v989 = vld [vmem:[#allocation5 + $0xd0] sm:$0xff]
        %v990 = vld [vmem:[#allocation5 + $0xd8] sm:$0xff]
        %v991 = vld [vmem:[#allocation5 + $0xe0] sm:$0xff]
        %v992 = vld [vmem:[#allocation5 + $0xe8] sm:$0xff]
        %v993 = vld [vmem:[#allocation5 + $0xf0] sm:$0xff]
        %v994 = vld [vmem:[#allocation5 + $0xf8] sm:$0xff]
        %995 = vmatprep.subr.mxu0 %v994
        %996 = vmatpush1.msra.mxu0 %v993
        %997 = vmatprep.subr.mxu0 %v992
        %998 = vmatpush1.msra.mxu0 %v991
        %999 = vmatprep.subr.mxu0 %v990
        %1000 = vmatpush1.msra.mxu0 %v989
        %1001 = vmatprep.subr.mxu0 %v988
        %1002 = vmatpush1.msra.mxu0 %v987
        %1003 = vmatprep.subr.mxu0 %v986
        %1004 = vmatpush1.msra.mxu0 %v985
        %1005 = vmatprep.subr.mxu0 %v984
        %1006 = vmatpush1.msra.mxu0 %v983
        %1007 = vmatprep.subr.mxu0 %v982
        %1008 = vmatpush1.msra.mxu0 %v981
        %1009 = vmatprep.subr.mxu0 %v980
        %1010 = vmatpush1.msra.mxu0 %v979
        %1011 = vmatprep.subr.mxu0 %v978
        %1012 = vmatpush1.msra.mxu0 %v977
        %1013 = vmatprep.subr.mxu0 %v976
        %1014 = vmatpush1.msra.mxu0 %v975
        %1015 = vmatprep.subr.mxu0 %v974
        %1016 = vmatpush1.msra.mxu0 %v973
        %1017 = vmatprep.subr.mxu0 %v972
        %1018 = vmatpush1.msra.mxu0 %v971
        %1019 = vmatprep.subr.mxu0 %v970
        %1020 = vmatpush1.msra.mxu0 %v969
        %1021 = vmatprep.subr.mxu0 %v968
        %1022 = vmatpush1.msra.mxu0 %v967
        %1023 = vmatprep.subr.mxu0 %v966
        %1024 = vmatpush1.msra.mxu0 %v965
        %1025 = vmatprep.subr.mxu0 %v964
        %1026 = vmatpush1.msra.mxu0 %v963
        %1027 = vmatprep.subr.mxu0 0.0
        %1028 = vmatpush2.msra.mxu0 0.0
        %1029 = vmatprep.subr.mxu0 0.0
        %1030 = vmatpush2.msra.mxu0 0.0
        %1031 = vmatprep.subr.mxu0 0.0
        %1032 = vmatpush2.msra.mxu0 0.0
        %1033 = vmatprep.subr.mxu0 0.0
        %1034 = vmatpush2.msra.mxu0 0.0
        %1035 = vmatprep.subr.mxu0 0.0
        %1036 = vmatpush2.msra.mxu0 0.0
        %1037 = vmatprep.subr.mxu0 0.0
        %1038 = vmatpush2.msra.mxu0 0.0
        %1039 = vmatprep.subr.mxu0 0.0
        %1040 = vmatpush2.msra.mxu0 0.0
        %1041 = vmatprep.subr.mxu0 0.0
        %1042 = vmatpush2.msra.mxu0 0.0
        %1043 = vmatprep.subr.mxu0 0.0
        %1044 = vmatpush2.msra.mxu0 0.0
        %1045 = vmatprep.subr.mxu0 0.0
        %1046 = vmatpush2.msra.mxu0 0.0
        %1047 = vmatprep.subr.mxu0 0.0
        %1048 = vmatpush2.msra.mxu0 0.0
        %1049 = vmatprep.subr.mxu0 0.0
        %1050 = vmatpush2.msra.mxu0 0.0
        %1051 = vmatprep.subr.mxu0 0.0
        %1052 = vmatpush2.msra.mxu0 0.0
        %1053 = vmatprep.subr.mxu0 0.0
        %1054 = vmatpush2.msra.mxu0 0.0
        %1055 = vmatprep.subr.mxu0 0.0
        %1056 = vmatpush2.msra.mxu0 0.0
        %1057 = vmatprep.subr.mxu0 0.0
        %1058 = vmatpush2.msra.mxu0 0.0
        %1059 = vmatprep.mubr.f32.mxu0 0.0
        %1060 = vmatmul.mubr.f32.gmra.mxu0 %v947
        %v1061 = vpop.f32.mrf.mxu0
        %v1062 = vadd.f32 0.0, %v1061
        %v1063 = vpop.f32.mrf.mxu0
        %v1064 = vadd.f32 0.0, %v1063
        %1065 = vmatprep.mubr.f32.mxu0 0.0
        %1066 = vmatmul.mubr.f32.gmra.mxu0 %v948
        %v1067 = vpop.f32.mrf.mxu0
        %v1068 = vadd.f32 0.0, %v1067
        %v1069 = vpop.f32.mrf.mxu0
        %v1070 = vadd.f32 0.0, %v1069
        %1071 = vmatprep.mubr.f32.mxu0 0.0
        %1072 = vmatmul.mubr.f32.gmra.mxu0 %v949
        %v1073 = vpop.f32.mrf.mxu0
        %v1074 = vadd.f32 0.0, %v1073
        %v1075 = vpop.f32.mrf.mxu0
        %v1076 = vadd.f32 0.0, %v1075
        %1077 = vmatprep.mubr.f32.mxu0 0.0
        %1078 = vmatmul.mubr.f32.gmra.mxu0 %v950
        %v1079 = vpop.f32.mrf.mxu0
        %v1080 = vadd.f32 0.0, %v1079
        %v1081 = vpop.f32.mrf.mxu0
        %v1082 = vadd.f32 0.0, %v1081
        %1083 = vmatprep.mubr.f32.mxu0 0.0
        %1084 = vmatmul.mubr.f32.gmra.mxu0 %v951
        %v1085 = vpop.f32.mrf.mxu0
        %v1086 = vadd.f32 0.0, %v1085
        %v1087 = vpop.f32.mrf.mxu0
        %v1088 = vadd.f32 0.0, %v1087
        %1089 = vmatprep.mubr.f32.mxu0 0.0
        %1090 = vmatmul.mubr.f32.gmra.mxu0 %v952
        %v1091 = vpop.f32.mrf.mxu0
        %v1092 = vadd.f32 0.0, %v1091
        %v1093 = vpop.f32.mrf.mxu0
        %v1094 = vadd.f32 0.0, %v1093
        %1095 = vmatprep.mubr.f32.mxu0 0.0
        %1096 = vmatmul.mubr.f32.gmra.mxu0 %v953
        %v1097 = vpop.f32.mrf.mxu0
        %v1098 = vadd.f32 0.0, %v1097
        %v1099 = vpop.f32.mrf.mxu0
        %v1100 = vadd.f32 0.0, %v1099
        %1101 = vmatprep.mubr.f32.mxu0 0.0
        %1102 = vmatmul.mubr.f32.gmra.mxu0 %v954
        %v1103 = vpop.f32.mrf.mxu0
        %v1104 = vadd.f32 0.0, %v1103
        %v1105 = vpop.f32.mrf.mxu0
        %v1106 = vadd.f32 0.0, %v1105
        %1107 = vmatprep.mubr.f32.mxu0 0.0
        %1108 = vmatmul.mubr.f32.gmra.mxu0 %v955
        %v1109 = vpop.f32.mrf.mxu0
        %v1110 = vadd.f32 0.0, %v1109
        %v1111 = vpop.f32.mrf.mxu0
        %v1112 = vadd.f32 0.0, %v1111
        %1113 = vmatprep.mubr.f32.mxu0 0.0
        %1114 = vmatmul.mubr.f32.gmra.mxu0 %v956
        %v1115 = vpop.f32.mrf.mxu0
        %v1116 = vadd.f32 0.0, %v1115
        %v1117 = vpop.f32.mrf.mxu0
        %v1118 = vadd.f32 0.0, %v1117
        %1119 = vmatprep.mubr.f32.mxu0 0.0
        %1120 = vmatmul.mubr.f32.gmra.mxu0 %v957
        %v1121 = vpop.f32.mrf.mxu0
        %v1122 = vadd.f32 0.0, %v1121
        %v1123 = vpop.f32.mrf.mxu0
        %v1124 = vadd.f32 0.0, %v1123
        %1125 = vmatprep.mubr.f32.mxu0 0.0
        %1126 = vmatmul.mubr.f32.gmra.mxu0 %v958
        %v1127 = vpop.f32.mrf.mxu0
        %v1128 = vadd.f32 0.0, %v1127
        %v1129 = vpop.f32.mrf.mxu0
        %v1130 = vadd.f32 0.0, %v1129
        %1131 = vmatprep.mubr.f32.mxu0 0.0
        %1132 = vmatmul.mubr.f32.gmra.mxu0 %v959
        %v1133 = vpop.f32.mrf.mxu0
        %v1134 = vadd.f32 0.0, %v1133
        %v1135 = vpop.f32.mrf.mxu0
        %v1136 = vadd.f32 0.0, %v1135
        %1137 = vmatprep.mubr.f32.mxu0 0.0
        %1138 = vmatmul.mubr.f32.gmra.mxu0 %v960
        %v1139 = vpop.f32.mrf.mxu0
        %v1140 = vadd.f32 0.0, %v1139
        %v1141 = vpop.f32.mrf.mxu0
        %v1142 = vadd.f32 0.0, %v1141
        %1143 = vmatprep.mubr.f32.mxu0 0.0
        %1144 = vmatmul.mubr.f32.gmra.mxu0 %v961
        %v1145 = vpop.f32.mrf.mxu0
        %v1146 = vadd.f32 0.0, %v1145
        %v1147 = vpop.f32.mrf.mxu0
        %v1148 = vadd.f32 0.0, %v1147
        %1149 = vmatprep.mubr.f32.mxu0 0.0
        %1150 = vmatmul.mubr.f32.gmra.mxu0 %v962
        %v1151 = vpop.f32.mrf.mxu0
        %v1152 = vadd.f32 0.0, %v1151
        %v1153 = vpop.f32.mrf.mxu0
        %v1154 = vadd.f32 0.0, %v1153
        %1155 = vdwg.mxu0
        %v1156 = vld [vmem:[#allocation7] sm:$0xff]
        %v1157 = vld [vmem:[#allocation7 + $0x8] sm:$0xff]
        %v1158 = vld [vmem:[#allocation8] sm:$0xff]
        %v1159 = vld [vmem:[#allocation8 + $0x8] sm:$0xff]
        %vm1160 = vcmask 130048
        %v1162 = vsel %vm1160, %v1156, 0
        %v1165 = vsel %vm1160, %v1157, 0
        %1167 = vmatprep.subr.mxu0 0.0
        %1168 = vmatpush1.msra.mxu0 0.0
        %1169 = vmatprep.subr.mxu0 0.0
        %1170 = vmatpush1.msra.mxu0 0.0
        %1171 = vmatprep.subr.mxu0 0.0
        %1172 = vmatpush1.msra.mxu0 0.0
        %1173 = vmatprep.subr.mxu0 0.0
        %1174 = vmatpush1.msra.mxu0 0.0
        %1175 = vmatprep.subr.mxu0 0.0
        %1176 = vmatpush1.msra.mxu0 0.0
        %1177 = vmatprep.subr.mxu0 0.0
        %1178 = vmatpush1.msra.mxu0 0.0
        %1179 = vmatprep.subr.mxu0 0.0
        %1180 = vmatpush1.msra.mxu0 0.0
        %1181 = vmatprep.subr.mxu0 0.0
        %1182 = vmatpush1.msra.mxu0 0.0
        %1183 = vmatprep.subr.mxu0 0.0
        %1184 = vmatpush1.msra.mxu0 0.0
        %1185 = vmatprep.subr.mxu0 0.0
        %1186 = vmatpush1.msra.mxu0 0.0
        %1187 = vmatprep.subr.mxu0 0.0
        %1188 = vmatpush1.msra.mxu0 0.0
        %1189 = vmatprep.subr.mxu0 0.0
        %1190 = vmatpush1.msra.mxu0 0.0
        %1191 = vmatprep.subr.mxu0 0.0
        %1192 = vmatpush1.msra.mxu0 0.0
        %1193 = vmatprep.subr.mxu0 0.0
        %1194 = vmatpush1.msra.mxu0 0.0
        %1195 = vmatprep.subr.mxu0 0.0
        %1196 = vmatpush1.msra.mxu0 %v1068
        %1197 = vmatprep.subr.mxu0 0.0
        %1198 = vmatpush1.msra.mxu0 %v1062
        %1199 = vmatprep.subr.mxu0 0.0
        %1200 = vmatpush2.msra.mxu0 0.0
        %1201 = vmatprep.subr.mxu0 0.0
        %1202 = vmatpush2.msra.mxu0 0.0
        %1203 = vmatprep.subr.mxu0 0.0
        %1204 = vmatpush2.msra.mxu0 0.0
        %1205 = vmatprep.subr.mxu0 0.0
        %1206 = vmatpush2.msra.mxu0 0.0
        %1207 = vmatprep.subr.mxu0 0.0
        %1208 = vmatpush2.msra.mxu0 0.0
        %1209 = vmatprep.subr.mxu0 0.0
        %1210 = vmatpush2.msra.mxu0 0.0
        %1211 = vmatprep.subr.mxu0 0.0
        %1212 = vmatpush2.msra.mxu0 0.0
        %1213 = vmatprep.subr.mxu0 0.0
        %1214 = vmatpush2.msra.mxu0 0.0
        %1215 = vmatprep.subr.mxu0 0.0
        %1216 = vmatpush2.msra.mxu0 0.0
        %1217 = vmatprep.subr.mxu0 0.0
        %1218 = vmatpush2.msra.mxu0 0.0
        %1219 = vmatprep.subr.mxu0 0.0
        %1220 = vmatpush2.msra.mxu0 0.0
        %1221 = vmatprep.subr.mxu0 0.0
        %1222 = vmatpush2.msra.mxu0 0.0
        %1223 = vmatprep.subr.mxu0 0.0
        %1224 = vmatpush2.msra.mxu0 0.0
        %1225 = vmatprep.subr.mxu0 0.0
        %1226 = vmatpush2.msra.mxu0 0.0
        %1227 = vmatprep.subr.mxu0 0.0
        %1228 = vmatpush2.msra.mxu0 0.0
        %1229 = vmatprep.subr.mxu0 0.0
        %1230 = vmatpush2.msra.mxu0 0.0
        %1231 = vmatprep.mubr.f32.mxu0 0.0
        %1232 = vmatmul.mubr.f32.gmra.mxu0 %v1162
        %v1233 = vpop.f32.mrf.mxu0
        %v1234 = vadd.f32 0.0, %v1233
        %v1235 = vpop.f32.mrf.mxu0
        %1236 = vmatprep.mubr.f32.mxu0 0.0
        %1237 = vmatmul.mubr.f32.gmra.mxu0 %v1165
        %v1238 = vpop.f32.mrf.mxu0
        %v1239 = vadd.f32 0.0, %v1238
        %v1240 = vpop.f32.mrf.mxu0
        %1241 = vdwg.mxu0
        %1242 = vmatprep.subr.mxu0 0.0
        %1243 = vmatpush1.msra.mxu0 0.0
        %1244 = vmatprep.subr.mxu0 0.0
        %1245 = vmatpush1.msra.mxu0 0.0
        %1246 = vmatprep.subr.mxu0 0.0
        %1247 = vmatpush1.msra.mxu0 0.0
        %1248 = vmatprep.subr.mxu0 0.0
        %1249 = vmatpush1.msra.mxu0 0.0
        %1250 = vmatprep.subr.mxu0 0.0
        %1251 = vmatpush1.msra.mxu0 0.0
        %1252 = vmatprep.subr.mxu0 0.0
        %1253 = vmatpush1.msra.mxu0 0.0
        %1254 = vmatprep.subr.mxu0 0.0
        %1255 = vmatpush1.msra.mxu0 0.0
        %1256 = vmatprep.subr.mxu0 0.0
        %1257 = vmatpush1.msra.mxu0 0.0
        %1258 = vmatprep.subr.mxu0 0.0
        %1259 = vmatpush1.msra.mxu0 0.0
        %1260 = vmatprep.subr.mxu0 0.0
        %1261 = vmatpush1.msra.mxu0 0.0
        %1262 = vmatprep.subr.mxu0 0.0
        %1263 = vmatpush1.msra.mxu0 0.0
        %1264 = vmatprep.subr.mxu0 0.0
        %1265 = vmatpush1.msra.mxu0 0.0
        %1266 = vmatprep.subr.mxu0 0.0
        %1267 = vmatpush1.msra.mxu0 0.0
        %1268 = vmatprep.subr.mxu0 0.0
        %1269 = vmatpush1.msra.mxu0 0.0
        %1270 = vmatprep.subr.mxu0 0.0
        %1271 = vmatpush1.msra.mxu0 %v1080
        %1272 = vmatprep.subr.mxu0 0.0
        %1273 = vmatpush1.msra.mxu0 %v1074
        %1274 = vmatprep.subr.mxu0 0.0
        %1275 = vmatpush2.msra.mxu0 0.0
        %1276 = vmatprep.subr.mxu0 0.0
        %1277 = vmatpush2.msra.mxu0 0.0
        %1278 = vmatprep.subr.mxu0 0.0
        %1279 = vmatpush2.msra.mxu0 0.0
        %1280 = vmatprep.subr.mxu0 0.0
        %1281 = vmatpush2.msra.mxu0 0.0
        %1282 = vmatprep.subr.mxu0 0.0
        %1283 = vmatpush2.msra.mxu0 0.0
        %1284 = vmatprep.subr.mxu0 0.0
        %1285 = vmatpush2.msra.mxu0 0.0
        %1286 = vmatprep.subr.mxu0 0.0
        %1287 = vmatpush2.msra.mxu0 0.0
        %1288 = vmatprep.subr.mxu0 0.0
        %1289 = vmatpush2.msra.mxu0 0.0
        %1290 = vmatprep.subr.mxu0 0.0
        %1291 = vmatpush2.msra.mxu0 0.0
        %1292 = vmatprep.subr.mxu0 0.0
        %1293 = vmatpush2.msra.mxu0 0.0
        %1294 = vmatprep.subr.mxu0 0.0
        %1295 = vmatpush2.msra.mxu0 0.0
        %1296 = vmatprep.subr.mxu0 0.0
        %1297 = vmatpush2.msra.mxu0 0.0
        %1298 = vmatprep.subr.mxu0 0.0
        %1299 = vmatpush2.msra.mxu0 0.0
        %1300 = vmatprep.subr.mxu0 0.0
        %1301 = vmatpush2.msra.mxu0 0.0
        %1302 = vmatprep.subr.mxu0 0.0
        %1303 = vmatpush2.msra.mxu0 0.0
        %1304 = vmatprep.subr.mxu0 0.0
        %1305 = vmatpush2.msra.mxu0 0.0
        %1306 = vmatprep.mubr.f32.mxu0 0.0
        %1307 = vmatmul.mubr.f32.gmra.mxu0 %v1162
        %v1308 = vpop.f32.mrf.mxu0
        %v1309 = vadd.f32 0.0, %v1308
        %v1310 = vpop.f32.mrf.mxu0
        %1311 = vmatprep.mubr.f32.mxu0 0.0
        %1312 = vmatmul.mubr.f32.gmra.mxu0 %v1165
        %v1313 = vpop.f32.mrf.mxu0
        %v1314 = vadd.f32 0.0, %v1313
        %v1315 = vpop.f32.mrf.mxu0
        %1316 = vdwg.mxu0
        %1317 = vmatprep.subr.mxu0 0.0
        %1318 = vmatpush1.msra.mxu0 0.0
        %1319 = vmatprep.subr.mxu0 0.0
        %1320 = vmatpush1.msra.mxu0 0.0
        %1321 = vmatprep.subr.mxu0 0.0
        %1322 = vmatpush1.msra.mxu0 0.0
        %1323 = vmatprep.subr.mxu0 0.0
        %1324 = vmatpush1.msra.mxu0 0.0
        %1325 = vmatprep.subr.mxu0 0.0
        %1326 = vmatpush1.msra.mxu0 0.0
        %1327 = vmatprep.subr.mxu0 0.0
        %1328 = vmatpush1.msra.mxu0 0.0
        %1329 = vmatprep.subr.mxu0 0.0
        %1330 = vmatpush1.msra.mxu0 0.0
        %1331 = vmatprep.subr.mxu0 0.0
        %1332 = vmatpush1.msra.mxu0 0.0
        %1333 = vmatprep.subr.mxu0 0.0
        %1334 = vmatpush1.msra.mxu0 0.0
        %1335 = vmatprep.subr.mxu0 0.0
        %1336 = vmatpush1.msra.mxu0 0.0
        %1337 = vmatprep.subr.mxu0 0.0
        %1338 = vmatpush1.msra.mxu0 0.0
        %1339 = vmatprep.subr.mxu0 0.0
        %1340 = vmatpush1.msra.mxu0 0.0
        %1341 = vmatprep.subr.mxu0 0.0
        %1342 = vmatpush1.msra.mxu0 0.0
        %1343 = vmatprep.subr.mxu0 0.0
        %1344 = vmatpush1.msra.mxu0 0.0
        %1345 = vmatprep.subr.mxu0 0.0
        %1346 = vmatpush1.msra.mxu0 %v1092
        %1347 = vmatprep.subr.mxu0 0.0
        %1348 = vmatpush1.msra.mxu0 %v1086
        %1349 = vmatprep.subr.mxu0 0.0
        %1350 = vmatpush2.msra.mxu0 0.0
        %1351 = vmatprep.subr.mxu0 0.0
        %1352 = vmatpush2.msra.mxu0 0.0
        %1353 = vmatprep.subr.mxu0 0.0
        %1354 = vmatpush2.msra.mxu0 0.0
        %1355 = vmatprep.subr.mxu0 0.0
        %1356 = vmatpush2.msra.mxu0 0.0
        %1357 = vmatprep.subr.mxu0 0.0
        %1358 = vmatpush2.msra.mxu0 0.0
        %1359 = vmatprep.subr.mxu0 0.0
        %1360 = vmatpush2.msra.mxu0 0.0
        %1361 = vmatprep.subr.mxu0 0.0
        %1362 = vmatpush2.msra.mxu0 0.0
        %1363 = vmatprep.subr.mxu0 0.0
        %1364 = vmatpush2.msra.mxu0 0.0
        %1365 = vmatprep.subr.mxu0 0.0
        %1366 = vmatpush2.msra.mxu0 0.0
        %1367 = vmatprep.subr.mxu0 0.0
        %1368 = vmatpush2.msra.mxu0 0.0
        %1369 = vmatprep.subr.mxu0 0.0
        %1370 = vmatpush2.msra.mxu0 0.0
        %1371 = vmatprep.subr.mxu0 0.0
        %1372 = vmatpush2.msra.mxu0 0.0
        %1373 = vmatprep.subr.mxu0 0.0
        %1374 = vmatpush2.msra.mxu0 0.0
        %1375 = vmatprep.subr.mxu0 0.0
        %1376 = vmatpush2.msra.mxu0 0.0
        %1377 = vmatprep.subr.mxu0 0.0
        %1378 = vmatpush2.msra.mxu0 0.0
        %1379 = vmatprep.subr.mxu0 0.0
        %1380 = vmatpush2.msra.mxu0 0.0
        %1381 = vmatprep.mubr.f32.mxu0 0.0
        %1382 = vmatmul.mubr.f32.gmra.mxu0 %v1162
        %v1383 = vpop.f32.mrf.mxu0
        %v1384 = vadd.f32 0.0, %v1383
        %v1385 = vpop.f32.mrf.mxu0
        %1386 = vmatprep.mubr.f32.mxu0 0.0
        %1387 = vmatmul.mubr.f32.gmra.mxu0 %v1165
        %v1388 = vpop.f32.mrf.mxu0
        %v1389 = vadd.f32 0.0, %v1388
        %v1390 = vpop.f32.mrf.mxu0
        %1391 = vdwg.mxu0
        %1392 = vmatprep.subr.mxu0 0.0
        %1393 = vmatpush1.msra.mxu0 0.0
        %1394 = vmatprep.subr.mxu0 0.0
        %1395 = vmatpush1.msra.mxu0 0.0
        %1396 = vmatprep.subr.mxu0 0.0
        %1397 = vmatpush1.msra.mxu0 0.0
        %1398 = vmatprep.subr.mxu0 0.0
        %1399 = vmatpush1.msra.mxu0 0.0
        %1400 = vmatprep.subr.mxu0 0.0
        %1401 = vmatpush1.msra.mxu0 0.0
        %1402 = vmatprep.subr.mxu0 0.0
        %1403 = vmatpush1.msra.mxu0 0.0
        %1404 = vmatprep.subr.mxu0 0.0
        %1405 = vmatpush1.msra.mxu0 0.0
        %1406 = vmatprep.subr.mxu0 0.0
        %1407 = vmatpush1.msra.mxu0 0.0
        %1408 = vmatprep.subr.mxu0 0.0
        %1409 = vmatpush1.msra.mxu0 0.0
        %1410 = vmatprep.subr.mxu0 0.0
        %1411 = vmatpush1.msra.mxu0 0.0
        %1412 = vmatprep.subr.mxu0 0.0
        %1413 = vmatpush1.msra.mxu0 0.0
        %1414 = vmatprep.subr.mxu0 0.0
        %1415 = vmatpush1.msra.mxu0 0.0
        %1416 = vmatprep.subr.mxu0 0.0
        %1417 = vmatpush1.msra.mxu0 0.0
        %1418 = vmatprep.subr.mxu0 0.0
        %1419 = vmatpush1.msra.mxu0 0.0
        %1420 = vmatprep.subr.mxu0 0.0
        %1421 = vmatpush1.msra.mxu0 %v1104
        %1422 = vmatprep.subr.mxu0 0.0
        %1423 = vmatpush1.msra.mxu0 %v1098
        %1424 = vmatprep.subr.mxu0 0.0
        %1425 = vmatpush2.msra.mxu0 0.0
        %1426 = vmatprep.subr.mxu0 0.0
        %1427 = vmatpush2.msra.mxu0 0.0
        %1428 = vmatprep.subr.mxu0 0.0
        %1429 = vmatpush2.msra.mxu0 0.0
        %1430 = vmatprep.subr.mxu0 0.0
        %1431 = vmatpush2.msra.mxu0 0.0
        %1432 = vmatprep.subr.mxu0 0.0
        %1433 = vmatpush2.msra.mxu0 0.0
        %1434 = vmatprep.subr.mxu0 0.0
        %1435 = vmatpush2.msra.mxu0 0.0
        %1436 = vmatprep.subr.mxu0 0.0
        %1437 = vmatpush2.msra.mxu0 0.0
        %1438 = vmatprep.subr.mxu0 0.0
        %1439 = vmatpush2.msra.mxu0 0.0
        %1440 = vmatprep.subr.mxu0 0.0
        %1441 = vmatpush2.msra.mxu0 0.0
        %1442 = vmatprep.subr.mxu0 0.0
        %1443 = vmatpush2.msra.mxu0 0.0
        %1444 = vmatprep.subr.mxu0 0.0
        %1445 = vmatpush2.msra.mxu0 0.0
        %1446 = vmatprep.subr.mxu0 0.0
        %1447 = vmatpush2.msra.mxu0 0.0
        %1448 = vmatprep.subr.mxu0 0.0
        %1449 = vmatpush2.msra.mxu0 0.0
        %1450 = vmatprep.subr.mxu0 0.0
        %1451 = vmatpush2.msra.mxu0 0.0
        %1452 = vmatprep.subr.mxu0 0.0
        %1453 = vmatpush2.msra.mxu0 0.0
        %1454 = vmatprep.subr.mxu0 0.0
        %1455 = vmatpush2.msra.mxu0 0.0
        %1456 = vmatprep.mubr.f32.mxu0 0.0
        %1457 = vmatmul.mubr.f32.gmra.mxu0 %v1162
        %v1458 = vpop.f32.mrf.mxu0
        %v1459 = vadd.f32 0.0, %v1458
        %v1460 = vpop.f32.mrf.mxu0
        %1461 = vmatprep.mubr.f32.mxu0 0.0
        %1462 = vmatmul.mubr.f32.gmra.mxu0 %v1165
        %v1463 = vpop.f32.mrf.mxu0
        %v1464 = vadd.f32 0.0, %v1463
        %v1465 = vpop.f32.mrf.mxu0
        %1466 = vdwg.mxu0
        %1467 = vmatprep.subr.mxu0 0.0
        %1468 = vmatpush1.msra.mxu0 0.0
        %1469 = vmatprep.subr.mxu0 0.0
        %1470 = vmatpush1.msra.mxu0 0.0
        %1471 = vmatprep.subr.mxu0 0.0
        %1472 = vmatpush1.msra.mxu0 0.0
        %1473 = vmatprep.subr.mxu0 0.0
        %1474 = vmatpush1.msra.mxu0 0.0
        %1475 = vmatprep.subr.mxu0 0.0
        %1476 = vmatpush1.msra.mxu0 0.0
        %1477 = vmatprep.subr.mxu0 0.0
        %1478 = vmatpush1.msra.mxu0 0.0
        %1479 = vmatprep.subr.mxu0 0.0
        %1480 = vmatpush1.msra.mxu0 0.0
        %1481 = vmatprep.subr.mxu0 0.0
        %1482 = vmatpush1.msra.mxu0 0.0
        %1483 = vmatprep.subr.mxu0 0.0
        %1484 = vmatpush1.msra.mxu0 0.0
        %1485 = vmatprep.subr.mxu0 0.0
        %1486 = vmatpush1.msra.mxu0 0.0
        %1487 = vmatprep.subr.mxu0 0.0
        %1488 = vmatpush1.msra.mxu0 0.0
        %1489 = vmatprep.subr.mxu0 0.0
        %1490 = vmatpush1.msra.mxu0 0.0
        %1491 = vmatprep.subr.mxu0 0.0
        %1492 = vmatpush1.msra.mxu0 0.0
        %1493 = vmatprep.subr.mxu0 0.0
        %1494 = vmatpush1.msra.mxu0 0.0
        %1495 = vmatprep.subr.mxu0 0.0
        %1496 = vmatpush1.msra.mxu0 %v1116
        %1497 = vmatprep.subr.mxu0 0.0
        %1498 = vmatpush1.msra.mxu0 %v1110
        %1499 = vmatprep.subr.mxu0 0.0
        %1500 = vmatpush2.msra.mxu0 0.0
        %1501 = vmatprep.subr.mxu0 0.0
        %1502 = vmatpush2.msra.mxu0 0.0
        %1503 = vmatprep.subr.mxu0 0.0
        %1504 = vmatpush2.msra.mxu0 0.0
        %1505 = vmatprep.subr.mxu0 0.0
        %1506 = vmatpush2.msra.mxu0 0.0
        %1507 = vmatprep.subr.mxu0 0.0
        %1508 = vmatpush2.msra.mxu0 0.0
        %1509 = vmatprep.subr.mxu0 0.0
        %1510 = vmatpush2.msra.mxu0 0.0
        %1511 = vmatprep.subr.mxu0 0.0
        %1512 = vmatpush2.msra.mxu0 0.0
        %1513 = vmatprep.subr.mxu0 0.0
        %1514 = vmatpush2.msra.mxu0 0.0
        %1515 = vmatprep.subr.mxu0 0.0
        %1516 = vmatpush2.msra.mxu0 0.0
        %1517 = vmatprep.subr.mxu0 0.0
        %1518 = vmatpush2.msra.mxu0 0.0
        %1519 = vmatprep.subr.mxu0 0.0
        %1520 = vmatpush2.msra.mxu0 0.0
        %1521 = vmatprep.subr.mxu0 0.0
        %1522 = vmatpush2.msra.mxu0 0.0
        %1523 = vmatprep.subr.mxu0 0.0
        %1524 = vmatpush2.msra.mxu0 0.0
        %1525 = vmatprep.subr.mxu0 0.0
        %1526 = vmatpush2.msra.mxu0 0.0
        %1527 = vmatprep.subr.mxu0 0.0
        %1528 = vmatpush2.msra.mxu0 0.0
        %1529 = vmatprep.subr.mxu0 0.0
        %1530 = vmatpush2.msra.mxu0 0.0
        %1531 = vmatprep.mubr.f32.mxu0 0.0
        %1532 = vmatmul.mubr.f32.gmra.mxu0 %v1162
        %v1533 = vpop.f32.mrf.mxu0
        %v1534 = vadd.f32 0.0, %v1533
        %v1535 = vpop.f32.mrf.mxu0
        %1536 = vmatprep.mubr.f32.mxu0 0.0
        %1537 = vmatmul.mubr.f32.gmra.mxu0 %v1165
        %v1538 = vpop.f32.mrf.mxu0
        %v1539 = vadd.f32 0.0, %v1538
        %v1540 = vpop.f32.mrf.mxu0
        %1541 = vdwg.mxu0
        %1542 = vmatprep.subr.mxu0 0.0
        %1543 = vmatpush1.msra.mxu0 0.0
        %1544 = vmatprep.subr.mxu0 0.0
        %1545 = vmatpush1.msra.mxu0 0.0
        %1546 = vmatprep.subr.mxu0 0.0
        %1547 = vmatpush1.msra.mxu0 0.0
        %1548 = vmatprep.subr.mxu0 0.0
        %1549 = vmatpush1.msra.mxu0 0.0
        %1550 = vmatprep.subr.mxu0 0.0
        %1551 = vmatpush1.msra.mxu0 0.0
        %1552 = vmatprep.subr.mxu0 0.0
        %1553 = vmatpush1.msra.mxu0 0.0
        %1554 = vmatprep.subr.mxu0 0.0
        %1555 = vmatpush1.msra.mxu0 0.0
        %1556 = vmatprep.subr.mxu0 0.0
        %1557 = vmatpush1.msra.mxu0 0.0
        %1558 = vmatprep.subr.mxu0 0.0
        %1559 = vmatpush1.msra.mxu0 0.0
        %1560 = vmatprep.subr.mxu0 0.0
        %1561 = vmatpush1.msra.mxu0 0.0
        %1562 = vmatprep.subr.mxu0 0.0
        %1563 = vmatpush1.msra.mxu0 0.0
        %1564 = vmatprep.subr.mxu0 0.0
        %1565 = vmatpush1.msra.mxu0 0.0
        %1566 = vmatprep.subr.mxu0 0.0
        %1567 = vmatpush1.msra.mxu0 0.0
        %1568 = vmatprep.subr.mxu0 0.0
        %1569 = vmatpush1.msra.mxu0 0.0
        %1570 = vmatprep.subr.mxu0 0.0
        %1571 = vmatpush1.msra.mxu0 %v1128
        %1572 = vmatprep.subr.mxu0 0.0
        %1573 = vmatpush1.msra.mxu0 %v1122
        %1574 = vmatprep.subr.mxu0 0.0
        %1575 = vmatpush2.msra.mxu0 0.0
        %1576 = vmatprep.subr.mxu0 0.0
        %1577 = vmatpush2.msra.mxu0 0.0
        %1578 = vmatprep.subr.mxu0 0.0
        %1579 = vmatpush2.msra.mxu0 0.0
        %1580 = vmatprep.subr.mxu0 0.0
        %1581 = vmatpush2.msra.mxu0 0.0
        %1582 = vmatprep.subr.mxu0 0.0
        %1583 = vmatpush2.msra.mxu0 0.0
        %1584 = vmatprep.subr.mxu0 0.0
        %1585 = vmatpush2.msra.mxu0 0.0
        %1586 = vmatprep.subr.mxu0 0.0
        %1587 = vmatpush2.msra.mxu0 0.0
        %1588 = vmatprep.subr.mxu0 0.0
        %1589 = vmatpush2.msra.mxu0 0.0
        %1590 = vmatprep.subr.mxu0 0.0
        %1591 = vmatpush2.msra.mxu0 0.0
        %1592 = vmatprep.subr.mxu0 0.0
        %1593 = vmatpush2.msra.mxu0 0.0
        %1594 = vmatprep.subr.mxu0 0.0
        %1595 = vmatpush2.msra.mxu0 0.0
        %1596 = vmatprep.subr.mxu0 0.0
        %1597 = vmatpush2.msra.mxu0 0.0
        %1598 = vmatprep.subr.mxu0 0.0
        %1599 = vmatpush2.msra.mxu0 0.0
        %1600 = vmatprep.subr.mxu0 0.0
        %1601 = vmatpush2.msra.mxu0 0.0
        %1602 = vmatprep.subr.mxu0 0.0
        %1603 = vmatpush2.msra.mxu0 0.0
        %1604 = vmatprep.subr.mxu0 0.0
        %1605 = vmatpush2.msra.mxu0 0.0
        %1606 = vmatprep.mubr.f32.mxu0 0.0
        %1607 = vmatmul.mubr.f32.gmra.mxu0 %v1162
        %v1608 = vpop.f32.mrf.mxu0
        %v1609 = vadd.f32 0.0, %v1608
        %v1610 = vpop.f32.mrf.mxu0
        %1611 = vmatprep.mubr.f32.mxu0 0.0
        %1612 = vmatmul.mubr.f32.gmra.mxu0 %v1165
        %v1613 = vpop.f32.mrf.mxu0
        %v1614 = vadd.f32 0.0, %v1613
        %v1615 = vpop.f32.mrf.mxu0
        %1616 = vdwg.mxu0
        %1617 = vmatprep.subr.mxu0 0.0
        %1618 = vmatpush1.msra.mxu0 0.0
        %1619 = vmatprep.subr.mxu0 0.0
        %1620 = vmatpush1.msra.mxu0 0.0
        %1621 = vmatprep.subr.mxu0 0.0
        %1622 = vmatpush1.msra.mxu0 0.0
        %1623 = vmatprep.subr.mxu0 0.0
        %1624 = vmatpush1.msra.mxu0 0.0
        %1625 = vmatprep.subr.mxu0 0.0
        %1626 = vmatpush1.msra.mxu0 0.0
        %1627 = vmatprep.subr.mxu0 0.0
        %1628 = vmatpush1.msra.mxu0 0.0
        %1629 = vmatprep.subr.mxu0 0.0
        %1630 = vmatpush1.msra.mxu0 0.0
        %1631 = vmatprep.subr.mxu0 0.0
        %1632 = vmatpush1.msra.mxu0 0.0
        %1633 = vmatprep.subr.mxu0 0.0
        %1634 = vmatpush1.msra.mxu0 0.0
        %1635 = vmatprep.subr.mxu0 0.0
        %1636 = vmatpush1.msra.mxu0 0.0
        %1637 = vmatprep.subr.mxu0 0.0
        %1638 = vmatpush1.msra.mxu0 0.0
        %1639 = vmatprep.subr.mxu0 0.0
        %1640 = vmatpush1.msra.mxu0 0.0
        %1641 = vmatprep.subr.mxu0 0.0
        %1642 = vmatpush1.msra.mxu0 0.0
        %1643 = vmatprep.subr.mxu0 0.0
        %1644 = vmatpush1.msra.mxu0 0.0
        %1645 = vmatprep.subr.mxu0 0.0
        %1646 = vmatpush1.msra.mxu0 %v1140
        %1647 = vmatprep.subr.mxu0 0.0
        %1648 = vmatpush1.msra.mxu0 %v1134
        %1649 = vmatprep.subr.mxu0 0.0
        %1650 = vmatpush2.msra.mxu0 0.0
        %1651 = vmatprep.subr.mxu0 0.0
        %1652 = vmatpush2.msra.mxu0 0.0
        %1653 = vmatprep.subr.mxu0 0.0
        %1654 = vmatpush2.msra.mxu0 0.0
        %1655 = vmatprep.subr.mxu0 0.0
        %1656 = vmatpush2.msra.mxu0 0.0
        %1657 = vmatprep.subr.mxu0 0.0
        %1658 = vmatpush2.msra.mxu0 0.0
        %1659 = vmatprep.subr.mxu0 0.0
        %1660 = vmatpush2.msra.mxu0 0.0
        %1661 = vmatprep.subr.mxu0 0.0
        %1662 = vmatpush2.msra.mxu0 0.0
        %1663 = vmatprep.subr.mxu0 0.0
        %1664 = vmatpush2.msra.mxu0 0.0
        %1665 = vmatprep.subr.mxu0 0.0
        %1666 = vmatpush2.msra.mxu0 0.0
        %1667 = vmatprep.subr.mxu0 0.0
        %1668 = vmatpush2.msra.mxu0 0.0
        %1669 = vmatprep.subr.mxu0 0.0
        %1670 = vmatpush2.msra.mxu0 0.0
        %1671 = vmatprep.subr.mxu0 0.0
        %1672 = vmatpush2.msra.mxu0 0.0
        %1673 = vmatprep.subr.mxu0 0.0
        %1674 = vmatpush2.msra.mxu0 0.0
        %1675 = vmatprep.subr.mxu0 0.0
        %1676 = vmatpush2.msra.mxu0 0.0
        %1677 = vmatprep.subr.mxu0 0.0
        %1678 = vmatpush2.msra.mxu0 0.0
        %1679 = vmatprep.subr.mxu0 0.0
        %1680 = vmatpush2.msra.mxu0 0.0
        %1681 = vmatprep.mubr.f32.mxu0 0.0
        %1682 = vmatmul.mubr.f32.gmra.mxu0 %v1162
        %v1683 = vpop.f32.mrf.mxu0
        %v1684 = vadd.f32 0.0, %v1683
        %v1685 = vpop.f32.mrf.mxu0
        %1686 = vmatprep.mubr.f32.mxu0 0.0
        %1687 = vmatmul.mubr.f32.gmra.mxu0 %v1165
        %v1688 = vpop.f32.mrf.mxu0
        %v1689 = vadd.f32 0.0, %v1688
        %v1690 = vpop.f32.mrf.mxu0
        %1691 = vdwg.mxu0
        %1692 = vmatprep.subr.mxu0 0.0
        %1693 = vmatpush1.msra.mxu0 0.0
        %1694 = vmatprep.subr.mxu0 0.0
        %1695 = vmatpush1.msra.mxu0 0.0
        %1696 = vmatprep.subr.mxu0 0.0
        %1697 = vmatpush1.msra.mxu0 0.0
        %1698 = vmatprep.subr.mxu0 0.0
        %1699 = vmatpush1.msra.mxu0 0.0
        %1700 = vmatprep.subr.mxu0 0.0
        %1701 = vmatpush1.msra.mxu0 0.0
        %1702 = vmatprep.subr.mxu0 0.0
        %1703 = vmatpush1.msra.mxu0 0.0
        %1704 = vmatprep.subr.mxu0 0.0
        %1705 = vmatpush1.msra.mxu0 0.0
        %1706 = vmatprep.subr.mxu0 0.0
        %1707 = vmatpush1.msra.mxu0 0.0
        %1708 = vmatprep.subr.mxu0 0.0
        %1709 = vmatpush1.msra.mxu0 0.0
        %1710 = vmatprep.subr.mxu0 0.0
        %1711 = vmatpush1.msra.mxu0 0.0
        %1712 = vmatprep.subr.mxu0 0.0
        %1713 = vmatpush1.msra.mxu0 0.0
        %1714 = vmatprep.subr.mxu0 0.0
        %1715 = vmatpush1.msra.mxu0 0.0
        %1716 = vmatprep.subr.mxu0 0.0
        %1717 = vmatpush1.msra.mxu0 0.0
        %1718 = vmatprep.subr.mxu0 0.0
        %1719 = vmatpush1.msra.mxu0 0.0
        %1720 = vmatprep.subr.mxu0 0.0
        %1721 = vmatpush1.msra.mxu0 %v1152
        %1722 = vmatprep.subr.mxu0 0.0
        %1723 = vmatpush1.msra.mxu0 %v1146
        %1724 = vmatprep.subr.mxu0 0.0
        %1725 = vmatpush2.msra.mxu0 0.0
        %1726 = vmatprep.subr.mxu0 0.0
        %1727 = vmatpush2.msra.mxu0 0.0
        %1728 = vmatprep.subr.mxu0 0.0
        %1729 = vmatpush2.msra.mxu0 0.0
        %1730 = vmatprep.subr.mxu0 0.0
        %1731 = vmatpush2.msra.mxu0 0.0
        %1732 = vmatprep.subr.mxu0 0.0
        %1733 = vmatpush2.msra.mxu0 0.0
        %1734 = vmatprep.subr.mxu0 0.0
        %1735 = vmatpush2.msra.mxu0 0.0
        %1736 = vmatprep.subr.mxu0 0.0
        %1737 = vmatpush2.msra.mxu0 0.0
        %1738 = vmatprep.subr.mxu0 0.0
        %1739 = vmatpush2.msra.mxu0 0.0
        %1740 = vmatprep.subr.mxu0 0.0
        %1741 = vmatpush2.msra.mxu0 0.0
        %1742 = vmatprep.subr.mxu0 0.0
        %1743 = vmatpush2.msra.mxu0 0.0
        %1744 = vmatprep.subr.mxu0 0.0
        %1745 = vmatpush2.msra.mxu0 0.0
        %1746 = vmatprep.subr.mxu0 0.0
        %1747 = vmatpush2.msra.mxu0 0.0
        %1748 = vmatprep.subr.mxu0 0.0
        %1749 = vmatpush2.msra.mxu0 0.0
        %1750 = vmatprep.subr.mxu0 0.0
        %1751 = vmatpush2.msra.mxu0 0.0
        %1752 = vmatprep.subr.mxu0 0.0
        %1753 = vmatpush2.msra.mxu0 0.0
        %1754 = vmatprep.subr.mxu0 0.0
        %1755 = vmatpush2.msra.mxu0 0.0
        %1756 = vmatprep.mubr.f32.mxu0 0.0
        %1757 = vmatmul.mubr.f32.gmra.mxu0 %v1162
        %v1758 = vpop.f32.mrf.mxu0
        %v1759 = vadd.f32 0.0, %v1758
        %v1760 = vpop.f32.mrf.mxu0
        %1761 = vmatprep.mubr.f32.mxu0 0.0
        %1762 = vmatmul.mubr.f32.gmra.mxu0 %v1165
        %v1763 = vpop.f32.mrf.mxu0
        %v1764 = vadd.f32 0.0, %v1763
        %v1765 = vpop.f32.mrf.mxu0
        %1766 = vdwg.mxu0
        %v1768 = vsel %vm1160, %v1158, 0
        %v1771 = vsel %vm1160, %v1159, 0
        %1773 = vmatprep.subr.mxu0 0.0
        %1774 = vmatpush1.msra.mxu0 0.0
        %1775 = vmatprep.subr.mxu0 0.0
        %1776 = vmatpush1.msra.mxu0 0.0
        %1777 = vmatprep.subr.mxu0 0.0
        %1778 = vmatpush1.msra.mxu0 0.0
        %1779 = vmatprep.subr.mxu0 0.0
        %1780 = vmatpush1.msra.mxu0 0.0
        %1781 = vmatprep.subr.mxu0 0.0
        %1782 = vmatpush1.msra.mxu0 0.0
        %1783 = vmatprep.subr.mxu0 0.0
        %1784 = vmatpush1.msra.mxu0 0.0
        %1785 = vmatprep.subr.mxu0 0.0
        %1786 = vmatpush1.msra.mxu0 0.0
        %1787 = vmatprep.subr.mxu0 0.0
        %1788 = vmatpush1.msra.mxu0 0.0
        %1789 = vmatprep.subr.mxu0 0.0
        %1790 = vmatpush1.msra.mxu0 0.0
        %1791 = vmatprep.subr.mxu0 0.0
        %1792 = vmatpush1.msra.mxu0 0.0
        %1793 = vmatprep.subr.mxu0 0.0
        %1794 = vmatpush1.msra.mxu0 0.0
        %1795 = vmatprep.subr.mxu0 0.0
        %1796 = vmatpush1.msra.mxu0 0.0
        %1797 = vmatprep.subr.mxu0 0.0
        %1798 = vmatpush1.msra.mxu0 0.0
        %1799 = vmatprep.subr.mxu0 0.0
        %1800 = vmatpush1.msra.mxu0 0.0
        %1801 = vmatprep.subr.mxu0 0.0
        %1802 = vmatpush1.msra.mxu0 %v1070
        %1803 = vmatprep.subr.mxu0 0.0
        %1804 = vmatpush1.msra.mxu0 %v1064
        %1805 = vmatprep.subr.mxu0 0.0
        %1806 = vmatpush2.msra.mxu0 0.0
        %1807 = vmatprep.subr.mxu0 0.0
        %1808 = vmatpush2.msra.mxu0 0.0
        %1809 = vmatprep.subr.mxu0 0.0
        %1810 = vmatpush2.msra.mxu0 0.0
        %1811 = vmatprep.subr.mxu0 0.0
        %1812 = vmatpush2.msra.mxu0 0.0
        %1813 = vmatprep.subr.mxu0 0.0
        %1814 = vmatpush2.msra.mxu0 0.0
        %1815 = vmatprep.subr.mxu0 0.0
        %1816 = vmatpush2.msra.mxu0 0.0
        %1817 = vmatprep.subr.mxu0 0.0
        %1818 = vmatpush2.msra.mxu0 0.0
        %1819 = vmatprep.subr.mxu0 0.0
        %1820 = vmatpush2.msra.mxu0 0.0
        %1821 = vmatprep.subr.mxu0 0.0
        %1822 = vmatpush2.msra.mxu0 0.0
        %1823 = vmatprep.subr.mxu0 0.0
        %1824 = vmatpush2.msra.mxu0 0.0
        %1825 = vmatprep.subr.mxu0 0.0
        %1826 = vmatpush2.msra.mxu0 0.0
        %1827 = vmatprep.subr.mxu0 0.0
        %1828 = vmatpush2.msra.mxu0 0.0
        %1829 = vmatprep.subr.mxu0 0.0
        %1830 = vmatpush2.msra.mxu0 0.0
        %1831 = vmatprep.subr.mxu0 0.0
        %1832 = vmatpush2.msra.mxu0 0.0
        %1833 = vmatprep.subr.mxu0 0.0
        %1834 = vmatpush2.msra.mxu0 0.0
        %1835 = vmatprep.subr.mxu0 0.0
        %1836 = vmatpush2.msra.mxu0 0.0
        %1837 = vmatprep.mubr.f32.mxu0 0.0
        %1838 = vmatmul.mubr.f32.gmra.mxu0 %v1768
        %v1839 = vpop.f32.mrf.mxu0
        %v1840 = vadd.f32 0.0, %v1839
        %v1841 = vpop.f32.mrf.mxu0
        %1842 = vmatprep.mubr.f32.mxu0 0.0
        %1843 = vmatmul.mubr.f32.gmra.mxu0 %v1771
        %v1844 = vpop.f32.mrf.mxu0
        %v1845 = vadd.f32 0.0, %v1844
        %v1846 = vpop.f32.mrf.mxu0
        %1847 = vdwg.mxu0
        %1848 = vmatprep.subr.mxu0 0.0
        %1849 = vmatpush1.msra.mxu0 0.0
        %1850 = vmatprep.subr.mxu0 0.0
        %1851 = vmatpush1.msra.mxu0 0.0
        %1852 = vmatprep.subr.mxu0 0.0
        %1853 = vmatpush1.msra.mxu0 0.0
        %1854 = vmatprep.subr.mxu0 0.0
        %1855 = vmatpush1.msra.mxu0 0.0
        %1856 = vmatprep.subr.mxu0 0.0
        %1857 = vmatpush1.msra.mxu0 0.0
        %1858 = vmatprep.subr.mxu0 0.0
        %1859 = vmatpush1.msra.mxu0 0.0
        %1860 = vmatprep.subr.mxu0 0.0
        %1861 = vmatpush1.msra.mxu0 0.0
        %1862 = vmatprep.subr.mxu0 0.0
        %1863 = vmatpush1.msra.mxu0 0.0
        %1864 = vmatprep.subr.mxu0 0.0
        %1865 = vmatpush1.msra.mxu0 0.0
        %1866 = vmatprep.subr.mxu0 0.0
        %1867 = vmatpush1.msra.mxu0 0.0
        %1868 = vmatprep.subr.mxu0 0.0
        %1869 = vmatpush1.msra.mxu0 0.0
        %1870 = vmatprep.subr.mxu0 0.0
        %1871 = vmatpush1.msra.mxu0 0.0
        %1872 = vmatprep.subr.mxu0 0.0
        %1873 = vmatpush1.msra.mxu0 0.0
        %1874 = vmatprep.subr.mxu0 0.0
        %1875 = vmatpush1.msra.mxu0 0.0
        %1876 = vmatprep.subr.mxu0 0.0
        %1877 = vmatpush1.msra.mxu0 %v1082
        %1878 = vmatprep.subr.mxu0 0.0
        %1879 = vmatpush1.msra.mxu0 %v1076
        %1880 = vmatprep.subr.mxu0 0.0
        %1881 = vmatpush2.msra.mxu0 0.0
        %1882 = vmatprep.subr.mxu0 0.0
        %1883 = vmatpush2.msra.mxu0 0.0
        %1884 = vmatprep.subr.mxu0 0.0
        %1885 = vmatpush2.msra.mxu0 0.0
        %1886 = vmatprep.subr.mxu0 0.0
        %1887 = vmatpush2.msra.mxu0 0.0
        %1888 = vmatprep.subr.mxu0 0.0
        %1889 = vmatpush2.msra.mxu0 0.0
        %1890 = vmatprep.subr.mxu0 0.0
        %1891 = vmatpush2.msra.mxu0 0.0
        %1892 = vmatprep.subr.mxu0 0.0
        %1893 = vmatpush2.msra.mxu0 0.0
        %1894 = vmatprep.subr.mxu0 0.0
        %1895 = vmatpush2.msra.mxu0 0.0
        %1896 = vmatprep.subr.mxu0 0.0
        %1897 = vmatpush2.msra.mxu0 0.0
        %1898 = vmatprep.subr.mxu0 0.0
        %1899 = vmatpush2.msra.mxu0 0.0
        %1900 = vmatprep.subr.mxu0 0.0
        %1901 = vmatpush2.msra.mxu0 0.0
        %1902 = vmatprep.subr.mxu0 0.0
        %1903 = vmatpush2.msra.mxu0 0.0
        %1904 = vmatprep.subr.mxu0 0.0
        %1905 = vmatpush2.msra.mxu0 0.0
        %1906 = vmatprep.subr.mxu0 0.0
        %1907 = vmatpush2.msra.mxu0 0.0
        %1908 = vmatprep.subr.mxu0 0.0
        %1909 = vmatpush2.msra.mxu0 0.0
        %1910 = vmatprep.subr.mxu0 0.0
        %1911 = vmatpush2.msra.mxu0 0.0
        %1912 = vmatprep.mubr.f32.mxu0 0.0
        %1913 = vmatmul.mubr.f32.gmra.mxu0 %v1768
        %v1914 = vpop.f32.mrf.mxu0
        %v1915 = vadd.f32 0.0, %v1914
        %v1916 = vpop.f32.mrf.mxu0
        %1917 = vmatprep.mubr.f32.mxu0 0.0
        %1918 = vmatmul.mubr.f32.gmra.mxu0 %v1771
        %v1919 = vpop.f32.mrf.mxu0
        %v1920 = vadd.f32 0.0, %v1919
        %v1921 = vpop.f32.mrf.mxu0
        %1922 = vdwg.mxu0
        %1923 = vmatprep.subr.mxu0 0.0
        %1924 = vmatpush1.msra.mxu0 0.0
        %1925 = vmatprep.subr.mxu0 0.0
        %1926 = vmatpush1.msra.mxu0 0.0
        %1927 = vmatprep.subr.mxu0 0.0
        %1928 = vmatpush1.msra.mxu0 0.0
        %1929 = vmatprep.subr.mxu0 0.0
        %1930 = vmatpush1.msra.mxu0 0.0
        %1931 = vmatprep.subr.mxu0 0.0
        %1932 = vmatpush1.msra.mxu0 0.0
        %1933 = vmatprep.subr.mxu0 0.0
        %1934 = vmatpush1.msra.mxu0 0.0
        %1935 = vmatprep.subr.mxu0 0.0
        %1936 = vmatpush1.msra.mxu0 0.0
        %1937 = vmatprep.subr.mxu0 0.0
        %1938 = vmatpush1.msra.mxu0 0.0
        %1939 = vmatprep.subr.mxu0 0.0
        %1940 = vmatpush1.msra.mxu0 0.0
        %1941 = vmatprep.subr.mxu0 0.0
        %1942 = vmatpush1.msra.mxu0 0.0
        %1943 = vmatprep.subr.mxu0 0.0
        %1944 = vmatpush1.msra.mxu0 0.0
        %1945 = vmatprep.subr.mxu0 0.0
        %1946 = vmatpush1.msra.mxu0 0.0
        %1947 = vmatprep.subr.mxu0 0.0
        %1948 = vmatpush1.msra.mxu0 0.0
        %1949 = vmatprep.subr.mxu0 0.0
        %1950 = vmatpush1.msra.mxu0 0.0
        %1951 = vmatprep.subr.mxu0 0.0
        %1952 = vmatpush1.msra.mxu0 %v1094
        %1953 = vmatprep.subr.mxu0 0.0
        %1954 = vmatpush1.msra.mxu0 %v1088
        %1955 = vmatprep.subr.mxu0 0.0
        %1956 = vmatpush2.msra.mxu0 0.0
        %1957 = vmatprep.subr.mxu0 0.0
        %1958 = vmatpush2.msra.mxu0 0.0
        %1959 = vmatprep.subr.mxu0 0.0
        %1960 = vmatpush2.msra.mxu0 0.0
        %1961 = vmatprep.subr.mxu0 0.0
        %1962 = vmatpush2.msra.mxu0 0.0
        %1963 = vmatprep.subr.mxu0 0.0
        %1964 = vmatpush2.msra.mxu0 0.0
        %1965 = vmatprep.subr.mxu0 0.0
        %1966 = vmatpush2.msra.mxu0 0.0
        %1967 = vmatprep.subr.mxu0 0.0
        %1968 = vmatpush2.msra.mxu0 0.0
        %1969 = vmatprep.subr.mxu0 0.0
        %1970 = vmatpush2.msra.mxu0 0.0
        %1971 = vmatprep.subr.mxu0 0.0
        %1972 = vmatpush2.msra.mxu0 0.0
        %1973 = vmatprep.subr.mxu0 0.0
        %1974 = vmatpush2.msra.mxu0 0.0
        %1975 = vmatprep.subr.mxu0 0.0
        %1976 = vmatpush2.msra.mxu0 0.0
        %1977 = vmatprep.subr.mxu0 0.0
        %1978 = vmatpush2.msra.mxu0 0.0
        %1979 = vmatprep.subr.mxu0 0.0
        %1980 = vmatpush2.msra.mxu0 0.0
        %1981 = vmatprep.subr.mxu0 0.0
        %1982 = vmatpush2.msra.mxu0 0.0
        %1983 = vmatprep.subr.mxu0 0.0
        %1984 = vmatpush2.msra.mxu0 0.0
        %1985 = vmatprep.subr.mxu0 0.0
        %1986 = vmatpush2.msra.mxu0 0.0
        %1987 = vmatprep.mubr.f32.mxu0 0.0
        %1988 = vmatmul.mubr.f32.gmra.mxu0 %v1768
        %v1989 = vpop.f32.mrf.mxu0
        %v1990 = vadd.f32 0.0, %v1989
        %v1991 = vpop.f32.mrf.mxu0
        %1992 = vmatprep.mubr.f32.mxu0 0.0
        %1993 = vmatmul.mubr.f32.gmra.mxu0 %v1771
        %v1994 = vpop.f32.mrf.mxu0
        %v1995 = vadd.f32 0.0, %v1994
        %v1996 = vpop.f32.mrf.mxu0
        %1997 = vdwg.mxu0
        %1998 = vmatprep.subr.mxu0 0.0
        %1999 = vmatpush1.msra.mxu0 0.0
        %2000 = vmatprep.subr.mxu0 0.0
        %2001 = vmatpush1.msra.mxu0 0.0
        %2002 = vmatprep.subr.mxu0 0.0
        %2003 = vmatpush1.msra.mxu0 0.0
        %2004 = vmatprep.subr.mxu0 0.0
        %2005 = vmatpush1.msra.mxu0 0.0
        %2006 = vmatprep.subr.mxu0 0.0
        %2007 = vmatpush1.msra.mxu0 0.0
        %2008 = vmatprep.subr.mxu0 0.0
        %2009 = vmatpush1.msra.mxu0 0.0
        %2010 = vmatprep.subr.mxu0 0.0
        %2011 = vmatpush1.msra.mxu0 0.0
        %2012 = vmatprep.subr.mxu0 0.0
        %2013 = vmatpush1.msra.mxu0 0.0
        %2014 = vmatprep.subr.mxu0 0.0
        %2015 = vmatpush1.msra.mxu0 0.0
        %2016 = vmatprep.subr.mxu0 0.0
        %2017 = vmatpush1.msra.mxu0 0.0
        %2018 = vmatprep.subr.mxu0 0.0
        %2019 = vmatpush1.msra.mxu0 0.0
        %2020 = vmatprep.subr.mxu0 0.0
        %2021 = vmatpush1.msra.mxu0 0.0
        %2022 = vmatprep.subr.mxu0 0.0
        %2023 = vmatpush1.msra.mxu0 0.0
        %2024 = vmatprep.subr.mxu0 0.0
        %2025 = vmatpush1.msra.mxu0 0.0
        %2026 = vmatprep.subr.mxu0 0.0
        %2027 = vmatpush1.msra.mxu0 %v1106
        %2028 = vmatprep.subr.mxu0 0.0
        %2029 = vmatpush1.msra.mxu0 %v1100
        %2030 = vmatprep.subr.mxu0 0.0
        %2031 = vmatpush2.msra.mxu0 0.0
        %2032 = vmatprep.subr.mxu0 0.0
        %2033 = vmatpush2.msra.mxu0 0.0
        %2034 = vmatprep.subr.mxu0 0.0
        %2035 = vmatpush2.msra.mxu0 0.0
        %2036 = vmatprep.subr.mxu0 0.0
        %2037 = vmatpush2.msra.mxu0 0.0
        %2038 = vmatprep.subr.mxu0 0.0
        %2039 = vmatpush2.msra.mxu0 0.0
        %2040 = vmatprep.subr.mxu0 0.0
        %2041 = vmatpush2.msra.mxu0 0.0
        %2042 = vmatprep.subr.mxu0 0.0
        %2043 = vmatpush2.msra.mxu0 0.0
        %2044 = vmatprep.subr.mxu0 0.0
        %2045 = vmatpush2.msra.mxu0 0.0
        %2046 = vmatprep.subr.mxu0 0.0
        %2047 = vmatpush2.msra.mxu0 0.0
        %2048 = vmatprep.subr.mxu0 0.0
        %2049 = vmatpush2.msra.mxu0 0.0
        %2050 = vmatprep.subr.mxu0 0.0
        %2051 = vmatpush2.msra.mxu0 0.0
        %2052 = vmatprep.subr.mxu0 0.0
        %2053 = vmatpush2.msra.mxu0 0.0
        %2054 = vmatprep.subr.mxu0 0.0
        %2055 = vmatpush2.msra.mxu0 0.0
        %2056 = vmatprep.subr.mxu0 0.0
        %2057 = vmatpush2.msra.mxu0 0.0
        %2058 = vmatprep.subr.mxu0 0.0
        %2059 = vmatpush2.msra.mxu0 0.0
        %2060 = vmatprep.subr.mxu0 0.0
        %2061 = vmatpush2.msra.mxu0 0.0
        %2062 = vmatprep.mubr.f32.mxu0 0.0
        %2063 = vmatmul.mubr.f32.gmra.mxu0 %v1768
        %v2064 = vpop.f32.mrf.mxu0
        %v2065 = vadd.f32 0.0, %v2064
        %v2066 = vpop.f32.mrf.mxu0
        %2067 = vmatprep.mubr.f32.mxu0 0.0
        %2068 = vmatmul.mubr.f32.gmra.mxu0 %v1771
        %v2069 = vpop.f32.mrf.mxu0
        %v2070 = vadd.f32 0.0, %v2069
        %v2071 = vpop.f32.mrf.mxu0
        %2072 = vdwg.mxu0
        %2073 = vmatprep.subr.mxu0 0.0
        %2074 = vmatpush1.msra.mxu0 0.0
        %2075 = vmatprep.subr.mxu0 0.0
        %2076 = vmatpush1.msra.mxu0 0.0
        %2077 = vmatprep.subr.mxu0 0.0
        %2078 = vmatpush1.msra.mxu0 0.0
        %2079 = vmatprep.subr.mxu0 0.0
        %2080 = vmatpush1.msra.mxu0 0.0
        %2081 = vmatprep.subr.mxu0 0.0
        %2082 = vmatpush1.msra.mxu0 0.0
        %2083 = vmatprep.subr.mxu0 0.0
        %2084 = vmatpush1.msra.mxu0 0.0
        %2085 = vmatprep.subr.mxu0 0.0
        %2086 = vmatpush1.msra.mxu0 0.0
        %2087 = vmatprep.subr.mxu0 0.0
        %2088 = vmatpush1.msra.mxu0 0.0
        %2089 = vmatprep.subr.mxu0 0.0
        %2090 = vmatpush1.msra.mxu0 0.0
        %2091 = vmatprep.subr.mxu0 0.0
        %2092 = vmatpush1.msra.mxu0 0.0
        %2093 = vmatprep.subr.mxu0 0.0
        %2094 = vmatpush1.msra.mxu0 0.0
        %2095 = vmatprep.subr.mxu0 0.0
        %2096 = vmatpush1.msra.mxu0 0.0
        %2097 = vmatprep.subr.mxu0 0.0
        %2098 = vmatpush1.msra.mxu0 0.0
        %2099 = vmatprep.subr.mxu0 0.0
        %2100 = vmatpush1.msra.mxu0 0.0
        %2101 = vmatprep.subr.mxu0 0.0
        %2102 = vmatpush1.msra.mxu0 %v1118
        %2103 = vmatprep.subr.mxu0 0.0
        %2104 = vmatpush1.msra.mxu0 %v1112
        %2105 = vmatprep.subr.mxu0 0.0
        %2106 = vmatpush2.msra.mxu0 0.0
        %2107 = vmatprep.subr.mxu0 0.0
        %2108 = vmatpush2.msra.mxu0 0.0
        %2109 = vmatprep.subr.mxu0 0.0
        %2110 = vmatpush2.msra.mxu0 0.0
        %2111 = vmatprep.subr.mxu0 0.0
        %2112 = vmatpush2.msra.mxu0 0.0
        %2113 = vmatprep.subr.mxu0 0.0
        %2114 = vmatpush2.msra.mxu0 0.0
        %2115 = vmatprep.subr.mxu0 0.0
        %2116 = vmatpush2.msra.mxu0 0.0
        %2117 = vmatprep.subr.mxu0 0.0
        %2118 = vmatpush2.msra.mxu0 0.0
        %2119 = vmatprep.subr.mxu0 0.0
        %2120 = vmatpush2.msra.mxu0 0.0
        %2121 = vmatprep.subr.mxu0 0.0
        %2122 = vmatpush2.msra.mxu0 0.0
        %2123 = vmatprep.subr.mxu0 0.0
        %2124 = vmatpush2.msra.mxu0 0.0
        %2125 = vmatprep.subr.mxu0 0.0
        %2126 = vmatpush2.msra.mxu0 0.0
        %2127 = vmatprep.subr.mxu0 0.0
        %2128 = vmatpush2.msra.mxu0 0.0
        %2129 = vmatprep.subr.mxu0 0.0
        %2130 = vmatpush2.msra.mxu0 0.0
        %2131 = vmatprep.subr.mxu0 0.0
        %2132 = vmatpush2.msra.mxu0 0.0
        %2133 = vmatprep.subr.mxu0 0.0
        %2134 = vmatpush2.msra.mxu0 0.0
        %2135 = vmatprep.subr.mxu0 0.0
        %2136 = vmatpush2.msra.mxu0 0.0
        %2137 = vmatprep.mubr.f32.mxu0 0.0
        %2138 = vmatmul.mubr.f32.gmra.mxu0 %v1768
        %v2139 = vpop.f32.mrf.mxu0
        %v2140 = vadd.f32 0.0, %v2139
        %v2141 = vpop.f32.mrf.mxu0
        %2142 = vmatprep.mubr.f32.mxu0 0.0
        %2143 = vmatmul.mubr.f32.gmra.mxu0 %v1771
        %v2144 = vpop.f32.mrf.mxu0
        %v2145 = vadd.f32 0.0, %v2144
        %v2146 = vpop.f32.mrf.mxu0
        %2147 = vdwg.mxu0
        %2148 = vmatprep.subr.mxu0 0.0
        %2149 = vmatpush1.msra.mxu0 0.0
        %2150 = vmatprep.subr.mxu0 0.0
        %2151 = vmatpush1.msra.mxu0 0.0
        %2152 = vmatprep.subr.mxu0 0.0
        %2153 = vmatpush1.msra.mxu0 0.0
        %2154 = vmatprep.subr.mxu0 0.0
        %2155 = vmatpush1.msra.mxu0 0.0
        %2156 = vmatprep.subr.mxu0 0.0
        %2157 = vmatpush1.msra.mxu0 0.0
        %2158 = vmatprep.subr.mxu0 0.0
        %2159 = vmatpush1.msra.mxu0 0.0
        %2160 = vmatprep.subr.mxu0 0.0
        %2161 = vmatpush1.msra.mxu0 0.0
        %2162 = vmatprep.subr.mxu0 0.0
        %2163 = vmatpush1.msra.mxu0 0.0
        %2164 = vmatprep.subr.mxu0 0.0
        %2165 = vmatpush1.msra.mxu0 0.0
        %2166 = vmatprep.subr.mxu0 0.0
        %2167 = vmatpush1.msra.mxu0 0.0
        %2168 = vmatprep.subr.mxu0 0.0
        %2169 = vmatpush1.msra.mxu0 0.0
        %2170 = vmatprep.subr.mxu0 0.0
        %2171 = vmatpush1.msra.mxu0 0.0
        %2172 = vmatprep.subr.mxu0 0.0
        %2173 = vmatpush1.msra.mxu0 0.0
        %2174 = vmatprep.subr.mxu0 0.0
        %2175 = vmatpush1.msra.mxu0 0.0
        %2176 = vmatprep.subr.mxu0 0.0
        %2177 = vmatpush1.msra.mxu0 %v1130
        %2178 = vmatprep.subr.mxu0 0.0
        %2179 = vmatpush1.msra.mxu0 %v1124
        %2180 = vmatprep.subr.mxu0 0.0
        %2181 = vmatpush2.msra.mxu0 0.0
        %2182 = vmatprep.subr.mxu0 0.0
        %2183 = vmatpush2.msra.mxu0 0.0
        %2184 = vmatprep.subr.mxu0 0.0
        %2185 = vmatpush2.msra.mxu0 0.0
        %2186 = vmatprep.subr.mxu0 0.0
        %2187 = vmatpush2.msra.mxu0 0.0
        %2188 = vmatprep.subr.mxu0 0.0
        %2189 = vmatpush2.msra.mxu0 0.0
        %2190 = vmatprep.subr.mxu0 0.0
        %2191 = vmatpush2.msra.mxu0 0.0
        %2192 = vmatprep.subr.mxu0 0.0
        %2193 = vmatpush2.msra.mxu0 0.0
        %2194 = vmatprep.subr.mxu0 0.0
        %2195 = vmatpush2.msra.mxu0 0.0
        %2196 = vmatprep.subr.mxu0 0.0
        %2197 = vmatpush2.msra.mxu0 0.0
        %2198 = vmatprep.subr.mxu0 0.0
        %2199 = vmatpush2.msra.mxu0 0.0
        %2200 = vmatprep.subr.mxu0 0.0
        %2201 = vmatpush2.msra.mxu0 0.0
        %2202 = vmatprep.subr.mxu0 0.0
        %2203 = vmatpush2.msra.mxu0 0.0
        %2204 = vmatprep.subr.mxu0 0.0
        %2205 = vmatpush2.msra.mxu0 0.0
        %2206 = vmatprep.subr.mxu0 0.0
        %2207 = vmatpush2.msra.mxu0 0.0
        %2208 = vmatprep.subr.mxu0 0.0
        %2209 = vmatpush2.msra.mxu0 0.0
        %2210 = vmatprep.subr.mxu0 0.0
        %2211 = vmatpush2.msra.mxu0 0.0
        %2212 = vmatprep.mubr.f32.mxu0 0.0
        %2213 = vmatmul.mubr.f32.gmra.mxu0 %v1768
        %v2214 = vpop.f32.mrf.mxu0
        %v2215 = vadd.f32 0.0, %v2214
        %v2216 = vpop.f32.mrf.mxu0
        %2217 = vmatprep.mubr.f32.mxu0 0.0
        %2218 = vmatmul.mubr.f32.gmra.mxu0 %v1771
        %v2219 = vpop.f32.mrf.mxu0
        %v2220 = vadd.f32 0.0, %v2219
        %v2221 = vpop.f32.mrf.mxu0
        %2222 = vdwg.mxu0
        %2223 = vmatprep.subr.mxu0 0.0
        %2224 = vmatpush1.msra.mxu0 0.0
        %2225 = vmatprep.subr.mxu0 0.0
        %2226 = vmatpush1.msra.mxu0 0.0
        %2227 = vmatprep.subr.mxu0 0.0
        %2228 = vmatpush1.msra.mxu0 0.0
        %2229 = vmatprep.subr.mxu0 0.0
        %2230 = vmatpush1.msra.mxu0 0.0
        %2231 = vmatprep.subr.mxu0 0.0
        %2232 = vmatpush1.msra.mxu0 0.0
        %2233 = vmatprep.subr.mxu0 0.0
        %2234 = vmatpush1.msra.mxu0 0.0
        %2235 = vmatprep.subr.mxu0 0.0
        %2236 = vmatpush1.msra.mxu0 0.0
        %2237 = vmatprep.subr.mxu0 0.0
        %2238 = vmatpush1.msra.mxu0 0.0
        %2239 = vmatprep.subr.mxu0 0.0
        %2240 = vmatpush1.msra.mxu0 0.0
        %2241 = vmatprep.subr.mxu0 0.0
        %2242 = vmatpush1.msra.mxu0 0.0
        %2243 = vmatprep.subr.mxu0 0.0
        %2244 = vmatpush1.msra.mxu0 0.0
        %2245 = vmatprep.subr.mxu0 0.0
        %2246 = vmatpush1.msra.mxu0 0.0
        %2247 = vmatprep.subr.mxu0 0.0
        %2248 = vmatpush1.msra.mxu0 0.0
        %2249 = vmatprep.subr.mxu0 0.0
        %2250 = vmatpush1.msra.mxu0 0.0
        %2251 = vmatprep.subr.mxu0 0.0
        %2252 = vmatpush1.msra.mxu0 %v1142
        %2253 = vmatprep.subr.mxu0 0.0
        %2254 = vmatpush1.msra.mxu0 %v1136
        %2255 = vmatprep.subr.mxu0 0.0
        %2256 = vmatpush2.msra.mxu0 0.0
        %2257 = vmatprep.subr.mxu0 0.0
        %2258 = vmatpush2.msra.mxu0 0.0
        %2259 = vmatprep.subr.mxu0 0.0
        %2260 = vmatpush2.msra.mxu0 0.0
        %2261 = vmatprep.subr.mxu0 0.0
        %2262 = vmatpush2.msra.mxu0 0.0
        %2263 = vmatprep.subr.mxu0 0.0
        %2264 = vmatpush2.msra.mxu0 0.0
        %2265 = vmatprep.subr.mxu0 0.0
        %2266 = vmatpush2.msra.mxu0 0.0
        %2267 = vmatprep.subr.mxu0 0.0
        %2268 = vmatpush2.msra.mxu0 0.0
        %2269 = vmatprep.subr.mxu0 0.0
        %2270 = vmatpush2.msra.mxu0 0.0
        %2271 = vmatprep.subr.mxu0 0.0
        %2272 = vmatpush2.msra.mxu0 0.0
        %2273 = vmatprep.subr.mxu0 0.0
        %2274 = vmatpush2.msra.mxu0 0.0
        %2275 = vmatprep.subr.mxu0 0.0
        %2276 = vmatpush2.msra.mxu0 0.0
        %2277 = vmatprep.subr.mxu0 0.0
        %2278 = vmatpush2.msra.mxu0 0.0
        %2279 = vmatprep.subr.mxu0 0.0
        %2280 = vmatpush2.msra.mxu0 0.0
        %2281 = vmatprep.subr.mxu0 0.0
        %2282 = vmatpush2.msra.mxu0 0.0
        %2283 = vmatprep.subr.mxu0 0.0
        %2284 = vmatpush2.msra.mxu0 0.0
        %2285 = vmatprep.subr.mxu0 0.0
        %2286 = vmatpush2.msra.mxu0 0.0
        %2287 = vmatprep.mubr.f32.mxu0 0.0
        %2288 = vmatmul.mubr.f32.gmra.mxu0 %v1768
        %v2289 = vpop.f32.mrf.mxu0
        %v2290 = vadd.f32 0.0, %v2289
        %v2291 = vpop.f32.mrf.mxu0
        %2292 = vmatprep.mubr.f32.mxu0 0.0
        %2293 = vmatmul.mubr.f32.gmra.mxu0 %v1771
        %v2294 = vpop.f32.mrf.mxu0
        %v2295 = vadd.f32 0.0, %v2294
        %v2296 = vpop.f32.mrf.mxu0
        %2297 = vdwg.mxu0
        %2298 = vmatprep.subr.mxu0 0.0
        %2299 = vmatpush1.msra.mxu0 0.0
        %2300 = vmatprep.subr.mxu0 0.0
        %2301 = vmatpush1.msra.mxu0 0.0
        %2302 = vmatprep.subr.mxu0 0.0
        %2303 = vmatpush1.msra.mxu0 0.0
        %2304 = vmatprep.subr.mxu0 0.0
        %2305 = vmatpush1.msra.mxu0 0.0
        %2306 = vmatprep.subr.mxu0 0.0
        %2307 = vmatpush1.msra.mxu0 0.0
        %2308 = vmatprep.subr.mxu0 0.0
        %2309 = vmatpush1.msra.mxu0 0.0
        %2310 = vmatprep.subr.mxu0 0.0
        %2311 = vmatpush1.msra.mxu0 0.0
        %2312 = vmatprep.subr.mxu0 0.0
        %2313 = vmatpush1.msra.mxu0 0.0
        %2314 = vmatprep.subr.mxu0 0.0
        %2315 = vmatpush1.msra.mxu0 0.0
        %2316 = vmatprep.subr.mxu0 0.0
        %2317 = vmatpush1.msra.mxu0 0.0
        %2318 = vmatprep.subr.mxu0 0.0
        %2319 = vmatpush1.msra.mxu0 0.0
        %2320 = vmatprep.subr.mxu0 0.0
        %2321 = vmatpush1.msra.mxu0 0.0
        %2322 = vmatprep.subr.mxu0 0.0
        %2323 = vmatpush1.msra.mxu0 0.0
        %2324 = vmatprep.subr.mxu0 0.0
        %2325 = vmatpush1.msra.mxu0 0.0
        %2326 = vmatprep.subr.mxu0 0.0
        %2327 = vmatpush1.msra.mxu0 %v1154
        %2328 = vmatprep.subr.mxu0 0.0
        %2329 = vmatpush1.msra.mxu0 %v1148
        %2330 = vmatprep.subr.mxu0 0.0
        %2331 = vmatpush2.msra.mxu0 0.0
        %2332 = vmatprep.subr.mxu0 0.0
        %2333 = vmatpush2.msra.mxu0 0.0
        %2334 = vmatprep.subr.mxu0 0.0
        %2335 = vmatpush2.msra.mxu0 0.0
        %2336 = vmatprep.subr.mxu0 0.0
        %2337 = vmatpush2.msra.mxu0 0.0
        %2338 = vmatprep.subr.mxu0 0.0
        %2339 = vmatpush2.msra.mxu0 0.0
        %2340 = vmatprep.subr.mxu0 0.0
        %2341 = vmatpush2.msra.mxu0 0.0
        %2342 = vmatprep.subr.mxu0 0.0
        %2343 = vmatpush2.msra.mxu0 0.0
        %2344 = vmatprep.subr.mxu0 0.0
        %2345 = vmatpush2.msra.mxu0 0.0
        %2346 = vmatprep.subr.mxu0 0.0
        %2347 = vmatpush2.msra.mxu0 0.0
        %2348 = vmatprep.subr.mxu0 0.0
        %2349 = vmatpush2.msra.mxu0 0.0
        %2350 = vmatprep.subr.mxu0 0.0
        %2351 = vmatpush2.msra.mxu0 0.0
        %2352 = vmatprep.subr.mxu0 0.0
        %2353 = vmatpush2.msra.mxu0 0.0
        %2354 = vmatprep.subr.mxu0 0.0
        %2355 = vmatpush2.msra.mxu0 0.0
        %2356 = vmatprep.subr.mxu0 0.0
        %2357 = vmatpush2.msra.mxu0 0.0
        %2358 = vmatprep.subr.mxu0 0.0
        %2359 = vmatpush2.msra.mxu0 0.0
        %2360 = vmatprep.subr.mxu0 0.0
        %2361 = vmatpush2.msra.mxu0 0.0
        %2362 = vmatprep.mubr.f32.mxu0 0.0
        %2363 = vmatmul.mubr.f32.gmra.mxu0 %v1768
        %v2364 = vpop.f32.mrf.mxu0
        %v2365 = vadd.f32 0.0, %v2364
        %v2366 = vpop.f32.mrf.mxu0
        %2367 = vmatprep.mubr.f32.mxu0 0.0
        %2368 = vmatmul.mubr.f32.gmra.mxu0 %v1771
        %v2369 = vpop.f32.mrf.mxu0
        %v2370 = vadd.f32 0.0, %v2369
        %v2371 = vpop.f32.mrf.mxu0
        %2372 = vdwg.mxu0
        %v2373 = vsub.f32 %v1234, %v1840
        %v2374 = vsub.f32 %v1239, %v1845
        %v2375 = vsub.f32 %v1309, %v1915
        %v2376 = vsub.f32 %v1314, %v1920
        %v2377 = vsub.f32 %v1384, %v1990
        %v2378 = vsub.f32 %v1389, %v1995
        %v2379 = vsub.f32 %v1459, %v2065
        %v2380 = vsub.f32 %v1464, %v2070
        %v2381 = vsub.f32 %v1534, %v2140
        %v2382 = vsub.f32 %v1539, %v2145
        %v2383 = vsub.f32 %v1609, %v2215
        %v2384 = vsub.f32 %v1614, %v2220
        %v2385 = vsub.f32 %v1684, %v2290
        %v2386 = vsub.f32 %v1689, %v2295
        %v2387 = vsub.f32 %v1759, %v2365
        %v2388 = vsub.f32 %v1764, %v2370
        %v2389 = vadd.f32 %v689, %v2373
        %v2390 = vadd.f32 %v690, %v2374
        %v2391 = vadd.f32 %v691, %v2375
        %v2392 = vadd.f32 %v692, %v2376
        %v2393 = vadd.f32 %v693, %v2377
        %v2394 = vadd.f32 %v694, %v2378
        %v2395 = vadd.f32 %v695, %v2379
        %v2396 = vadd.f32 %v696, %v2380
        %v2397 = vadd.f32 %v697, %v2381
        %v2398 = vadd.f32 %v698, %v2382
        %v2399 = vadd.f32 %v699, %v2383
        %v2400 = vadd.f32 %v700, %v2384
        %v2401 = vadd.f32 %v701, %v2385
        %v2402 = vadd.f32 %v702, %v2386
        %v2403 = vadd.f32 %v703, %v2387
        %v2404 = vadd.f32 %v704, %v2388
        %2405 = vadd.xlane.f32.xlu0 %v2389
        %v2406 = vpop.xlane.xlu0 %2405
        %2407 = vadd.xlane.f32.xlu0 %v2390
        %v2408 = vpop.xlane.xlu0 %2407
        %2409 = vadd.xlane.f32.xlu0 %v2391
        %v2410 = vpop.xlane.xlu0 %2409
        %2411 = vadd.xlane.f32.xlu0 %v2392
        %v2412 = vpop.xlane.xlu0 %2411
        %2413 = vadd.xlane.f32.xlu0 %v2393
        %v2414 = vpop.xlane.xlu0 %2413
        %2415 = vadd.xlane.f32.xlu0 %v2394
        %v2416 = vpop.xlane.xlu0 %2415
        %2417 = vadd.xlane.f32.xlu0 %v2395
        %v2418 = vpop.xlane.xlu0 %2417
        %2419 = vadd.xlane.f32.xlu0 %v2396
        %v2420 = vpop.xlane.xlu0 %2419
        %2421 = vadd.xlane.f32.xlu0 %v2397
        %v2422 = vpop.xlane.xlu0 %2421
        %2423 = vadd.xlane.f32.xlu0 %v2398
        %v2424 = vpop.xlane.xlu0 %2423
        %2425 = vadd.xlane.f32.xlu0 %v2399
        %v2426 = vpop.xlane.xlu0 %2425
        %2427 = vadd.xlane.f32.xlu0 %v2400
        %v2428 = vpop.xlane.xlu0 %2427
        %2429 = vadd.xlane.f32.xlu0 %v2401
        %v2430 = vpop.xlane.xlu0 %2429
        %2431 = vadd.xlane.f32.xlu0 %v2402
        %v2432 = vpop.xlane.xlu0 %2431
        %2433 = vadd.xlane.f32.xlu0 %v2403
        %v2434 = vpop.xlane.xlu0 %2433
        %2435 = vadd.xlane.f32.xlu0 %v2404
        %v2436 = vpop.xlane.xlu0 %2435
        %v2437 = vmul.f32 %v2406, %v742
        %v2438 = vmul.f32 %v2408, %v742
        %v2439 = vmul.f32 %v2410, %v742
        %v2440 = vmul.f32 %v2412, %v742
        %v2441 = vmul.f32 %v2414, %v742
        %v2442 = vmul.f32 %v2416, %v742
        %v2443 = vmul.f32 %v2418, %v742
        %v2444 = vmul.f32 %v2420, %v742
        %v2445 = vmul.f32 %v2422, %v742
        %v2446 = vmul.f32 %v2424, %v742
        %v2447 = vmul.f32 %v2426, %v742
        %v2448 = vmul.f32 %v2428, %v742
        %v2449 = vmul.f32 %v2430, %v742
        %v2450 = vmul.f32 %v2432, %v742
        %v2451 = vmul.f32 %v2434, %v742
        %v2452 = vmul.f32 %v2436, %v742
        %v2453 = vmul.f32 %v2389, %v2389
        %v2454 = vmul.f32 %v2390, %v2390
        %v2455 = vmul.f32 %v2391, %v2391
        %v2456 = vmul.f32 %v2392, %v2392
        %v2457 = vmul.f32 %v2393, %v2393
        %v2458 = vmul.f32 %v2394, %v2394
        %v2459 = vmul.f32 %v2395, %v2395
        %v2460 = vmul.f32 %v2396, %v2396
        %v2461 = vmul.f32 %v2397, %v2397
        %v2462 = vmul.f32 %v2398, %v2398
        %v2463 = vmul.f32 %v2399, %v2399
        %v2464 = vmul.f32 %v2400, %v2400
        %v2465 = vmul.f32 %v2401, %v2401
        %v2466 = vmul.f32 %v2402, %v2402
        %v2467 = vmul.f32 %v2403, %v2403
        %v2468 = vmul.f32 %v2404, %v2404
        %2469 = vadd.xlane.f32.xlu0 %v2453
        %v2470 = vpop.xlane.xlu0 %2469
        %2471 = vadd.xlane.f32.xlu0 %v2454
        %v2472 = vpop.xlane.xlu0 %2471
        %2473 = vadd.xlane.f32.xlu0 %v2455
        %v2474 = vpop.xlane.xlu0 %2473
        %2475 = vadd.xlane.f32.xlu0 %v2456
        %v2476 = vpop.xlane.xlu0 %2475
        %2477 = vadd.xlane.f32.xlu0 %v2457
        %v2478 = vpop.xlane.xlu0 %2477
        %2479 = vadd.xlane.f32.xlu0 %v2458
        %v2480 = vpop.xlane.xlu0 %2479
        %2481 = vadd.xlane.f32.xlu0 %v2459
        %v2482 = vpop.xlane.xlu0 %2481
        %2483 = vadd.xlane.f32.xlu0 %v2460
        %v2484 = vpop.xlane.xlu0 %2483
        %2485 = vadd.xlane.f32.xlu0 %v2461
        %v2486 = vpop.xlane.xlu0 %2485
        %2487 = vadd.xlane.f32.xlu0 %v2462
        %v2488 = vpop.xlane.xlu0 %2487
        %2489 = vadd.xlane.f32.xlu0 %v2463
        %v2490 = vpop.xlane.xlu0 %2489
        %2491 = vadd.xlane.f32.xlu0 %v2464
        %v2492 = vpop.xlane.xlu0 %2491
        %2493 = vadd.xlane.f32.xlu0 %v2465
        %v2494 = vpop.xlane.xlu0 %2493
        %2495 = vadd.xlane.f32.xlu0 %v2466
        %v2496 = vpop.xlane.xlu0 %2495
        %2497 = vadd.xlane.f32.xlu0 %v2467
        %v2498 = vpop.xlane.xlu0 %2497
        %2499 = vadd.xlane.f32.xlu0 %v2468
        %v2500 = vpop.xlane.xlu0 %2499
        %v2501 = vmul.f32 %v2470, %v742
        %v2502 = vmul.f32 %v2472, %v742
        %v2503 = vmul.f32 %v2474, %v742
        %v2504 = vmul.f32 %v2476, %v742
        %v2505 = vmul.f32 %v2478, %v742
        %v2506 = vmul.f32 %v2480, %v742
        %v2507 = vmul.f32 %v2482, %v742
        %v2508 = vmul.f32 %v2484, %v742
        %v2509 = vmul.f32 %v2486, %v742
        %v2510 = vmul.f32 %v2488, %v742
        %v2511 = vmul.f32 %v2490, %v742
        %v2512 = vmul.f32 %v2492, %v742
        %v2513 = vmul.f32 %v2494, %v742
        %v2514 = vmul.f32 %v2496, %v742
        %v2515 = vmul.f32 %v2498, %v742
        %v2516 = vmul.f32 %v2500, %v742
        %v2517 = vmul.f32 %v2437, %v2437
        %v2518 = vmul.f32 %v2438, %v2438
        %v2519 = vmul.f32 %v2439, %v2439
        %v2520 = vmul.f32 %v2440, %v2440
        %v2521 = vmul.f32 %v2441, %v2441
        %v2522 = vmul.f32 %v2442, %v2442
        %v2523 = vmul.f32 %v2443, %v2443
        %v2524 = vmul.f32 %v2444, %v2444
        %v2525 = vmul.f32 %v2445, %v2445
        %v2526 = vmul.f32 %v2446, %v2446
        %v2527 = vmul.f32 %v2447, %v2447
        %v2528 = vmul.f32 %v2448, %v2448
        %v2529 = vmul.f32 %v2449, %v2449
        %v2530 = vmul.f32 %v2450, %v2450
        %v2531 = vmul.f32 %v2451, %v2451
        %v2532 = vmul.f32 %v2452, %v2452
        %v2533 = vsub.f32 %v2501, %v2517
        %v2534 = vsub.f32 %v2502, %v2518
        %v2535 = vsub.f32 %v2503, %v2519
        %v2536 = vsub.f32 %v2504, %v2520
        %v2537 = vsub.f32 %v2505, %v2521
        %v2538 = vsub.f32 %v2506, %v2522
        %v2539 = vsub.f32 %v2507, %v2523
        %v2540 = vsub.f32 %v2508, %v2524
        %v2541 = vsub.f32 %v2509, %v2525
        %v2542 = vsub.f32 %v2510, %v2526
        %v2543 = vsub.f32 %v2511, %v2527
        %v2544 = vsub.f32 %v2512, %v2528
        %v2545 = vsub.f32 %v2513, %v2529
        %v2546 = vsub.f32 %v2514, %v2530
        %v2547 = vsub.f32 %v2515, %v2531
        %v2548 = vsub.f32 %v2516, %v2532
        %v2549 = vsub.f32 %v2389, %v2437
        %v2550 = vsub.f32 %v2390, %v2438
        %v2551 = vsub.f32 %v2391, %v2439
        %v2552 = vsub.f32 %v2392, %v2440
        %v2553 = vsub.f32 %v2393, %v2441
        %v2554 = vsub.f32 %v2394, %v2442
        %v2555 = vsub.f32 %v2395, %v2443
        %v2556 = vsub.f32 %v2396, %v2444
        %v2557 = vsub.f32 %v2397, %v2445
        %v2558 = vsub.f32 %v2398, %v2446
        %v2559 = vsub.f32 %v2399, %v2447
        %v2560 = vsub.f32 %v2400, %v2448
        %v2561 = vsub.f32 %v2401, %v2449
        %v2562 = vsub.f32 %v2402, %v2450
        %v2563 = vsub.f32 %v2403, %v2451
        %v2564 = vsub.f32 %v2404, %v2452
        %v2565 = vadd.f32 %v2533, 1e-05
        %v2566 = vadd.f32 %v2534, 1e-05
        %v2567 = vadd.f32 %v2535, 1e-05
        %v2568 = vadd.f32 %v2536, 1e-05
        %v2569 = vadd.f32 %v2537, 1e-05
        %v2570 = vadd.f32 %v2538, 1e-05
        %v2571 = vadd.f32 %v2539, 1e-05
        %v2572 = vadd.f32 %v2540, 1e-05
        %v2573 = vadd.f32 %v2541, 1e-05
        %v2574 = vadd.f32 %v2542, 1e-05
        %v2575 = vadd.f32 %v2543, 1e-05
        %v2576 = vadd.f32 %v2544, 1e-05
        %v2577 = vadd.f32 %v2545, 1e-05
        %v2578 = vadd.f32 %v2546, 1e-05
        %v2579 = vadd.f32 %v2547, 1e-05
        %v2580 = vadd.f32 %v2548, 1e-05
        %v2581 = vrsqrt.pop %v2565
        %v2582 = vrsqrt.pop %v2566
        %v2583 = vrsqrt.pop %v2567
        %v2584 = vrsqrt.pop %v2568
        %v2585 = vrsqrt.pop %v2569
        %v2586 = vrsqrt.pop %v2570
        %v2587 = vrsqrt.pop %v2571
        %v2588 = vrsqrt.pop %v2572
        %v2589 = vrsqrt.pop %v2573
        %v2590 = vrsqrt.pop %v2574
        %v2591 = vrsqrt.pop %v2575
        %v2592 = vrsqrt.pop %v2576
        %v2593 = vrsqrt.pop %v2577
        %v2594 = vrsqrt.pop %v2578
        %v2595 = vrsqrt.pop %v2579
        %v2596 = vrsqrt.pop %v2580
        %v2597 = vmul.f32 %v2549, %v2581
        %v2598 = vmul.f32 %v2550, %v2582
        %v2599 = vmul.f32 %v2551, %v2583
        %v2600 = vmul.f32 %v2552, %v2584
        %v2601 = vmul.f32 %v2553, %v2585
        %v2602 = vmul.f32 %v2554, %v2586
        %v2603 = vmul.f32 %v2555, %v2587
        %v2604 = vmul.f32 %v2556, %v2588
        %v2605 = vmul.f32 %v2557, %v2589
        %v2606 = vmul.f32 %v2558, %v2590
        %v2607 = vmul.f32 %v2559, %v2591
        %v2608 = vmul.f32 %v2560, %v2592
        %v2609 = vmul.f32 %v2561, %v2593
        %v2610 = vmul.f32 %v2562, %v2594
        %v2611 = vmul.f32 %v2563, %v2595
        %v2612 = vmul.f32 %v2564, %v2596
        %v2614 = vlaneseq
        %v2615 = vshrl.u32 %v2614, 7
        %v2616 = vsub.s32 0, %v2615
        %v2617 = vrot.slane %v707, %v2616
        %v2619 = vmul.f32 %v2597, %v2617
        %v2620 = vmul.f32 %v2598, %v2617
        %v2621 = vmul.f32 %v2599, %v2617
        %v2622 = vmul.f32 %v2600, %v2617
        %v2623 = vmul.f32 %v2601, %v2617
        %v2624 = vmul.f32 %v2602, %v2617
        %v2625 = vmul.f32 %v2603, %v2617
        %v2626 = vmul.f32 %v2604, %v2617
        %v2627 = vmul.f32 %v2605, %v2617
        %v2628 = vmul.f32 %v2606, %v2617
        %v2629 = vmul.f32 %v2607, %v2617
        %v2630 = vmul.f32 %v2608, %v2617
        %v2631 = vmul.f32 %v2609, %v2617
        %v2632 = vmul.f32 %v2610, %v2617
        %v2633 = vmul.f32 %v2611, %v2617
        %v2634 = vmul.f32 %v2612, %v2617
        %v2636 = vlaneseq
        %v2637 = vshrl.u32 %v2636, 7
        %v2638 = vsub.s32 0, %v2637
        %v2639 = vrot.slane %v708, %v2638
        %v2641 = vadd.f32 %v2619, %v2639
        %v2642 = vadd.f32 %v2620, %v2639
        %v2643 = vadd.f32 %v2621, %v2639
        %v2644 = vadd.f32 %v2622, %v2639
        %v2645 = vadd.f32 %v2623, %v2639
        %v2646 = vadd.f32 %v2624, %v2639
        %v2647 = vadd.f32 %v2625, %v2639
        %v2648 = vadd.f32 %v2626, %v2639
        %v2649 = vadd.f32 %v2627, %v2639
        %v2650 = vadd.f32 %v2628, %v2639
        %v2651 = vadd.f32 %v2629, %v2639
        %v2652 = vadd.f32 %v2630, %v2639
        %v2653 = vadd.f32 %v2631, %v2639
        %v2654 = vadd.f32 %v2632, %v2639
        %v2655 = vadd.f32 %v2633, %v2639
        %v2656 = vadd.f32 %v2634, %v2639
        %v2657 = vpack.c.bf16 %v2642, %v2641
        %v2658 = vpack.c.bf16 %v2644, %v2643
        %v2659 = vpack.c.bf16 %v2646, %v2645
        %v2660 = vpack.c.bf16 %v2648, %v2647
        %v2661 = vpack.c.bf16 %v2650, %v2649
        %v2662 = vpack.c.bf16 %v2652, %v2651
        %v2663 = vpack.c.bf16 %v2654, %v2653
        %v2664 = vpack.c.bf16 %v2656, %v2655
        %v2665 = vld [vmem:[%s552] sm:$0xff]
        %v2666 = vld [vmem:[%s552 + $0x8] sm:$0xff]
        %v2667 = vld [vmem:[%s552 + $0x10] sm:$0xff]
        %v2668 = vld [vmem:[%s552 + $0x18] sm:$0xff]
        %v2669 = vld [vmem:[%s552 + $0x20] sm:$0xff]
        %v2670 = vld [vmem:[%s552 + $0x28] sm:$0xff]
        %v2671 = vld [vmem:[%s552 + $0x30] sm:$0xff]
        %v2672 = vld [vmem:[%s552 + $0x38] sm:$0xff]
        %v2673 = vld [vmem:[%s552 + $0x40] sm:$0xff]
        %v2674 = vld [vmem:[%s552 + $0x48] sm:$0xff]
        %v2675 = vld [vmem:[%s552 + $0x50] sm:$0xff]
        %v2676 = vld [vmem:[%s552 + $0x58] sm:$0xff]
        %v2677 = vld [vmem:[%s552 + $0x60] sm:$0xff]
        %v2678 = vld [vmem:[%s552 + $0x68] sm:$0xff]
        %v2679 = vld [vmem:[%s552 + $0x70] sm:$0xff]
        %v2680 = vld [vmem:[%s552 + $0x78] sm:$0xff]
        %v2681 = vld [vmem:[%s647] sm:$0x3]
        %v2683 = vlaneseq
        %v2684 = vshrl.u32 %v2683, 7
        %v2685 = vsub.s32 0, %v2684
        %v2686 = vrot.slane %v2681, %v2685
        %v2687 = vlaneseq
        %v2688 = vshrl.u32 %v2687, 7
        %v2689 = vsub.s32 1, %v2688
        %v2690 = vrot.slane %v2681, %v2689
        %v2709 = vunpack.c.l.b16 %v2665
        %v2710 = vunpack.c.h.b16 %v2665
        %v2711 = vunpack.c.l.b16 %v2666
        %v2712 = vunpack.c.h.b16 %v2666
        %v2713 = vunpack.c.l.b16 %v2667
        %v2714 = vunpack.c.h.b16 %v2667
        %v2715 = vunpack.c.l.b16 %v2668
        %v2716 = vunpack.c.h.b16 %v2668
        %v2717 = vunpack.c.l.b16 %v2669
        %v2718 = vunpack.c.h.b16 %v2669
        %v2719 = vunpack.c.l.b16 %v2670
        %v2720 = vunpack.c.h.b16 %v2670
        %v2721 = vunpack.c.l.b16 %v2671
        %v2722 = vunpack.c.h.b16 %v2671
        %v2723 = vunpack.c.l.b16 %v2672
        %v2724 = vunpack.c.h.b16 %v2672
        %v2725 = vunpack.c.l.b16 %v2673
        %v2726 = vunpack.c.h.b16 %v2673
        %v2727 = vunpack.c.l.b16 %v2674
        %v2728 = vunpack.c.h.b16 %v2674
        %v2729 = vunpack.c.l.b16 %v2675
        %v2730 = vunpack.c.h.b16 %v2675
        %v2731 = vunpack.c.l.b16 %v2676
        %v2732 = vunpack.c.h.b16 %v2676
        %v2733 = vunpack.c.l.b16 %v2677
        %v2734 = vunpack.c.h.b16 %v2677
        %v2735 = vunpack.c.l.b16 %v2678
        %v2736 = vunpack.c.h.b16 %v2678
        %v2737 = vunpack.c.l.b16 %v2679
        %v2738 = vunpack.c.h.b16 %v2679
        %v2739 = vunpack.c.l.b16 %v2680
        %v2740 = vunpack.c.h.b16 %v2680
        %v2741 = vpack.c.b16 %v2711, %v2709
        %v2742 = vpack.c.b16 %v2712, %v2710
        %v2743 = vpack.c.b16 %v2715, %v2713
        %v2744 = vpack.c.b16 %v2716, %v2714
        %v2745 = vpack.c.b16 %v2719, %v2717
        %v2746 = vpack.c.b16 %v2720, %v2718
        %v2747 = vpack.c.b16 %v2723, %v2721
        %v2748 = vpack.c.b16 %v2724, %v2722
        %v2749 = vpack.c.b16 %v2727, %v2725
        %v2750 = vpack.c.b16 %v2728, %v2726
        %v2751 = vpack.c.b16 %v2731, %v2729
        %v2752 = vpack.c.b16 %v2732, %v2730
        %v2753 = vpack.c.b16 %v2735, %v2733
        %v2754 = vpack.c.b16 %v2736, %v2734
        %v2755 = vpack.c.b16 %v2739, %v2737
        %v2756 = vpack.c.b16 %v2740, %v2738
        %2773 = vmatprep.subr.bf16.mxu0 %v2756
        %2774 = vmatpush1.bf16.msra.mxu0 %v2755
        %2775 = vmatprep.subr.bf16.mxu0 %v2754
        %2776 = vmatpush1.bf16.msra.mxu0 %v2753
        %2777 = vmatprep.subr.bf16.mxu0 %v2752
        %2778 = vmatpush1.bf16.msra.mxu0 %v2751
        %2779 = vmatprep.subr.bf16.mxu0 %v2750
        %2780 = vmatpush1.bf16.msra.mxu0 %v2749
        %2781 = vmatprep.subr.bf16.mxu0 %v2748
        %2782 = vmatpush1.bf16.msra.mxu0 %v2747
        %2783 = vmatprep.subr.bf16.mxu0 %v2746
        %2784 = vmatpush1.bf16.msra.mxu0 %v2745
        %2785 = vmatprep.subr.bf16.mxu0 %v2744
        %2786 = vmatpush1.bf16.msra.mxu0 %v2743
        %2787 = vmatprep.subr.bf16.mxu0 %v2742
        %2788 = vmatpush1.bf16.msra.mxu0 %v2741
        %2789 = vmatprep.subr.bf16.mxu0 0
        %2790 = vmatpush2.bf16.msra.mxu0 0
        %2791 = vmatprep.subr.bf16.mxu0 0
        %2792 = vmatpush2.bf16.msra.mxu0 0
        %2793 = vmatprep.subr.bf16.mxu0 0
        %2794 = vmatpush2.bf16.msra.mxu0 0
        %2795 = vmatprep.subr.bf16.mxu0 0
        %2796 = vmatpush2.bf16.msra.mxu0 0
        %2797 = vmatprep.subr.bf16.mxu0 0
        %2798 = vmatpush2.bf16.msra.mxu0 0
        %2799 = vmatprep.subr.bf16.mxu0 0
        %2800 = vmatpush2.bf16.msra.mxu0 0
        %2801 = vmatprep.subr.bf16.mxu0 0
        %2802 = vmatpush2.bf16.msra.mxu0 0
        %2803 = vmatprep.subr.bf16.mxu0 0
        %2804 = vmatpush2.bf16.msra.mxu0 0
        %2805 = vmatprep.mubr.bf16.mxu0 0
        %2806 = vmatmul.mubr.bf16.gmra.mxu0 %v2657
        %v2807 = vpop.f32.mrf.mxu0
        %v2808 = vadd.f32 %v2686, %v2807
        %v2809 = vpop.f32.mrf.mxu0
        %v2810 = vadd.f32 %v2690, %v2809
        %v2811 = vpop.f32.mrf.mxu0
        %v2812 = vadd.f32 %v2686, %v2811
        %v2813 = vpop.f32.mrf.mxu0
        %v2814 = vadd.f32 %v2690, %v2813
        %2815 = vmatprep.mubr.bf16.mxu0 0
        %2816 = vmatmul.mubr.bf16.gmra.mxu0 %v2658
        %v2817 = vpop.f32.mrf.mxu0
        %v2818 = vadd.f32 %v2686, %v2817
        %v2819 = vpop.f32.mrf.mxu0
        %v2820 = vadd.f32 %v2690, %v2819
        %v2821 = vpop.f32.mrf.mxu0
        %v2822 = vadd.f32 %v2686, %v2821
        %v2823 = vpop.f32.mrf.mxu0
        %v2824 = vadd.f32 %v2690, %v2823
        %2825 = vmatprep.mubr.bf16.mxu0 0
        %2826 = vmatmul.mubr.bf16.gmra.mxu0 %v2659
        %v2827 = vpop.f32.mrf.mxu0
        %v2828 = vadd.f32 %v2686, %v2827
        %v2829 = vpop.f32.mrf.mxu0
        %v2830 = vadd.f32 %v2690, %v2829
        %v2831 = vpop.f32.mrf.mxu0
        %v2832 = vadd.f32 %v2686, %v2831
        %v2833 = vpop.f32.mrf.mxu0
        %v2834 = vadd.f32 %v2690, %v2833
        %2835 = vmatprep.mubr.bf16.mxu0 0
        %2836 = vmatmul.mubr.bf16.gmra.mxu0 %v2660
        %v2837 = vpop.f32.mrf.mxu0
        %v2838 = vadd.f32 %v2686, %v2837
        %v2839 = vpop.f32.mrf.mxu0
        %v2840 = vadd.f32 %v2690, %v2839
        %v2841 = vpop.f32.mrf.mxu0
        %v2842 = vadd.f32 %v2686, %v2841
        %v2843 = vpop.f32.mrf.mxu0
        %v2844 = vadd.f32 %v2690, %v2843
        %2845 = vmatprep.mubr.bf16.mxu0 0
        %2846 = vmatmul.mubr.bf16.gmra.mxu0 %v2661
        %v2847 = vpop.f32.mrf.mxu0
        %v2848 = vadd.f32 %v2686, %v2847
        %v2849 = vpop.f32.mrf.mxu0
        %v2850 = vadd.f32 %v2690, %v2849
        %v2851 = vpop.f32.mrf.mxu0
        %v2852 = vadd.f32 %v2686, %v2851
        %v2853 = vpop.f32.mrf.mxu0
        %v2854 = vadd.f32 %v2690, %v2853
        %2855 = vmatprep.mubr.bf16.mxu0 0
        %2856 = vmatmul.mubr.bf16.gmra.mxu0 %v2662
        %v2857 = vpop.f32.mrf.mxu0
        %v2858 = vadd.f32 %v2686, %v2857
        %v2859 = vpop.f32.mrf.mxu0
        %v2860 = vadd.f32 %v2690, %v2859
        %v2861 = vpop.f32.mrf.mxu0
        %v2862 = vadd.f32 %v2686, %v2861
        %v2863 = vpop.f32.mrf.mxu0
        %v2864 = vadd.f32 %v2690, %v2863
        %2865 = vmatprep.mubr.bf16.mxu0 0
        %2866 = vmatmul.mubr.bf16.gmra.mxu0 %v2663
        %v2867 = vpop.f32.mrf.mxu0
        %v2868 = vadd.f32 %v2686, %v2867
        %v2869 = vpop.f32.mrf.mxu0
        %v2870 = vadd.f32 %v2690, %v2869
        %v2871 = vpop.f32.mrf.mxu0
        %v2872 = vadd.f32 %v2686, %v2871
        %v2873 = vpop.f32.mrf.mxu0
        %v2874 = vadd.f32 %v2690, %v2873
        %2875 = vmatprep.mubr.bf16.mxu0 0
        %2876 = vmatmul.mubr.bf16.gmra.mxu0 %v2664
        %v2877 = vpop.f32.mrf.mxu0
        %v2878 = vadd.f32 %v2686, %v2877
        %v2879 = vpop.f32.mrf.mxu0
        %v2880 = vadd.f32 %v2690, %v2879
        %v2881 = vpop.f32.mrf.mxu0
        %v2882 = vadd.f32 %v2686, %v2881
        %v2883 = vpop.f32.mrf.mxu0
        %v2884 = vadd.f32 %v2690, %v2883
        %2885 = vdwg.mxu0
        %v2886 = vmul.f32 %v2808, 0.5
        %v2887 = vmul.f32 %v2810, 0.5
        %v2888 = vmul.f32 %v2812, 0.5
        %v2889 = vmul.f32 %v2814, 0.5
        %v2890 = vmul.f32 %v2818, 0.5
        %v2891 = vmul.f32 %v2820, 0.5
        %v2892 = vmul.f32 %v2822, 0.5
        %v2893 = vmul.f32 %v2824, 0.5
        %v2894 = vmul.f32 %v2828, 0.5
        %v2895 = vmul.f32 %v2830, 0.5
        %v2896 = vmul.f32 %v2832, 0.5
        %v2897 = vmul.f32 %v2834, 0.5
        %v2898 = vmul.f32 %v2838, 0.5
        %v2899 = vmul.f32 %v2840, 0.5
        %v2900 = vmul.f32 %v2842, 0.5
        %v2901 = vmul.f32 %v2844, 0.5
        %v2902 = vmul.f32 %v2848, 0.5
        %v2903 = vmul.f32 %v2850, 0.5
        %v2904 = vmul.f32 %v2852, 0.5
        %v2905 = vmul.f32 %v2854, 0.5
        %v2906 = vmul.f32 %v2858, 0.5
        %v2907 = vmul.f32 %v2860, 0.5
        %v2908 = vmul.f32 %v2862, 0.5
        %v2909 = vmul.f32 %v2864, 0.5
        %v2910 = vmul.f32 %v2868, 0.5
        %v2911 = vmul.f32 %v2870, 0.5
        %v2912 = vmul.f32 %v2872, 0.5
        %v2913 = vmul.f32 %v2874, 0.5
        %v2914 = vmul.f32 %v2878, 0.5
        %v2915 = vmul.f32 %v2880, 0.5
        %v2916 = vmul.f32 %v2882, 0.5
        %v2917 = vmul.f32 %v2884, 0.5
        %v2918 = vmul.f32 %v2808, 0.70710677
        %v2919 = vmul.f32 %v2810, 0.70710677
        %v2920 = vmul.f32 %v2812, 0.70710677
        %v2921 = vmul.f32 %v2814, 0.70710677
        %v2922 = vmul.f32 %v2818, 0.70710677
        %v2923 = vmul.f32 %v2820, 0.70710677
        %v2924 = vmul.f32 %v2822, 0.70710677
        %v2925 = vmul.f32 %v2824, 0.70710677
        %v2926 = vmul.f32 %v2828, 0.70710677
        %v2927 = vmul.f32 %v2830, 0.70710677
        %v2928 = vmul.f32 %v2832, 0.70710677
        %v2929 = vmul.f32 %v2834, 0.70710677
        %v2930 = vmul.f32 %v2838, 0.70710677
        %v2931 = vmul.f32 %v2840, 0.70710677
        %v2932 = vmul.f32 %v2842, 0.70710677
        %v2933 = vmul.f32 %v2844, 0.70710677
        %v2934 = vmul.f32 %v2848, 0.70710677
        %v2935 = vmul.f32 %v2850, 0.70710677
        %v2936 = vmul.f32 %v2852, 0.70710677
        %v2937 = vmul.f32 %v2854, 0.70710677
        %v2938 = vmul.f32 %v2858, 0.70710677
        %v2939 = vmul.f32 %v2860, 0.70710677
        %v2940 = vmul.f32 %v2862, 0.70710677
        %v2941 = vmul.f32 %v2864, 0.70710677
        %v2942 = vmul.f32 %v2868, 0.70710677
        %v2943 = vmul.f32 %v2870, 0.70710677
        %v2944 = vmul.f32 %v2872, 0.70710677
        %v2945 = vmul.f32 %v2874, 0.70710677
        %v2946 = vmul.f32 %v2878, 0.70710677
        %v2947 = vmul.f32 %v2880, 0.70710677
        %v2948 = vmul.f32 %v2882, 0.70710677
        %v2949 = vmul.f32 %v2884, 0.70710677
        %v2950 = verf.f32.pop %v2918
        %v2951 = verf.f32.pop %v2919
        %v2952 = verf.f32.pop %v2920
        %v2953 = verf.f32.pop %v2921
        %v2954 = verf.f32.pop %v2922
        %v2955 = verf.f32.pop %v2923
        %v2956 = verf.f32.pop %v2924
        %v2957 = verf.f32.pop %v2925
        %v2958 = verf.f32.pop %v2926
        %v2959 = verf.f32.pop %v2927
        %v2960 = verf.f32.pop %v2928
        %v2961 = verf.f32.pop %v2929
        %v2962 = verf.f32.pop %v2930
        %v2963 = verf.f32.pop %v2931
        %v2964 = verf.f32.pop %v2932
        %v2965 = verf.f32.pop %v2933
        %v2966 = verf.f32.pop %v2934
        %v2967 = verf.f32.pop %v2935
        %v2968 = verf.f32.pop %v2936
        %v2969 = verf.f32.pop %v2937
        %v2970 = verf.f32.pop %v2938
        %v2971 = verf.f32.pop %v2939
        %v2972 = verf.f32.pop %v2940
        %v2973 = verf.f32.pop %v2941
        %v2974 = verf.f32.pop %v2942
        %v2975 = verf.f32.pop %v2943
        %v2976 = verf.f32.pop %v2944
        %v2977 = verf.f32.pop %v2945
        %v2978 = verf.f32.pop %v2946
        %v2979 = verf.f32.pop %v2947
        %v2980 = verf.f32.pop %v2948
        %v2981 = verf.f32.pop %v2949
        %v2982 = vadd.f32 %v2950, 1.0
        %v2983 = vadd.f32 %v2951, 1.0
        %v2984 = vadd.f32 %v2952, 1.0
        %v2985 = vadd.f32 %v2953, 1.0
        %v2986 = vadd.f32 %v2954, 1.0
        %v2987 = vadd.f32 %v2955, 1.0
        %v2988 = vadd.f32 %v2956, 1.0
        %v2989 = vadd.f32 %v2957, 1.0
        %v2990 = vadd.f32 %v2958, 1.0
        %v2991 = vadd.f32 %v2959, 1.0
        %v2992 = vadd.f32 %v2960, 1.0
        %v2993 = vadd.f32 %v2961, 1.0
        %v2994 = vadd.f32 %v2962, 1.0
        %v2995 = vadd.f32 %v2963, 1.0
        %v2996 = vadd.f32 %v2964, 1.0
        %v2997 = vadd.f32 %v2965, 1.0
        %v2998 = vadd.f32 %v2966, 1.0
        %v2999 = vadd.f32 %v2967, 1.0
        %v3000 = vadd.f32 %v2968, 1.0
        %v3001 = vadd.f32 %v2969, 1.0
        %v3002 = vadd.f32 %v2970, 1.0
        %v3003 = vadd.f32 %v2971, 1.0
        %v3004 = vadd.f32 %v2972, 1.0
        %v3005 = vadd.f32 %v2973, 1.0
        %v3006 = vadd.f32 %v2974, 1.0
        %v3007 = vadd.f32 %v2975, 1.0
        %v3008 = vadd.f32 %v2976, 1.0
        %v3009 = vadd.f32 %v2977, 1.0
        %v3010 = vadd.f32 %v2978, 1.0
        %v3011 = vadd.f32 %v2979, 1.0
        %v3012 = vadd.f32 %v2980, 1.0
        %v3013 = vadd.f32 %v2981, 1.0
        %v3014 = vmul.f32 %v2886, %v2982
        %v3015 = vmul.f32 %v2887, %v2983
        %v3016 = vmul.f32 %v2888, %v2984
        %v3017 = vmul.f32 %v2889, %v2985
        %v3018 = vmul.f32 %v2890, %v2986
        %v3019 = vmul.f32 %v2891, %v2987
        %v3020 = vmul.f32 %v2892, %v2988
        %v3021 = vmul.f32 %v2893, %v2989
        %v3022 = vmul.f32 %v2894, %v2990
        %v3023 = vmul.f32 %v2895, %v2991
        %v3024 = vmul.f32 %v2896, %v2992
        %v3025 = vmul.f32 %v2897, %v2993
        %v3026 = vmul.f32 %v2898, %v2994
        %v3027 = vmul.f32 %v2899, %v2995
        %v3028 = vmul.f32 %v2900, %v2996
        %v3029 = vmul.f32 %v2901, %v2997
        %v3030 = vmul.f32 %v2902, %v2998
        %v3031 = vmul.f32 %v2903, %v2999
        %v3032 = vmul.f32 %v2904, %v3000
        %v3033 = vmul.f32 %v2905, %v3001
        %v3034 = vmul.f32 %v2906, %v3002
        %v3035 = vmul.f32 %v2907, %v3003
        %v3036 = vmul.f32 %v2908, %v3004
        %v3037 = vmul.f32 %v2909, %v3005
        %v3038 = vmul.f32 %v2910, %v3006
        %v3039 = vmul.f32 %v2911, %v3007
        %v3040 = vmul.f32 %v2912, %v3008
        %v3041 = vmul.f32 %v2913, %v3009
        %v3042 = vmul.f32 %v2914, %v3010
        %v3043 = vmul.f32 %v2915, %v3011
        %v3044 = vmul.f32 %v2916, %v3012
        %v3045 = vmul.f32 %v2917, %v3013
        %v3046 = vpack.c.bf16 %v3016, %v3014
        %v3047 = vpack.c.bf16 %v3017, %v3015
        %v3048 = vpack.c.bf16 %v3020, %v3018
        %v3049 = vpack.c.bf16 %v3021, %v3019
        %v3050 = vpack.c.bf16 %v3024, %v3022
        %v3051 = vpack.c.bf16 %v3025, %v3023
        %v3052 = vpack.c.bf16 %v3028, %v3026
        %v3053 = vpack.c.bf16 %v3029, %v3027
        %v3054 = vpack.c.bf16 %v3032, %v3030
        %v3055 = vpack.c.bf16 %v3033, %v3031
        %v3056 = vpack.c.bf16 %v3036, %v3034
        %v3057 = vpack.c.bf16 %v3037, %v3035
        %v3058 = vpack.c.bf16 %v3040, %v3038
        %v3059 = vpack.c.bf16 %v3041, %v3039
        %v3060 = vpack.c.bf16 %v3044, %v3042
        %v3061 = vpack.c.bf16 %v3045, %v3043
        %v3062 = vld [vmem:[%s561] sm:$0xf]
        %v3063 = vld [vmem:[%s561 + $0x4] sm:$0xf]
        %v3064 = vld [vmem:[%s561 + $0x8] sm:$0xf]
        %v3065 = vld [vmem:[%s561 + $0xc] sm:$0xf]
        %v3066 = vld [vmem:[%s561 + $0x10] sm:$0xf]
        %v3067 = vld [vmem:[%s561 + $0x14] sm:$0xf]
        %v3068 = vld [vmem:[%s561 + $0x18] sm:$0xf]
        %v3069 = vld [vmem:[%s561 + $0x1c] sm:$0xf]
        %v3070 = vld [vmem:[%s561 + $0x20] sm:$0xf]
        %v3071 = vld [vmem:[%s561 + $0x24] sm:$0xf]
        %v3072 = vld [vmem:[%s561 + $0x28] sm:$0xf]
        %v3073 = vld [vmem:[%s561 + $0x2c] sm:$0xf]
        %v3074 = vld [vmem:[%s561 + $0x30] sm:$0xf]
        %v3075 = vld [vmem:[%s561 + $0x34] sm:$0xf]
        %v3076 = vld [vmem:[%s561 + $0x38] sm:$0xf]
        %v3077 = vld [vmem:[%s561 + $0x3c] sm:$0xf]
        %v3078 = vld [vmem:[%s561 + $0x40] sm:$0xf]
        %v3079 = vld [vmem:[%s561 + $0x44] sm:$0xf]
        %v3080 = vld [vmem:[%s561 + $0x48] sm:$0xf]
        %v3081 = vld [vmem:[%s561 + $0x4c] sm:$0xf]
        %v3082 = vld [vmem:[%s561 + $0x50] sm:$0xf]
        %v3083 = vld [vmem:[%s561 + $0x54] sm:$0xf]
        %v3084 = vld [vmem:[%s561 + $0x58] sm:$0xf]
        %v3085 = vld [vmem:[%s561 + $0x5c] sm:$0xf]
        %v3086 = vld [vmem:[%s561 + $0x60] sm:$0xf]
        %v3087 = vld [vmem:[%s561 + $0x64] sm:$0xf]
        %v3088 = vld [vmem:[%s561 + $0x68] sm:$0xf]
        %v3089 = vld [vmem:[%s561 + $0x6c] sm:$0xf]
        %v3090 = vld [vmem:[%s561 + $0x70] sm:$0xf]
        %v3091 = vld [vmem:[%s561 + $0x74] sm:$0xf]
        %v3092 = vld [vmem:[%s561 + $0x78] sm:$0xf]
        %v3093 = vld [vmem:[%s561 + $0x7c] sm:$0xf]
        %v3095 = vlaneseq
        %v3096 = vshrl.u32 %v3095, 7
        %v3097 = vsub.s32 0, %v3096
        %v3098 = vrot.slane %v709, %v3097
        %v3132 = vunpack.c.l.b16 %v3062
        %v3133 = vunpack.c.l.b16 %v3063
        %v3134 = vunpack.c.l.b16 %v3064
        %v3135 = vunpack.c.l.b16 %v3065
        %v3136 = vunpack.c.l.b16 %v3066
        %v3137 = vunpack.c.l.b16 %v3067
        %v3138 = vunpack.c.l.b16 %v3068
        %v3139 = vunpack.c.l.b16 %v3069
        %v3140 = vunpack.c.l.b16 %v3070
        %v3141 = vunpack.c.l.b16 %v3071
        %v3142 = vunpack.c.l.b16 %v3072
        %v3143 = vunpack.c.l.b16 %v3073
        %v3144 = vunpack.c.l.b16 %v3074
        %v3145 = vunpack.c.l.b16 %v3075
        %v3146 = vunpack.c.l.b16 %v3076
        %v3147 = vunpack.c.l.b16 %v3077
        %v3148 = vunpack.c.l.b16 %v3078
        %v3149 = vunpack.c.l.b16 %v3079
        %v3150 = vunpack.c.l.b16 %v3080
        %v3151 = vunpack.c.l.b16 %v3081
        %v3152 = vunpack.c.l.b16 %v3082
        %v3153 = vunpack.c.l.b16 %v3083
        %v3154 = vunpack.c.l.b16 %v3084
        %v3155 = vunpack.c.l.b16 %v3085
        %v3156 = vunpack.c.l.b16 %v3086
        %v3157 = vunpack.c.l.b16 %v3087
        %v3158 = vunpack.c.l.b16 %v3088
        %v3159 = vunpack.c.l.b16 %v3089
        %v3160 = vunpack.c.l.b16 %v3090
        %v3161 = vunpack.c.l.b16 %v3091
        %v3162 = vunpack.c.l.b16 %v3092
        %v3163 = vunpack.c.l.b16 %v3093
        %v3164 = vpack.c.b16 %v3133, %v3132
        %v3165 = vpack.c.b16 %v3135, %v3134
        %v3166 = vpack.c.b16 %v3137, %v3136
        %v3167 = vpack.c.b16 %v3139, %v3138
        %v3168 = vpack.c.b16 %v3141, %v3140
        %v3169 = vpack.c.b16 %v3143, %v3142
        %v3170 = vpack.c.b16 %v3145, %v3144
        %v3171 = vpack.c.b16 %v3147, %v3146
        %v3172 = vpack.c.b16 %v3149, %v3148
        %v3173 = vpack.c.b16 %v3151, %v3150
        %v3174 = vpack.c.b16 %v3153, %v3152
        %v3175 = vpack.c.b16 %v3155, %v3154
        %v3176 = vpack.c.b16 %v3157, %v3156
        %v3177 = vpack.c.b16 %v3159, %v3158
        %v3178 = vpack.c.b16 %v3161, %v3160
        %v3179 = vpack.c.b16 %v3163, %v3162
        %3196 = vmatprep.subr.bf16.mxu0 0
        %3197 = vmatpush1.bf16.msra.mxu0 %v3171
        %3198 = vmatprep.subr.bf16.mxu0 0
        %3199 = vmatpush1.bf16.msra.mxu0 %v3170
        %3200 = vmatprep.subr.bf16.mxu0 0
        %3201 = vmatpush1.bf16.msra.mxu0 %v3169
        %3202 = vmatprep.subr.bf16.mxu0 0
        %3203 = vmatpush1.bf16.msra.mxu0 %v3168
        %3204 = vmatprep.subr.bf16.mxu0 0
        %3205 = vmatpush1.bf16.msra.mxu0 %v3167
        %3206 = vmatprep.subr.bf16.mxu0 0
        %3207 = vmatpush1.bf16.msra.mxu0 %v3166
        %3208 = vmatprep.subr.bf16.mxu0 0
        %3209 = vmatpush1.bf16.msra.mxu0 %v3165
        %3210 = vmatprep.subr.bf16.mxu0 0
        %3211 = vmatpush1.bf16.msra.mxu0 %v3164
        %3212 = vmatprep.subr.bf16.mxu0 0
        %3213 = vmatpush2.bf16.msra.mxu0 %v3179
        %3214 = vmatprep.subr.bf16.mxu0 0
        %3215 = vmatpush2.bf16.msra.mxu0 %v3178
        %3216 = vmatprep.subr.bf16.mxu0 0
        %3217 = vmatpush2.bf16.msra.mxu0 %v3177
        %3218 = vmatprep.subr.bf16.mxu0 0
        %3219 = vmatpush2.bf16.msra.mxu0 %v3176
        %3220 = vmatprep.subr.bf16.mxu0 0
        %3221 = vmatpush2.bf16.msra.mxu0 %v3175
        %3222 = vmatprep.subr.bf16.mxu0 0
        %3223 = vmatpush2.bf16.msra.mxu0 %v3174
        %3224 = vmatprep.subr.bf16.mxu0 0
        %3225 = vmatpush2.bf16.msra.mxu0 %v3173
        %3226 = vmatprep.subr.bf16.mxu0 0
        %3227 = vmatpush2.bf16.msra.mxu0 %v3172
        %3228 = vmatprep.mubr.bf16.mxu0 %v3047
        %3229 = vmatmul.mubr.bf16.gmra.mxu0 %v3046
        %v3230 = vpop.f32.mrf.mxu0
        %v3231 = vadd.f32 %v3098, %v3230
        %v3232 = vpop.f32.mrf.mxu0
        %v3233 = vpop.f32.mrf.mxu0
        %v3234 = vadd.f32 %v3098, %v3233
        %v3235 = vpop.f32.mrf.mxu0
        %3236 = vmatprep.mubr.bf16.mxu0 %v3049
        %3237 = vmatmul.mubr.bf16.gmra.mxu0 %v3048
        %v3238 = vpop.f32.mrf.mxu0
        %v3239 = vadd.f32 %v3098, %v3238
        %v3240 = vpop.f32.mrf.mxu0
        %v3241 = vpop.f32.mrf.mxu0
        %v3242 = vadd.f32 %v3098, %v3241
        %v3243 = vpop.f32.mrf.mxu0
        %3244 = vmatprep.mubr.bf16.mxu0 %v3051
        %3245 = vmatmul.mubr.bf16.gmra.mxu0 %v3050
        %v3246 = vpop.f32.mrf.mxu0
        %v3247 = vadd.f32 %v3098, %v3246
        %v3248 = vpop.f32.mrf.mxu0
        %v3249 = vpop.f32.mrf.mxu0
        %v3250 = vadd.f32 %v3098, %v3249
        %v3251 = vpop.f32.mrf.mxu0
        %3252 = vmatprep.mubr.bf16.mxu0 %v3053
        %3253 = vmatmul.mubr.bf16.gmra.mxu0 %v3052
        %v3254 = vpop.f32.mrf.mxu0
        %v3255 = vadd.f32 %v3098, %v3254
        %v3256 = vpop.f32.mrf.mxu0
        %v3257 = vpop.f32.mrf.mxu0
        %v3258 = vadd.f32 %v3098, %v3257
        %v3259 = vpop.f32.mrf.mxu0
        %3260 = vmatprep.mubr.bf16.mxu0 %v3055
        %3261 = vmatmul.mubr.bf16.gmra.mxu0 %v3054
        %v3262 = vpop.f32.mrf.mxu0
        %v3263 = vadd.f32 %v3098, %v3262
        %v3264 = vpop.f32.mrf.mxu0
        %v3265 = vpop.f32.mrf.mxu0
        %v3266 = vadd.f32 %v3098, %v3265
        %v3267 = vpop.f32.mrf.mxu0
        %3268 = vmatprep.mubr.bf16.mxu0 %v3057
        %3269 = vmatmul.mubr.bf16.gmra.mxu0 %v3056
        %v3270 = vpop.f32.mrf.mxu0
        %v3271 = vadd.f32 %v3098, %v3270
        %v3272 = vpop.f32.mrf.mxu0
        %v3273 = vpop.f32.mrf.mxu0
        %v3274 = vadd.f32 %v3098, %v3273
        %v3275 = vpop.f32.mrf.mxu0
        %3276 = vmatprep.mubr.bf16.mxu0 %v3059
        %3277 = vmatmul.mubr.bf16.gmra.mxu0 %v3058
        %v3278 = vpop.f32.mrf.mxu0
        %v3279 = vadd.f32 %v3098, %v3278
        %v3280 = vpop.f32.mrf.mxu0
        %v3281 = vpop.f32.mrf.mxu0
        %v3282 = vadd.f32 %v3098, %v3281
        %v3283 = vpop.f32.mrf.mxu0
        %3284 = vmatprep.mubr.bf16.mxu0 %v3061
        %3285 = vmatmul.mubr.bf16.gmra.mxu0 %v3060
        %v3286 = vpop.f32.mrf.mxu0
        %v3287 = vadd.f32 %v3098, %v3286
        %v3288 = vpop.f32.mrf.mxu0
        %v3289 = vpop.f32.mrf.mxu0
        %v3290 = vadd.f32 %v3098, %v3289
        %v3291 = vpop.f32.mrf.mxu0
        %3292 = vdwg.mxu0
        %v3293 = vadd.f32 %v2389, %v3231
        %v3294 = vadd.f32 %v2390, %v3234
        %v3295 = vadd.f32 %v2391, %v3239
        %v3296 = vadd.f32 %v2392, %v3242
        %v3297 = vadd.f32 %v2393, %v3247
        %v3298 = vadd.f32 %v2394, %v3250
        %v3299 = vadd.f32 %v2395, %v3255
        %v3300 = vadd.f32 %v2396, %v3258
        %v3301 = vadd.f32 %v2397, %v3263
        %v3302 = vadd.f32 %v2398, %v3266
        %v3303 = vadd.f32 %v2399, %v3271
        %v3304 = vadd.f32 %v2400, %v3274
        %v3305 = vadd.f32 %v2401, %v3279
        %v3306 = vadd.f32 %v2402, %v3282
        %v3307 = vadd.f32 %v2403, %v3287
        %v3308 = vadd.f32 %v2404, %v3290
        %3309 = vst [vmem:[%s630] sm:$0xff] %v3293
        %3310 = vst [vmem:[%s630 + $0x8] sm:$0xff] %v3294
        %3311 = vst [vmem:[%s630 + $0x10] sm:$0xff] %v3295
        %3312 = vst [vmem:[%s630 + $0x18] sm:$0xff] %v3296
        %3313 = vst [vmem:[%s630 + $0x20] sm:$0xff] %v3297
        %3314 = vst [vmem:[%s630 + $0x28] sm:$0xff] %v3298
        %3315 = vst [vmem:[%s630 + $0x30] sm:$0xff] %v3299
        %3316 = vst [vmem:[%s630 + $0x38] sm:$0xff] %v3300
        %3317 = vst [vmem:[%s630 + $0x40] sm:$0xff] %v3301
        %3318 = vst [vmem:[%s630 + $0x48] sm:$0xff] %v3302
        %3319 = vst [vmem:[%s630 + $0x50] sm:$0xff] %v3303
        %3320 = vst [vmem:[%s630 + $0x58] sm:$0xff] %v3304
        %3321 = vst [vmem:[%s630 + $0x60] sm:$0xff] %v3305
        %3322 = vst [vmem:[%s630 + $0x68] sm:$0xff] %v3306
        %3323 = vst [vmem:[%s630 + $0x70] sm:$0xff] %v3307
        %3324 = vst [vmem:[%s630 + $0x78] sm:$0xff] %v3308
        %s3325 = sand.u32 %s348, 1
        %s3326 = scalar_lea.sflag [#allocation4], %s3325
        %s3327 = sand.u32 %s348, 1
        %s3328 = smul.addr %s3327, 128
        %s3329 = scalar_lea.vmem [#allocation12], %s3328
        // Predicated region
        $region97: #{tpu_custom_call.1} parent=67 // pred_check
          %p3330 = pneg %p358
        $region98: #{tpu_custom_call.1} parent=67 // pred_check_branch
          %3332 = sbr.rel (%p3330) target = $region100
        $region99: #{tpu_custom_call.1} parent=67 // pred_region
          %s3333 = smul.u32 8, %s35
          %s3335 = ssub.s32 2048, 2048
          %3336 = vsyncadd %s3326, %s3335
          %s3337 = smul.addr %s3333, 2
          %s3338 = smul.addr %s3337, 128
          %s3339 = scalar_lea.hbm %s12, %s3338
          %s3340 = sshll.u32 %s3329, 4
          %s3341 = int_to_ptr.vmem [resolvable:$true] %s3340
          %3346 = dma.vmem_to_hbm [thread:$0]  %s3341, 2048, %s3339, %s3326, 128, 128, 8
        $region100: #{tpu_custom_call.1} parent=67 // pred_fallthru
          _
      $region68: #{tpu_custom_call.1} parent=5 // pred_fallthru
        _
      %p3347 = scmp.le.s32.totalorder 2, %s26
      // Predicated region
      $region101: #{tpu_custom_call.1} parent=5 // pred_check
        %p3348 = pneg %p3347
      $region102: #{tpu_custom_call.1} parent=5 // pred_check_branch
        %3350 = sbr.rel (%p3348) target = $region104
      $region103: #{tpu_custom_call.1} parent=5 // pred_region
        %s3351 = ssub.s32 %s26, 2
        // Predicated region
        $region105: #{tpu_custom_call.1} parent=103 // pred_check
          %p3352 = pneg %p364
        $region106: #{tpu_custom_call.1} parent=103 // pred_check_branch
          %3354 = sbr.rel (%p3352) target = $region108
        $region107: #{tpu_custom_call.1} parent=103 // pred_region
          %s3355 = sand.u32 %s349, 1
          %s3356 = scalar_lea.sflag [#allocation4], %s3355
          %s3357 = sand.u32 %s349, 1
          %s3358 = smul.addr %s3357, 128
          %s3359 = scalar_lea.vmem [#allocation12], %s3358
          %3360 = dma.done %s3356, 2048
        $region108: #{tpu_custom_call.1} parent=103 // pred_fallthru
          _
      $region104: #{tpu_custom_call.1} parent=5 // pred_fallthru
        _
    $region6: #{tpu_custom_call.1} parent=1 // loop_footer
      %s30 = sadd.s32 1, %s26
    $region7: #{tpu_custom_call.1} parent=1 // loop_footer_branch
      %25 = sbr.rel target = $region3
    $region8: #{tpu_custom_call.1} parent=1 // loop_exit
      _
    %3361 = vsyncpa [#allocation3], 1
    %s3362 = scalar_lea.sflag [#allocation3], 1
    %3363 = vsyncpa %s3362, 1
    %3364 = vsyncpa [#allocation6], 1
    %3365 = vsyncpa [#allocation9], 1
    %3366 = vsyncpa [#allocation4], 1
    %s3367 = scalar_lea.sflag [#allocation4], 1
    %3368 = vsyncpa %s3367, 1

</llo_original>
